<compile_context>
chip_gen: v7x
topology: tpu7x:2x2x1
jax: 0.10.0
libtpu: 0.0.40
codegen_flags: <defaults>
</compile_context>

<pallas_src>
import jax
import jax.numpy as jnp
from jax.experimental import pallas as pl
from jax.experimental.pallas import tpu as pltpu

BN_EPS = 1e-3


def _cdiv(a, b):
    return -(-a // b)


def _round_up(a, m):
    return _cdiv(a, m) * m


def _pfn_kernel(x_ref, w_ref, b_ref, out_ref):
    """One pillar tile: folded-BN linear + relu + max-over-points + concat.

    x_ref:   (TILE_N, P, Cin)        f32, pipelined over pillar tiles
    w_ref:   (Cin, Cout)             f32, BN-folded weight (resident)
    b_ref:   (1, Cout)               f32, BN-folded bias  (resident)
    out_ref: (TILE_N * P, 2 * Cout)  pipelined; byte-identical to (TILE_N, P, 2*Cout)
    """
    tn, p, cin = x_ref.shape
    cout = w_ref.shape[1]

    # Leading-dim merge is layout-free (last dim unchanged, P a multiple of 8).
    x2d = x_ref[...].reshape(tn * p, cin)
    y = jnp.dot(x2d, w_ref[...], preferred_element_type=jnp.float32)
    y = jnp.maximum(y + b_ref[...], 0.0)               # folded BN shift + ReLU

    # Max over points: (tn*P, C) -> (tn, P, C) is a pure layout reinterpretation.
    y3 = y.reshape(tn, p, cout)
    y_max = jnp.max(y3, axis=1, keepdims=True)          # (tn, 1, C)
    y_rep = jnp.broadcast_to(y_max, (tn, p, cout)).reshape(tn * p, cout)

    # Build the concatenated result in vregs; single full-block store.
    out_ref[...] = jnp.concatenate([y, y_rep], axis=-1).astype(out_ref.dtype)


def _fold_batchnorm(inputs, weight, gamma, beta):
    """Fold training-mode BatchNorm1d into (W, b) from one input-stat pass."""
    n, p, cin = inputs.shape
    cout = weight.shape[1]
    m = n * p
    x2d = inputs.reshape(m, cin)
    sum_x = jnp.sum(x2d, axis=0)                                           # (Cin,)
    gram = jnp.dot(x2d.T, x2d, preferred_element_type=jnp.float32) / m     # E[x x^T]
    mean_x = sum_x / m
    mean_y = jnp.dot(mean_x, weight)                                       # (Cout,)
    e_y2 = jnp.sum(weight * jnp.dot(gram, weight), axis=0)                 # (Cout,)
    # Uncentered form avoids an input-sized centered temp in HBM; fp32
    # cancellation is negligible for typical (roughly centered) pillar features.
    var_y = jnp.maximum(e_y2 - mean_y * mean_y, 0.0)                       # biased
    scale = gamma * jax.lax.rsqrt(var_y + BN_EPS)
    w_fold = (weight * scale[None, :]).astype(jnp.float32)
    b_fold = (beta - mean_y * scale).reshape(1, cout).astype(jnp.float32)
    return w_fold, b_fold


def _pick_tiling(n, p, cin, cout, tile_n):
    """Generation-aware tile size + VMEM limit (v5e/v6e: 128 MiB, v7x: 64 MiB)."""
    try:
        vmem_cap = int(pltpu.get_tpu_info().vmem_capacity_bytes)
    except Exception:  # be conservative if the query is unavailable
        vmem_cap = 64 * 1024 * 1024
    # Never request the whole physical VMEM (headroom for compiler scratch and
    # the resident weight/bias): v7x (64 MiB) -> 48 MiB, v5e/v6e (128) -> 96 MiB.
    vmem_limit = int(min(vmem_cap * 3 // 4, 96 * 1024 * 1024))

    # Rough per-pillar VMEM footprint (f32, lane-padded to 128): double-buffered
    # input + output blocks plus tile-sized temporaries (y, y_rep, concat).
    in_lanes = _round_up(cin, 128)
    out_lanes = _round_up(2 * cout, 128)
    tmp_lanes = 2 * _round_up(cout, 128) + out_lanes
    bytes_per_pillar = 4 * p * (2 * in_lanes + 2 * out_lanes + tmp_lanes)

    if tile_n is None:
        tile_n = (vmem_limit * 3 // 4) // bytes_per_pillar
    tile_n = max(8, min(int(tile_n), max(n, 8), 1024))

    # Prefer an even grid of >= 2 steps so a 2-TensorCore chip (v7x) splits the
    # "parallel" axis evenly; extra steps are ~free on 1-TC chips (v5e/v6e).
    num_tiles = _cdiv(n, tile_n)
    if n > 8:
        num_tiles = max(num_tiles, 2)
    if num_tiles > 1 and num_tiles % 2 == 1:
        num_tiles += 1
    tile_n = _round_up(_cdiv(n, num_tiles), 8)
    return tile_n, num_tiles, vmem_limit


def pfn_layer_forward(inputs, weight, gamma, beta, *, tile_n=None,
                      out_dtype=jnp.float32):
    """PFNLayer forward (use_norm=True, last_layer=False), training-mode BN.

    inputs: (N, P, Cin) float32
    weight: (Cin, Cout) float32   (torch Linear weight, transposed)
    gamma, beta: (Cout,) float32  (BatchNorm1d affine params)
    returns: (N, P, 2*Cout) `out_dtype`   (out_dtype=bf16 halves writeback if the
                                           downstream layer tolerates it)
    """
    n, p, cin = inputs.shape
    cout = weight.shape[1]
    inputs = inputs.astype(jnp.float32)
    weight = weight.astype(jnp.float32)

    w_fold, b_fold = _fold_batchnorm(
        inputs, weight, gamma.astype(jnp.float32), beta.astype(jnp.float32))

    tile_n, num_tiles, vmem_limit = _pick_tiling(n, p, cin, cout, tile_n)
    n_pad = num_tiles * tile_n
    if n_pad != n:
        # Tile selection keeps the pad small (< 8 * num_tiles dead pillars).
        inputs = jnp.pad(inputs, ((0, n_pad - n), (0, 0), (0, 0)))

    out2d = pl.pallas_call(
        _pfn_kernel,
        out_shape=jax.ShapeDtypeStruct((n_pad * p, 2 * cout), out_dtype),
        grid=(num_tiles,),
        in_specs=[
            pl.BlockSpec((tile_n, p, cin), lambda i: (i, 0, 0)),
            pl.BlockSpec((cin, cout), lambda i: (0, 0)),
            pl.BlockSpec((1, cout), lambda i: (0, 0)),
        ],
        # Output declared 2-D (byte-identical to (N, P, 2*Cout)): one full-block
        # store per tile; unmasked vst whenever 2*Cout is a multiple of 128.
        out_specs=pl.BlockSpec((tile_n * p, 2 * cout), lambda i: (i, 0)),
        compiler_params=pltpu.CompilerParams(
            dimension_semantics=("parallel",),
            vmem_limit_bytes=vmem_limit,
        ),
    )(inputs, w_fold, b_fold)

    out = out2d.reshape(n_pad, p, 2 * cout)
    return out[:n] if n_pad != n else out


def _reference(inputs, weight, gamma, beta):
    """Pure-JAX reference mirroring the torch forward (training-mode BN)."""
    y = jnp.einsum("npc,cd->npd", inputs, weight)
    mean = jnp.mean(y, axis=(0, 1), keepdims=True)
    var = jnp.mean((y - mean) ** 2, axis=(0, 1), keepdims=True)
    y = (y - mean) / jnp.sqrt(var + BN_EPS) * gamma[None, None, :] + beta[None, None, :]
    y = jax.nn.relu(y)
    y_max = jnp.max(y, axis=1, keepdims=True)
    y_rep = jnp.broadcast_to(y_max, y.shape)
    return jnp.concatenate([y, y_rep], axis=2)


if __name__ == "__main__":
    # PFN-like small shapes: 384 pillars x 32 points x 10 raw features,
    # out_channels=64, not last layer -> linear Cout = 32, concat output = 64.
    N_PILLARS, N_POINTS, C_IN, OUT_CHANNELS = 384, 32, 10, 64
    C_OUT = OUT_CHANNELS // 2  # not last layer

    key = jax.random.PRNGKey(0)
    k_x, k_w, k_g, k_b = jax.random.split(key, 4)

    inputs = jax.random.normal(k_x, (N_PILLARS, N_POINTS, C_IN), dtype=jnp.float32)
    bound = 1.0 / (C_IN ** 0.5)
    weight = jax.random.uniform(k_w, (C_IN, C_OUT), minval=-bound, maxval=bound,
                                dtype=jnp.float32)
    # Non-trivial BN affine params (torch default would be gamma=1, beta=0).
    gamma = 1.0 + 0.1 * jax.random.normal(k_g, (C_OUT,), dtype=jnp.float32)
    beta = 0.1 * jax.random.normal(k_b, (C_OUT,), dtype=jnp.float32)

    fwd = jax.jit(pfn_layer_forward)
    out = jax.block_until_ready(fwd(inputs, weight, gamma, beta))

    ref = _reference(inputs, weight, gamma, beta)
    assert out.shape == (N_PILLARS, N_POINTS, 2 * C_OUT), out.shape
    max_err = float(jnp.max(jnp.abs(out - ref)))
    assert max_err < 5e-4, max_err

    print("KERNEL_OK")
</pallas_src>

<mosaic_0001>
module attributes {stable_mosaic.version = 11 : i64} {
  func.func @_pfn_kernel(%arg0: i32, %arg1: memref<192x32x10xf32, #tpu.memory_space<vmem>>, %arg2: memref<10x32xf32, #tpu.memory_space<vmem>>, %arg3: memref<1x32xf32, #tpu.memory_space<vmem>>, %arg4: memref<6144x64xf32, #tpu.memory_space<vmem>>) attributes {dimension_semantics = [#tpu.dimension_semantics<parallel>], iteration_bounds = array<i64: 2>, scalar_prefetch = 0 : i64, scratch_operands = 0 : i64, tpu.core_type = #tpu.core_type<tc>, window_params = [{transform_indices = @transform_0, window_bounds = array<i64: 192, 32, 10>}, {pipeline_mode = #tpu.pipeline_mode<synchronous>, transform_indices = @transform_1, window_bounds = array<i64: 10, 32>}, {pipeline_mode = #tpu.pipeline_mode<synchronous>, transform_indices = @transform_2, window_bounds = array<i64: 1, 32>}, {transform_indices = @transform_3, window_bounds = array<i64: 6144, 64>}]} {
    %c0 = arith.constant 0 : index
    %c0_0 = arith.constant 0 : index
    %c0_1 = arith.constant 0 : index
    %0 = vector.load %arg1[%c0, %c0_0, %c0_1] : memref<192x32x10xf32, #tpu.memory_space<vmem>>, vector<192x32x10xf32>
    %1 = vector.shape_cast %0 : vector<192x32x10xf32> to vector<6144x10xf32>
    %c0_2 = arith.constant 0 : index
    %c0_3 = arith.constant 0 : index
    %2 = vector.load %arg2[%c0_2, %c0_3] : memref<10x32xf32, #tpu.memory_space<vmem>>, vector<10x32xf32>
    %cst = arith.constant dense<0.000000e+00> : vector<6144x32xf32>
    %3 = tpu.matmul %1, %2, %cst {dimension_numbers = #tpu.dot_dimension_numbers<[1], [0], [0], [1], [0, 0, 1, 1], [], []>} : vector<6144x10xf32>, vector<10x32xf32>, vector<6144x32xf32> -> vector<6144x32xf32>
    %c0_4 = arith.constant 0 : index
    %c0_5 = arith.constant 0 : index
    %4 = vector.load %arg3[%c0_4, %c0_5] : memref<1x32xf32, #tpu.memory_space<vmem>>, vector<1x32xf32>
    %5 = vector.broadcast %4 : vector<1x32xf32> to vector<6144x32xf32>
    %6 = arith.addf %3, %5 : vector<6144x32xf32>
    %cst_6 = arith.constant 0.000000e+00 : f32
    %7 = vector.broadcast %cst_6 : f32 to vector<6144x32xf32>
    %8 = arith.maximumf %6, %7 : vector<6144x32xf32>
    %9 = vector.shape_cast %8 : vector<6144x32xf32> to vector<192x32x32xf32>
    %cst_7 = arith.constant dense<0xFF800000> : vector<192x32xf32>
    %10 = vector.multi_reduction <maximumf>, %9, %cst_7 [1] : vector<192x32x32xf32> to vector<192x32xf32>
    %11 = vector.shape_cast %10 : vector<192x32xf32> to vector<192x1x32xf32>
    %12 = vector.shape_cast %11 : vector<192x1x32xf32> to vector<192x1x32xf32>
    %13 = vector.broadcast %12 : vector<192x1x32xf32> to vector<192x32x32xf32>
    %14 = vector.shape_cast %13 : vector<192x32x32xf32> to vector<6144x32xf32>
    %15 = tpu.concatenate %8, %14 in 1 : vector<6144x32xf32>, vector<6144x32xf32> -> vector<6144x64xf32>
    %c0_8 = arith.constant 0 : index
    %c0_9 = arith.constant 0 : index
    %16 = vector.load %arg4[%c0_8, %c0_9] : memref<6144x64xf32, #tpu.memory_space<vmem>>, vector<6144x64xf32>
    tpu.vector_store %arg4[%c0_8, %c0_9], %15 {strides = array<i32>} : memref<6144x64xf32, #tpu.memory_space<vmem>>, vector<6144x64xf32>,
    return
  }
  func.func @transform_0(%arg0: i32) -> (i32, i32, i32) {
    %c0_i32 = arith.constant 0 : i32
    %c0_i32_0 = arith.constant 0 : i32
    %c0_i32_1 = arith.constant 0 : i32
    return %arg0, %c0_i32, %c0_i32_0 : i32, i32, i32
  }
  func.func @transform_1(%arg0: i32) -> (i32, i32) {
    %c0_i32 = arith.constant 0 : i32
    %c0_i32_0 = arith.constant 0 : i32
    %c0_i32_1 = arith.constant 0 : i32
    return %c0_i32, %c0_i32_0 : i32, i32
  }
  func.func @transform_2(%arg0: i32) -> (i32, i32) {
    %c0_i32 = arith.constant 0 : i32
    %c0_i32_0 = arith.constant 0 : i32
    %c0_i32_1 = arith.constant 0 : i32
    return %c0_i32, %c0_i32_0 : i32, i32
  }
  func.func @transform_3(%arg0: i32) -> (i32, i32) {
    %c0_i32 = arith.constant 0 : i32
    %c0_i32_0 = arith.constant 0 : i32
    return %arg0, %c0_i32 : i32, i32
  }
}

</mosaic_0001>

<llo_original>
// kernel: pfn_layer_forward.1
$region0: #{pfn_layer_forward.1}
  #allocation0 [shape = 'u32[]', space=smem, size = 0x4, offset = 0x4, fixed_abs, tag = 'smem constant byte address 0x4 - core index']
  #allocation1 [shape = 'u32[144,128]{1,0:T(1,128)}', space=vmem, size = 0x12000, scoped, tag = 'internal scratch']
  %s0 = inlined_call_operand.vmem [shape: f32[384,32,10], index: 0, kind: input, shape index: {}]
  %s1 = inlined_call_operand.vmem [shape: f32[10,32], index: 1, kind: input, shape index: {}]
  %s2 = inlined_call_operand.vmem [shape: f32[1,32], index: 2, kind: input, shape index: {}]
  %s3 = inlined_call_operand.vmem [shape: f32[12288,64], index: 3, kind: output, shape index: {}]
  %s4 = sld [smem:[#allocation0]]
  $region45: #{pfn_layer_forward.1} parent=0
    _
  %s6 = ssub.s32 1, %s4
  %s7 = scalar_select 0, %s6, %s4
  loop: start=0, step=1, limit=4
  $region2: #{pfn_layer_forward.1} parent=0 // loop_pre_header
    _
  $region3: #{pfn_layer_forward.1} parent=0 // loop_header
    %s9 = sphi 0, %s13
    %p10 = scmp.ge.s32.totalorder %s9, 4
    %s19 = sphi 0, %s21
    %s22 = sphi 0, %s19
    %s23 = sphi 0, %s22
    %s39 = sphi 0, %s23
    %s43 = sphi 0, %s43
    %s45 = sphi 0, %s43
    %s46 = sphi 0, %s45
    %s60 = sphi 0, %s46
    %s64 = sphi 0, %s64
    %s66 = sphi 0, %s64
    %s67 = sphi 0, %s66
    %s81 = sphi 0, %s67
    %s87 = sphi 0, %s89
    %s90 = sphi 0, %s87
    %s91 = sphi 0, %s90
    %s107 = sphi 0, %s91
  $region4: #{pfn_layer_forward.1} parent=0 // loop_header_branch
    %12 = sbr.rel (%p10) target = $region8
  $region5: #{pfn_layer_forward.1} parent=0 // loop_body
    %s14 = ssub.s32 %s9, 1
    %s15 = ssub.s32 %s9, 2
    %s16 = sadd.s32 %s9, 1
    %s17 = ssub.s32 %s9, %s16
    %p18 = scmp.eq.s32.totalorder %s17, 0
    %s20 = sadd.s32 %s19, 1
    %s21 = scalar_select %p18, %s19, %s20
    %p24 = pneg %p18
    %p25 = scmp.eq.s32.totalorder %s9, 1
    %p26 = por %p24, %p25
    %p27 = scmp.ne.s32.totalorder %s19, %s22
    %p28 = scmp.eq.s32.totalorder %s9, 0
    %p29 = por %p27, %p28
    %p30 = scmp.ne.s32.totalorder %s19, %s22
    %p31 = scmp.eq.s32.totalorder %s14, 1
    %p32 = por %p30, %p31
    %p33 = scmp.ne.s32.totalorder %s22, %s23
    %p34 = scmp.eq.s32.totalorder %s14, 0
    %p35 = por %p33, %p34
    %p36 = scmp.ne.s32.totalorder %s22, %s23
    %p37 = scmp.eq.s32.totalorder %s15, 1
    %p38 = por %p36, %p37
    %p40 = scmp.ne.s32.totalorder %s23, %s39
    %p41 = scmp.eq.s32.totalorder %s15, 0
    %p42 = por %p40, %p41
    %s44 = sadd.s32 %s43, 1
    %p47 = scmp.eq.s32.totalorder %s9, 1
    %p48 = scmp.ne.s32.totalorder %s43, %s45
    %p49 = scmp.eq.s32.totalorder %s9, 0
    %p50 = por %p48, %p49
    %p51 = scmp.ne.s32.totalorder %s43, %s45
    %p52 = scmp.eq.s32.totalorder %s14, 1
    %p53 = por %p51, %p52
    %p54 = scmp.ne.s32.totalorder %s45, %s46
    %p55 = scmp.eq.s32.totalorder %s14, 0
    %p56 = por %p54, %p55
    %p57 = scmp.ne.s32.totalorder %s45, %s46
    %p58 = scmp.eq.s32.totalorder %s15, 1
    %p59 = por %p57, %p58
    %p61 = scmp.ne.s32.totalorder %s46, %s60
    %p62 = scmp.eq.s32.totalorder %s15, 0
    %p63 = por %p61, %p62
    %s65 = sadd.s32 %s64, 1
    %p68 = scmp.eq.s32.totalorder %s9, 1
    %p69 = scmp.ne.s32.totalorder %s64, %s66
    %p70 = scmp.eq.s32.totalorder %s9, 0
    %p71 = por %p69, %p70
    %p72 = scmp.ne.s32.totalorder %s64, %s66
    %p73 = scmp.eq.s32.totalorder %s14, 1
    %p74 = por %p72, %p73
    %p75 = scmp.ne.s32.totalorder %s66, %s67
    %p76 = scmp.eq.s32.totalorder %s14, 0
    %p77 = por %p75, %p76
    %p78 = scmp.ne.s32.totalorder %s66, %s67
    %p79 = scmp.eq.s32.totalorder %s15, 1
    %p80 = por %p78, %p79
    %p82 = scmp.ne.s32.totalorder %s67, %s81
    %p83 = scmp.eq.s32.totalorder %s15, 0
    %p84 = por %p82, %p83
    %s85 = ssub.s32 %s9, %s16
    %p86 = scmp.eq.s32.totalorder %s85, 0
    %s88 = sadd.s32 %s87, 1
    %s89 = scalar_select %p86, %s87, %s88
    %p92 = pneg %p86
    %p93 = scmp.eq.s32.totalorder %s9, 1
    %p94 = por %p92, %p93
    %p95 = scmp.ne.s32.totalorder %s87, %s90
    %p96 = scmp.eq.s32.totalorder %s9, 0
    %p97 = por %p95, %p96
    %p98 = scmp.ne.s32.totalorder %s87, %s90
    %p99 = scmp.eq.s32.totalorder %s14, 1
    %p100 = por %p98, %p99
    %p101 = scmp.ne.s32.totalorder %s90, %s91
    %p102 = scmp.eq.s32.totalorder %s14, 0
    %p103 = por %p101, %p102
    %p104 = scmp.ne.s32.totalorder %s90, %s91
    %p105 = scmp.eq.s32.totalorder %s15, 1
    %p106 = por %p104, %p105
    %p108 = scmp.ne.s32.totalorder %s91, %s107
    %p109 = scmp.eq.s32.totalorder %s15, 0
    %p110 = por %p108, %p109
    %p111 = scmp.le.s32.totalorder 1, %s9
    %p112 = scmp.lt.s32.totalorder %s9, 3
    %p113 = pnand %p111, %p112
    %p114 = pneg %p113
    // Predicated region
    $region9: #{pfn_layer_forward.1} parent=5 // pred_check
      _
    $region10: #{pfn_layer_forward.1} parent=5 // pred_check_branch
      %116 = sbr.rel (%p113) target = $region12
    $region11: #{pfn_layer_forward.1} parent=5 // pred_region
      %s117 = ssub.s32 %s9, 1
      // Predicated region
      $region13: #{pfn_layer_forward.1} parent=11 // pred_check
        %p118 = pneg %p56
      $region14: #{pfn_layer_forward.1} parent=11 // pred_check_branch
        %120 = sbr.rel (%p118) target = $region16
      $region15: #{pfn_layer_forward.1} parent=11 // pred_region
        _
      $region16: #{pfn_layer_forward.1} parent=11 // pred_fallthru
        _
      // Predicated region
      $region17: #{pfn_layer_forward.1} parent=11 // pred_check
        %p121 = pneg %p77
      $region18: #{pfn_layer_forward.1} parent=11 // pred_check_branch
        %123 = sbr.rel (%p121) target = $region20
      $region19: #{pfn_layer_forward.1} parent=11 // pred_region
        _
      $region20: #{pfn_layer_forward.1} parent=11 // pred_fallthru
        _
    $region12: #{pfn_layer_forward.1} parent=5 // pred_fallthru
      _
    %p124 = scmp.lt.s32.totalorder %s9, 2
    // Predicated region
    $region21: #{pfn_layer_forward.1} parent=5 // pred_check
      %p125 = pneg %p124
    $region22: #{pfn_layer_forward.1} parent=5 // pred_check_branch
      %127 = sbr.rel (%p125) target = $region24
    $region23: #{pfn_layer_forward.1} parent=5 // pred_region
      // Predicated region
      $region25: #{pfn_layer_forward.1} parent=23 // pred_check
        %p128 = pneg %p29
      $region26: #{pfn_layer_forward.1} parent=23 // pred_check_branch
        %130 = sbr.rel (%p128) target = $region28
      $region27: #{pfn_layer_forward.1} parent=23 // pred_region
        %s131 = smul.u32 192, %s9
        %p132 = scmp.lt.s32.totalorder %s131, 383
        %s133 = scalar_select %p132, %s131, 383
        %s134 = smul.addr %s133, 4
        %s135 = smul.addr %s134, 8
        %s136 = scalar_lea.vmem %s0, %s135
        %s137 = smul.u32 192, %s9
      $region28: #{pfn_layer_forward.1} parent=23 // pred_fallthru
        _
    $region24: #{pfn_layer_forward.1} parent=5 // pred_fallthru
      _
    %p138 = scmp.le.s32.totalorder 1, %s9
    %p139 = scmp.lt.s32.totalorder %s9, 3
    %p140 = pnand %p138, %p139
    %p141 = pneg %p140
    // Predicated region
    $region29: #{pfn_layer_forward.1} parent=5 // pred_check
      _
    $region30: #{pfn_layer_forward.1} parent=5 // pred_check_branch
      %143 = sbr.rel (%p140) target = $region32
    $region31: #{pfn_layer_forward.1} parent=5 // pred_region
      %s144 = ssub.s32 %s9, 1
      %s145 = smul.u32 192, %s14
      %p146 = scmp.lt.s32.totalorder %s145, 383
      %s147 = scalar_select %p146, %s145, 383
      %s148 = smul.addr %s147, 4
      %s149 = smul.addr %s148, 8
      %s150 = scalar_lea.vmem %s0, %s149
      %p151 = pneg %p35
      %p152 = pneg %p32
      %p153 = pneg %p56
      %p154 = pneg %p53
      %p155 = pneg %p77
      %p156 = pneg %p74
      %p157 = pneg %p103
      %p158 = pneg %p100
      %s159 = smul.u32 768, %s14
      %p160 = scmp.lt.s32.totalorder %s159, 1535
      %s161 = scalar_select %p160, %s159, 1535
      %s162 = smul.addr %s161, 8
      %s163 = scalar_lea.vmem %s3, %s162
      %s164 = smul.u32 192, %s14
      %p165 = scmp.lt.s32.totalorder %s164, 383
      %s166 = scalar_select %p165, %s164, 383
      %s167 = smul.addr %s166, 4
      %s168 = smul.addr %s167, 8
      %s169 = scalar_lea.vmem %s0, %s168
      %s170 = smul.u32 192, %s14
      %s171 = smul.u32 768, %s14
      %p172 = scmp.lt.s32.totalorder %s171, 1535
      %s173 = scalar_select %p172, %s171, 1535
      %s174 = smul.addr %s173, 8
      %s175 = scalar_lea.vmem %s3, %s174
      %s176 = smul.u32 768, %s14
      %v177 = vld [vmem:[%s169] sm:$0xff]
      %v178 = vld [vmem:[%s169 + $0x8] sm:$0xff]
      %v179 = vld [vmem:[%s169 + $0x10] sm:$0xff]
      %v180 = vld [vmem:[%s169 + $0x18] sm:$0xff]
      %v181 = vld [vmem:[%s169 + $0x20] sm:$0xff]
      %v182 = vld [vmem:[%s169 + $0x28] sm:$0xff]
      %v183 = vld [vmem:[%s169 + $0x30] sm:$0xff]
      %v184 = vld [vmem:[%s169 + $0x38] sm:$0xff]
      %v185 = vld [vmem:[%s169 + $0x40] sm:$0xff]
      %v186 = vld [vmem:[%s169 + $0x48] sm:$0xff]
      %v187 = vld [vmem:[%s169 + $0x50] sm:$0xff]
      %v188 = vld [vmem:[%s169 + $0x58] sm:$0xff]
      %v189 = vld [vmem:[%s169 + $0x60] sm:$0xff]
      %v190 = vld [vmem:[%s169 + $0x68] sm:$0xff]
      %v191 = vld [vmem:[%s169 + $0x70] sm:$0xff]
      %v192 = vld [vmem:[%s169 + $0x78] sm:$0xff]
      %v193 = vld [vmem:[%s169 + $0x80] sm:$0xff]
      %v194 = vld [vmem:[%s169 + $0x88] sm:$0xff]
      %v195 = vld [vmem:[%s169 + $0x90] sm:$0xff]
      %v196 = vld [vmem:[%s169 + $0x98] sm:$0xff]
      %v197 = vld [vmem:[%s169 + $0xa0] sm:$0xff]
      %v198 = vld [vmem:[%s169 + $0xa8] sm:$0xff]
      %v199 = vld [vmem:[%s169 + $0xb0] sm:$0xff]
      %v200 = vld [vmem:[%s169 + $0xb8] sm:$0xff]
      %v201 = vld [vmem:[%s169 + $0xc0] sm:$0xff]
      %v202 = vld [vmem:[%s169 + $0xc8] sm:$0xff]
      %v203 = vld [vmem:[%s169 + $0xd0] sm:$0xff]
      %v204 = vld [vmem:[%s169 + $0xd8] sm:$0xff]
      %v205 = vld [vmem:[%s169 + $0xe0] sm:$0xff]
      %v206 = vld [vmem:[%s169 + $0xe8] sm:$0xff]
      %v207 = vld [vmem:[%s169 + $0xf0] sm:$0xff]
      %v208 = vld [vmem:[%s169 + $0xf8] sm:$0xff]
      %v209 = vld [vmem:[%s169 + $0x100] sm:$0xff]
      %v210 = vld [vmem:[%s169 + $0x108] sm:$0xff]
      %v211 = vld [vmem:[%s169 + $0x110] sm:$0xff]
      %v212 = vld [vmem:[%s169 + $0x118] sm:$0xff]
      %v213 = vld [vmem:[%s169 + $0x120] sm:$0xff]
      %v214 = vld [vmem:[%s169 + $0x128] sm:$0xff]
      %v215 = vld [vmem:[%s169 + $0x130] sm:$0xff]
      %v216 = vld [vmem:[%s169 + $0x138] sm:$0xff]
      %v217 = vld [vmem:[%s169 + $0x140] sm:$0xff]
      %v218 = vld [vmem:[%s169 + $0x148] sm:$0xff]
      %v219 = vld [vmem:[%s169 + $0x150] sm:$0xff]
      %v220 = vld [vmem:[%s169 + $0x158] sm:$0xff]
      %v221 = vld [vmem:[%s169 + $0x160] sm:$0xff]
      %v222 = vld [vmem:[%s169 + $0x168] sm:$0xff]
      %v223 = vld [vmem:[%s169 + $0x170] sm:$0xff]
      %v224 = vld [vmem:[%s169 + $0x178] sm:$0xff]
      %v225 = vld [vmem:[%s169 + $0x180] sm:$0xff]
      %v226 = vld [vmem:[%s169 + $0x188] sm:$0xff]
      %v227 = vld [vmem:[%s169 + $0x190] sm:$0xff]
      %v228 = vld [vmem:[%s169 + $0x198] sm:$0xff]
      %v229 = vld [vmem:[%s169 + $0x1a0] sm:$0xff]
      %v230 = vld [vmem:[%s169 + $0x1a8] sm:$0xff]
      %v231 = vld [vmem:[%s169 + $0x1b0] sm:$0xff]
      %v232 = vld [vmem:[%s169 + $0x1b8] sm:$0xff]
      %v233 = vld [vmem:[%s169 + $0x1c0] sm:$0xff]
      %v234 = vld [vmem:[%s169 + $0x1c8] sm:$0xff]
      %v235 = vld [vmem:[%s169 + $0x1d0] sm:$0xff]
      %v236 = vld [vmem:[%s169 + $0x1d8] sm:$0xff]
      %v237 = vld [vmem:[%s169 + $0x1e0] sm:$0xff]
      %v238 = vld [vmem:[%s169 + $0x1e8] sm:$0xff]
      %v239 = vld [vmem:[%s169 + $0x1f0] sm:$0xff]
      %v240 = vld [vmem:[%s169 + $0x1f8] sm:$0xff]
      %v241 = vld [vmem:[%s169 + $0x200] sm:$0xff]
      %v242 = vld [vmem:[%s169 + $0x208] sm:$0xff]
      %v243 = vld [vmem:[%s169 + $0x210] sm:$0xff]
      %v244 = vld [vmem:[%s169 + $0x218] sm:$0xff]
      %v245 = vld [vmem:[%s169 + $0x220] sm:$0xff]
      %v246 = vld [vmem:[%s169 + $0x228] sm:$0xff]
      %v247 = vld [vmem:[%s169 + $0x230] sm:$0xff]
      %v248 = vld [vmem:[%s169 + $0x238] sm:$0xff]
      %v249 = vld [vmem:[%s169 + $0x240] sm:$0xff]
      %v250 = vld [vmem:[%s169 + $0x248] sm:$0xff]
      %v251 = vld [vmem:[%s169 + $0x250] sm:$0xff]
      %v252 = vld [vmem:[%s169 + $0x258] sm:$0xff]
      %v253 = vld [vmem:[%s169 + $0x260] sm:$0xff]
      %v254 = vld [vmem:[%s169 + $0x268] sm:$0xff]
      %v255 = vld [vmem:[%s169 + $0x270] sm:$0xff]
      %v256 = vld [vmem:[%s169 + $0x278] sm:$0xff]
      %v257 = vld [vmem:[%s169 + $0x280] sm:$0xff]
      %v258 = vld [vmem:[%s169 + $0x288] sm:$0xff]
      %v259 = vld [vmem:[%s169 + $0x290] sm:$0xff]
      %v260 = vld [vmem:[%s169 + $0x298] sm:$0xff]
      %v261 = vld [vmem:[%s169 + $0x2a0] sm:$0xff]
      %v262 = vld [vmem:[%s169 + $0x2a8] sm:$0xff]
      %v263 = vld [vmem:[%s169 + $0x2b0] sm:$0xff]
      %v264 = vld [vmem:[%s169 + $0x2b8] sm:$0xff]
      %v265 = vld [vmem:[%s169 + $0x2c0] sm:$0xff]
      %v266 = vld [vmem:[%s169 + $0x2c8] sm:$0xff]
      %v267 = vld [vmem:[%s169 + $0x2d0] sm:$0xff]
      %v268 = vld [vmem:[%s169 + $0x2d8] sm:$0xff]
      %v269 = vld [vmem:[%s169 + $0x2e0] sm:$0xff]
      %v270 = vld [vmem:[%s169 + $0x2e8] sm:$0xff]
      %v271 = vld [vmem:[%s169 + $0x2f0] sm:$0xff]
      %v272 = vld [vmem:[%s169 + $0x2f8] sm:$0xff]
      %v273 = vld [vmem:[%s169 + $0x300] sm:$0xff]
      %v274 = vld [vmem:[%s169 + $0x308] sm:$0xff]
      %v275 = vld [vmem:[%s169 + $0x310] sm:$0xff]
      %v276 = vld [vmem:[%s169 + $0x318] sm:$0xff]
      %v277 = vld [vmem:[%s169 + $0x320] sm:$0xff]
      %v278 = vld [vmem:[%s169 + $0x328] sm:$0xff]
      %v279 = vld [vmem:[%s169 + $0x330] sm:$0xff]
      %v280 = vld [vmem:[%s169 + $0x338] sm:$0xff]
      %v281 = vld [vmem:[%s169 + $0x340] sm:$0xff]
      %v282 = vld [vmem:[%s169 + $0x348] sm:$0xff]
      %v283 = vld [vmem:[%s169 + $0x350] sm:$0xff]
      %v284 = vld [vmem:[%s169 + $0x358] sm:$0xff]
      %v285 = vld [vmem:[%s169 + $0x360] sm:$0xff]
      %v286 = vld [vmem:[%s169 + $0x368] sm:$0xff]
      %v287 = vld [vmem:[%s169 + $0x370] sm:$0xff]
      %v288 = vld [vmem:[%s169 + $0x378] sm:$0xff]
      %v289 = vld [vmem:[%s169 + $0x380] sm:$0xff]
      %v290 = vld [vmem:[%s169 + $0x388] sm:$0xff]
      %v291 = vld [vmem:[%s169 + $0x390] sm:$0xff]
      %v292 = vld [vmem:[%s169 + $0x398] sm:$0xff]
      %v293 = vld [vmem:[%s169 + $0x3a0] sm:$0xff]
      %v294 = vld [vmem:[%s169 + $0x3a8] sm:$0xff]
      %v295 = vld [vmem:[%s169 + $0x3b0] sm:$0xff]
      %v296 = vld [vmem:[%s169 + $0x3b8] sm:$0xff]
      %v297 = vld [vmem:[%s169 + $0x3c0] sm:$0xff]
      %v298 = vld [vmem:[%s169 + $0x3c8] sm:$0xff]
      %v299 = vld [vmem:[%s169 + $0x3d0] sm:$0xff]
      %v300 = vld [vmem:[%s169 + $0x3d8] sm:$0xff]
      %v301 = vld [vmem:[%s169 + $0x3e0] sm:$0xff]
      %v302 = vld [vmem:[%s169 + $0x3e8] sm:$0xff]
      %v303 = vld [vmem:[%s169 + $0x3f0] sm:$0xff]
      %v304 = vld [vmem:[%s169 + $0x3f8] sm:$0xff]
      %v305 = vld [vmem:[%s169 + $0x400] sm:$0xff]
      %v306 = vld [vmem:[%s169 + $0x408] sm:$0xff]
      %v307 = vld [vmem:[%s169 + $0x410] sm:$0xff]
      %v308 = vld [vmem:[%s169 + $0x418] sm:$0xff]
      %v309 = vld [vmem:[%s169 + $0x420] sm:$0xff]
      %v310 = vld [vmem:[%s169 + $0x428] sm:$0xff]
      %v311 = vld [vmem:[%s169 + $0x430] sm:$0xff]
      %v312 = vld [vmem:[%s169 + $0x438] sm:$0xff]
      %v313 = vld [vmem:[%s169 + $0x440] sm:$0xff]
      %v314 = vld [vmem:[%s169 + $0x448] sm:$0xff]
      %v315 = vld [vmem:[%s169 + $0x450] sm:$0xff]
      %v316 = vld [vmem:[%s169 + $0x458] sm:$0xff]
      %v317 = vld [vmem:[%s169 + $0x460] sm:$0xff]
      %v318 = vld [vmem:[%s169 + $0x468] sm:$0xff]
      %v319 = vld [vmem:[%s169 + $0x470] sm:$0xff]
      %v320 = vld [vmem:[%s169 + $0x478] sm:$0xff]
      %v321 = vld [vmem:[%s169 + $0x480] sm:$0xff]
      %v322 = vld [vmem:[%s169 + $0x488] sm:$0xff]
      %v323 = vld [vmem:[%s169 + $0x490] sm:$0xff]
      %v324 = vld [vmem:[%s169 + $0x498] sm:$0xff]
      %v325 = vld [vmem:[%s169 + $0x4a0] sm:$0xff]
      %v326 = vld [vmem:[%s169 + $0x4a8] sm:$0xff]
      %v327 = vld [vmem:[%s169 + $0x4b0] sm:$0xff]
      %v328 = vld [vmem:[%s169 + $0x4b8] sm:$0xff]
      %v329 = vld [vmem:[%s169 + $0x4c0] sm:$0xff]
      %v330 = vld [vmem:[%s169 + $0x4c8] sm:$0xff]
      %v331 = vld [vmem:[%s169 + $0x4d0] sm:$0xff]
      %v332 = vld [vmem:[%s169 + $0x4d8] sm:$0xff]
      %v333 = vld [vmem:[%s169 + $0x4e0] sm:$0xff]
      %v334 = vld [vmem:[%s169 + $0x4e8] sm:$0xff]
      %v335 = vld [vmem:[%s169 + $0x4f0] sm:$0xff]
      %v336 = vld [vmem:[%s169 + $0x4f8] sm:$0xff]
      %v337 = vld [vmem:[%s169 + $0x500] sm:$0xff]
      %v338 = vld [vmem:[%s169 + $0x508] sm:$0xff]
      %v339 = vld [vmem:[%s169 + $0x510] sm:$0xff]
      %v340 = vld [vmem:[%s169 + $0x518] sm:$0xff]
      %v341 = vld [vmem:[%s169 + $0x520] sm:$0xff]
      %v342 = vld [vmem:[%s169 + $0x528] sm:$0xff]
      %v343 = vld [vmem:[%s169 + $0x530] sm:$0xff]
      %v344 = vld [vmem:[%s169 + $0x538] sm:$0xff]
      %v345 = vld [vmem:[%s169 + $0x540] sm:$0xff]
      %v346 = vld [vmem:[%s169 + $0x548] sm:$0xff]
      %v347 = vld [vmem:[%s169 + $0x550] sm:$0xff]
      %v348 = vld [vmem:[%s169 + $0x558] sm:$0xff]
      %v349 = vld [vmem:[%s169 + $0x560] sm:$0xff]
      %v350 = vld [vmem:[%s169 + $0x568] sm:$0xff]
      %v351 = vld [vmem:[%s169 + $0x570] sm:$0xff]
      %v352 = vld [vmem:[%s169 + $0x578] sm:$0xff]
      %v353 = vld [vmem:[%s169 + $0x580] sm:$0xff]
      %v354 = vld [vmem:[%s169 + $0x588] sm:$0xff]
      %v355 = vld [vmem:[%s169 + $0x590] sm:$0xff]
      %v356 = vld [vmem:[%s169 + $0x598] sm:$0xff]
      %v357 = vld [vmem:[%s169 + $0x5a0] sm:$0xff]
      %v358 = vld [vmem:[%s169 + $0x5a8] sm:$0xff]
      %v359 = vld [vmem:[%s169 + $0x5b0] sm:$0xff]
      %v360 = vld [vmem:[%s169 + $0x5b8] sm:$0xff]
      %v361 = vld [vmem:[%s169 + $0x5c0] sm:$0xff]
      %v362 = vld [vmem:[%s169 + $0x5c8] sm:$0xff]
      %v363 = vld [vmem:[%s169 + $0x5d0] sm:$0xff]
      %v364 = vld [vmem:[%s169 + $0x5d8] sm:$0xff]
      %v365 = vld [vmem:[%s169 + $0x5e0] sm:$0xff]
      %v366 = vld [vmem:[%s169 + $0x5e8] sm:$0xff]
      %v367 = vld [vmem:[%s169 + $0x5f0] sm:$0xff]
      %v368 = vld [vmem:[%s169 + $0x5f8] sm:$0xff]
      %v369 = vld [vmem:[%s169 + $0x600] sm:$0xff]
      %v370 = vld [vmem:[%s169 + $0x608] sm:$0xff]
      %v371 = vld [vmem:[%s169 + $0x610] sm:$0xff]
      %v372 = vld [vmem:[%s169 + $0x618] sm:$0xff]
      %v373 = vld [vmem:[%s169 + $0x620] sm:$0xff]
      %v374 = vld [vmem:[%s169 + $0x628] sm:$0xff]
      %v375 = vld [vmem:[%s169 + $0x630] sm:$0xff]
      %v376 = vld [vmem:[%s169 + $0x638] sm:$0xff]
      %v377 = vld [vmem:[%s169 + $0x640] sm:$0xff]
      %v378 = vld [vmem:[%s169 + $0x648] sm:$0xff]
      %v379 = vld [vmem:[%s169 + $0x650] sm:$0xff]
      %v380 = vld [vmem:[%s169 + $0x658] sm:$0xff]
      %v381 = vld [vmem:[%s169 + $0x660] sm:$0xff]
      %v382 = vld [vmem:[%s169 + $0x668] sm:$0xff]
      %v383 = vld [vmem:[%s169 + $0x670] sm:$0xff]
      %v384 = vld [vmem:[%s169 + $0x678] sm:$0xff]
      %v385 = vld [vmem:[%s169 + $0x680] sm:$0xff]
      %v386 = vld [vmem:[%s169 + $0x688] sm:$0xff]
      %v387 = vld [vmem:[%s169 + $0x690] sm:$0xff]
      %v388 = vld [vmem:[%s169 + $0x698] sm:$0xff]
      %v389 = vld [vmem:[%s169 + $0x6a0] sm:$0xff]
      %v390 = vld [vmem:[%s169 + $0x6a8] sm:$0xff]
      %v391 = vld [vmem:[%s169 + $0x6b0] sm:$0xff]
      %v392 = vld [vmem:[%s169 + $0x6b8] sm:$0xff]
      %v393 = vld [vmem:[%s169 + $0x6c0] sm:$0xff]
      %v394 = vld [vmem:[%s169 + $0x6c8] sm:$0xff]
      %v395 = vld [vmem:[%s169 + $0x6d0] sm:$0xff]
      %v396 = vld [vmem:[%s169 + $0x6d8] sm:$0xff]
      %v397 = vld [vmem:[%s169 + $0x6e0] sm:$0xff]
      %v398 = vld [vmem:[%s169 + $0x6e8] sm:$0xff]
      %v399 = vld [vmem:[%s169 + $0x6f0] sm:$0xff]
      %v400 = vld [vmem:[%s169 + $0x6f8] sm:$0xff]
      %v401 = vld [vmem:[%s169 + $0x700] sm:$0xff]
      %v402 = vld [vmem:[%s169 + $0x708] sm:$0xff]
      %v403 = vld [vmem:[%s169 + $0x710] sm:$0xff]
      %v404 = vld [vmem:[%s169 + $0x718] sm:$0xff]
      %v405 = vld [vmem:[%s169 + $0x720] sm:$0xff]
      %v406 = vld [vmem:[%s169 + $0x728] sm:$0xff]
      %v407 = vld [vmem:[%s169 + $0x730] sm:$0xff]
      %v408 = vld [vmem:[%s169 + $0x738] sm:$0xff]
      %v409 = vld [vmem:[%s169 + $0x740] sm:$0xff]
      %v410 = vld [vmem:[%s169 + $0x748] sm:$0xff]
      %v411 = vld [vmem:[%s169 + $0x750] sm:$0xff]
      %v412 = vld [vmem:[%s169 + $0x758] sm:$0xff]
      %v413 = vld [vmem:[%s169 + $0x760] sm:$0xff]
      %v414 = vld [vmem:[%s169 + $0x768] sm:$0xff]
      %v415 = vld [vmem:[%s169 + $0x770] sm:$0xff]
      %v416 = vld [vmem:[%s169 + $0x778] sm:$0xff]
      %v417 = vld [vmem:[%s169 + $0x780] sm:$0xff]
      %v418 = vld [vmem:[%s169 + $0x788] sm:$0xff]
      %v419 = vld [vmem:[%s169 + $0x790] sm:$0xff]
      %v420 = vld [vmem:[%s169 + $0x798] sm:$0xff]
      %v421 = vld [vmem:[%s169 + $0x7a0] sm:$0xff]
      %v422 = vld [vmem:[%s169 + $0x7a8] sm:$0xff]
      %v423 = vld [vmem:[%s169 + $0x7b0] sm:$0xff]
      %v424 = vld [vmem:[%s169 + $0x7b8] sm:$0xff]
      %v425 = vld [vmem:[%s169 + $0x7c0] sm:$0xff]
      %v426 = vld [vmem:[%s169 + $0x7c8] sm:$0xff]
      %v427 = vld [vmem:[%s169 + $0x7d0] sm:$0xff]
      %v428 = vld [vmem:[%s169 + $0x7d8] sm:$0xff]
      %v429 = vld [vmem:[%s169 + $0x7e0] sm:$0xff]
      %v430 = vld [vmem:[%s169 + $0x7e8] sm:$0xff]
      %v431 = vld [vmem:[%s169 + $0x7f0] sm:$0xff]
      %v432 = vld [vmem:[%s169 + $0x7f8] sm:$0xff]
      %v433 = vld [vmem:[%s169 + $0x800] sm:$0xff]
      %v434 = vld [vmem:[%s169 + $0x808] sm:$0xff]
      %v435 = vld [vmem:[%s169 + $0x810] sm:$0xff]
      %v436 = vld [vmem:[%s169 + $0x818] sm:$0xff]
      %v437 = vld [vmem:[%s169 + $0x820] sm:$0xff]
      %v438 = vld [vmem:[%s169 + $0x828] sm:$0xff]
      %v439 = vld [vmem:[%s169 + $0x830] sm:$0xff]
      %v440 = vld [vmem:[%s169 + $0x838] sm:$0xff]
      %v441 = vld [vmem:[%s169 + $0x840] sm:$0xff]
      %v442 = vld [vmem:[%s169 + $0x848] sm:$0xff]
      %v443 = vld [vmem:[%s169 + $0x850] sm:$0xff]
      %v444 = vld [vmem:[%s169 + $0x858] sm:$0xff]
      %v445 = vld [vmem:[%s169 + $0x860] sm:$0xff]
      %v446 = vld [vmem:[%s169 + $0x868] sm:$0xff]
      %v447 = vld [vmem:[%s169 + $0x870] sm:$0xff]
      %v448 = vld [vmem:[%s169 + $0x878] sm:$0xff]
      %v449 = vld [vmem:[%s169 + $0x880] sm:$0xff]
      %v450 = vld [vmem:[%s169 + $0x888] sm:$0xff]
      %v451 = vld [vmem:[%s169 + $0x890] sm:$0xff]
      %v452 = vld [vmem:[%s169 + $0x898] sm:$0xff]
      %v453 = vld [vmem:[%s169 + $0x8a0] sm:$0xff]
      %v454 = vld [vmem:[%s169 + $0x8a8] sm:$0xff]
      %v455 = vld [vmem:[%s169 + $0x8b0] sm:$0xff]
      %v456 = vld [vmem:[%s169 + $0x8b8] sm:$0xff]
      %v457 = vld [vmem:[%s169 + $0x8c0] sm:$0xff]
      %v458 = vld [vmem:[%s169 + $0x8c8] sm:$0xff]
      %v459 = vld [vmem:[%s169 + $0x8d0] sm:$0xff]
      %v460 = vld [vmem:[%s169 + $0x8d8] sm:$0xff]
      %v461 = vld [vmem:[%s169 + $0x8e0] sm:$0xff]
      %v462 = vld [vmem:[%s169 + $0x8e8] sm:$0xff]
      %v463 = vld [vmem:[%s169 + $0x8f0] sm:$0xff]
      %v464 = vld [vmem:[%s169 + $0x8f8] sm:$0xff]
      %v465 = vld [vmem:[%s169 + $0x900] sm:$0xff]
      %v466 = vld [vmem:[%s169 + $0x908] sm:$0xff]
      %v467 = vld [vmem:[%s169 + $0x910] sm:$0xff]
      %v468 = vld [vmem:[%s169 + $0x918] sm:$0xff]
      %v469 = vld [vmem:[%s169 + $0x920] sm:$0xff]
      %v470 = vld [vmem:[%s169 + $0x928] sm:$0xff]
      %v471 = vld [vmem:[%s169 + $0x930] sm:$0xff]
      %v472 = vld [vmem:[%s169 + $0x938] sm:$0xff]
      %v473 = vld [vmem:[%s169 + $0x940] sm:$0xff]
      %v474 = vld [vmem:[%s169 + $0x948] sm:$0xff]
      %v475 = vld [vmem:[%s169 + $0x950] sm:$0xff]
      %v476 = vld [vmem:[%s169 + $0x958] sm:$0xff]
      %v477 = vld [vmem:[%s169 + $0x960] sm:$0xff]
      %v478 = vld [vmem:[%s169 + $0x968] sm:$0xff]
      %v479 = vld [vmem:[%s169 + $0x970] sm:$0xff]
      %v480 = vld [vmem:[%s169 + $0x978] sm:$0xff]
      %v481 = vld [vmem:[%s169 + $0x980] sm:$0xff]
      %v482 = vld [vmem:[%s169 + $0x988] sm:$0xff]
      %v483 = vld [vmem:[%s169 + $0x990] sm:$0xff]
      %v484 = vld [vmem:[%s169 + $0x998] sm:$0xff]
      %v485 = vld [vmem:[%s169 + $0x9a0] sm:$0xff]
      %v486 = vld [vmem:[%s169 + $0x9a8] sm:$0xff]
      %v487 = vld [vmem:[%s169 + $0x9b0] sm:$0xff]
      %v488 = vld [vmem:[%s169 + $0x9b8] sm:$0xff]
      %v489 = vld [vmem:[%s169 + $0x9c0] sm:$0xff]
      %v490 = vld [vmem:[%s169 + $0x9c8] sm:$0xff]
      %v491 = vld [vmem:[%s169 + $0x9d0] sm:$0xff]
      %v492 = vld [vmem:[%s169 + $0x9d8] sm:$0xff]
      %v493 = vld [vmem:[%s169 + $0x9e0] sm:$0xff]
      %v494 = vld [vmem:[%s169 + $0x9e8] sm:$0xff]
      %v495 = vld [vmem:[%s169 + $0x9f0] sm:$0xff]
      %v496 = vld [vmem:[%s169 + $0x9f8] sm:$0xff]
      %v497 = vld [vmem:[%s169 + $0xa00] sm:$0xff]
      %v498 = vld [vmem:[%s169 + $0xa08] sm:$0xff]
      %v499 = vld [vmem:[%s169 + $0xa10] sm:$0xff]
      %v500 = vld [vmem:[%s169 + $0xa18] sm:$0xff]
      %v501 = vld [vmem:[%s169 + $0xa20] sm:$0xff]
      %v502 = vld [vmem:[%s169 + $0xa28] sm:$0xff]
      %v503 = vld [vmem:[%s169 + $0xa30] sm:$0xff]
      %v504 = vld [vmem:[%s169 + $0xa38] sm:$0xff]
      %v505 = vld [vmem:[%s169 + $0xa40] sm:$0xff]
      %v506 = vld [vmem:[%s169 + $0xa48] sm:$0xff]
      %v507 = vld [vmem:[%s169 + $0xa50] sm:$0xff]
      %v508 = vld [vmem:[%s169 + $0xa58] sm:$0xff]
      %v509 = vld [vmem:[%s169 + $0xa60] sm:$0xff]
      %v510 = vld [vmem:[%s169 + $0xa68] sm:$0xff]
      %v511 = vld [vmem:[%s169 + $0xa70] sm:$0xff]
      %v512 = vld [vmem:[%s169 + $0xa78] sm:$0xff]
      %v513 = vld [vmem:[%s169 + $0xa80] sm:$0xff]
      %v514 = vld [vmem:[%s169 + $0xa88] sm:$0xff]
      %v515 = vld [vmem:[%s169 + $0xa90] sm:$0xff]
      %v516 = vld [vmem:[%s169 + $0xa98] sm:$0xff]
      %v517 = vld [vmem:[%s169 + $0xaa0] sm:$0xff]
      %v518 = vld [vmem:[%s169 + $0xaa8] sm:$0xff]
      %v519 = vld [vmem:[%s169 + $0xab0] sm:$0xff]
      %v520 = vld [vmem:[%s169 + $0xab8] sm:$0xff]
      %v521 = vld [vmem:[%s169 + $0xac0] sm:$0xff]
      %v522 = vld [vmem:[%s169 + $0xac8] sm:$0xff]
      %v523 = vld [vmem:[%s169 + $0xad0] sm:$0xff]
      %v524 = vld [vmem:[%s169 + $0xad8] sm:$0xff]
      %v525 = vld [vmem:[%s169 + $0xae0] sm:$0xff]
      %v526 = vld [vmem:[%s169 + $0xae8] sm:$0xff]
      %v527 = vld [vmem:[%s169 + $0xaf0] sm:$0xff]
      %v528 = vld [vmem:[%s169 + $0xaf8] sm:$0xff]
      %v529 = vld [vmem:[%s169 + $0xb00] sm:$0xff]
      %v530 = vld [vmem:[%s169 + $0xb08] sm:$0xff]
      %v531 = vld [vmem:[%s169 + $0xb10] sm:$0xff]
      %v532 = vld [vmem:[%s169 + $0xb18] sm:$0xff]
      %v533 = vld [vmem:[%s169 + $0xb20] sm:$0xff]
      %v534 = vld [vmem:[%s169 + $0xb28] sm:$0xff]
      %v535 = vld [vmem:[%s169 + $0xb30] sm:$0xff]
      %v536 = vld [vmem:[%s169 + $0xb38] sm:$0xff]
      %v537 = vld [vmem:[%s169 + $0xb40] sm:$0xff]
      %v538 = vld [vmem:[%s169 + $0xb48] sm:$0xff]
      %v539 = vld [vmem:[%s169 + $0xb50] sm:$0xff]
      %v540 = vld [vmem:[%s169 + $0xb58] sm:$0xff]
      %v541 = vld [vmem:[%s169 + $0xb60] sm:$0xff]
      %v542 = vld [vmem:[%s169 + $0xb68] sm:$0xff]
      %v543 = vld [vmem:[%s169 + $0xb70] sm:$0xff]
      %v544 = vld [vmem:[%s169 + $0xb78] sm:$0xff]
      %v545 = vld [vmem:[%s169 + $0xb80] sm:$0xff]
      %v546 = vld [vmem:[%s169 + $0xb88] sm:$0xff]
      %v547 = vld [vmem:[%s169 + $0xb90] sm:$0xff]
      %v548 = vld [vmem:[%s169 + $0xb98] sm:$0xff]
      %v549 = vld [vmem:[%s169 + $0xba0] sm:$0xff]
      %v550 = vld [vmem:[%s169 + $0xba8] sm:$0xff]
      %v551 = vld [vmem:[%s169 + $0xbb0] sm:$0xff]
      %v552 = vld [vmem:[%s169 + $0xbb8] sm:$0xff]
      %v553 = vld [vmem:[%s169 + $0xbc0] sm:$0xff]
      %v554 = vld [vmem:[%s169 + $0xbc8] sm:$0xff]
      %v555 = vld [vmem:[%s169 + $0xbd0] sm:$0xff]
      %v556 = vld [vmem:[%s169 + $0xbd8] sm:$0xff]
      %v557 = vld [vmem:[%s169 + $0xbe0] sm:$0xff]
      %v558 = vld [vmem:[%s169 + $0xbe8] sm:$0xff]
      %v559 = vld [vmem:[%s169 + $0xbf0] sm:$0xff]
      %v560 = vld [vmem:[%s169 + $0xbf8] sm:$0xff]
      %v561 = vld [vmem:[%s169 + $0xc00] sm:$0xff]
      %v562 = vld [vmem:[%s169 + $0xc08] sm:$0xff]
      %v563 = vld [vmem:[%s169 + $0xc10] sm:$0xff]
      %v564 = vld [vmem:[%s169 + $0xc18] sm:$0xff]
      %v565 = vld [vmem:[%s169 + $0xc20] sm:$0xff]
      %v566 = vld [vmem:[%s169 + $0xc28] sm:$0xff]
      %v567 = vld [vmem:[%s169 + $0xc30] sm:$0xff]
      %v568 = vld [vmem:[%s169 + $0xc38] sm:$0xff]
      %v569 = vld [vmem:[%s169 + $0xc40] sm:$0xff]
      %v570 = vld [vmem:[%s169 + $0xc48] sm:$0xff]
      %v571 = vld [vmem:[%s169 + $0xc50] sm:$0xff]
      %v572 = vld [vmem:[%s169 + $0xc58] sm:$0xff]
      %v573 = vld [vmem:[%s169 + $0xc60] sm:$0xff]
      %v574 = vld [vmem:[%s169 + $0xc68] sm:$0xff]
      %v575 = vld [vmem:[%s169 + $0xc70] sm:$0xff]
      %v576 = vld [vmem:[%s169 + $0xc78] sm:$0xff]
      %v577 = vld [vmem:[%s169 + $0xc80] sm:$0xff]
      %v578 = vld [vmem:[%s169 + $0xc88] sm:$0xff]
      %v579 = vld [vmem:[%s169 + $0xc90] sm:$0xff]
      %v580 = vld [vmem:[%s169 + $0xc98] sm:$0xff]
      %v581 = vld [vmem:[%s169 + $0xca0] sm:$0xff]
      %v582 = vld [vmem:[%s169 + $0xca8] sm:$0xff]
      %v583 = vld [vmem:[%s169 + $0xcb0] sm:$0xff]
      %v584 = vld [vmem:[%s169 + $0xcb8] sm:$0xff]
      %v585 = vld [vmem:[%s169 + $0xcc0] sm:$0xff]
      %v586 = vld [vmem:[%s169 + $0xcc8] sm:$0xff]
      %v587 = vld [vmem:[%s169 + $0xcd0] sm:$0xff]
      %v588 = vld [vmem:[%s169 + $0xcd8] sm:$0xff]
      %v589 = vld [vmem:[%s169 + $0xce0] sm:$0xff]
      %v590 = vld [vmem:[%s169 + $0xce8] sm:$0xff]
      %v591 = vld [vmem:[%s169 + $0xcf0] sm:$0xff]
      %v592 = vld [vmem:[%s169 + $0xcf8] sm:$0xff]
      %v593 = vld [vmem:[%s169 + $0xd00] sm:$0xff]
      %v594 = vld [vmem:[%s169 + $0xd08] sm:$0xff]
      %v595 = vld [vmem:[%s169 + $0xd10] sm:$0xff]
      %v596 = vld [vmem:[%s169 + $0xd18] sm:$0xff]
      %v597 = vld [vmem:[%s169 + $0xd20] sm:$0xff]
      %v598 = vld [vmem:[%s169 + $0xd28] sm:$0xff]
      %v599 = vld [vmem:[%s169 + $0xd30] sm:$0xff]
      %v600 = vld [vmem:[%s169 + $0xd38] sm:$0xff]
      %v601 = vld [vmem:[%s169 + $0xd40] sm:$0xff]
      %v602 = vld [vmem:[%s169 + $0xd48] sm:$0xff]
      %v603 = vld [vmem:[%s169 + $0xd50] sm:$0xff]
      %v604 = vld [vmem:[%s169 + $0xd58] sm:$0xff]
      %v605 = vld [vmem:[%s169 + $0xd60] sm:$0xff]
      %v606 = vld [vmem:[%s169 + $0xd68] sm:$0xff]
      %v607 = vld [vmem:[%s169 + $0xd70] sm:$0xff]
      %v608 = vld [vmem:[%s169 + $0xd78] sm:$0xff]
      %v609 = vld [vmem:[%s169 + $0xd80] sm:$0xff]
      %v610 = vld [vmem:[%s169 + $0xd88] sm:$0xff]
      %v611 = vld [vmem:[%s169 + $0xd90] sm:$0xff]
      %v612 = vld [vmem:[%s169 + $0xd98] sm:$0xff]
      %v613 = vld [vmem:[%s169 + $0xda0] sm:$0xff]
      %v614 = vld [vmem:[%s169 + $0xda8] sm:$0xff]
      %v615 = vld [vmem:[%s169 + $0xdb0] sm:$0xff]
      %v616 = vld [vmem:[%s169 + $0xdb8] sm:$0xff]
      %v617 = vld [vmem:[%s169 + $0xdc0] sm:$0xff]
      %v618 = vld [vmem:[%s169 + $0xdc8] sm:$0xff]
      %v619 = vld [vmem:[%s169 + $0xdd0] sm:$0xff]
      %v620 = vld [vmem:[%s169 + $0xdd8] sm:$0xff]
      %v621 = vld [vmem:[%s169 + $0xde0] sm:$0xff]
      %v622 = vld [vmem:[%s169 + $0xde8] sm:$0xff]
      %v623 = vld [vmem:[%s169 + $0xdf0] sm:$0xff]
      %v624 = vld [vmem:[%s169 + $0xdf8] sm:$0xff]
      %v625 = vld [vmem:[%s169 + $0xe00] sm:$0xff]
      %v626 = vld [vmem:[%s169 + $0xe08] sm:$0xff]
      %v627 = vld [vmem:[%s169 + $0xe10] sm:$0xff]
      %v628 = vld [vmem:[%s169 + $0xe18] sm:$0xff]
      %v629 = vld [vmem:[%s169 + $0xe20] sm:$0xff]
      %v630 = vld [vmem:[%s169 + $0xe28] sm:$0xff]
      %v631 = vld [vmem:[%s169 + $0xe30] sm:$0xff]
      %v632 = vld [vmem:[%s169 + $0xe38] sm:$0xff]
      %v633 = vld [vmem:[%s169 + $0xe40] sm:$0xff]
      %v634 = vld [vmem:[%s169 + $0xe48] sm:$0xff]
      %v635 = vld [vmem:[%s169 + $0xe50] sm:$0xff]
      %v636 = vld [vmem:[%s169 + $0xe58] sm:$0xff]
      %v637 = vld [vmem:[%s169 + $0xe60] sm:$0xff]
      %v638 = vld [vmem:[%s169 + $0xe68] sm:$0xff]
      %v639 = vld [vmem:[%s169 + $0xe70] sm:$0xff]
      %v640 = vld [vmem:[%s169 + $0xe78] sm:$0xff]
      %v641 = vld [vmem:[%s169 + $0xe80] sm:$0xff]
      %v642 = vld [vmem:[%s169 + $0xe88] sm:$0xff]
      %v643 = vld [vmem:[%s169 + $0xe90] sm:$0xff]
      %v644 = vld [vmem:[%s169 + $0xe98] sm:$0xff]
      %v645 = vld [vmem:[%s169 + $0xea0] sm:$0xff]
      %v646 = vld [vmem:[%s169 + $0xea8] sm:$0xff]
      %v647 = vld [vmem:[%s169 + $0xeb0] sm:$0xff]
      %v648 = vld [vmem:[%s169 + $0xeb8] sm:$0xff]
      %v649 = vld [vmem:[%s169 + $0xec0] sm:$0xff]
      %v650 = vld [vmem:[%s169 + $0xec8] sm:$0xff]
      %v651 = vld [vmem:[%s169 + $0xed0] sm:$0xff]
      %v652 = vld [vmem:[%s169 + $0xed8] sm:$0xff]
      %v653 = vld [vmem:[%s169 + $0xee0] sm:$0xff]
      %v654 = vld [vmem:[%s169 + $0xee8] sm:$0xff]
      %v655 = vld [vmem:[%s169 + $0xef0] sm:$0xff]
      %v656 = vld [vmem:[%s169 + $0xef8] sm:$0xff]
      %v657 = vld [vmem:[%s169 + $0xf00] sm:$0xff]
      %v658 = vld [vmem:[%s169 + $0xf08] sm:$0xff]
      %v659 = vld [vmem:[%s169 + $0xf10] sm:$0xff]
      %v660 = vld [vmem:[%s169 + $0xf18] sm:$0xff]
      %v661 = vld [vmem:[%s169 + $0xf20] sm:$0xff]
      %v662 = vld [vmem:[%s169 + $0xf28] sm:$0xff]
      %v663 = vld [vmem:[%s169 + $0xf30] sm:$0xff]
      %v664 = vld [vmem:[%s169 + $0xf38] sm:$0xff]
      %v665 = vld [vmem:[%s169 + $0xf40] sm:$0xff]
      %v666 = vld [vmem:[%s169 + $0xf48] sm:$0xff]
      %v667 = vld [vmem:[%s169 + $0xf50] sm:$0xff]
      %v668 = vld [vmem:[%s169 + $0xf58] sm:$0xff]
      %v669 = vld [vmem:[%s169 + $0xf60] sm:$0xff]
      %v670 = vld [vmem:[%s169 + $0xf68] sm:$0xff]
      %v671 = vld [vmem:[%s169 + $0xf70] sm:$0xff]
      %v672 = vld [vmem:[%s169 + $0xf78] sm:$0xff]
      %v673 = vld [vmem:[%s169 + $0xf80] sm:$0xff]
      %v674 = vld [vmem:[%s169 + $0xf88] sm:$0xff]
      %v675 = vld [vmem:[%s169 + $0xf90] sm:$0xff]
      %v676 = vld [vmem:[%s169 + $0xf98] sm:$0xff]
      %v677 = vld [vmem:[%s169 + $0xfa0] sm:$0xff]
      %v678 = vld [vmem:[%s169 + $0xfa8] sm:$0xff]
      %v679 = vld [vmem:[%s169 + $0xfb0] sm:$0xff]
      %v680 = vld [vmem:[%s169 + $0xfb8] sm:$0xff]
      %v681 = vld [vmem:[%s169 + $0xfc0] sm:$0xff]
      %v682 = vld [vmem:[%s169 + $0xfc8] sm:$0xff]
      %v683 = vld [vmem:[%s169 + $0xfd0] sm:$0xff]
      %v684 = vld [vmem:[%s169 + $0xfd8] sm:$0xff]
      %v685 = vld [vmem:[%s169 + $0xfe0] sm:$0xff]
      %v686 = vld [vmem:[%s169 + $0xfe8] sm:$0xff]
      %v687 = vld [vmem:[%s169 + $0xff0] sm:$0xff]
      %v688 = vld [vmem:[%s169 + $0xff8] sm:$0xff]
      %v689 = vld [vmem:[%s169 + $0x1000] sm:$0xff]
      %v690 = vld [vmem:[%s169 + $0x1008] sm:$0xff]
      %v691 = vld [vmem:[%s169 + $0x1010] sm:$0xff]
      %v692 = vld [vmem:[%s169 + $0x1018] sm:$0xff]
      %v693 = vld [vmem:[%s169 + $0x1020] sm:$0xff]
      %v694 = vld [vmem:[%s169 + $0x1028] sm:$0xff]
      %v695 = vld [vmem:[%s169 + $0x1030] sm:$0xff]
      %v696 = vld [vmem:[%s169 + $0x1038] sm:$0xff]
      %v697 = vld [vmem:[%s169 + $0x1040] sm:$0xff]
      %v698 = vld [vmem:[%s169 + $0x1048] sm:$0xff]
      %v699 = vld [vmem:[%s169 + $0x1050] sm:$0xff]
      %v700 = vld [vmem:[%s169 + $0x1058] sm:$0xff]
      %v701 = vld [vmem:[%s169 + $0x1060] sm:$0xff]
      %v702 = vld [vmem:[%s169 + $0x1068] sm:$0xff]
      %v703 = vld [vmem:[%s169 + $0x1070] sm:$0xff]
      %v704 = vld [vmem:[%s169 + $0x1078] sm:$0xff]
      %v705 = vld [vmem:[%s169 + $0x1080] sm:$0xff]
      %v706 = vld [vmem:[%s169 + $0x1088] sm:$0xff]
      %v707 = vld [vmem:[%s169 + $0x1090] sm:$0xff]
      %v708 = vld [vmem:[%s169 + $0x1098] sm:$0xff]
      %v709 = vld [vmem:[%s169 + $0x10a0] sm:$0xff]
      %v710 = vld [vmem:[%s169 + $0x10a8] sm:$0xff]
      %v711 = vld [vmem:[%s169 + $0x10b0] sm:$0xff]
      %v712 = vld [vmem:[%s169 + $0x10b8] sm:$0xff]
      %v713 = vld [vmem:[%s169 + $0x10c0] sm:$0xff]
      %v714 = vld [vmem:[%s169 + $0x10c8] sm:$0xff]
      %v715 = vld [vmem:[%s169 + $0x10d0] sm:$0xff]
      %v716 = vld [vmem:[%s169 + $0x10d8] sm:$0xff]
      %v717 = vld [vmem:[%s169 + $0x10e0] sm:$0xff]
      %v718 = vld [vmem:[%s169 + $0x10e8] sm:$0xff]
      %v719 = vld [vmem:[%s169 + $0x10f0] sm:$0xff]
      %v720 = vld [vmem:[%s169 + $0x10f8] sm:$0xff]
      %v721 = vld [vmem:[%s169 + $0x1100] sm:$0xff]
      %v722 = vld [vmem:[%s169 + $0x1108] sm:$0xff]
      %v723 = vld [vmem:[%s169 + $0x1110] sm:$0xff]
      %v724 = vld [vmem:[%s169 + $0x1118] sm:$0xff]
      %v725 = vld [vmem:[%s169 + $0x1120] sm:$0xff]
      %v726 = vld [vmem:[%s169 + $0x1128] sm:$0xff]
      %v727 = vld [vmem:[%s169 + $0x1130] sm:$0xff]
      %v728 = vld [vmem:[%s169 + $0x1138] sm:$0xff]
      %v729 = vld [vmem:[%s169 + $0x1140] sm:$0xff]
      %v730 = vld [vmem:[%s169 + $0x1148] sm:$0xff]
      %v731 = vld [vmem:[%s169 + $0x1150] sm:$0xff]
      %v732 = vld [vmem:[%s169 + $0x1158] sm:$0xff]
      %v733 = vld [vmem:[%s169 + $0x1160] sm:$0xff]
      %v734 = vld [vmem:[%s169 + $0x1168] sm:$0xff]
      %v735 = vld [vmem:[%s169 + $0x1170] sm:$0xff]
      %v736 = vld [vmem:[%s169 + $0x1178] sm:$0xff]
      %v737 = vld [vmem:[%s169 + $0x1180] sm:$0xff]
      %v738 = vld [vmem:[%s169 + $0x1188] sm:$0xff]
      %v739 = vld [vmem:[%s169 + $0x1190] sm:$0xff]
      %v740 = vld [vmem:[%s169 + $0x1198] sm:$0xff]
      %v741 = vld [vmem:[%s169 + $0x11a0] sm:$0xff]
      %v742 = vld [vmem:[%s169 + $0x11a8] sm:$0xff]
      %v743 = vld [vmem:[%s169 + $0x11b0] sm:$0xff]
      %v744 = vld [vmem:[%s169 + $0x11b8] sm:$0xff]
      %v745 = vld [vmem:[%s169 + $0x11c0] sm:$0xff]
      %v746 = vld [vmem:[%s169 + $0x11c8] sm:$0xff]
      %v747 = vld [vmem:[%s169 + $0x11d0] sm:$0xff]
      %v748 = vld [vmem:[%s169 + $0x11d8] sm:$0xff]
      %v749 = vld [vmem:[%s169 + $0x11e0] sm:$0xff]
      %v750 = vld [vmem:[%s169 + $0x11e8] sm:$0xff]
      %v751 = vld [vmem:[%s169 + $0x11f0] sm:$0xff]
      %v752 = vld [vmem:[%s169 + $0x11f8] sm:$0xff]
      %v753 = vld [vmem:[%s169 + $0x1200] sm:$0xff]
      %v754 = vld [vmem:[%s169 + $0x1208] sm:$0xff]
      %v755 = vld [vmem:[%s169 + $0x1210] sm:$0xff]
      %v756 = vld [vmem:[%s169 + $0x1218] sm:$0xff]
      %v757 = vld [vmem:[%s169 + $0x1220] sm:$0xff]
      %v758 = vld [vmem:[%s169 + $0x1228] sm:$0xff]
      %v759 = vld [vmem:[%s169 + $0x1230] sm:$0xff]
      %v760 = vld [vmem:[%s169 + $0x1238] sm:$0xff]
      %v761 = vld [vmem:[%s169 + $0x1240] sm:$0xff]
      %v762 = vld [vmem:[%s169 + $0x1248] sm:$0xff]
      %v763 = vld [vmem:[%s169 + $0x1250] sm:$0xff]
      %v764 = vld [vmem:[%s169 + $0x1258] sm:$0xff]
      %v765 = vld [vmem:[%s169 + $0x1260] sm:$0xff]
      %v766 = vld [vmem:[%s169 + $0x1268] sm:$0xff]
      %v767 = vld [vmem:[%s169 + $0x1270] sm:$0xff]
      %v768 = vld [vmem:[%s169 + $0x1278] sm:$0xff]
      %v769 = vld [vmem:[%s169 + $0x1280] sm:$0xff]
      %v770 = vld [vmem:[%s169 + $0x1288] sm:$0xff]
      %v771 = vld [vmem:[%s169 + $0x1290] sm:$0xff]
      %v772 = vld [vmem:[%s169 + $0x1298] sm:$0xff]
      %v773 = vld [vmem:[%s169 + $0x12a0] sm:$0xff]
      %v774 = vld [vmem:[%s169 + $0x12a8] sm:$0xff]
      %v775 = vld [vmem:[%s169 + $0x12b0] sm:$0xff]
      %v776 = vld [vmem:[%s169 + $0x12b8] sm:$0xff]
      %v777 = vld [vmem:[%s169 + $0x12c0] sm:$0xff]
      %v778 = vld [vmem:[%s169 + $0x12c8] sm:$0xff]
      %v779 = vld [vmem:[%s169 + $0x12d0] sm:$0xff]
      %v780 = vld [vmem:[%s169 + $0x12d8] sm:$0xff]
      %v781 = vld [vmem:[%s169 + $0x12e0] sm:$0xff]
      %v782 = vld [vmem:[%s169 + $0x12e8] sm:$0xff]
      %v783 = vld [vmem:[%s169 + $0x12f0] sm:$0xff]
      %v784 = vld [vmem:[%s169 + $0x12f8] sm:$0xff]
      %v785 = vld [vmem:[%s169 + $0x1300] sm:$0xff]
      %v786 = vld [vmem:[%s169 + $0x1308] sm:$0xff]
      %v787 = vld [vmem:[%s169 + $0x1310] sm:$0xff]
      %v788 = vld [vmem:[%s169 + $0x1318] sm:$0xff]
      %v789 = vld [vmem:[%s169 + $0x1320] sm:$0xff]
      %v790 = vld [vmem:[%s169 + $0x1328] sm:$0xff]
      %v791 = vld [vmem:[%s169 + $0x1330] sm:$0xff]
      %v792 = vld [vmem:[%s169 + $0x1338] sm:$0xff]
      %v793 = vld [vmem:[%s169 + $0x1340] sm:$0xff]
      %v794 = vld [vmem:[%s169 + $0x1348] sm:$0xff]
      %v795 = vld [vmem:[%s169 + $0x1350] sm:$0xff]
      %v796 = vld [vmem:[%s169 + $0x1358] sm:$0xff]
      %v797 = vld [vmem:[%s169 + $0x1360] sm:$0xff]
      %v798 = vld [vmem:[%s169 + $0x1368] sm:$0xff]
      %v799 = vld [vmem:[%s169 + $0x1370] sm:$0xff]
      %v800 = vld [vmem:[%s169 + $0x1378] sm:$0xff]
      %v801 = vld [vmem:[%s169 + $0x1380] sm:$0xff]
      %v802 = vld [vmem:[%s169 + $0x1388] sm:$0xff]
      %v803 = vld [vmem:[%s169 + $0x1390] sm:$0xff]
      %v804 = vld [vmem:[%s169 + $0x1398] sm:$0xff]
      %v805 = vld [vmem:[%s169 + $0x13a0] sm:$0xff]
      %v806 = vld [vmem:[%s169 + $0x13a8] sm:$0xff]
      %v807 = vld [vmem:[%s169 + $0x13b0] sm:$0xff]
      %v808 = vld [vmem:[%s169 + $0x13b8] sm:$0xff]
      %v809 = vld [vmem:[%s169 + $0x13c0] sm:$0xff]
      %v810 = vld [vmem:[%s169 + $0x13c8] sm:$0xff]
      %v811 = vld [vmem:[%s169 + $0x13d0] sm:$0xff]
      %v812 = vld [vmem:[%s169 + $0x13d8] sm:$0xff]
      %v813 = vld [vmem:[%s169 + $0x13e0] sm:$0xff]
      %v814 = vld [vmem:[%s169 + $0x13e8] sm:$0xff]
      %v815 = vld [vmem:[%s169 + $0x13f0] sm:$0xff]
      %v816 = vld [vmem:[%s169 + $0x13f8] sm:$0xff]
      %v817 = vld [vmem:[%s169 + $0x1400] sm:$0xff]
      %v818 = vld [vmem:[%s169 + $0x1408] sm:$0xff]
      %v819 = vld [vmem:[%s169 + $0x1410] sm:$0xff]
      %v820 = vld [vmem:[%s169 + $0x1418] sm:$0xff]
      %v821 = vld [vmem:[%s169 + $0x1420] sm:$0xff]
      %v822 = vld [vmem:[%s169 + $0x1428] sm:$0xff]
      %v823 = vld [vmem:[%s169 + $0x1430] sm:$0xff]
      %v824 = vld [vmem:[%s169 + $0x1438] sm:$0xff]
      %v825 = vld [vmem:[%s169 + $0x1440] sm:$0xff]
      %v826 = vld [vmem:[%s169 + $0x1448] sm:$0xff]
      %v827 = vld [vmem:[%s169 + $0x1450] sm:$0xff]
      %v828 = vld [vmem:[%s169 + $0x1458] sm:$0xff]
      %v829 = vld [vmem:[%s169 + $0x1460] sm:$0xff]
      %v830 = vld [vmem:[%s169 + $0x1468] sm:$0xff]
      %v831 = vld [vmem:[%s169 + $0x1470] sm:$0xff]
      %v832 = vld [vmem:[%s169 + $0x1478] sm:$0xff]
      %v833 = vld [vmem:[%s169 + $0x1480] sm:$0xff]
      %v834 = vld [vmem:[%s169 + $0x1488] sm:$0xff]
      %v835 = vld [vmem:[%s169 + $0x1490] sm:$0xff]
      %v836 = vld [vmem:[%s169 + $0x1498] sm:$0xff]
      %v837 = vld [vmem:[%s169 + $0x14a0] sm:$0xff]
      %v838 = vld [vmem:[%s169 + $0x14a8] sm:$0xff]
      %v839 = vld [vmem:[%s169 + $0x14b0] sm:$0xff]
      %v840 = vld [vmem:[%s169 + $0x14b8] sm:$0xff]
      %v841 = vld [vmem:[%s169 + $0x14c0] sm:$0xff]
      %v842 = vld [vmem:[%s169 + $0x14c8] sm:$0xff]
      %v843 = vld [vmem:[%s169 + $0x14d0] sm:$0xff]
      %v844 = vld [vmem:[%s169 + $0x14d8] sm:$0xff]
      %v845 = vld [vmem:[%s169 + $0x14e0] sm:$0xff]
      %v846 = vld [vmem:[%s169 + $0x14e8] sm:$0xff]
      %v847 = vld [vmem:[%s169 + $0x14f0] sm:$0xff]
      %v848 = vld [vmem:[%s169 + $0x14f8] sm:$0xff]
      %v849 = vld [vmem:[%s169 + $0x1500] sm:$0xff]
      %v850 = vld [vmem:[%s169 + $0x1508] sm:$0xff]
      %v851 = vld [vmem:[%s169 + $0x1510] sm:$0xff]
      %v852 = vld [vmem:[%s169 + $0x1518] sm:$0xff]
      %v853 = vld [vmem:[%s169 + $0x1520] sm:$0xff]
      %v854 = vld [vmem:[%s169 + $0x1528] sm:$0xff]
      %v855 = vld [vmem:[%s169 + $0x1530] sm:$0xff]
      %v856 = vld [vmem:[%s169 + $0x1538] sm:$0xff]
      %v857 = vld [vmem:[%s169 + $0x1540] sm:$0xff]
      %v858 = vld [vmem:[%s169 + $0x1548] sm:$0xff]
      %v859 = vld [vmem:[%s169 + $0x1550] sm:$0xff]
      %v860 = vld [vmem:[%s169 + $0x1558] sm:$0xff]
      %v861 = vld [vmem:[%s169 + $0x1560] sm:$0xff]
      %v862 = vld [vmem:[%s169 + $0x1568] sm:$0xff]
      %v863 = vld [vmem:[%s169 + $0x1570] sm:$0xff]
      %v864 = vld [vmem:[%s169 + $0x1578] sm:$0xff]
      %v865 = vld [vmem:[%s169 + $0x1580] sm:$0xff]
      %v866 = vld [vmem:[%s169 + $0x1588] sm:$0xff]
      %v867 = vld [vmem:[%s169 + $0x1590] sm:$0xff]
      %v868 = vld [vmem:[%s169 + $0x1598] sm:$0xff]
      %v869 = vld [vmem:[%s169 + $0x15a0] sm:$0xff]
      %v870 = vld [vmem:[%s169 + $0x15a8] sm:$0xff]
      %v871 = vld [vmem:[%s169 + $0x15b0] sm:$0xff]
      %v872 = vld [vmem:[%s169 + $0x15b8] sm:$0xff]
      %v873 = vld [vmem:[%s169 + $0x15c0] sm:$0xff]
      %v874 = vld [vmem:[%s169 + $0x15c8] sm:$0xff]
      %v875 = vld [vmem:[%s169 + $0x15d0] sm:$0xff]
      %v876 = vld [vmem:[%s169 + $0x15d8] sm:$0xff]
      %v877 = vld [vmem:[%s169 + $0x15e0] sm:$0xff]
      %v878 = vld [vmem:[%s169 + $0x15e8] sm:$0xff]
      %v879 = vld [vmem:[%s169 + $0x15f0] sm:$0xff]
      %v880 = vld [vmem:[%s169 + $0x15f8] sm:$0xff]
      %v881 = vld [vmem:[%s169 + $0x1600] sm:$0xff]
      %v882 = vld [vmem:[%s169 + $0x1608] sm:$0xff]
      %v883 = vld [vmem:[%s169 + $0x1610] sm:$0xff]
      %v884 = vld [vmem:[%s169 + $0x1618] sm:$0xff]
      %v885 = vld [vmem:[%s169 + $0x1620] sm:$0xff]
      %v886 = vld [vmem:[%s169 + $0x1628] sm:$0xff]
      %v887 = vld [vmem:[%s169 + $0x1630] sm:$0xff]
      %v888 = vld [vmem:[%s169 + $0x1638] sm:$0xff]
      %v889 = vld [vmem:[%s169 + $0x1640] sm:$0xff]
      %v890 = vld [vmem:[%s169 + $0x1648] sm:$0xff]
      %v891 = vld [vmem:[%s169 + $0x1650] sm:$0xff]
      %v892 = vld [vmem:[%s169 + $0x1658] sm:$0xff]
      %v893 = vld [vmem:[%s169 + $0x1660] sm:$0xff]
      %v894 = vld [vmem:[%s169 + $0x1668] sm:$0xff]
      %v895 = vld [vmem:[%s169 + $0x1670] sm:$0xff]
      %v896 = vld [vmem:[%s169 + $0x1678] sm:$0xff]
      %v897 = vld [vmem:[%s169 + $0x1680] sm:$0xff]
      %v898 = vld [vmem:[%s169 + $0x1688] sm:$0xff]
      %v899 = vld [vmem:[%s169 + $0x1690] sm:$0xff]
      %v900 = vld [vmem:[%s169 + $0x1698] sm:$0xff]
      %v901 = vld [vmem:[%s169 + $0x16a0] sm:$0xff]
      %v902 = vld [vmem:[%s169 + $0x16a8] sm:$0xff]
      %v903 = vld [vmem:[%s169 + $0x16b0] sm:$0xff]
      %v904 = vld [vmem:[%s169 + $0x16b8] sm:$0xff]
      %v905 = vld [vmem:[%s169 + $0x16c0] sm:$0xff]
      %v906 = vld [vmem:[%s169 + $0x16c8] sm:$0xff]
      %v907 = vld [vmem:[%s169 + $0x16d0] sm:$0xff]
      %v908 = vld [vmem:[%s169 + $0x16d8] sm:$0xff]
      %v909 = vld [vmem:[%s169 + $0x16e0] sm:$0xff]
      %v910 = vld [vmem:[%s169 + $0x16e8] sm:$0xff]
      %v911 = vld [vmem:[%s169 + $0x16f0] sm:$0xff]
      %v912 = vld [vmem:[%s169 + $0x16f8] sm:$0xff]
      %v913 = vld [vmem:[%s169 + $0x1700] sm:$0xff]
      %v914 = vld [vmem:[%s169 + $0x1708] sm:$0xff]
      %v915 = vld [vmem:[%s169 + $0x1710] sm:$0xff]
      %v916 = vld [vmem:[%s169 + $0x1718] sm:$0xff]
      %v917 = vld [vmem:[%s169 + $0x1720] sm:$0xff]
      %v918 = vld [vmem:[%s169 + $0x1728] sm:$0xff]
      %v919 = vld [vmem:[%s169 + $0x1730] sm:$0xff]
      %v920 = vld [vmem:[%s169 + $0x1738] sm:$0xff]
      %v921 = vld [vmem:[%s169 + $0x1740] sm:$0xff]
      %v922 = vld [vmem:[%s169 + $0x1748] sm:$0xff]
      %v923 = vld [vmem:[%s169 + $0x1750] sm:$0xff]
      %v924 = vld [vmem:[%s169 + $0x1758] sm:$0xff]
      %v925 = vld [vmem:[%s169 + $0x1760] sm:$0xff]
      %v926 = vld [vmem:[%s169 + $0x1768] sm:$0xff]
      %v927 = vld [vmem:[%s169 + $0x1770] sm:$0xff]
      %v928 = vld [vmem:[%s169 + $0x1778] sm:$0xff]
      %v929 = vld [vmem:[%s169 + $0x1780] sm:$0xff]
      %v930 = vld [vmem:[%s169 + $0x1788] sm:$0xff]
      %v931 = vld [vmem:[%s169 + $0x1790] sm:$0xff]
      %v932 = vld [vmem:[%s169 + $0x1798] sm:$0xff]
      %v933 = vld [vmem:[%s169 + $0x17a0] sm:$0xff]
      %v934 = vld [vmem:[%s169 + $0x17a8] sm:$0xff]
      %v935 = vld [vmem:[%s169 + $0x17b0] sm:$0xff]
      %v936 = vld [vmem:[%s169 + $0x17b8] sm:$0xff]
      %v937 = vld [vmem:[%s169 + $0x17c0] sm:$0xff]
      %v938 = vld [vmem:[%s169 + $0x17c8] sm:$0xff]
      %v939 = vld [vmem:[%s169 + $0x17d0] sm:$0xff]
      %v940 = vld [vmem:[%s169 + $0x17d8] sm:$0xff]
      %v941 = vld [vmem:[%s169 + $0x17e0] sm:$0xff]
      %v942 = vld [vmem:[%s169 + $0x17e8] sm:$0xff]
      %v943 = vld [vmem:[%s169 + $0x17f0] sm:$0xff]
      %v944 = vld [vmem:[%s169 + $0x17f8] sm:$0xff]
      %v945 = vld [vmem:[%s1] sm:$0xff]
      %v946 = vld [vmem:[%s1 + $0x8] sm:$0x3]
      %v947 = vld [vmem:[%s2] sm:$0x1]
      %v949 = vlaneseq
      %v950 = vshrl.u32 %v949, 7
      %v951 = vsub.s32 0, %v950
      %v952 = vrot.slane %v947, %v951
      %vm954 = vcmask 80896
      %v956 = vsel %vm954, %v177, 0
      %v959 = vsel %vm954, %v178, 0
      %v962 = vsel %vm954, %v179, 0
      %v965 = vsel %vm954, %v180, 0
      %v968 = vsel %vm954, %v181, 0
      %v971 = vsel %vm954, %v182, 0
      %v974 = vsel %vm954, %v183, 0
      %v977 = vsel %vm954, %v184, 0
      %v980 = vsel %vm954, %v185, 0
      %v983 = vsel %vm954, %v186, 0
      %v986 = vsel %vm954, %v187, 0
      %v989 = vsel %vm954, %v188, 0
      %v992 = vsel %vm954, %v189, 0
      %v995 = vsel %vm954, %v190, 0
      %v998 = vsel %vm954, %v191, 0
      %v1001 = vsel %vm954, %v192, 0
      %v1004 = vsel %vm954, %v193, 0
      %v1007 = vsel %vm954, %v194, 0
      %v1010 = vsel %vm954, %v195, 0
      %v1013 = vsel %vm954, %v196, 0
      %v1016 = vsel %vm954, %v197, 0
      %v1019 = vsel %vm954, %v198, 0
      %v1022 = vsel %vm954, %v199, 0
      %v1025 = vsel %vm954, %v200, 0
      %v1028 = vsel %vm954, %v201, 0
      %v1031 = vsel %vm954, %v202, 0
      %v1034 = vsel %vm954, %v203, 0
      %v1037 = vsel %vm954, %v204, 0
      %v1040 = vsel %vm954, %v205, 0
      %v1043 = vsel %vm954, %v206, 0
      %v1046 = vsel %vm954, %v207, 0
      %v1049 = vsel %vm954, %v208, 0
      %v1052 = vsel %vm954, %v209, 0
      %v1055 = vsel %vm954, %v210, 0
      %v1058 = vsel %vm954, %v211, 0
      %v1061 = vsel %vm954, %v212, 0
      %v1064 = vsel %vm954, %v213, 0
      %v1067 = vsel %vm954, %v214, 0
      %v1070 = vsel %vm954, %v215, 0
      %v1073 = vsel %vm954, %v216, 0
      %v1076 = vsel %vm954, %v217, 0
      %v1079 = vsel %vm954, %v218, 0
      %v1082 = vsel %vm954, %v219, 0
      %v1085 = vsel %vm954, %v220, 0
      %v1088 = vsel %vm954, %v221, 0
      %v1091 = vsel %vm954, %v222, 0
      %v1094 = vsel %vm954, %v223, 0
      %v1097 = vsel %vm954, %v224, 0
      %v1100 = vsel %vm954, %v225, 0
      %v1103 = vsel %vm954, %v226, 0
      %v1106 = vsel %vm954, %v227, 0
      %v1109 = vsel %vm954, %v228, 0
      %v1112 = vsel %vm954, %v229, 0
      %v1115 = vsel %vm954, %v230, 0
      %v1118 = vsel %vm954, %v231, 0
      %v1121 = vsel %vm954, %v232, 0
      %v1124 = vsel %vm954, %v233, 0
      %v1127 = vsel %vm954, %v234, 0
      %v1130 = vsel %vm954, %v235, 0
      %v1133 = vsel %vm954, %v236, 0
      %v1136 = vsel %vm954, %v237, 0
      %v1139 = vsel %vm954, %v238, 0
      %v1142 = vsel %vm954, %v239, 0
      %v1145 = vsel %vm954, %v240, 0
      %v1148 = vsel %vm954, %v241, 0
      %v1151 = vsel %vm954, %v242, 0
      %v1154 = vsel %vm954, %v243, 0
      %v1157 = vsel %vm954, %v244, 0
      %v1160 = vsel %vm954, %v245, 0
      %v1163 = vsel %vm954, %v246, 0
      %v1166 = vsel %vm954, %v247, 0
      %v1169 = vsel %vm954, %v248, 0
      %v1172 = vsel %vm954, %v249, 0
      %v1175 = vsel %vm954, %v250, 0
      %v1178 = vsel %vm954, %v251, 0
      %v1181 = vsel %vm954, %v252, 0
      %v1184 = vsel %vm954, %v253, 0
      %v1187 = vsel %vm954, %v254, 0
      %v1190 = vsel %vm954, %v255, 0
      %v1193 = vsel %vm954, %v256, 0
      %v1196 = vsel %vm954, %v257, 0
      %v1199 = vsel %vm954, %v258, 0
      %v1202 = vsel %vm954, %v259, 0
      %v1205 = vsel %vm954, %v260, 0
      %v1208 = vsel %vm954, %v261, 0
      %v1211 = vsel %vm954, %v262, 0
      %v1214 = vsel %vm954, %v263, 0
      %v1217 = vsel %vm954, %v264, 0
      %v1220 = vsel %vm954, %v265, 0
      %v1223 = vsel %vm954, %v266, 0
      %v1226 = vsel %vm954, %v267, 0
      %v1229 = vsel %vm954, %v268, 0
      %v1232 = vsel %vm954, %v269, 0
      %v1235 = vsel %vm954, %v270, 0
      %v1238 = vsel %vm954, %v271, 0
      %v1241 = vsel %vm954, %v272, 0
      %v1244 = vsel %vm954, %v273, 0
      %v1247 = vsel %vm954, %v274, 0
      %v1250 = vsel %vm954, %v275, 0
      %v1253 = vsel %vm954, %v276, 0
      %v1256 = vsel %vm954, %v277, 0
      %v1259 = vsel %vm954, %v278, 0
      %v1262 = vsel %vm954, %v279, 0
      %v1265 = vsel %vm954, %v280, 0
      %v1268 = vsel %vm954, %v281, 0
      %v1271 = vsel %vm954, %v282, 0
      %v1274 = vsel %vm954, %v283, 0
      %v1277 = vsel %vm954, %v284, 0
      %v1280 = vsel %vm954, %v285, 0
      %v1283 = vsel %vm954, %v286, 0
      %v1286 = vsel %vm954, %v287, 0
      %v1289 = vsel %vm954, %v288, 0
      %v1292 = vsel %vm954, %v289, 0
      %v1295 = vsel %vm954, %v290, 0
      %v1298 = vsel %vm954, %v291, 0
      %v1301 = vsel %vm954, %v292, 0
      %v1304 = vsel %vm954, %v293, 0
      %v1307 = vsel %vm954, %v294, 0
      %v1310 = vsel %vm954, %v295, 0
      %v1313 = vsel %vm954, %v296, 0
      %v1316 = vsel %vm954, %v297, 0
      %v1319 = vsel %vm954, %v298, 0
      %v1322 = vsel %vm954, %v299, 0
      %v1325 = vsel %vm954, %v300, 0
      %v1328 = vsel %vm954, %v301, 0
      %v1331 = vsel %vm954, %v302, 0
      %v1334 = vsel %vm954, %v303, 0
      %v1337 = vsel %vm954, %v304, 0
      %v1340 = vsel %vm954, %v305, 0
      %v1343 = vsel %vm954, %v306, 0
      %v1346 = vsel %vm954, %v307, 0
      %v1349 = vsel %vm954, %v308, 0
      %v1352 = vsel %vm954, %v309, 0
      %v1355 = vsel %vm954, %v310, 0
      %v1358 = vsel %vm954, %v311, 0
      %v1361 = vsel %vm954, %v312, 0
      %v1364 = vsel %vm954, %v313, 0
      %v1367 = vsel %vm954, %v314, 0
      %v1370 = vsel %vm954, %v315, 0
      %v1373 = vsel %vm954, %v316, 0
      %v1376 = vsel %vm954, %v317, 0
      %v1379 = vsel %vm954, %v318, 0
      %v1382 = vsel %vm954, %v319, 0
      %v1385 = vsel %vm954, %v320, 0
      %v1388 = vsel %vm954, %v321, 0
      %v1391 = vsel %vm954, %v322, 0
      %v1394 = vsel %vm954, %v323, 0
      %v1397 = vsel %vm954, %v324, 0
      %v1400 = vsel %vm954, %v325, 0
      %v1403 = vsel %vm954, %v326, 0
      %v1406 = vsel %vm954, %v327, 0
      %v1409 = vsel %vm954, %v328, 0
      %v1412 = vsel %vm954, %v329, 0
      %v1415 = vsel %vm954, %v330, 0
      %v1418 = vsel %vm954, %v331, 0
      %v1421 = vsel %vm954, %v332, 0
      %v1424 = vsel %vm954, %v333, 0
      %v1427 = vsel %vm954, %v334, 0
      %v1430 = vsel %vm954, %v335, 0
      %v1433 = vsel %vm954, %v336, 0
      %v1436 = vsel %vm954, %v337, 0
      %v1439 = vsel %vm954, %v338, 0
      %v1442 = vsel %vm954, %v339, 0
      %v1445 = vsel %vm954, %v340, 0
      %v1448 = vsel %vm954, %v341, 0
      %v1451 = vsel %vm954, %v342, 0
      %v1454 = vsel %vm954, %v343, 0
      %v1457 = vsel %vm954, %v344, 0
      %v1460 = vsel %vm954, %v345, 0
      %v1463 = vsel %vm954, %v346, 0
      %v1466 = vsel %vm954, %v347, 0
      %v1469 = vsel %vm954, %v348, 0
      %v1472 = vsel %vm954, %v349, 0
      %v1475 = vsel %vm954, %v350, 0
      %v1478 = vsel %vm954, %v351, 0
      %v1481 = vsel %vm954, %v352, 0
      %v1484 = vsel %vm954, %v353, 0
      %v1487 = vsel %vm954, %v354, 0
      %v1490 = vsel %vm954, %v355, 0
      %v1493 = vsel %vm954, %v356, 0
      %v1496 = vsel %vm954, %v357, 0
      %v1499 = vsel %vm954, %v358, 0
      %v1502 = vsel %vm954, %v359, 0
      %v1505 = vsel %vm954, %v360, 0
      %v1508 = vsel %vm954, %v361, 0
      %v1511 = vsel %vm954, %v362, 0
      %v1514 = vsel %vm954, %v363, 0
      %v1517 = vsel %vm954, %v364, 0
      %v1520 = vsel %vm954, %v365, 0
      %v1523 = vsel %vm954, %v366, 0
      %v1526 = vsel %vm954, %v367, 0
      %v1529 = vsel %vm954, %v368, 0
      %v1532 = vsel %vm954, %v369, 0
      %v1535 = vsel %vm954, %v370, 0
      %v1538 = vsel %vm954, %v371, 0
      %v1541 = vsel %vm954, %v372, 0
      %v1544 = vsel %vm954, %v373, 0
      %v1547 = vsel %vm954, %v374, 0
      %v1550 = vsel %vm954, %v375, 0
      %v1553 = vsel %vm954, %v376, 0
      %v1556 = vsel %vm954, %v377, 0
      %v1559 = vsel %vm954, %v378, 0
      %v1562 = vsel %vm954, %v379, 0
      %v1565 = vsel %vm954, %v380, 0
      %v1568 = vsel %vm954, %v381, 0
      %v1571 = vsel %vm954, %v382, 0
      %v1574 = vsel %vm954, %v383, 0
      %v1577 = vsel %vm954, %v384, 0
      %v1580 = vsel %vm954, %v385, 0
      %v1583 = vsel %vm954, %v386, 0
      %v1586 = vsel %vm954, %v387, 0
      %v1589 = vsel %vm954, %v388, 0
      %v1592 = vsel %vm954, %v389, 0
      %v1595 = vsel %vm954, %v390, 0
      %v1598 = vsel %vm954, %v391, 0
      %v1601 = vsel %vm954, %v392, 0
      %v1604 = vsel %vm954, %v393, 0
      %v1607 = vsel %vm954, %v394, 0
      %v1610 = vsel %vm954, %v395, 0
      %v1613 = vsel %vm954, %v396, 0
      %v1616 = vsel %vm954, %v397, 0
      %v1619 = vsel %vm954, %v398, 0
      %v1622 = vsel %vm954, %v399, 0
      %v1625 = vsel %vm954, %v400, 0
      %v1628 = vsel %vm954, %v401, 0
      %v1631 = vsel %vm954, %v402, 0
      %v1634 = vsel %vm954, %v403, 0
      %v1637 = vsel %vm954, %v404, 0
      %v1640 = vsel %vm954, %v405, 0
      %v1643 = vsel %vm954, %v406, 0
      %v1646 = vsel %vm954, %v407, 0
      %v1649 = vsel %vm954, %v408, 0
      %v1652 = vsel %vm954, %v409, 0
      %v1655 = vsel %vm954, %v410, 0
      %v1658 = vsel %vm954, %v411, 0
      %v1661 = vsel %vm954, %v412, 0
      %v1664 = vsel %vm954, %v413, 0
      %v1667 = vsel %vm954, %v414, 0
      %v1670 = vsel %vm954, %v415, 0
      %v1673 = vsel %vm954, %v416, 0
      %v1676 = vsel %vm954, %v417, 0
      %v1679 = vsel %vm954, %v418, 0
      %v1682 = vsel %vm954, %v419, 0
      %v1685 = vsel %vm954, %v420, 0
      %v1688 = vsel %vm954, %v421, 0
      %v1691 = vsel %vm954, %v422, 0
      %v1694 = vsel %vm954, %v423, 0
      %v1697 = vsel %vm954, %v424, 0
      %v1700 = vsel %vm954, %v425, 0
      %v1703 = vsel %vm954, %v426, 0
      %v1706 = vsel %vm954, %v427, 0
      %v1709 = vsel %vm954, %v428, 0
      %v1712 = vsel %vm954, %v429, 0
      %v1715 = vsel %vm954, %v430, 0
      %v1718 = vsel %vm954, %v431, 0
      %v1721 = vsel %vm954, %v432, 0
      %v1724 = vsel %vm954, %v433, 0
      %v1727 = vsel %vm954, %v434, 0
      %v1730 = vsel %vm954, %v435, 0
      %v1733 = vsel %vm954, %v436, 0
      %v1736 = vsel %vm954, %v437, 0
      %v1739 = vsel %vm954, %v438, 0
      %v1742 = vsel %vm954, %v439, 0
      %v1745 = vsel %vm954, %v440, 0
      %v1748 = vsel %vm954, %v441, 0
      %v1751 = vsel %vm954, %v442, 0
      %v1754 = vsel %vm954, %v443, 0
      %v1757 = vsel %vm954, %v444, 0
      %v1760 = vsel %vm954, %v445, 0
      %v1763 = vsel %vm954, %v446, 0
      %v1766 = vsel %vm954, %v447, 0
      %v1769 = vsel %vm954, %v448, 0
      %v1772 = vsel %vm954, %v449, 0
      %v1775 = vsel %vm954, %v450, 0
      %v1778 = vsel %vm954, %v451, 0
      %v1781 = vsel %vm954, %v452, 0
      %v1784 = vsel %vm954, %v453, 0
      %v1787 = vsel %vm954, %v454, 0
      %v1790 = vsel %vm954, %v455, 0
      %v1793 = vsel %vm954, %v456, 0
      %v1796 = vsel %vm954, %v457, 0
      %v1799 = vsel %vm954, %v458, 0
      %v1802 = vsel %vm954, %v459, 0
      %v1805 = vsel %vm954, %v460, 0
      %v1808 = vsel %vm954, %v461, 0
      %v1811 = vsel %vm954, %v462, 0
      %v1814 = vsel %vm954, %v463, 0
      %v1817 = vsel %vm954, %v464, 0
      %v1820 = vsel %vm954, %v465, 0
      %v1823 = vsel %vm954, %v466, 0
      %v1826 = vsel %vm954, %v467, 0
      %v1829 = vsel %vm954, %v468, 0
      %v1832 = vsel %vm954, %v469, 0
      %v1835 = vsel %vm954, %v470, 0
      %v1838 = vsel %vm954, %v471, 0
      %v1841 = vsel %vm954, %v472, 0
      %v1844 = vsel %vm954, %v473, 0
      %v1847 = vsel %vm954, %v474, 0
      %v1850 = vsel %vm954, %v475, 0
      %v1853 = vsel %vm954, %v476, 0
      %v1856 = vsel %vm954, %v477, 0
      %v1859 = vsel %vm954, %v478, 0
      %v1862 = vsel %vm954, %v479, 0
      %v1865 = vsel %vm954, %v480, 0
      %v1868 = vsel %vm954, %v481, 0
      %v1871 = vsel %vm954, %v482, 0
      %v1874 = vsel %vm954, %v483, 0
      %v1877 = vsel %vm954, %v484, 0
      %v1880 = vsel %vm954, %v485, 0
      %v1883 = vsel %vm954, %v486, 0
      %v1886 = vsel %vm954, %v487, 0
      %v1889 = vsel %vm954, %v488, 0
      %v1892 = vsel %vm954, %v489, 0
      %v1895 = vsel %vm954, %v490, 0
      %v1898 = vsel %vm954, %v491, 0
      %v1901 = vsel %vm954, %v492, 0
      %v1904 = vsel %vm954, %v493, 0
      %v1907 = vsel %vm954, %v494, 0
      %v1910 = vsel %vm954, %v495, 0
      %v1913 = vsel %vm954, %v496, 0
      %v1916 = vsel %vm954, %v497, 0
      %v1919 = vsel %vm954, %v498, 0
      %v1922 = vsel %vm954, %v499, 0
      %v1925 = vsel %vm954, %v500, 0
      %v1928 = vsel %vm954, %v501, 0
      %v1931 = vsel %vm954, %v502, 0
      %v1934 = vsel %vm954, %v503, 0
      %v1937 = vsel %vm954, %v504, 0
      %v1940 = vsel %vm954, %v505, 0
      %v1943 = vsel %vm954, %v506, 0
      %v1946 = vsel %vm954, %v507, 0
      %v1949 = vsel %vm954, %v508, 0
      %v1952 = vsel %vm954, %v509, 0
      %v1955 = vsel %vm954, %v510, 0
      %v1958 = vsel %vm954, %v511, 0
      %v1961 = vsel %vm954, %v512, 0
      %v1964 = vsel %vm954, %v513, 0
      %v1967 = vsel %vm954, %v514, 0
      %v1970 = vsel %vm954, %v515, 0
      %v1973 = vsel %vm954, %v516, 0
      %v1976 = vsel %vm954, %v517, 0
      %v1979 = vsel %vm954, %v518, 0
      %v1982 = vsel %vm954, %v519, 0
      %v1985 = vsel %vm954, %v520, 0
      %v1988 = vsel %vm954, %v521, 0
      %v1991 = vsel %vm954, %v522, 0
      %v1994 = vsel %vm954, %v523, 0
      %v1997 = vsel %vm954, %v524, 0
      %v2000 = vsel %vm954, %v525, 0
      %v2003 = vsel %vm954, %v526, 0
      %v2006 = vsel %vm954, %v527, 0
      %v2009 = vsel %vm954, %v528, 0
      %v2012 = vsel %vm954, %v529, 0
      %v2015 = vsel %vm954, %v530, 0
      %v2018 = vsel %vm954, %v531, 0
      %v2021 = vsel %vm954, %v532, 0
      %v2024 = vsel %vm954, %v533, 0
      %v2027 = vsel %vm954, %v534, 0
      %v2030 = vsel %vm954, %v535, 0
      %v2033 = vsel %vm954, %v536, 0
      %v2036 = vsel %vm954, %v537, 0
      %v2039 = vsel %vm954, %v538, 0
      %v2042 = vsel %vm954, %v539, 0
      %v2045 = vsel %vm954, %v540, 0
      %v2048 = vsel %vm954, %v541, 0
      %v2051 = vsel %vm954, %v542, 0
      %v2054 = vsel %vm954, %v543, 0
      %v2057 = vsel %vm954, %v544, 0
      %v2060 = vsel %vm954, %v545, 0
      %v2063 = vsel %vm954, %v546, 0
      %v2066 = vsel %vm954, %v547, 0
      %v2069 = vsel %vm954, %v548, 0
      %v2072 = vsel %vm954, %v549, 0
      %v2075 = vsel %vm954, %v550, 0
      %v2078 = vsel %vm954, %v551, 0
      %v2081 = vsel %vm954, %v552, 0
      %v2084 = vsel %vm954, %v553, 0
      %v2087 = vsel %vm954, %v554, 0
      %v2090 = vsel %vm954, %v555, 0
      %v2093 = vsel %vm954, %v556, 0
      %v2096 = vsel %vm954, %v557, 0
      %v2099 = vsel %vm954, %v558, 0
      %v2102 = vsel %vm954, %v559, 0
      %v2105 = vsel %vm954, %v560, 0
      %v2108 = vsel %vm954, %v561, 0
      %v2111 = vsel %vm954, %v562, 0
      %v2114 = vsel %vm954, %v563, 0
      %v2117 = vsel %vm954, %v564, 0
      %v2120 = vsel %vm954, %v565, 0
      %v2123 = vsel %vm954, %v566, 0
      %v2126 = vsel %vm954, %v567, 0
      %v2129 = vsel %vm954, %v568, 0
      %v2132 = vsel %vm954, %v569, 0
      %v2135 = vsel %vm954, %v570, 0
      %v2138 = vsel %vm954, %v571, 0
      %v2141 = vsel %vm954, %v572, 0
      %v2144 = vsel %vm954, %v573, 0
      %v2147 = vsel %vm954, %v574, 0
      %v2150 = vsel %vm954, %v575, 0
      %v2153 = vsel %vm954, %v576, 0
      %v2156 = vsel %vm954, %v577, 0
      %v2159 = vsel %vm954, %v578, 0
      %v2162 = vsel %vm954, %v579, 0
      %v2165 = vsel %vm954, %v580, 0
      %v2168 = vsel %vm954, %v581, 0
      %v2171 = vsel %vm954, %v582, 0
      %v2174 = vsel %vm954, %v583, 0
      %v2177 = vsel %vm954, %v584, 0
      %v2180 = vsel %vm954, %v585, 0
      %v2183 = vsel %vm954, %v586, 0
      %v2186 = vsel %vm954, %v587, 0
      %v2189 = vsel %vm954, %v588, 0
      %v2192 = vsel %vm954, %v589, 0
      %v2195 = vsel %vm954, %v590, 0
      %v2198 = vsel %vm954, %v591, 0
      %v2201 = vsel %vm954, %v592, 0
      %v2204 = vsel %vm954, %v593, 0
      %v2207 = vsel %vm954, %v594, 0
      %v2210 = vsel %vm954, %v595, 0
      %v2213 = vsel %vm954, %v596, 0
      %v2216 = vsel %vm954, %v597, 0
      %v2219 = vsel %vm954, %v598, 0
      %v2222 = vsel %vm954, %v599, 0
      %v2225 = vsel %vm954, %v600, 0
      %v2228 = vsel %vm954, %v601, 0
      %v2231 = vsel %vm954, %v602, 0
      %v2234 = vsel %vm954, %v603, 0
      %v2237 = vsel %vm954, %v604, 0
      %v2240 = vsel %vm954, %v605, 0
      %v2243 = vsel %vm954, %v606, 0
      %v2246 = vsel %vm954, %v607, 0
      %v2249 = vsel %vm954, %v608, 0
      %v2252 = vsel %vm954, %v609, 0
      %v2255 = vsel %vm954, %v610, 0
      %v2258 = vsel %vm954, %v611, 0
      %v2261 = vsel %vm954, %v612, 0
      %v2264 = vsel %vm954, %v613, 0
      %v2267 = vsel %vm954, %v614, 0
      %v2270 = vsel %vm954, %v615, 0
      %v2273 = vsel %vm954, %v616, 0
      %v2276 = vsel %vm954, %v617, 0
      %v2279 = vsel %vm954, %v618, 0
      %v2282 = vsel %vm954, %v619, 0
      %v2285 = vsel %vm954, %v620, 0
      %v2288 = vsel %vm954, %v621, 0
      %v2291 = vsel %vm954, %v622, 0
      %v2294 = vsel %vm954, %v623, 0
      %v2297 = vsel %vm954, %v624, 0
      %v2300 = vsel %vm954, %v625, 0
      %v2303 = vsel %vm954, %v626, 0
      %v2306 = vsel %vm954, %v627, 0
      %v2309 = vsel %vm954, %v628, 0
      %v2312 = vsel %vm954, %v629, 0
      %v2315 = vsel %vm954, %v630, 0
      %v2318 = vsel %vm954, %v631, 0
      %v2321 = vsel %vm954, %v632, 0
      %v2324 = vsel %vm954, %v633, 0
      %v2327 = vsel %vm954, %v634, 0
      %v2330 = vsel %vm954, %v635, 0
      %v2333 = vsel %vm954, %v636, 0
      %v2336 = vsel %vm954, %v637, 0
      %v2339 = vsel %vm954, %v638, 0
      %v2342 = vsel %vm954, %v639, 0
      %v2345 = vsel %vm954, %v640, 0
      %v2348 = vsel %vm954, %v641, 0
      %v2351 = vsel %vm954, %v642, 0
      %v2354 = vsel %vm954, %v643, 0
      %v2357 = vsel %vm954, %v644, 0
      %v2360 = vsel %vm954, %v645, 0
      %v2363 = vsel %vm954, %v646, 0
      %v2366 = vsel %vm954, %v647, 0
      %v2369 = vsel %vm954, %v648, 0
      %v2372 = vsel %vm954, %v649, 0
      %v2375 = vsel %vm954, %v650, 0
      %v2378 = vsel %vm954, %v651, 0
      %v2381 = vsel %vm954, %v652, 0
      %v2384 = vsel %vm954, %v653, 0
      %v2387 = vsel %vm954, %v654, 0
      %v2390 = vsel %vm954, %v655, 0
      %v2393 = vsel %vm954, %v656, 0
      %v2396 = vsel %vm954, %v657, 0
      %v2399 = vsel %vm954, %v658, 0
      %v2402 = vsel %vm954, %v659, 0
      %v2405 = vsel %vm954, %v660, 0
      %v2408 = vsel %vm954, %v661, 0
      %v2411 = vsel %vm954, %v662, 0
      %v2414 = vsel %vm954, %v663, 0
      %v2417 = vsel %vm954, %v664, 0
      %v2420 = vsel %vm954, %v665, 0
      %v2423 = vsel %vm954, %v666, 0
      %v2426 = vsel %vm954, %v667, 0
      %v2429 = vsel %vm954, %v668, 0
      %v2432 = vsel %vm954, %v669, 0
      %v2435 = vsel %vm954, %v670, 0
      %v2438 = vsel %vm954, %v671, 0
      %v2441 = vsel %vm954, %v672, 0
      %v2444 = vsel %vm954, %v673, 0
      %v2447 = vsel %vm954, %v674, 0
      %v2450 = vsel %vm954, %v675, 0
      %v2453 = vsel %vm954, %v676, 0
      %v2456 = vsel %vm954, %v677, 0
      %v2459 = vsel %vm954, %v678, 0
      %v2462 = vsel %vm954, %v679, 0
      %v2465 = vsel %vm954, %v680, 0
      %v2468 = vsel %vm954, %v681, 0
      %v2471 = vsel %vm954, %v682, 0
      %v2474 = vsel %vm954, %v683, 0
      %v2477 = vsel %vm954, %v684, 0
      %v2480 = vsel %vm954, %v685, 0
      %v2483 = vsel %vm954, %v686, 0
      %v2486 = vsel %vm954, %v687, 0
      %v2489 = vsel %vm954, %v688, 0
      %v2492 = vsel %vm954, %v689, 0
      %v2495 = vsel %vm954, %v690, 0
      %v2498 = vsel %vm954, %v691, 0
      %v2501 = vsel %vm954, %v692, 0
      %v2504 = vsel %vm954, %v693, 0
      %v2507 = vsel %vm954, %v694, 0
      %v2510 = vsel %vm954, %v695, 0
      %v2513 = vsel %vm954, %v696, 0
      %v2516 = vsel %vm954, %v697, 0
      %v2519 = vsel %vm954, %v698, 0
      %v2522 = vsel %vm954, %v699, 0
      %v2525 = vsel %vm954, %v700, 0
      %v2528 = vsel %vm954, %v701, 0
      %v2531 = vsel %vm954, %v702, 0
      %v2534 = vsel %vm954, %v703, 0
      %v2537 = vsel %vm954, %v704, 0
      %v2540 = vsel %vm954, %v705, 0
      %v2543 = vsel %vm954, %v706, 0
      %v2546 = vsel %vm954, %v707, 0
      %v2549 = vsel %vm954, %v708, 0
      %v2552 = vsel %vm954, %v709, 0
      %v2555 = vsel %vm954, %v710, 0
      %v2558 = vsel %vm954, %v711, 0
      %v2561 = vsel %vm954, %v712, 0
      %v2564 = vsel %vm954, %v713, 0
      %v2567 = vsel %vm954, %v714, 0
      %v2570 = vsel %vm954, %v715, 0
      %v2573 = vsel %vm954, %v716, 0
      %v2576 = vsel %vm954, %v717, 0
      %v2579 = vsel %vm954, %v718, 0
      %v2582 = vsel %vm954, %v719, 0
      %v2585 = vsel %vm954, %v720, 0
      %v2588 = vsel %vm954, %v721, 0
      %v2591 = vsel %vm954, %v722, 0
      %v2594 = vsel %vm954, %v723, 0
      %v2597 = vsel %vm954, %v724, 0
      %v2600 = vsel %vm954, %v725, 0
      %v2603 = vsel %vm954, %v726, 0
      %v2606 = vsel %vm954, %v727, 0
      %v2609 = vsel %vm954, %v728, 0
      %v2612 = vsel %vm954, %v729, 0
      %v2615 = vsel %vm954, %v730, 0
      %v2618 = vsel %vm954, %v731, 0
      %v2621 = vsel %vm954, %v732, 0
      %v2624 = vsel %vm954, %v733, 0
      %v2627 = vsel %vm954, %v734, 0
      %v2630 = vsel %vm954, %v735, 0
      %v2633 = vsel %vm954, %v736, 0
      %v2636 = vsel %vm954, %v737, 0
      %v2639 = vsel %vm954, %v738, 0
      %v2642 = vsel %vm954, %v739, 0
      %v2645 = vsel %vm954, %v740, 0
      %v2648 = vsel %vm954, %v741, 0
      %v2651 = vsel %vm954, %v742, 0
      %v2654 = vsel %vm954, %v743, 0
      %v2657 = vsel %vm954, %v744, 0
      %v2660 = vsel %vm954, %v745, 0
      %v2663 = vsel %vm954, %v746, 0
      %v2666 = vsel %vm954, %v747, 0
      %v2669 = vsel %vm954, %v748, 0
      %v2672 = vsel %vm954, %v749, 0
      %v2675 = vsel %vm954, %v750, 0
      %v2678 = vsel %vm954, %v751, 0
      %v2681 = vsel %vm954, %v752, 0
      %v2684 = vsel %vm954, %v753, 0
      %v2687 = vsel %vm954, %v754, 0
      %v2690 = vsel %vm954, %v755, 0
      %v2693 = vsel %vm954, %v756, 0
      %v2696 = vsel %vm954, %v757, 0
      %v2699 = vsel %vm954, %v758, 0
      %v2702 = vsel %vm954, %v759, 0
      %v2705 = vsel %vm954, %v760, 0
      %v2708 = vsel %vm954, %v761, 0
      %v2711 = vsel %vm954, %v762, 0
      %v2714 = vsel %vm954, %v763, 0
      %v2717 = vsel %vm954, %v764, 0
      %v2720 = vsel %vm954, %v765, 0
      %v2723 = vsel %vm954, %v766, 0
      %v2726 = vsel %vm954, %v767, 0
      %v2729 = vsel %vm954, %v768, 0
      %v2732 = vsel %vm954, %v769, 0
      %v2735 = vsel %vm954, %v770, 0
      %v2738 = vsel %vm954, %v771, 0
      %v2741 = vsel %vm954, %v772, 0
      %v2744 = vsel %vm954, %v773, 0
      %v2747 = vsel %vm954, %v774, 0
      %v2750 = vsel %vm954, %v775, 0
      %v2753 = vsel %vm954, %v776, 0
      %v2756 = vsel %vm954, %v777, 0
      %v2759 = vsel %vm954, %v778, 0
      %v2762 = vsel %vm954, %v779, 0
      %v2765 = vsel %vm954, %v780, 0
      %v2768 = vsel %vm954, %v781, 0
      %v2771 = vsel %vm954, %v782, 0
      %v2774 = vsel %vm954, %v783, 0
      %v2777 = vsel %vm954, %v784, 0
      %v2780 = vsel %vm954, %v785, 0
      %v2783 = vsel %vm954, %v786, 0
      %v2786 = vsel %vm954, %v787, 0
      %v2789 = vsel %vm954, %v788, 0
      %v2792 = vsel %vm954, %v789, 0
      %v2795 = vsel %vm954, %v790, 0
      %v2798 = vsel %vm954, %v791, 0
      %v2801 = vsel %vm954, %v792, 0
      %v2804 = vsel %vm954, %v793, 0
      %v2807 = vsel %vm954, %v794, 0
      %v2810 = vsel %vm954, %v795, 0
      %v2813 = vsel %vm954, %v796, 0
      %v2816 = vsel %vm954, %v797, 0
      %v2819 = vsel %vm954, %v798, 0
      %v2822 = vsel %vm954, %v799, 0
      %v2825 = vsel %vm954, %v800, 0
      %v2828 = vsel %vm954, %v801, 0
      %v2831 = vsel %vm954, %v802, 0
      %v2834 = vsel %vm954, %v803, 0
      %v2837 = vsel %vm954, %v804, 0
      %v2840 = vsel %vm954, %v805, 0
      %v2843 = vsel %vm954, %v806, 0
      %v2846 = vsel %vm954, %v807, 0
      %v2849 = vsel %vm954, %v808, 0
      %v2852 = vsel %vm954, %v809, 0
      %v2855 = vsel %vm954, %v810, 0
      %v2858 = vsel %vm954, %v811, 0
      %v2861 = vsel %vm954, %v812, 0
      %v2864 = vsel %vm954, %v813, 0
      %v2867 = vsel %vm954, %v814, 0
      %v2870 = vsel %vm954, %v815, 0
      %v2873 = vsel %vm954, %v816, 0
      %v2876 = vsel %vm954, %v817, 0
      %v2879 = vsel %vm954, %v818, 0
      %v2882 = vsel %vm954, %v819, 0
      %v2885 = vsel %vm954, %v820, 0
      %v2888 = vsel %vm954, %v821, 0
      %v2891 = vsel %vm954, %v822, 0
      %v2894 = vsel %vm954, %v823, 0
      %v2897 = vsel %vm954, %v824, 0
      %v2900 = vsel %vm954, %v825, 0
      %v2903 = vsel %vm954, %v826, 0
      %v2906 = vsel %vm954, %v827, 0
      %v2909 = vsel %vm954, %v828, 0
      %v2912 = vsel %vm954, %v829, 0
      %v2915 = vsel %vm954, %v830, 0
      %v2918 = vsel %vm954, %v831, 0
      %v2921 = vsel %vm954, %v832, 0
      %v2924 = vsel %vm954, %v833, 0
      %v2927 = vsel %vm954, %v834, 0
      %v2930 = vsel %vm954, %v835, 0
      %v2933 = vsel %vm954, %v836, 0
      %v2936 = vsel %vm954, %v837, 0
      %v2939 = vsel %vm954, %v838, 0
      %v2942 = vsel %vm954, %v839, 0
      %v2945 = vsel %vm954, %v840, 0
      %v2948 = vsel %vm954, %v841, 0
      %v2951 = vsel %vm954, %v842, 0
      %v2954 = vsel %vm954, %v843, 0
      %v2957 = vsel %vm954, %v844, 0
      %v2960 = vsel %vm954, %v845, 0
      %v2963 = vsel %vm954, %v846, 0
      %v2966 = vsel %vm954, %v847, 0
      %v2969 = vsel %vm954, %v848, 0
      %v2972 = vsel %vm954, %v849, 0
      %v2975 = vsel %vm954, %v850, 0
      %v2978 = vsel %vm954, %v851, 0
      %v2981 = vsel %vm954, %v852, 0
      %v2984 = vsel %vm954, %v853, 0
      %v2987 = vsel %vm954, %v854, 0
      %v2990 = vsel %vm954, %v855, 0
      %v2993 = vsel %vm954, %v856, 0
      %v2996 = vsel %vm954, %v857, 0
      %v2999 = vsel %vm954, %v858, 0
      %v3002 = vsel %vm954, %v859, 0
      %v3005 = vsel %vm954, %v860, 0
      %v3008 = vsel %vm954, %v861, 0
      %v3011 = vsel %vm954, %v862, 0
      %v3014 = vsel %vm954, %v863, 0
      %v3017 = vsel %vm954, %v864, 0
      %v3020 = vsel %vm954, %v865, 0
      %v3023 = vsel %vm954, %v866, 0
      %v3026 = vsel %vm954, %v867, 0
      %v3029 = vsel %vm954, %v868, 0
      %v3032 = vsel %vm954, %v869, 0
      %v3035 = vsel %vm954, %v870, 0
      %v3038 = vsel %vm954, %v871, 0
      %v3041 = vsel %vm954, %v872, 0
      %v3044 = vsel %vm954, %v873, 0
      %v3047 = vsel %vm954, %v874, 0
      %v3050 = vsel %vm954, %v875, 0
      %v3053 = vsel %vm954, %v876, 0
      %v3056 = vsel %vm954, %v877, 0
      %v3059 = vsel %vm954, %v878, 0
      %v3062 = vsel %vm954, %v879, 0
      %v3065 = vsel %vm954, %v880, 0
      %v3068 = vsel %vm954, %v881, 0
      %v3071 = vsel %vm954, %v882, 0
      %v3074 = vsel %vm954, %v883, 0
      %v3077 = vsel %vm954, %v884, 0
      %v3080 = vsel %vm954, %v885, 0
      %v3083 = vsel %vm954, %v886, 0
      %v3086 = vsel %vm954, %v887, 0
      %v3089 = vsel %vm954, %v888, 0
      %v3092 = vsel %vm954, %v889, 0
      %v3095 = vsel %vm954, %v890, 0
      %v3098 = vsel %vm954, %v891, 0
      %v3101 = vsel %vm954, %v892, 0
      %v3104 = vsel %vm954, %v893, 0
      %v3107 = vsel %vm954, %v894, 0
      %v3110 = vsel %vm954, %v895, 0
      %v3113 = vsel %vm954, %v896, 0
      %v3116 = vsel %vm954, %v897, 0
      %v3119 = vsel %vm954, %v898, 0
      %v3122 = vsel %vm954, %v899, 0
      %v3125 = vsel %vm954, %v900, 0
      %v3128 = vsel %vm954, %v901, 0
      %v3131 = vsel %vm954, %v902, 0
      %v3134 = vsel %vm954, %v903, 0
      %v3137 = vsel %vm954, %v904, 0
      %v3140 = vsel %vm954, %v905, 0
      %v3143 = vsel %vm954, %v906, 0
      %v3146 = vsel %vm954, %v907, 0
      %v3149 = vsel %vm954, %v908, 0
      %v3152 = vsel %vm954, %v909, 0
      %v3155 = vsel %vm954, %v910, 0
      %v3158 = vsel %vm954, %v911, 0
      %v3161 = vsel %vm954, %v912, 0
      %v3164 = vsel %vm954, %v913, 0
      %v3167 = vsel %vm954, %v914, 0
      %v3170 = vsel %vm954, %v915, 0
      %v3173 = vsel %vm954, %v916, 0
      %v3176 = vsel %vm954, %v917, 0
      %v3179 = vsel %vm954, %v918, 0
      %v3182 = vsel %vm954, %v919, 0
      %v3185 = vsel %vm954, %v920, 0
      %v3188 = vsel %vm954, %v921, 0
      %v3191 = vsel %vm954, %v922, 0
      %v3194 = vsel %vm954, %v923, 0
      %v3197 = vsel %vm954, %v924, 0
      %v3200 = vsel %vm954, %v925, 0
      %v3203 = vsel %vm954, %v926, 0
      %v3206 = vsel %vm954, %v927, 0
      %v3209 = vsel %vm954, %v928, 0
      %v3212 = vsel %vm954, %v929, 0
      %v3215 = vsel %vm954, %v930, 0
      %v3218 = vsel %vm954, %v931, 0
      %v3221 = vsel %vm954, %v932, 0
      %v3224 = vsel %vm954, %v933, 0
      %v3227 = vsel %vm954, %v934, 0
      %v3230 = vsel %vm954, %v935, 0
      %v3233 = vsel %vm954, %v936, 0
      %v3236 = vsel %vm954, %v937, 0
      %v3239 = vsel %vm954, %v938, 0
      %v3242 = vsel %vm954, %v939, 0
      %v3245 = vsel %vm954, %v940, 0
      %v3248 = vsel %vm954, %v941, 0
      %v3251 = vsel %vm954, %v942, 0
      %v3254 = vsel %vm954, %v943, 0
      %v3257 = vsel %vm954, %v944, 0
      %vm3259 = vcmask 1041408
      %v3261 = vsel %vm3259, %v946, 0
      %3263 = vmatprep.subr.mxu0 0.0
      %3264 = vmatpush1.msra.mxu0 %v945
      %3265 = vmatprep.subr.mxu0 0.0
      %3266 = vmatpush1.msra.mxu0 %v3261
      %3267 = vmatprep.subr.mxu0 0.0
      %3268 = vmatpush1.msra.mxu0 0.0
      %3269 = vmatprep.subr.mxu0 0.0
      %3270 = vmatpush1.msra.mxu0 0.0
      %3271 = vmatprep.subr.mxu0 0.0
      %3272 = vmatpush1.msra.mxu0 0.0
      %3273 = vmatprep.subr.mxu0 0.0
      %3274 = vmatpush1.msra.mxu0 0.0
      %3275 = vmatprep.subr.mxu0 0.0
      %3276 = vmatpush1.msra.mxu0 0.0
      %3277 = vmatprep.subr.mxu0 0.0
      %3278 = vmatpush1.msra.mxu0 0.0
      %3279 = vmatprep.subr.mxu0 0.0
      %3280 = vmatpush1.msra.mxu0 0.0
      %3281 = vmatprep.subr.mxu0 0.0
      %3282 = vmatpush1.msra.mxu0 0.0
      %3283 = vmatprep.subr.mxu0 0.0
      %3284 = vmatpush1.msra.mxu0 0.0
      %3285 = vmatprep.subr.mxu0 0.0
      %3286 = vmatpush1.msra.mxu0 0.0
      %3287 = vmatprep.subr.mxu0 0.0
      %3288 = vmatpush1.msra.mxu0 0.0
      %3289 = vmatprep.subr.mxu0 0.0
      %3290 = vmatpush1.msra.mxu0 0.0
      %3291 = vmatprep.subr.mxu0 0.0
      %3292 = vmatpush1.msra.mxu0 0.0
      %3293 = vmatprep.subr.mxu0 0.0
      %3294 = vmatpush1.msra.mxu0 0.0
      %3295 = vmatprep.subr.mxu0 0.0
      %3296 = vmatpush1.msra.mxu0 0.0
      %3297 = vmatprep.subr.mxu0 0.0
      %3298 = vmatpush1.msra.mxu0 0.0
      %3299 = vmatprep.subr.mxu0 0.0
      %3300 = vmatpush1.msra.mxu0 0.0
      %3301 = vmatprep.subr.mxu0 0.0
      %3302 = vmatpush1.msra.mxu0 0.0
      %3303 = vmatprep.subr.mxu0 0.0
      %3304 = vmatpush1.msra.mxu0 0.0
      %3305 = vmatprep.subr.mxu0 0.0
      %3306 = vmatpush1.msra.mxu0 0.0
      %3307 = vmatprep.subr.mxu0 0.0
      %3308 = vmatpush1.msra.mxu0 0.0
      %3309 = vmatprep.subr.mxu0 0.0
      %3310 = vmatpush1.msra.mxu0 0.0
      %3311 = vmatprep.subr.mxu0 0.0
      %3312 = vmatpush1.msra.mxu0 0.0
      %3313 = vmatprep.subr.mxu0 0.0
      %3314 = vmatpush1.msra.mxu0 0.0
      %3315 = vmatprep.subr.mxu0 0.0
      %3316 = vmatpush1.msra.mxu0 0.0
      %3317 = vmatprep.subr.mxu0 0.0
      %3318 = vmatpush1.msra.mxu0 0.0
      %3319 = vmatprep.subr.mxu0 0.0
      %3320 = vmatpush1.msra.mxu0 0.0
      %3321 = vmatprep.subr.mxu0 0.0
      %3322 = vmatpush1.msra.mxu0 0.0
      %3323 = vmatprep.subr.mxu0 0.0
      %3324 = vmatpush1.msra.mxu0 0.0
      %3325 = vmatprep.subr.mxu0 0.0
      %3326 = vmatpush1.msra.mxu0 0.0
      %3327 = vmatprep.mubr.f32.mxu0 0.0
      %3328 = vmatmul.mubr.f32.gmra.mrb[0].mxu0 %v956
      %v3329 = vpop.f32.mrb[0].mxu0
      %v3330 = vadd.f32 %v952, %v3329
      %v3331 = vpop.f32.mrb[0].mxu0
      %3332 = vmatprep.mubr.f32.mxu0 0.0
      %3333 = vmatmul.mubr.f32.gmra.mrb[0].mxu0 %v959
      %v3334 = vpop.f32.mrb[0].mxu0
      %v3335 = vadd.f32 %v952, %v3334
      %v3336 = vpop.f32.mrb[0].mxu0
      %3337 = vmatprep.mubr.f32.mxu0 0.0
      %3338 = vmatmul.mubr.f32.gmra.mrb[0].mxu0 %v962
      %v3339 = vpop.f32.mrb[0].mxu0
      %v3340 = vadd.f32 %v952, %v3339
      %v3341 = vpop.f32.mrb[0].mxu0
      %3342 = vmatprep.mubr.f32.mxu0 0.0
      %3343 = vmatmul.mubr.f32.gmra.mrb[0].mxu0 %v965
      %v3344 = vpop.f32.mrb[0].mxu0
      %v3345 = vadd.f32 %v952, %v3344
      %v3346 = vpop.f32.mrb[0].mxu0
      %3347 = vmatprep.mubr.f32.mxu0 0.0
      %3348 = vmatmul.mubr.f32.gmra.mrb[0].mxu0 %v968
      %v3349 = vpop.f32.mrb[0].mxu0
      %v3350 = vadd.f32 %v952, %v3349
      %v3351 = vpop.f32.mrb[0].mxu0
      %3352 = vmatprep.mubr.f32.mxu0 0.0
      %3353 = vmatmul.mubr.f32.gmra.mrb[0].mxu0 %v971
      %v3354 = vpop.f32.mrb[0].mxu0
      %v3355 = vadd.f32 %v952, %v3354
      %v3356 = vpop.f32.mrb[0].mxu0
      %3357 = vmatprep.mubr.f32.mxu0 0.0
      %3358 = vmatmul.mubr.f32.gmra.mrb[0].mxu0 %v974
      %v3359 = vpop.f32.mrb[0].mxu0
      %v3360 = vadd.f32 %v952, %v3359
      %v3361 = vpop.f32.mrb[0].mxu0
      %3362 = vmatprep.mubr.f32.mxu0 0.0
      %3363 = vmatmul.mubr.f32.gmra.mrb[0].mxu0 %v977
      %v3364 = vpop.f32.mrb[0].mxu0
      %v3365 = vadd.f32 %v952, %v3364
      %v3366 = vpop.f32.mrb[0].mxu0
      %3367 = vmatprep.mubr.f32.mxu0 0.0
      %3368 = vmatmul.mubr.f32.gmra.mrb[0].mxu0 %v980
      %v3369 = vpop.f32.mrb[0].mxu0
      %v3370 = vadd.f32 %v952, %v3369
      %v3371 = vpop.f32.mrb[0].mxu0
      %3372 = vmatprep.mubr.f32.mxu0 0.0
      %3373 = vmatmul.mubr.f32.gmra.mrb[0].mxu0 %v983
      %v3374 = vpop.f32.mrb[0].mxu0
      %v3375 = vadd.f32 %v952, %v3374
      %v3376 = vpop.f32.mrb[0].mxu0
      %3377 = vmatprep.mubr.f32.mxu0 0.0
      %3378 = vmatmul.mubr.f32.gmra.mrb[0].mxu0 %v986
      %v3379 = vpop.f32.mrb[0].mxu0
      %v3380 = vadd.f32 %v952, %v3379
      %v3381 = vpop.f32.mrb[0].mxu0
      %3382 = vmatprep.mubr.f32.mxu0 0.0
      %3383 = vmatmul.mubr.f32.gmra.mrb[0].mxu0 %v989
      %v3384 = vpop.f32.mrb[0].mxu0
      %v3385 = vadd.f32 %v952, %v3384
      %v3386 = vpop.f32.mrb[0].mxu0
      %3387 = vmatprep.mubr.f32.mxu0 0.0
      %3388 = vmatmul.mubr.f32.gmra.mrb[0].mxu0 %v992
      %v3389 = vpop.f32.mrb[0].mxu0
      %v3390 = vadd.f32 %v952, %v3389
      %v3391 = vpop.f32.mrb[0].mxu0
      %3392 = vmatprep.mubr.f32.mxu0 0.0
      %3393 = vmatmul.mubr.f32.gmra.mrb[0].mxu0 %v995
      %v3394 = vpop.f32.mrb[0].mxu0
      %v3395 = vadd.f32 %v952, %v3394
      %v3396 = vpop.f32.mrb[0].mxu0
      %3397 = vmatprep.mubr.f32.mxu0 0.0
      %3398 = vmatmul.mubr.f32.gmra.mrb[0].mxu0 %v998
      %v3399 = vpop.f32.mrb[0].mxu0
      %v3400 = vadd.f32 %v952, %v3399
      %v3401 = vpop.f32.mrb[0].mxu0
      %3402 = vmatprep.mubr.f32.mxu0 0.0
      %3403 = vmatmul.mubr.f32.gmra.mrb[0].mxu0 %v1001
      %v3404 = vpop.f32.mrb[0].mxu0
      %v3405 = vadd.f32 %v952, %v3404
      %v3406 = vpop.f32.mrb[0].mxu0
      %3407 = vmatprep.mubr.f32.mxu0 0.0
      %3408 = vmatmul.mubr.f32.gmra.mrb[0].mxu0 %v1004
      %v3409 = vpop.f32.mrb[0].mxu0
      %v3410 = vadd.f32 %v952, %v3409
      %v3411 = vpop.f32.mrb[0].mxu0
      %3412 = vmatprep.mubr.f32.mxu0 0.0
      %3413 = vmatmul.mubr.f32.gmra.mrb[0].mxu0 %v1007
      %v3414 = vpop.f32.mrb[0].mxu0
      %v3415 = vadd.f32 %v952, %v3414
      %v3416 = vpop.f32.mrb[0].mxu0
      %3417 = vmatprep.mubr.f32.mxu0 0.0
      %3418 = vmatmul.mubr.f32.gmra.mrb[0].mxu0 %v1010
      %v3419 = vpop.f32.mrb[0].mxu0
      %v3420 = vadd.f32 %v952, %v3419
      %v3421 = vpop.f32.mrb[0].mxu0
      %3422 = vmatprep.mubr.f32.mxu0 0.0
      %3423 = vmatmul.mubr.f32.gmra.mrb[0].mxu0 %v1013
      %v3424 = vpop.f32.mrb[0].mxu0
      %v3425 = vadd.f32 %v952, %v3424
      %v3426 = vpop.f32.mrb[0].mxu0
      %3427 = vmatprep.mubr.f32.mxu0 0.0
      %3428 = vmatmul.mubr.f32.gmra.mrb[0].mxu0 %v1016
      %v3429 = vpop.f32.mrb[0].mxu0
      %v3430 = vadd.f32 %v952, %v3429
      %v3431 = vpop.f32.mrb[0].mxu0
      %3432 = vmatprep.mubr.f32.mxu0 0.0
      %3433 = vmatmul.mubr.f32.gmra.mrb[0].mxu0 %v1019
      %v3434 = vpop.f32.mrb[0].mxu0
      %v3435 = vadd.f32 %v952, %v3434
      %v3436 = vpop.f32.mrb[0].mxu0
      %3437 = vmatprep.mubr.f32.mxu0 0.0
      %3438 = vmatmul.mubr.f32.gmra.mrb[0].mxu0 %v1022
      %v3439 = vpop.f32.mrb[0].mxu0
      %v3440 = vadd.f32 %v952, %v3439
      %v3441 = vpop.f32.mrb[0].mxu0
      %3442 = vmatprep.mubr.f32.mxu0 0.0
      %3443 = vmatmul.mubr.f32.gmra.mrb[0].mxu0 %v1025
      %v3444 = vpop.f32.mrb[0].mxu0
      %v3445 = vadd.f32 %v952, %v3444
      %v3446 = vpop.f32.mrb[0].mxu0
      %3447 = vmatprep.mubr.f32.mxu0 0.0
      %3448 = vmatmul.mubr.f32.gmra.mrb[0].mxu0 %v1028
      %v3449 = vpop.f32.mrb[0].mxu0
      %v3450 = vadd.f32 %v952, %v3449
      %v3451 = vpop.f32.mrb[0].mxu0
      %3452 = vmatprep.mubr.f32.mxu0 0.0
      %3453 = vmatmul.mubr.f32.gmra.mrb[0].mxu0 %v1031
      %v3454 = vpop.f32.mrb[0].mxu0
      %v3455 = vadd.f32 %v952, %v3454
      %v3456 = vpop.f32.mrb[0].mxu0
      %3457 = vmatprep.mubr.f32.mxu0 0.0
      %3458 = vmatmul.mubr.f32.gmra.mrb[0].mxu0 %v1034
      %v3459 = vpop.f32.mrb[0].mxu0
      %v3460 = vadd.f32 %v952, %v3459
      %v3461 = vpop.f32.mrb[0].mxu0
      %3462 = vmatprep.mubr.f32.mxu0 0.0
      %3463 = vmatmul.mubr.f32.gmra.mrb[0].mxu0 %v1037
      %v3464 = vpop.f32.mrb[0].mxu0
      %v3465 = vadd.f32 %v952, %v3464
      %v3466 = vpop.f32.mrb[0].mxu0
      %3467 = vmatprep.mubr.f32.mxu0 0.0
      %3468 = vmatmul.mubr.f32.gmra.mrb[0].mxu0 %v1040
      %v3469 = vpop.f32.mrb[0].mxu0
      %v3470 = vadd.f32 %v952, %v3469
      %v3471 = vpop.f32.mrb[0].mxu0
      %3472 = vmatprep.mubr.f32.mxu0 0.0
      %3473 = vmatmul.mubr.f32.gmra.mrb[0].mxu0 %v1043
      %v3474 = vpop.f32.mrb[0].mxu0
      %v3475 = vadd.f32 %v952, %v3474
      %v3476 = vpop.f32.mrb[0].mxu0
      %3477 = vmatprep.mubr.f32.mxu0 0.0
      %3478 = vmatmul.mubr.f32.gmra.mrb[0].mxu0 %v1046
      %v3479 = vpop.f32.mrb[0].mxu0
      %v3480 = vadd.f32 %v952, %v3479
      %v3481 = vpop.f32.mrb[0].mxu0
      %3482 = vmatprep.mubr.f32.mxu0 0.0
      %3483 = vmatmul.mubr.f32.gmra.mrb[0].mxu0 %v1049
      %v3484 = vpop.f32.mrb[0].mxu0
      %v3485 = vadd.f32 %v952, %v3484
      %v3486 = vpop.f32.mrb[0].mxu0
      %3487 = vmatprep.mubr.f32.mxu0 0.0
      %3488 = vmatmul.mubr.f32.gmra.mrb[0].mxu0 %v1052
      %v3489 = vpop.f32.mrb[0].mxu0
      %v3490 = vadd.f32 %v952, %v3489
      %v3491 = vpop.f32.mrb[0].mxu0
      %3492 = vmatprep.mubr.f32.mxu0 0.0
      %3493 = vmatmul.mubr.f32.gmra.mrb[0].mxu0 %v1055
      %v3494 = vpop.f32.mrb[0].mxu0
      %v3495 = vadd.f32 %v952, %v3494
      %v3496 = vpop.f32.mrb[0].mxu0
      %3497 = vmatprep.mubr.f32.mxu0 0.0
      %3498 = vmatmul.mubr.f32.gmra.mrb[0].mxu0 %v1058
      %v3499 = vpop.f32.mrb[0].mxu0
      %v3500 = vadd.f32 %v952, %v3499
      %v3501 = vpop.f32.mrb[0].mxu0
      %3502 = vmatprep.mubr.f32.mxu0 0.0
      %3503 = vmatmul.mubr.f32.gmra.mrb[0].mxu0 %v1061
      %v3504 = vpop.f32.mrb[0].mxu0
      %v3505 = vadd.f32 %v952, %v3504
      %v3506 = vpop.f32.mrb[0].mxu0
      %3507 = vmatprep.mubr.f32.mxu0 0.0
      %3508 = vmatmul.mubr.f32.gmra.mrb[0].mxu0 %v1064
      %v3509 = vpop.f32.mrb[0].mxu0
      %v3510 = vadd.f32 %v952, %v3509
      %v3511 = vpop.f32.mrb[0].mxu0
      %3512 = vmatprep.mubr.f32.mxu0 0.0
      %3513 = vmatmul.mubr.f32.gmra.mrb[0].mxu0 %v1067
      %v3514 = vpop.f32.mrb[0].mxu0
      %v3515 = vadd.f32 %v952, %v3514
      %v3516 = vpop.f32.mrb[0].mxu0
      %3517 = vmatprep.mubr.f32.mxu0 0.0
      %3518 = vmatmul.mubr.f32.gmra.mrb[0].mxu0 %v1070
      %v3519 = vpop.f32.mrb[0].mxu0
      %v3520 = vadd.f32 %v952, %v3519
      %v3521 = vpop.f32.mrb[0].mxu0
      %3522 = vmatprep.mubr.f32.mxu0 0.0
      %3523 = vmatmul.mubr.f32.gmra.mrb[0].mxu0 %v1073
      %v3524 = vpop.f32.mrb[0].mxu0
      %v3525 = vadd.f32 %v952, %v3524
      %v3526 = vpop.f32.mrb[0].mxu0
      %3527 = vmatprep.mubr.f32.mxu0 0.0
      %3528 = vmatmul.mubr.f32.gmra.mrb[0].mxu0 %v1076
      %v3529 = vpop.f32.mrb[0].mxu0
      %v3530 = vadd.f32 %v952, %v3529
      %v3531 = vpop.f32.mrb[0].mxu0
      %3532 = vmatprep.mubr.f32.mxu0 0.0
      %3533 = vmatmul.mubr.f32.gmra.mrb[0].mxu0 %v1079
      %v3534 = vpop.f32.mrb[0].mxu0
      %v3535 = vadd.f32 %v952, %v3534
      %v3536 = vpop.f32.mrb[0].mxu0
      %3537 = vmatprep.mubr.f32.mxu0 0.0
      %3538 = vmatmul.mubr.f32.gmra.mrb[0].mxu0 %v1082
      %v3539 = vpop.f32.mrb[0].mxu0
      %v3540 = vadd.f32 %v952, %v3539
      %v3541 = vpop.f32.mrb[0].mxu0
      %3542 = vmatprep.mubr.f32.mxu0 0.0
      %3543 = vmatmul.mubr.f32.gmra.mrb[0].mxu0 %v1085
      %v3544 = vpop.f32.mrb[0].mxu0
      %v3545 = vadd.f32 %v952, %v3544
      %v3546 = vpop.f32.mrb[0].mxu0
      %3547 = vmatprep.mubr.f32.mxu0 0.0
      %3548 = vmatmul.mubr.f32.gmra.mrb[0].mxu0 %v1088
      %v3549 = vpop.f32.mrb[0].mxu0
      %v3550 = vadd.f32 %v952, %v3549
      %v3551 = vpop.f32.mrb[0].mxu0
      %3552 = vmatprep.mubr.f32.mxu0 0.0
      %3553 = vmatmul.mubr.f32.gmra.mrb[0].mxu0 %v1091
      %v3554 = vpop.f32.mrb[0].mxu0
      %v3555 = vadd.f32 %v952, %v3554
      %v3556 = vpop.f32.mrb[0].mxu0
      %3557 = vmatprep.mubr.f32.mxu0 0.0
      %3558 = vmatmul.mubr.f32.gmra.mrb[0].mxu0 %v1094
      %v3559 = vpop.f32.mrb[0].mxu0
      %v3560 = vadd.f32 %v952, %v3559
      %v3561 = vpop.f32.mrb[0].mxu0
      %3562 = vmatprep.mubr.f32.mxu0 0.0
      %3563 = vmatmul.mubr.f32.gmra.mrb[0].mxu0 %v1097
      %v3564 = vpop.f32.mrb[0].mxu0
      %v3565 = vadd.f32 %v952, %v3564
      %v3566 = vpop.f32.mrb[0].mxu0
      %3567 = vmatprep.mubr.f32.mxu0 0.0
      %3568 = vmatmul.mubr.f32.gmra.mrb[0].mxu0 %v1100
      %v3569 = vpop.f32.mrb[0].mxu0
      %v3570 = vadd.f32 %v952, %v3569
      %v3571 = vpop.f32.mrb[0].mxu0
      %3572 = vmatprep.mubr.f32.mxu0 0.0
      %3573 = vmatmul.mubr.f32.gmra.mrb[0].mxu0 %v1103
      %v3574 = vpop.f32.mrb[0].mxu0
      %v3575 = vadd.f32 %v952, %v3574
      %v3576 = vpop.f32.mrb[0].mxu0
      %3577 = vmatprep.mubr.f32.mxu0 0.0
      %3578 = vmatmul.mubr.f32.gmra.mrb[0].mxu0 %v1106
      %v3579 = vpop.f32.mrb[0].mxu0
      %v3580 = vadd.f32 %v952, %v3579
      %v3581 = vpop.f32.mrb[0].mxu0
      %3582 = vmatprep.mubr.f32.mxu0 0.0
      %3583 = vmatmul.mubr.f32.gmra.mrb[0].mxu0 %v1109
      %v3584 = vpop.f32.mrb[0].mxu0
      %v3585 = vadd.f32 %v952, %v3584
      %v3586 = vpop.f32.mrb[0].mxu0
      %3587 = vmatprep.mubr.f32.mxu0 0.0
      %3588 = vmatmul.mubr.f32.gmra.mrb[0].mxu0 %v1112
      %v3589 = vpop.f32.mrb[0].mxu0
      %v3590 = vadd.f32 %v952, %v3589
      %v3591 = vpop.f32.mrb[0].mxu0
      %3592 = vmatprep.mubr.f32.mxu0 0.0
      %3593 = vmatmul.mubr.f32.gmra.mrb[0].mxu0 %v1115
      %v3594 = vpop.f32.mrb[0].mxu0
      %v3595 = vadd.f32 %v952, %v3594
      %v3596 = vpop.f32.mrb[0].mxu0
      %3597 = vmatprep.mubr.f32.mxu0 0.0
      %3598 = vmatmul.mubr.f32.gmra.mrb[0].mxu0 %v1118
      %v3599 = vpop.f32.mrb[0].mxu0
      %v3600 = vadd.f32 %v952, %v3599
      %v3601 = vpop.f32.mrb[0].mxu0
      %3602 = vmatprep.mubr.f32.mxu0 0.0
      %3603 = vmatmul.mubr.f32.gmra.mrb[0].mxu0 %v1121
      %v3604 = vpop.f32.mrb[0].mxu0
      %v3605 = vadd.f32 %v952, %v3604
      %v3606 = vpop.f32.mrb[0].mxu0
      %3607 = vmatprep.mubr.f32.mxu0 0.0
      %3608 = vmatmul.mubr.f32.gmra.mrb[0].mxu0 %v1124
      %v3609 = vpop.f32.mrb[0].mxu0
      %v3610 = vadd.f32 %v952, %v3609
      %v3611 = vpop.f32.mrb[0].mxu0
      %3612 = vmatprep.mubr.f32.mxu0 0.0
      %3613 = vmatmul.mubr.f32.gmra.mrb[0].mxu0 %v1127
      %v3614 = vpop.f32.mrb[0].mxu0
      %v3615 = vadd.f32 %v952, %v3614
      %v3616 = vpop.f32.mrb[0].mxu0
      %3617 = vmatprep.mubr.f32.mxu0 0.0
      %3618 = vmatmul.mubr.f32.gmra.mrb[0].mxu0 %v1130
      %v3619 = vpop.f32.mrb[0].mxu0
      %v3620 = vadd.f32 %v952, %v3619
      %v3621 = vpop.f32.mrb[0].mxu0
      %3622 = vmatprep.mubr.f32.mxu0 0.0
      %3623 = vmatmul.mubr.f32.gmra.mrb[0].mxu0 %v1133
      %v3624 = vpop.f32.mrb[0].mxu0
      %v3625 = vadd.f32 %v952, %v3624
      %v3626 = vpop.f32.mrb[0].mxu0
      %3627 = vmatprep.mubr.f32.mxu0 0.0
      %3628 = vmatmul.mubr.f32.gmra.mrb[0].mxu0 %v1136
      %v3629 = vpop.f32.mrb[0].mxu0
      %v3630 = vadd.f32 %v952, %v3629
      %v3631 = vpop.f32.mrb[0].mxu0
      %3632 = vmatprep.mubr.f32.mxu0 0.0
      %3633 = vmatmul.mubr.f32.gmra.mrb[0].mxu0 %v1139
      %v3634 = vpop.f32.mrb[0].mxu0
      %v3635 = vadd.f32 %v952, %v3634
      %v3636 = vpop.f32.mrb[0].mxu0
      %3637 = vmatprep.mubr.f32.mxu0 0.0
      %3638 = vmatmul.mubr.f32.gmra.mrb[0].mxu0 %v1142
      %v3639 = vpop.f32.mrb[0].mxu0
      %v3640 = vadd.f32 %v952, %v3639
      %v3641 = vpop.f32.mrb[0].mxu0
      %3642 = vmatprep.mubr.f32.mxu0 0.0
      %3643 = vmatmul.mubr.f32.gmra.mrb[0].mxu0 %v1145
      %v3644 = vpop.f32.mrb[0].mxu0
      %v3645 = vadd.f32 %v952, %v3644
      %v3646 = vpop.f32.mrb[0].mxu0
      %3647 = vmatprep.mubr.f32.mxu0 0.0
      %3648 = vmatmul.mubr.f32.gmra.mrb[0].mxu0 %v1148
      %v3649 = vpop.f32.mrb[0].mxu0
      %v3650 = vadd.f32 %v952, %v3649
      %v3651 = vpop.f32.mrb[0].mxu0
      %3652 = vmatprep.mubr.f32.mxu0 0.0
      %3653 = vmatmul.mubr.f32.gmra.mrb[0].mxu0 %v1151
      %v3654 = vpop.f32.mrb[0].mxu0
      %v3655 = vadd.f32 %v952, %v3654
      %v3656 = vpop.f32.mrb[0].mxu0
      %3657 = vmatprep.mubr.f32.mxu0 0.0
      %3658 = vmatmul.mubr.f32.gmra.mrb[0].mxu0 %v1154
      %v3659 = vpop.f32.mrb[0].mxu0
      %v3660 = vadd.f32 %v952, %v3659
      %v3661 = vpop.f32.mrb[0].mxu0
      %3662 = vmatprep.mubr.f32.mxu0 0.0
      %3663 = vmatmul.mubr.f32.gmra.mrb[0].mxu0 %v1157
      %v3664 = vpop.f32.mrb[0].mxu0
      %v3665 = vadd.f32 %v952, %v3664
      %v3666 = vpop.f32.mrb[0].mxu0
      %3667 = vmatprep.mubr.f32.mxu0 0.0
      %3668 = vmatmul.mubr.f32.gmra.mrb[0].mxu0 %v1160
      %v3669 = vpop.f32.mrb[0].mxu0
      %v3670 = vadd.f32 %v952, %v3669
      %v3671 = vpop.f32.mrb[0].mxu0
      %3672 = vmatprep.mubr.f32.mxu0 0.0
      %3673 = vmatmul.mubr.f32.gmra.mrb[0].mxu0 %v1163
      %v3674 = vpop.f32.mrb[0].mxu0
      %v3675 = vadd.f32 %v952, %v3674
      %v3676 = vpop.f32.mrb[0].mxu0
      %3677 = vmatprep.mubr.f32.mxu0 0.0
      %3678 = vmatmul.mubr.f32.gmra.mrb[0].mxu0 %v1166
      %v3679 = vpop.f32.mrb[0].mxu0
      %v3680 = vadd.f32 %v952, %v3679
      %v3681 = vpop.f32.mrb[0].mxu0
      %3682 = vmatprep.mubr.f32.mxu0 0.0
      %3683 = vmatmul.mubr.f32.gmra.mrb[0].mxu0 %v1169
      %v3684 = vpop.f32.mrb[0].mxu0
      %v3685 = vadd.f32 %v952, %v3684
      %v3686 = vpop.f32.mrb[0].mxu0
      %3687 = vmatprep.mubr.f32.mxu0 0.0
      %3688 = vmatmul.mubr.f32.gmra.mrb[0].mxu0 %v1172
      %v3689 = vpop.f32.mrb[0].mxu0
      %v3690 = vadd.f32 %v952, %v3689
      %v3691 = vpop.f32.mrb[0].mxu0
      %3692 = vmatprep.mubr.f32.mxu0 0.0
      %3693 = vmatmul.mubr.f32.gmra.mrb[0].mxu0 %v1175
      %v3694 = vpop.f32.mrb[0].mxu0
      %v3695 = vadd.f32 %v952, %v3694
      %v3696 = vpop.f32.mrb[0].mxu0
      %3697 = vmatprep.mubr.f32.mxu0 0.0
      %3698 = vmatmul.mubr.f32.gmra.mrb[0].mxu0 %v1178
      %v3699 = vpop.f32.mrb[0].mxu0
      %v3700 = vadd.f32 %v952, %v3699
      %v3701 = vpop.f32.mrb[0].mxu0
      %3702 = vmatprep.mubr.f32.mxu0 0.0
      %3703 = vmatmul.mubr.f32.gmra.mrb[0].mxu0 %v1181
      %v3704 = vpop.f32.mrb[0].mxu0
      %v3705 = vadd.f32 %v952, %v3704
      %v3706 = vpop.f32.mrb[0].mxu0
      %3707 = vmatprep.mubr.f32.mxu0 0.0
      %3708 = vmatmul.mubr.f32.gmra.mrb[0].mxu0 %v1184
      %v3709 = vpop.f32.mrb[0].mxu0
      %v3710 = vadd.f32 %v952, %v3709
      %v3711 = vpop.f32.mrb[0].mxu0
      %3712 = vmatprep.mubr.f32.mxu0 0.0
      %3713 = vmatmul.mubr.f32.gmra.mrb[0].mxu0 %v1187
      %v3714 = vpop.f32.mrb[0].mxu0
      %v3715 = vadd.f32 %v952, %v3714
      %v3716 = vpop.f32.mrb[0].mxu0
      %3717 = vmatprep.mubr.f32.mxu0 0.0
      %3718 = vmatmul.mubr.f32.gmra.mrb[0].mxu0 %v1190
      %v3719 = vpop.f32.mrb[0].mxu0
      %v3720 = vadd.f32 %v952, %v3719
      %v3721 = vpop.f32.mrb[0].mxu0
      %3722 = vmatprep.mubr.f32.mxu0 0.0
      %3723 = vmatmul.mubr.f32.gmra.mrb[0].mxu0 %v1193
      %v3724 = vpop.f32.mrb[0].mxu0
      %v3725 = vadd.f32 %v952, %v3724
      %v3726 = vpop.f32.mrb[0].mxu0
      %3727 = vmatprep.mubr.f32.mxu0 0.0
      %3728 = vmatmul.mubr.f32.gmra.mrb[0].mxu0 %v1196
      %v3729 = vpop.f32.mrb[0].mxu0
      %v3730 = vadd.f32 %v952, %v3729
      %v3731 = vpop.f32.mrb[0].mxu0
      %3732 = vmatprep.mubr.f32.mxu0 0.0
      %3733 = vmatmul.mubr.f32.gmra.mrb[0].mxu0 %v1199
      %v3734 = vpop.f32.mrb[0].mxu0
      %v3735 = vadd.f32 %v952, %v3734
      %v3736 = vpop.f32.mrb[0].mxu0
      %3737 = vmatprep.mubr.f32.mxu0 0.0
      %3738 = vmatmul.mubr.f32.gmra.mrb[0].mxu0 %v1202
      %v3739 = vpop.f32.mrb[0].mxu0
      %v3740 = vadd.f32 %v952, %v3739
      %v3741 = vpop.f32.mrb[0].mxu0
      %3742 = vmatprep.mubr.f32.mxu0 0.0
      %3743 = vmatmul.mubr.f32.gmra.mrb[0].mxu0 %v1205
      %v3744 = vpop.f32.mrb[0].mxu0
      %v3745 = vadd.f32 %v952, %v3744
      %v3746 = vpop.f32.mrb[0].mxu0
      %3747 = vmatprep.mubr.f32.mxu0 0.0
      %3748 = vmatmul.mubr.f32.gmra.mrb[0].mxu0 %v1208
      %v3749 = vpop.f32.mrb[0].mxu0
      %v3750 = vadd.f32 %v952, %v3749
      %v3751 = vpop.f32.mrb[0].mxu0
      %3752 = vmatprep.mubr.f32.mxu0 0.0
      %3753 = vmatmul.mubr.f32.gmra.mrb[0].mxu0 %v1211
      %v3754 = vpop.f32.mrb[0].mxu0
      %v3755 = vadd.f32 %v952, %v3754
      %v3756 = vpop.f32.mrb[0].mxu0
      %3757 = vmatprep.mubr.f32.mxu0 0.0
      %3758 = vmatmul.mubr.f32.gmra.mrb[0].mxu0 %v1214
      %v3759 = vpop.f32.mrb[0].mxu0
      %v3760 = vadd.f32 %v952, %v3759
      %v3761 = vpop.f32.mrb[0].mxu0
      %3762 = vmatprep.mubr.f32.mxu0 0.0
      %3763 = vmatmul.mubr.f32.gmra.mrb[0].mxu0 %v1217
      %v3764 = vpop.f32.mrb[0].mxu0
      %v3765 = vadd.f32 %v952, %v3764
      %v3766 = vpop.f32.mrb[0].mxu0
      %3767 = vmatprep.mubr.f32.mxu0 0.0
      %3768 = vmatmul.mubr.f32.gmra.mrb[0].mxu0 %v1220
      %v3769 = vpop.f32.mrb[0].mxu0
      %v3770 = vadd.f32 %v952, %v3769
      %v3771 = vpop.f32.mrb[0].mxu0
      %3772 = vmatprep.mubr.f32.mxu0 0.0
      %3773 = vmatmul.mubr.f32.gmra.mrb[0].mxu0 %v1223
      %v3774 = vpop.f32.mrb[0].mxu0
      %v3775 = vadd.f32 %v952, %v3774
      %v3776 = vpop.f32.mrb[0].mxu0
      %3777 = vmatprep.mubr.f32.mxu0 0.0
      %3778 = vmatmul.mubr.f32.gmra.mrb[0].mxu0 %v1226
      %v3779 = vpop.f32.mrb[0].mxu0
      %v3780 = vadd.f32 %v952, %v3779
      %v3781 = vpop.f32.mrb[0].mxu0
      %3782 = vmatprep.mubr.f32.mxu0 0.0
      %3783 = vmatmul.mubr.f32.gmra.mrb[0].mxu0 %v1229
      %v3784 = vpop.f32.mrb[0].mxu0
      %v3785 = vadd.f32 %v952, %v3784
      %v3786 = vpop.f32.mrb[0].mxu0
      %3787 = vmatprep.mubr.f32.mxu0 0.0
      %3788 = vmatmul.mubr.f32.gmra.mrb[0].mxu0 %v1232
      %v3789 = vpop.f32.mrb[0].mxu0
      %v3790 = vadd.f32 %v952, %v3789
      %v3791 = vpop.f32.mrb[0].mxu0
      %3792 = vmatprep.mubr.f32.mxu0 0.0
      %3793 = vmatmul.mubr.f32.gmra.mrb[0].mxu0 %v1235
      %v3794 = vpop.f32.mrb[0].mxu0
      %v3795 = vadd.f32 %v952, %v3794
      %v3796 = vpop.f32.mrb[0].mxu0
      %3797 = vmatprep.mubr.f32.mxu0 0.0
      %3798 = vmatmul.mubr.f32.gmra.mrb[0].mxu0 %v1238
      %v3799 = vpop.f32.mrb[0].mxu0
      %v3800 = vadd.f32 %v952, %v3799
      %v3801 = vpop.f32.mrb[0].mxu0
      %3802 = vmatprep.mubr.f32.mxu0 0.0
      %3803 = vmatmul.mubr.f32.gmra.mrb[0].mxu0 %v1241
      %v3804 = vpop.f32.mrb[0].mxu0
      %v3805 = vadd.f32 %v952, %v3804
      %v3806 = vpop.f32.mrb[0].mxu0
      %3807 = vmatprep.mubr.f32.mxu0 0.0
      %3808 = vmatmul.mubr.f32.gmra.mrb[0].mxu0 %v1244
      %v3809 = vpop.f32.mrb[0].mxu0
      %v3810 = vadd.f32 %v952, %v3809
      %v3811 = vpop.f32.mrb[0].mxu0
      %3812 = vmatprep.mubr.f32.mxu0 0.0
      %3813 = vmatmul.mubr.f32.gmra.mrb[0].mxu0 %v1247
      %v3814 = vpop.f32.mrb[0].mxu0
      %v3815 = vadd.f32 %v952, %v3814
      %v3816 = vpop.f32.mrb[0].mxu0
      %3817 = vmatprep.mubr.f32.mxu0 0.0
      %3818 = vmatmul.mubr.f32.gmra.mrb[0].mxu0 %v1250
      %v3819 = vpop.f32.mrb[0].mxu0
      %v3820 = vadd.f32 %v952, %v3819
      %v3821 = vpop.f32.mrb[0].mxu0
      %3822 = vmatprep.mubr.f32.mxu0 0.0
      %3823 = vmatmul.mubr.f32.gmra.mrb[0].mxu0 %v1253
      %v3824 = vpop.f32.mrb[0].mxu0
      %v3825 = vadd.f32 %v952, %v3824
      %v3826 = vpop.f32.mrb[0].mxu0
      %3827 = vmatprep.mubr.f32.mxu0 0.0
      %3828 = vmatmul.mubr.f32.gmra.mrb[0].mxu0 %v1256
      %v3829 = vpop.f32.mrb[0].mxu0
      %v3830 = vadd.f32 %v952, %v3829
      %v3831 = vpop.f32.mrb[0].mxu0
      %3832 = vmatprep.mubr.f32.mxu0 0.0
      %3833 = vmatmul.mubr.f32.gmra.mrb[0].mxu0 %v1259
      %v3834 = vpop.f32.mrb[0].mxu0
      %v3835 = vadd.f32 %v952, %v3834
      %v3836 = vpop.f32.mrb[0].mxu0
      %3837 = vmatprep.mubr.f32.mxu0 0.0
      %3838 = vmatmul.mubr.f32.gmra.mrb[0].mxu0 %v1262
      %v3839 = vpop.f32.mrb[0].mxu0
      %v3840 = vadd.f32 %v952, %v3839
      %v3841 = vpop.f32.mrb[0].mxu0
      %3842 = vmatprep.mubr.f32.mxu0 0.0
      %3843 = vmatmul.mubr.f32.gmra.mrb[0].mxu0 %v1265
      %v3844 = vpop.f32.mrb[0].mxu0
      %v3845 = vadd.f32 %v952, %v3844
      %v3846 = vpop.f32.mrb[0].mxu0
      %3847 = vmatprep.mubr.f32.mxu0 0.0
      %3848 = vmatmul.mubr.f32.gmra.mrb[0].mxu0 %v1268
      %v3849 = vpop.f32.mrb[0].mxu0
      %v3850 = vadd.f32 %v952, %v3849
      %v3851 = vpop.f32.mrb[0].mxu0
      %3852 = vmatprep.mubr.f32.mxu0 0.0
      %3853 = vmatmul.mubr.f32.gmra.mrb[0].mxu0 %v1271
      %v3854 = vpop.f32.mrb[0].mxu0
      %v3855 = vadd.f32 %v952, %v3854
      %v3856 = vpop.f32.mrb[0].mxu0
      %3857 = vmatprep.mubr.f32.mxu0 0.0
      %3858 = vmatmul.mubr.f32.gmra.mrb[0].mxu0 %v1274
      %v3859 = vpop.f32.mrb[0].mxu0
      %v3860 = vadd.f32 %v952, %v3859
      %v3861 = vpop.f32.mrb[0].mxu0
      %3862 = vmatprep.mubr.f32.mxu0 0.0
      %3863 = vmatmul.mubr.f32.gmra.mrb[0].mxu0 %v1277
      %v3864 = vpop.f32.mrb[0].mxu0
      %v3865 = vadd.f32 %v952, %v3864
      %v3866 = vpop.f32.mrb[0].mxu0
      %3867 = vmatprep.mubr.f32.mxu0 0.0
      %3868 = vmatmul.mubr.f32.gmra.mrb[0].mxu0 %v1280
      %v3869 = vpop.f32.mrb[0].mxu0
      %v3870 = vadd.f32 %v952, %v3869
      %v3871 = vpop.f32.mrb[0].mxu0
      %3872 = vmatprep.mubr.f32.mxu0 0.0
      %3873 = vmatmul.mubr.f32.gmra.mrb[0].mxu0 %v1283
      %v3874 = vpop.f32.mrb[0].mxu0
      %v3875 = vadd.f32 %v952, %v3874
      %v3876 = vpop.f32.mrb[0].mxu0
      %3877 = vmatprep.mubr.f32.mxu0 0.0
      %3878 = vmatmul.mubr.f32.gmra.mrb[0].mxu0 %v1286
      %v3879 = vpop.f32.mrb[0].mxu0
      %v3880 = vadd.f32 %v952, %v3879
      %v3881 = vpop.f32.mrb[0].mxu0
      %3882 = vmatprep.mubr.f32.mxu0 0.0
      %3883 = vmatmul.mubr.f32.gmra.mrb[0].mxu0 %v1289
      %v3884 = vpop.f32.mrb[0].mxu0
      %v3885 = vadd.f32 %v952, %v3884
      %v3886 = vpop.f32.mrb[0].mxu0
      %3887 = vmatprep.mubr.f32.mxu0 0.0
      %3888 = vmatmul.mubr.f32.gmra.mrb[0].mxu0 %v1292
      %v3889 = vpop.f32.mrb[0].mxu0
      %v3890 = vadd.f32 %v952, %v3889
      %v3891 = vpop.f32.mrb[0].mxu0
      %3892 = vmatprep.mubr.f32.mxu0 0.0
      %3893 = vmatmul.mubr.f32.gmra.mrb[0].mxu0 %v1295
      %v3894 = vpop.f32.mrb[0].mxu0
      %v3895 = vadd.f32 %v952, %v3894
      %v3896 = vpop.f32.mrb[0].mxu0
      %3897 = vmatprep.mubr.f32.mxu0 0.0
      %3898 = vmatmul.mubr.f32.gmra.mrb[0].mxu0 %v1298
      %v3899 = vpop.f32.mrb[0].mxu0
      %v3900 = vadd.f32 %v952, %v3899
      %v3901 = vpop.f32.mrb[0].mxu0
      %3902 = vmatprep.mubr.f32.mxu0 0.0
      %3903 = vmatmul.mubr.f32.gmra.mrb[0].mxu0 %v1301
      %v3904 = vpop.f32.mrb[0].mxu0
      %v3905 = vadd.f32 %v952, %v3904
      %v3906 = vpop.f32.mrb[0].mxu0
      %3907 = vmatprep.mubr.f32.mxu0 0.0
      %3908 = vmatmul.mubr.f32.gmra.mrb[0].mxu0 %v1304
      %v3909 = vpop.f32.mrb[0].mxu0
      %v3910 = vadd.f32 %v952, %v3909
      %v3911 = vpop.f32.mrb[0].mxu0
      %3912 = vmatprep.mubr.f32.mxu0 0.0
      %3913 = vmatmul.mubr.f32.gmra.mrb[0].mxu0 %v1307
      %v3914 = vpop.f32.mrb[0].mxu0
      %v3915 = vadd.f32 %v952, %v3914
      %v3916 = vpop.f32.mrb[0].mxu0
      %3917 = vmatprep.mubr.f32.mxu0 0.0
      %3918 = vmatmul.mubr.f32.gmra.mrb[0].mxu0 %v1310
      %v3919 = vpop.f32.mrb[0].mxu0
      %v3920 = vadd.f32 %v952, %v3919
      %v3921 = vpop.f32.mrb[0].mxu0
      %3922 = vmatprep.mubr.f32.mxu0 0.0
      %3923 = vmatmul.mubr.f32.gmra.mrb[0].mxu0 %v1313
      %v3924 = vpop.f32.mrb[0].mxu0
      %v3925 = vadd.f32 %v952, %v3924
      %v3926 = vpop.f32.mrb[0].mxu0
      %3927 = vmatprep.mubr.f32.mxu0 0.0
      %3928 = vmatmul.mubr.f32.gmra.mrb[0].mxu0 %v1316
      %v3929 = vpop.f32.mrb[0].mxu0
      %v3930 = vadd.f32 %v952, %v3929
      %v3931 = vpop.f32.mrb[0].mxu0
      %3932 = vmatprep.mubr.f32.mxu0 0.0
      %3933 = vmatmul.mubr.f32.gmra.mrb[0].mxu0 %v1319
      %v3934 = vpop.f32.mrb[0].mxu0
      %v3935 = vadd.f32 %v952, %v3934
      %v3936 = vpop.f32.mrb[0].mxu0
      %3937 = vmatprep.mubr.f32.mxu0 0.0
      %3938 = vmatmul.mubr.f32.gmra.mrb[0].mxu0 %v1322
      %v3939 = vpop.f32.mrb[0].mxu0
      %v3940 = vadd.f32 %v952, %v3939
      %v3941 = vpop.f32.mrb[0].mxu0
      %3942 = vmatprep.mubr.f32.mxu0 0.0
      %3943 = vmatmul.mubr.f32.gmra.mrb[0].mxu0 %v1325
      %v3944 = vpop.f32.mrb[0].mxu0
      %v3945 = vadd.f32 %v952, %v3944
      %v3946 = vpop.f32.mrb[0].mxu0
      %3947 = vmatprep.mubr.f32.mxu0 0.0
      %3948 = vmatmul.mubr.f32.gmra.mrb[0].mxu0 %v1328
      %v3949 = vpop.f32.mrb[0].mxu0
      %v3950 = vadd.f32 %v952, %v3949
      %v3951 = vpop.f32.mrb[0].mxu0
      %3952 = vmatprep.mubr.f32.mxu0 0.0
      %3953 = vmatmul.mubr.f32.gmra.mrb[0].mxu0 %v1331
      %v3954 = vpop.f32.mrb[0].mxu0
      %v3955 = vadd.f32 %v952, %v3954
      %v3956 = vpop.f32.mrb[0].mxu0
      %3957 = vmatprep.mubr.f32.mxu0 0.0
      %3958 = vmatmul.mubr.f32.gmra.mrb[0].mxu0 %v1334
      %v3959 = vpop.f32.mrb[0].mxu0
      %v3960 = vadd.f32 %v952, %v3959
      %v3961 = vpop.f32.mrb[0].mxu0
      %3962 = vmatprep.mubr.f32.mxu0 0.0
      %3963 = vmatmul.mubr.f32.gmra.mrb[0].mxu0 %v1337
      %v3964 = vpop.f32.mrb[0].mxu0
      %v3965 = vadd.f32 %v952, %v3964
      %v3966 = vpop.f32.mrb[0].mxu0
      %3967 = vmatprep.mubr.f32.mxu0 0.0
      %3968 = vmatmul.mubr.f32.gmra.mrb[0].mxu0 %v1340
      %v3969 = vpop.f32.mrb[0].mxu0
      %v3970 = vadd.f32 %v952, %v3969
      %v3971 = vpop.f32.mrb[0].mxu0
      %3972 = vmatprep.mubr.f32.mxu0 0.0
      %3973 = vmatmul.mubr.f32.gmra.mrb[0].mxu0 %v1343
      %v3974 = vpop.f32.mrb[0].mxu0
      %v3975 = vadd.f32 %v952, %v3974
      %v3976 = vpop.f32.mrb[0].mxu0
      %3977 = vmatprep.mubr.f32.mxu0 0.0
      %3978 = vmatmul.mubr.f32.gmra.mrb[0].mxu0 %v1346
      %v3979 = vpop.f32.mrb[0].mxu0
      %v3980 = vadd.f32 %v952, %v3979
      %v3981 = vpop.f32.mrb[0].mxu0
      %3982 = vmatprep.mubr.f32.mxu0 0.0
      %3983 = vmatmul.mubr.f32.gmra.mrb[0].mxu0 %v1349
      %v3984 = vpop.f32.mrb[0].mxu0
      %v3985 = vadd.f32 %v952, %v3984
      %v3986 = vpop.f32.mrb[0].mxu0
      %3987 = vmatprep.mubr.f32.mxu0 0.0
      %3988 = vmatmul.mubr.f32.gmra.mrb[0].mxu0 %v1352
      %v3989 = vpop.f32.mrb[0].mxu0
      %v3990 = vadd.f32 %v952, %v3989
      %v3991 = vpop.f32.mrb[0].mxu0
      %3992 = vmatprep.mubr.f32.mxu0 0.0
      %3993 = vmatmul.mubr.f32.gmra.mrb[0].mxu0 %v1355
      %v3994 = vpop.f32.mrb[0].mxu0
      %v3995 = vadd.f32 %v952, %v3994
      %v3996 = vpop.f32.mrb[0].mxu0
      %3997 = vmatprep.mubr.f32.mxu0 0.0
      %3998 = vmatmul.mubr.f32.gmra.mrb[0].mxu0 %v1358
      %v3999 = vpop.f32.mrb[0].mxu0
      %v4000 = vadd.f32 %v952, %v3999
      %v4001 = vpop.f32.mrb[0].mxu0
      %4002 = vmatprep.mubr.f32.mxu0 0.0
      %4003 = vmatmul.mubr.f32.gmra.mrb[0].mxu0 %v1361
      %v4004 = vpop.f32.mrb[0].mxu0
      %v4005 = vadd.f32 %v952, %v4004
      %v4006 = vpop.f32.mrb[0].mxu0
      %4007 = vmatprep.mubr.f32.mxu0 0.0
      %4008 = vmatmul.mubr.f32.gmra.mrb[0].mxu0 %v1364
      %v4009 = vpop.f32.mrb[0].mxu0
      %v4010 = vadd.f32 %v952, %v4009
      %v4011 = vpop.f32.mrb[0].mxu0
      %4012 = vmatprep.mubr.f32.mxu0 0.0
      %4013 = vmatmul.mubr.f32.gmra.mrb[0].mxu0 %v1367
      %v4014 = vpop.f32.mrb[0].mxu0
      %v4015 = vadd.f32 %v952, %v4014
      %v4016 = vpop.f32.mrb[0].mxu0
      %4017 = vmatprep.mubr.f32.mxu0 0.0
      %4018 = vmatmul.mubr.f32.gmra.mrb[0].mxu0 %v1370
      %v4019 = vpop.f32.mrb[0].mxu0
      %v4020 = vadd.f32 %v952, %v4019
      %v4021 = vpop.f32.mrb[0].mxu0
      %4022 = vmatprep.mubr.f32.mxu0 0.0
      %4023 = vmatmul.mubr.f32.gmra.mrb[0].mxu0 %v1373
      %v4024 = vpop.f32.mrb[0].mxu0
      %v4025 = vadd.f32 %v952, %v4024
      %v4026 = vpop.f32.mrb[0].mxu0
      %4027 = vmatprep.mubr.f32.mxu0 0.0
      %4028 = vmatmul.mubr.f32.gmra.mrb[0].mxu0 %v1376
      %v4029 = vpop.f32.mrb[0].mxu0
      %v4030 = vadd.f32 %v952, %v4029
      %v4031 = vpop.f32.mrb[0].mxu0
      %4032 = vmatprep.mubr.f32.mxu0 0.0
      %4033 = vmatmul.mubr.f32.gmra.mrb[0].mxu0 %v1379
      %v4034 = vpop.f32.mrb[0].mxu0
      %v4035 = vadd.f32 %v952, %v4034
      %v4036 = vpop.f32.mrb[0].mxu0
      %4037 = vmatprep.mubr.f32.mxu0 0.0
      %4038 = vmatmul.mubr.f32.gmra.mrb[0].mxu0 %v1382
      %v4039 = vpop.f32.mrb[0].mxu0
      %v4040 = vadd.f32 %v952, %v4039
      %v4041 = vpop.f32.mrb[0].mxu0
      %4042 = vmatprep.mubr.f32.mxu0 0.0
      %4043 = vmatmul.mubr.f32.gmra.mrb[0].mxu0 %v1385
      %v4044 = vpop.f32.mrb[0].mxu0
      %v4045 = vadd.f32 %v952, %v4044
      %v4046 = vpop.f32.mrb[0].mxu0
      %4047 = vmatprep.mubr.f32.mxu0 0.0
      %4048 = vmatmul.mubr.f32.gmra.mrb[0].mxu0 %v1388
      %v4049 = vpop.f32.mrb[0].mxu0
      %v4050 = vadd.f32 %v952, %v4049
      %v4051 = vpop.f32.mrb[0].mxu0
      %4052 = vmatprep.mubr.f32.mxu0 0.0
      %4053 = vmatmul.mubr.f32.gmra.mrb[0].mxu0 %v1391
      %v4054 = vpop.f32.mrb[0].mxu0
      %v4055 = vadd.f32 %v952, %v4054
      %v4056 = vpop.f32.mrb[0].mxu0
      %4057 = vmatprep.mubr.f32.mxu0 0.0
      %4058 = vmatmul.mubr.f32.gmra.mrb[0].mxu0 %v1394
      %v4059 = vpop.f32.mrb[0].mxu0
      %v4060 = vadd.f32 %v952, %v4059
      %v4061 = vpop.f32.mrb[0].mxu0
      %4062 = vmatprep.mubr.f32.mxu0 0.0
      %4063 = vmatmul.mubr.f32.gmra.mrb[0].mxu0 %v1397
      %v4064 = vpop.f32.mrb[0].mxu0
      %v4065 = vadd.f32 %v952, %v4064
      %v4066 = vpop.f32.mrb[0].mxu0
      %4067 = vmatprep.mubr.f32.mxu0 0.0
      %4068 = vmatmul.mubr.f32.gmra.mrb[0].mxu0 %v1400
      %v4069 = vpop.f32.mrb[0].mxu0
      %v4070 = vadd.f32 %v952, %v4069
      %v4071 = vpop.f32.mrb[0].mxu0
      %4072 = vmatprep.mubr.f32.mxu0 0.0
      %4073 = vmatmul.mubr.f32.gmra.mrb[0].mxu0 %v1403
      %v4074 = vpop.f32.mrb[0].mxu0
      %v4075 = vadd.f32 %v952, %v4074
      %v4076 = vpop.f32.mrb[0].mxu0
      %4077 = vmatprep.mubr.f32.mxu0 0.0
      %4078 = vmatmul.mubr.f32.gmra.mrb[0].mxu0 %v1406
      %v4079 = vpop.f32.mrb[0].mxu0
      %v4080 = vadd.f32 %v952, %v4079
      %v4081 = vpop.f32.mrb[0].mxu0
      %4082 = vmatprep.mubr.f32.mxu0 0.0
      %4083 = vmatmul.mubr.f32.gmra.mrb[0].mxu0 %v1409
      %v4084 = vpop.f32.mrb[0].mxu0
      %v4085 = vadd.f32 %v952, %v4084
      %v4086 = vpop.f32.mrb[0].mxu0
      %4087 = vmatprep.mubr.f32.mxu0 0.0
      %4088 = vmatmul.mubr.f32.gmra.mrb[0].mxu0 %v1412
      %v4089 = vpop.f32.mrb[0].mxu0
      %v4090 = vadd.f32 %v952, %v4089
      %v4091 = vpop.f32.mrb[0].mxu0
      %4092 = vmatprep.mubr.f32.mxu0 0.0
      %4093 = vmatmul.mubr.f32.gmra.mrb[0].mxu0 %v1415
      %v4094 = vpop.f32.mrb[0].mxu0
      %v4095 = vadd.f32 %v952, %v4094
      %v4096 = vpop.f32.mrb[0].mxu0
      %4097 = vmatprep.mubr.f32.mxu0 0.0
      %4098 = vmatmul.mubr.f32.gmra.mrb[0].mxu0 %v1418
      %v4099 = vpop.f32.mrb[0].mxu0
      %v4100 = vadd.f32 %v952, %v4099
      %v4101 = vpop.f32.mrb[0].mxu0
      %4102 = vmatprep.mubr.f32.mxu0 0.0
      %4103 = vmatmul.mubr.f32.gmra.mrb[0].mxu0 %v1421
      %v4104 = vpop.f32.mrb[0].mxu0
      %v4105 = vadd.f32 %v952, %v4104
      %v4106 = vpop.f32.mrb[0].mxu0
      %4107 = vmatprep.mubr.f32.mxu0 0.0
      %4108 = vmatmul.mubr.f32.gmra.mrb[0].mxu0 %v1424
      %v4109 = vpop.f32.mrb[0].mxu0
      %v4110 = vadd.f32 %v952, %v4109
      %v4111 = vpop.f32.mrb[0].mxu0
      %4112 = vmatprep.mubr.f32.mxu0 0.0
      %4113 = vmatmul.mubr.f32.gmra.mrb[0].mxu0 %v1427
      %v4114 = vpop.f32.mrb[0].mxu0
      %v4115 = vadd.f32 %v952, %v4114
      %v4116 = vpop.f32.mrb[0].mxu0
      %4117 = vmatprep.mubr.f32.mxu0 0.0
      %4118 = vmatmul.mubr.f32.gmra.mrb[0].mxu0 %v1430
      %v4119 = vpop.f32.mrb[0].mxu0
      %v4120 = vadd.f32 %v952, %v4119
      %v4121 = vpop.f32.mrb[0].mxu0
      %4122 = vmatprep.mubr.f32.mxu0 0.0
      %4123 = vmatmul.mubr.f32.gmra.mrb[0].mxu0 %v1433
      %v4124 = vpop.f32.mrb[0].mxu0
      %v4125 = vadd.f32 %v952, %v4124
      %v4126 = vpop.f32.mrb[0].mxu0
      %4127 = vmatprep.mubr.f32.mxu0 0.0
      %4128 = vmatmul.mubr.f32.gmra.mrb[0].mxu0 %v1436
      %v4129 = vpop.f32.mrb[0].mxu0
      %v4130 = vadd.f32 %v952, %v4129
      %v4131 = vpop.f32.mrb[0].mxu0
      %4132 = vmatprep.mubr.f32.mxu0 0.0
      %4133 = vmatmul.mubr.f32.gmra.mrb[0].mxu0 %v1439
      %v4134 = vpop.f32.mrb[0].mxu0
      %v4135 = vadd.f32 %v952, %v4134
      %v4136 = vpop.f32.mrb[0].mxu0
      %4137 = vmatprep.mubr.f32.mxu0 0.0
      %4138 = vmatmul.mubr.f32.gmra.mrb[0].mxu0 %v1442
      %v4139 = vpop.f32.mrb[0].mxu0
      %v4140 = vadd.f32 %v952, %v4139
      %v4141 = vpop.f32.mrb[0].mxu0
      %4142 = vmatprep.mubr.f32.mxu0 0.0
      %4143 = vmatmul.mubr.f32.gmra.mrb[0].mxu0 %v1445
      %v4144 = vpop.f32.mrb[0].mxu0
      %v4145 = vadd.f32 %v952, %v4144
      %v4146 = vpop.f32.mrb[0].mxu0
      %4147 = vmatprep.mubr.f32.mxu0 0.0
      %4148 = vmatmul.mubr.f32.gmra.mrb[0].mxu0 %v1448
      %v4149 = vpop.f32.mrb[0].mxu0
      %v4150 = vadd.f32 %v952, %v4149
      %v4151 = vpop.f32.mrb[0].mxu0
      %4152 = vmatprep.mubr.f32.mxu0 0.0
      %4153 = vmatmul.mubr.f32.gmra.mrb[0].mxu0 %v1451
      %v4154 = vpop.f32.mrb[0].mxu0
      %v4155 = vadd.f32 %v952, %v4154
      %v4156 = vpop.f32.mrb[0].mxu0
      %4157 = vmatprep.mubr.f32.mxu0 0.0
      %4158 = vmatmul.mubr.f32.gmra.mrb[0].mxu0 %v1454
      %v4159 = vpop.f32.mrb[0].mxu0
      %v4160 = vadd.f32 %v952, %v4159
      %v4161 = vpop.f32.mrb[0].mxu0
      %4162 = vmatprep.mubr.f32.mxu0 0.0
      %4163 = vmatmul.mubr.f32.gmra.mrb[0].mxu0 %v1457
      %v4164 = vpop.f32.mrb[0].mxu0
      %v4165 = vadd.f32 %v952, %v4164
      %v4166 = vpop.f32.mrb[0].mxu0
      %4167 = vmatprep.mubr.f32.mxu0 0.0
      %4168 = vmatmul.mubr.f32.gmra.mrb[0].mxu0 %v1460
      %v4169 = vpop.f32.mrb[0].mxu0
      %v4170 = vadd.f32 %v952, %v4169
      %v4171 = vpop.f32.mrb[0].mxu0
      %4172 = vmatprep.mubr.f32.mxu0 0.0
      %4173 = vmatmul.mubr.f32.gmra.mrb[0].mxu0 %v1463
      %v4174 = vpop.f32.mrb[0].mxu0
      %v4175 = vadd.f32 %v952, %v4174
      %v4176 = vpop.f32.mrb[0].mxu0
      %4177 = vmatprep.mubr.f32.mxu0 0.0
      %4178 = vmatmul.mubr.f32.gmra.mrb[0].mxu0 %v1466
      %v4179 = vpop.f32.mrb[0].mxu0
      %v4180 = vadd.f32 %v952, %v4179
      %v4181 = vpop.f32.mrb[0].mxu0
      %4182 = vmatprep.mubr.f32.mxu0 0.0
      %4183 = vmatmul.mubr.f32.gmra.mrb[0].mxu0 %v1469
      %v4184 = vpop.f32.mrb[0].mxu0
      %v4185 = vadd.f32 %v952, %v4184
      %v4186 = vpop.f32.mrb[0].mxu0
      %4187 = vmatprep.mubr.f32.mxu0 0.0
      %4188 = vmatmul.mubr.f32.gmra.mrb[0].mxu0 %v1472
      %v4189 = vpop.f32.mrb[0].mxu0
      %v4190 = vadd.f32 %v952, %v4189
      %v4191 = vpop.f32.mrb[0].mxu0
      %4192 = vmatprep.mubr.f32.mxu0 0.0
      %4193 = vmatmul.mubr.f32.gmra.mrb[0].mxu0 %v1475
      %v4194 = vpop.f32.mrb[0].mxu0
      %v4195 = vadd.f32 %v952, %v4194
      %v4196 = vpop.f32.mrb[0].mxu0
      %4197 = vmatprep.mubr.f32.mxu0 0.0
      %4198 = vmatmul.mubr.f32.gmra.mrb[0].mxu0 %v1478
      %v4199 = vpop.f32.mrb[0].mxu0
      %v4200 = vadd.f32 %v952, %v4199
      %v4201 = vpop.f32.mrb[0].mxu0
      %4202 = vmatprep.mubr.f32.mxu0 0.0
      %4203 = vmatmul.mubr.f32.gmra.mrb[0].mxu0 %v1481
      %v4204 = vpop.f32.mrb[0].mxu0
      %v4205 = vadd.f32 %v952, %v4204
      %v4206 = vpop.f32.mrb[0].mxu0
      %4207 = vmatprep.mubr.f32.mxu0 0.0
      %4208 = vmatmul.mubr.f32.gmra.mrb[0].mxu0 %v1484
      %v4209 = vpop.f32.mrb[0].mxu0
      %v4210 = vadd.f32 %v952, %v4209
      %v4211 = vpop.f32.mrb[0].mxu0
      %4212 = vmatprep.mubr.f32.mxu0 0.0
      %4213 = vmatmul.mubr.f32.gmra.mrb[0].mxu0 %v1487
      %v4214 = vpop.f32.mrb[0].mxu0
      %v4215 = vadd.f32 %v952, %v4214
      %v4216 = vpop.f32.mrb[0].mxu0
      %4217 = vmatprep.mubr.f32.mxu0 0.0
      %4218 = vmatmul.mubr.f32.gmra.mrb[0].mxu0 %v1490
      %v4219 = vpop.f32.mrb[0].mxu0
      %v4220 = vadd.f32 %v952, %v4219
      %v4221 = vpop.f32.mrb[0].mxu0
      %4222 = vmatprep.mubr.f32.mxu0 0.0
      %4223 = vmatmul.mubr.f32.gmra.mrb[0].mxu0 %v1493
      %v4224 = vpop.f32.mrb[0].mxu0
      %v4225 = vadd.f32 %v952, %v4224
      %v4226 = vpop.f32.mrb[0].mxu0
      %4227 = vmatprep.mubr.f32.mxu0 0.0
      %4228 = vmatmul.mubr.f32.gmra.mrb[0].mxu0 %v1496
      %v4229 = vpop.f32.mrb[0].mxu0
      %v4230 = vadd.f32 %v952, %v4229
      %v4231 = vpop.f32.mrb[0].mxu0
      %4232 = vmatprep.mubr.f32.mxu0 0.0
      %4233 = vmatmul.mubr.f32.gmra.mrb[0].mxu0 %v1499
      %v4234 = vpop.f32.mrb[0].mxu0
      %v4235 = vadd.f32 %v952, %v4234
      %v4236 = vpop.f32.mrb[0].mxu0
      %4237 = vmatprep.mubr.f32.mxu0 0.0
      %4238 = vmatmul.mubr.f32.gmra.mrb[0].mxu0 %v1502
      %v4239 = vpop.f32.mrb[0].mxu0
      %v4240 = vadd.f32 %v952, %v4239
      %v4241 = vpop.f32.mrb[0].mxu0
      %4242 = vmatprep.mubr.f32.mxu0 0.0
      %4243 = vmatmul.mubr.f32.gmra.mrb[0].mxu0 %v1505
      %v4244 = vpop.f32.mrb[0].mxu0
      %v4245 = vadd.f32 %v952, %v4244
      %v4246 = vpop.f32.mrb[0].mxu0
      %4247 = vmatprep.mubr.f32.mxu0 0.0
      %4248 = vmatmul.mubr.f32.gmra.mrb[0].mxu0 %v1508
      %v4249 = vpop.f32.mrb[0].mxu0
      %v4250 = vadd.f32 %v952, %v4249
      %v4251 = vpop.f32.mrb[0].mxu0
      %4252 = vmatprep.mubr.f32.mxu0 0.0
      %4253 = vmatmul.mubr.f32.gmra.mrb[0].mxu0 %v1511
      %v4254 = vpop.f32.mrb[0].mxu0
      %v4255 = vadd.f32 %v952, %v4254
      %v4256 = vpop.f32.mrb[0].mxu0
      %4257 = vmatprep.mubr.f32.mxu0 0.0
      %4258 = vmatmul.mubr.f32.gmra.mrb[0].mxu0 %v1514
      %v4259 = vpop.f32.mrb[0].mxu0
      %v4260 = vadd.f32 %v952, %v4259
      %v4261 = vpop.f32.mrb[0].mxu0
      %4262 = vmatprep.mubr.f32.mxu0 0.0
      %4263 = vmatmul.mubr.f32.gmra.mrb[0].mxu0 %v1517
      %v4264 = vpop.f32.mrb[0].mxu0
      %v4265 = vadd.f32 %v952, %v4264
      %v4266 = vpop.f32.mrb[0].mxu0
      %4267 = vmatprep.mubr.f32.mxu0 0.0
      %4268 = vmatmul.mubr.f32.gmra.mrb[0].mxu0 %v1520
      %v4269 = vpop.f32.mrb[0].mxu0
      %v4270 = vadd.f32 %v952, %v4269
      %v4271 = vpop.f32.mrb[0].mxu0
      %4272 = vmatprep.mubr.f32.mxu0 0.0
      %4273 = vmatmul.mubr.f32.gmra.mrb[0].mxu0 %v1523
      %v4274 = vpop.f32.mrb[0].mxu0
      %v4275 = vadd.f32 %v952, %v4274
      %v4276 = vpop.f32.mrb[0].mxu0
      %4277 = vmatprep.mubr.f32.mxu0 0.0
      %4278 = vmatmul.mubr.f32.gmra.mrb[0].mxu0 %v1526
      %v4279 = vpop.f32.mrb[0].mxu0
      %v4280 = vadd.f32 %v952, %v4279
      %v4281 = vpop.f32.mrb[0].mxu0
      %4282 = vmatprep.mubr.f32.mxu0 0.0
      %4283 = vmatmul.mubr.f32.gmra.mrb[0].mxu0 %v1529
      %v4284 = vpop.f32.mrb[0].mxu0
      %v4285 = vadd.f32 %v952, %v4284
      %v4286 = vpop.f32.mrb[0].mxu0
      %4287 = vmatprep.mubr.f32.mxu0 0.0
      %4288 = vmatmul.mubr.f32.gmra.mrb[0].mxu0 %v1532
      %v4289 = vpop.f32.mrb[0].mxu0
      %v4290 = vadd.f32 %v952, %v4289
      %v4291 = vpop.f32.mrb[0].mxu0
      %4292 = vmatprep.mubr.f32.mxu0 0.0
      %4293 = vmatmul.mubr.f32.gmra.mrb[0].mxu0 %v1535
      %v4294 = vpop.f32.mrb[0].mxu0
      %v4295 = vadd.f32 %v952, %v4294
      %v4296 = vpop.f32.mrb[0].mxu0
      %4297 = vmatprep.mubr.f32.mxu0 0.0
      %4298 = vmatmul.mubr.f32.gmra.mrb[0].mxu0 %v1538
      %v4299 = vpop.f32.mrb[0].mxu0
      %v4300 = vadd.f32 %v952, %v4299
      %v4301 = vpop.f32.mrb[0].mxu0
      %4302 = vmatprep.mubr.f32.mxu0 0.0
      %4303 = vmatmul.mubr.f32.gmra.mrb[0].mxu0 %v1541
      %v4304 = vpop.f32.mrb[0].mxu0
      %v4305 = vadd.f32 %v952, %v4304
      %v4306 = vpop.f32.mrb[0].mxu0
      %4307 = vmatprep.mubr.f32.mxu0 0.0
      %4308 = vmatmul.mubr.f32.gmra.mrb[0].mxu0 %v1544
      %v4309 = vpop.f32.mrb[0].mxu0
      %v4310 = vadd.f32 %v952, %v4309
      %v4311 = vpop.f32.mrb[0].mxu0
      %4312 = vmatprep.mubr.f32.mxu0 0.0
      %4313 = vmatmul.mubr.f32.gmra.mrb[0].mxu0 %v1547
      %v4314 = vpop.f32.mrb[0].mxu0
      %v4315 = vadd.f32 %v952, %v4314
      %v4316 = vpop.f32.mrb[0].mxu0
      %4317 = vmatprep.mubr.f32.mxu0 0.0
      %4318 = vmatmul.mubr.f32.gmra.mrb[0].mxu0 %v1550
      %v4319 = vpop.f32.mrb[0].mxu0
      %v4320 = vadd.f32 %v952, %v4319
      %v4321 = vpop.f32.mrb[0].mxu0
      %4322 = vmatprep.mubr.f32.mxu0 0.0
      %4323 = vmatmul.mubr.f32.gmra.mrb[0].mxu0 %v1553
      %v4324 = vpop.f32.mrb[0].mxu0
      %v4325 = vadd.f32 %v952, %v4324
      %v4326 = vpop.f32.mrb[0].mxu0
      %4327 = vmatprep.mubr.f32.mxu0 0.0
      %4328 = vmatmul.mubr.f32.gmra.mrb[0].mxu0 %v1556
      %v4329 = vpop.f32.mrb[0].mxu0
      %v4330 = vadd.f32 %v952, %v4329
      %v4331 = vpop.f32.mrb[0].mxu0
      %4332 = vmatprep.mubr.f32.mxu0 0.0
      %4333 = vmatmul.mubr.f32.gmra.mrb[0].mxu0 %v1559
      %v4334 = vpop.f32.mrb[0].mxu0
      %v4335 = vadd.f32 %v952, %v4334
      %v4336 = vpop.f32.mrb[0].mxu0
      %4337 = vmatprep.mubr.f32.mxu0 0.0
      %4338 = vmatmul.mubr.f32.gmra.mrb[0].mxu0 %v1562
      %v4339 = vpop.f32.mrb[0].mxu0
      %v4340 = vadd.f32 %v952, %v4339
      %v4341 = vpop.f32.mrb[0].mxu0
      %4342 = vmatprep.mubr.f32.mxu0 0.0
      %4343 = vmatmul.mubr.f32.gmra.mrb[0].mxu0 %v1565
      %v4344 = vpop.f32.mrb[0].mxu0
      %v4345 = vadd.f32 %v952, %v4344
      %v4346 = vpop.f32.mrb[0].mxu0
      %4347 = vmatprep.mubr.f32.mxu0 0.0
      %4348 = vmatmul.mubr.f32.gmra.mrb[0].mxu0 %v1568
      %v4349 = vpop.f32.mrb[0].mxu0
      %v4350 = vadd.f32 %v952, %v4349
      %v4351 = vpop.f32.mrb[0].mxu0
      %4352 = vmatprep.mubr.f32.mxu0 0.0
      %4353 = vmatmul.mubr.f32.gmra.mrb[0].mxu0 %v1571
      %v4354 = vpop.f32.mrb[0].mxu0
      %v4355 = vadd.f32 %v952, %v4354
      %v4356 = vpop.f32.mrb[0].mxu0
      %4357 = vmatprep.mubr.f32.mxu0 0.0
      %4358 = vmatmul.mubr.f32.gmra.mrb[0].mxu0 %v1574
      %v4359 = vpop.f32.mrb[0].mxu0
      %v4360 = vadd.f32 %v952, %v4359
      %v4361 = vpop.f32.mrb[0].mxu0
      %4362 = vmatprep.mubr.f32.mxu0 0.0
      %4363 = vmatmul.mubr.f32.gmra.mrb[0].mxu0 %v1577
      %v4364 = vpop.f32.mrb[0].mxu0
      %v4365 = vadd.f32 %v952, %v4364
      %v4366 = vpop.f32.mrb[0].mxu0
      %4367 = vmatprep.mubr.f32.mxu0 0.0
      %4368 = vmatmul.mubr.f32.gmra.mrb[0].mxu0 %v1580
      %v4369 = vpop.f32.mrb[0].mxu0
      %v4370 = vadd.f32 %v952, %v4369
      %v4371 = vpop.f32.mrb[0].mxu0
      %4372 = vmatprep.mubr.f32.mxu0 0.0
      %4373 = vmatmul.mubr.f32.gmra.mrb[0].mxu0 %v1583
      %v4374 = vpop.f32.mrb[0].mxu0
      %v4375 = vadd.f32 %v952, %v4374
      %v4376 = vpop.f32.mrb[0].mxu0
      %4377 = vmatprep.mubr.f32.mxu0 0.0
      %4378 = vmatmul.mubr.f32.gmra.mrb[0].mxu0 %v1586
      %v4379 = vpop.f32.mrb[0].mxu0
      %v4380 = vadd.f32 %v952, %v4379
      %v4381 = vpop.f32.mrb[0].mxu0
      %4382 = vmatprep.mubr.f32.mxu0 0.0
      %4383 = vmatmul.mubr.f32.gmra.mrb[0].mxu0 %v1589
      %v4384 = vpop.f32.mrb[0].mxu0
      %v4385 = vadd.f32 %v952, %v4384
      %v4386 = vpop.f32.mrb[0].mxu0
      %4387 = vmatprep.mubr.f32.mxu0 0.0
      %4388 = vmatmul.mubr.f32.gmra.mrb[0].mxu0 %v1592
      %v4389 = vpop.f32.mrb[0].mxu0
      %v4390 = vadd.f32 %v952, %v4389
      %v4391 = vpop.f32.mrb[0].mxu0
      %4392 = vmatprep.mubr.f32.mxu0 0.0
      %4393 = vmatmul.mubr.f32.gmra.mrb[0].mxu0 %v1595
      %v4394 = vpop.f32.mrb[0].mxu0
      %v4395 = vadd.f32 %v952, %v4394
      %v4396 = vpop.f32.mrb[0].mxu0
      %4397 = vmatprep.mubr.f32.mxu0 0.0
      %4398 = vmatmul.mubr.f32.gmra.mrb[0].mxu0 %v1598
      %v4399 = vpop.f32.mrb[0].mxu0
      %v4400 = vadd.f32 %v952, %v4399
      %v4401 = vpop.f32.mrb[0].mxu0
      %4402 = vmatprep.mubr.f32.mxu0 0.0
      %4403 = vmatmul.mubr.f32.gmra.mrb[0].mxu0 %v1601
      %v4404 = vpop.f32.mrb[0].mxu0
      %v4405 = vadd.f32 %v952, %v4404
      %v4406 = vpop.f32.mrb[0].mxu0
      %4407 = vmatprep.mubr.f32.mxu0 0.0
      %4408 = vmatmul.mubr.f32.gmra.mrb[0].mxu0 %v1604
      %v4409 = vpop.f32.mrb[0].mxu0
      %v4410 = vadd.f32 %v952, %v4409
      %v4411 = vpop.f32.mrb[0].mxu0
      %4412 = vmatprep.mubr.f32.mxu0 0.0
      %4413 = vmatmul.mubr.f32.gmra.mrb[0].mxu0 %v1607
      %v4414 = vpop.f32.mrb[0].mxu0
      %v4415 = vadd.f32 %v952, %v4414
      %v4416 = vpop.f32.mrb[0].mxu0
      %4417 = vmatprep.mubr.f32.mxu0 0.0
      %4418 = vmatmul.mubr.f32.gmra.mrb[0].mxu0 %v1610
      %v4419 = vpop.f32.mrb[0].mxu0
      %v4420 = vadd.f32 %v952, %v4419
      %v4421 = vpop.f32.mrb[0].mxu0
      %4422 = vmatprep.mubr.f32.mxu0 0.0
      %4423 = vmatmul.mubr.f32.gmra.mrb[0].mxu0 %v1613
      %v4424 = vpop.f32.mrb[0].mxu0
      %v4425 = vadd.f32 %v952, %v4424
      %v4426 = vpop.f32.mrb[0].mxu0
      %4427 = vmatprep.mubr.f32.mxu0 0.0
      %4428 = vmatmul.mubr.f32.gmra.mrb[0].mxu0 %v1616
      %v4429 = vpop.f32.mrb[0].mxu0
      %v4430 = vadd.f32 %v952, %v4429
      %v4431 = vpop.f32.mrb[0].mxu0
      %4432 = vmatprep.mubr.f32.mxu0 0.0
      %4433 = vmatmul.mubr.f32.gmra.mrb[0].mxu0 %v1619
      %v4434 = vpop.f32.mrb[0].mxu0
      %v4435 = vadd.f32 %v952, %v4434
      %v4436 = vpop.f32.mrb[0].mxu0
      %4437 = vmatprep.mubr.f32.mxu0 0.0
      %4438 = vmatmul.mubr.f32.gmra.mrb[0].mxu0 %v1622
      %v4439 = vpop.f32.mrb[0].mxu0
      %v4440 = vadd.f32 %v952, %v4439
      %v4441 = vpop.f32.mrb[0].mxu0
      %4442 = vmatprep.mubr.f32.mxu0 0.0
      %4443 = vmatmul.mubr.f32.gmra.mrb[0].mxu0 %v1625
      %v4444 = vpop.f32.mrb[0].mxu0
      %v4445 = vadd.f32 %v952, %v4444
      %v4446 = vpop.f32.mrb[0].mxu0
      %4447 = vmatprep.mubr.f32.mxu0 0.0
      %4448 = vmatmul.mubr.f32.gmra.mrb[0].mxu0 %v1628
      %v4449 = vpop.f32.mrb[0].mxu0
      %v4450 = vadd.f32 %v952, %v4449
      %v4451 = vpop.f32.mrb[0].mxu0
      %4452 = vmatprep.mubr.f32.mxu0 0.0
      %4453 = vmatmul.mubr.f32.gmra.mrb[0].mxu0 %v1631
      %v4454 = vpop.f32.mrb[0].mxu0
      %v4455 = vadd.f32 %v952, %v4454
      %v4456 = vpop.f32.mrb[0].mxu0
      %4457 = vmatprep.mubr.f32.mxu0 0.0
      %4458 = vmatmul.mubr.f32.gmra.mrb[0].mxu0 %v1634
      %v4459 = vpop.f32.mrb[0].mxu0
      %v4460 = vadd.f32 %v952, %v4459
      %v4461 = vpop.f32.mrb[0].mxu0
      %4462 = vmatprep.mubr.f32.mxu0 0.0
      %4463 = vmatmul.mubr.f32.gmra.mrb[0].mxu0 %v1637
      %v4464 = vpop.f32.mrb[0].mxu0
      %v4465 = vadd.f32 %v952, %v4464
      %v4466 = vpop.f32.mrb[0].mxu0
      %4467 = vmatprep.mubr.f32.mxu0 0.0
      %4468 = vmatmul.mubr.f32.gmra.mrb[0].mxu0 %v1640
      %v4469 = vpop.f32.mrb[0].mxu0
      %v4470 = vadd.f32 %v952, %v4469
      %v4471 = vpop.f32.mrb[0].mxu0
      %4472 = vmatprep.mubr.f32.mxu0 0.0
      %4473 = vmatmul.mubr.f32.gmra.mrb[0].mxu0 %v1643
      %v4474 = vpop.f32.mrb[0].mxu0
      %v4475 = vadd.f32 %v952, %v4474
      %v4476 = vpop.f32.mrb[0].mxu0
      %4477 = vmatprep.mubr.f32.mxu0 0.0
      %4478 = vmatmul.mubr.f32.gmra.mrb[0].mxu0 %v1646
      %v4479 = vpop.f32.mrb[0].mxu0
      %v4480 = vadd.f32 %v952, %v4479
      %v4481 = vpop.f32.mrb[0].mxu0
      %4482 = vmatprep.mubr.f32.mxu0 0.0
      %4483 = vmatmul.mubr.f32.gmra.mrb[0].mxu0 %v1649
      %v4484 = vpop.f32.mrb[0].mxu0
      %v4485 = vadd.f32 %v952, %v4484
      %v4486 = vpop.f32.mrb[0].mxu0
      %4487 = vmatprep.mubr.f32.mxu0 0.0
      %4488 = vmatmul.mubr.f32.gmra.mrb[0].mxu0 %v1652
      %v4489 = vpop.f32.mrb[0].mxu0
      %v4490 = vadd.f32 %v952, %v4489
      %v4491 = vpop.f32.mrb[0].mxu0
      %4492 = vmatprep.mubr.f32.mxu0 0.0
      %4493 = vmatmul.mubr.f32.gmra.mrb[0].mxu0 %v1655
      %v4494 = vpop.f32.mrb[0].mxu0
      %v4495 = vadd.f32 %v952, %v4494
      %v4496 = vpop.f32.mrb[0].mxu0
      %4497 = vmatprep.mubr.f32.mxu0 0.0
      %4498 = vmatmul.mubr.f32.gmra.mrb[0].mxu0 %v1658
      %v4499 = vpop.f32.mrb[0].mxu0
      %v4500 = vadd.f32 %v952, %v4499
      %v4501 = vpop.f32.mrb[0].mxu0
      %4502 = vmatprep.mubr.f32.mxu0 0.0
      %4503 = vmatmul.mubr.f32.gmra.mrb[0].mxu0 %v1661
      %v4504 = vpop.f32.mrb[0].mxu0
      %v4505 = vadd.f32 %v952, %v4504
      %v4506 = vpop.f32.mrb[0].mxu0
      %4507 = vmatprep.mubr.f32.mxu0 0.0
      %4508 = vmatmul.mubr.f32.gmra.mrb[0].mxu0 %v1664
      %v4509 = vpop.f32.mrb[0].mxu0
      %v4510 = vadd.f32 %v952, %v4509
      %v4511 = vpop.f32.mrb[0].mxu0
      %4512 = vmatprep.mubr.f32.mxu0 0.0
      %4513 = vmatmul.mubr.f32.gmra.mrb[0].mxu0 %v1667
      %v4514 = vpop.f32.mrb[0].mxu0
      %v4515 = vadd.f32 %v952, %v4514
      %v4516 = vpop.f32.mrb[0].mxu0
      %4517 = vmatprep.mubr.f32.mxu0 0.0
      %4518 = vmatmul.mubr.f32.gmra.mrb[0].mxu0 %v1670
      %v4519 = vpop.f32.mrb[0].mxu0
      %v4520 = vadd.f32 %v952, %v4519
      %v4521 = vpop.f32.mrb[0].mxu0
      %4522 = vmatprep.mubr.f32.mxu0 0.0
      %4523 = vmatmul.mubr.f32.gmra.mrb[0].mxu0 %v1673
      %v4524 = vpop.f32.mrb[0].mxu0
      %v4525 = vadd.f32 %v952, %v4524
      %v4526 = vpop.f32.mrb[0].mxu0
      %4527 = vmatprep.mubr.f32.mxu0 0.0
      %4528 = vmatmul.mubr.f32.gmra.mrb[0].mxu0 %v1676
      %v4529 = vpop.f32.mrb[0].mxu0
      %v4530 = vadd.f32 %v952, %v4529
      %v4531 = vpop.f32.mrb[0].mxu0
      %4532 = vmatprep.mubr.f32.mxu0 0.0
      %4533 = vmatmul.mubr.f32.gmra.mrb[0].mxu0 %v1679
      %v4534 = vpop.f32.mrb[0].mxu0
      %v4535 = vadd.f32 %v952, %v4534
      %v4536 = vpop.f32.mrb[0].mxu0
      %4537 = vmatprep.mubr.f32.mxu0 0.0
      %4538 = vmatmul.mubr.f32.gmra.mrb[0].mxu0 %v1682
      %v4539 = vpop.f32.mrb[0].mxu0
      %v4540 = vadd.f32 %v952, %v4539
      %v4541 = vpop.f32.mrb[0].mxu0
      %4542 = vmatprep.mubr.f32.mxu0 0.0
      %4543 = vmatmul.mubr.f32.gmra.mrb[0].mxu0 %v1685
      %v4544 = vpop.f32.mrb[0].mxu0
      %v4545 = vadd.f32 %v952, %v4544
      %v4546 = vpop.f32.mrb[0].mxu0
      %4547 = vmatprep.mubr.f32.mxu0 0.0
      %4548 = vmatmul.mubr.f32.gmra.mrb[0].mxu0 %v1688
      %v4549 = vpop.f32.mrb[0].mxu0
      %v4550 = vadd.f32 %v952, %v4549
      %v4551 = vpop.f32.mrb[0].mxu0
      %4552 = vmatprep.mubr.f32.mxu0 0.0
      %4553 = vmatmul.mubr.f32.gmra.mrb[0].mxu0 %v1691
      %v4554 = vpop.f32.mrb[0].mxu0
      %v4555 = vadd.f32 %v952, %v4554
      %v4556 = vpop.f32.mrb[0].mxu0
      %4557 = vmatprep.mubr.f32.mxu0 0.0
      %4558 = vmatmul.mubr.f32.gmra.mrb[0].mxu0 %v1694
      %v4559 = vpop.f32.mrb[0].mxu0
      %v4560 = vadd.f32 %v952, %v4559
      %v4561 = vpop.f32.mrb[0].mxu0
      %4562 = vmatprep.mubr.f32.mxu0 0.0
      %4563 = vmatmul.mubr.f32.gmra.mrb[0].mxu0 %v1697
      %v4564 = vpop.f32.mrb[0].mxu0
      %v4565 = vadd.f32 %v952, %v4564
      %v4566 = vpop.f32.mrb[0].mxu0
      %4567 = vmatprep.mubr.f32.mxu0 0.0
      %4568 = vmatmul.mubr.f32.gmra.mrb[0].mxu0 %v1700
      %v4569 = vpop.f32.mrb[0].mxu0
      %v4570 = vadd.f32 %v952, %v4569
      %v4571 = vpop.f32.mrb[0].mxu0
      %4572 = vmatprep.mubr.f32.mxu0 0.0
      %4573 = vmatmul.mubr.f32.gmra.mrb[0].mxu0 %v1703
      %v4574 = vpop.f32.mrb[0].mxu0
      %v4575 = vadd.f32 %v952, %v4574
      %v4576 = vpop.f32.mrb[0].mxu0
      %4577 = vmatprep.mubr.f32.mxu0 0.0
      %4578 = vmatmul.mubr.f32.gmra.mrb[0].mxu0 %v1706
      %v4579 = vpop.f32.mrb[0].mxu0
      %v4580 = vadd.f32 %v952, %v4579
      %v4581 = vpop.f32.mrb[0].mxu0
      %4582 = vmatprep.mubr.f32.mxu0 0.0
      %4583 = vmatmul.mubr.f32.gmra.mrb[0].mxu0 %v1709
      %v4584 = vpop.f32.mrb[0].mxu0
      %v4585 = vadd.f32 %v952, %v4584
      %v4586 = vpop.f32.mrb[0].mxu0
      %4587 = vmatprep.mubr.f32.mxu0 0.0
      %4588 = vmatmul.mubr.f32.gmra.mrb[0].mxu0 %v1712
      %v4589 = vpop.f32.mrb[0].mxu0
      %v4590 = vadd.f32 %v952, %v4589
      %v4591 = vpop.f32.mrb[0].mxu0
      %4592 = vmatprep.mubr.f32.mxu0 0.0
      %4593 = vmatmul.mubr.f32.gmra.mrb[0].mxu0 %v1715
      %v4594 = vpop.f32.mrb[0].mxu0
      %v4595 = vadd.f32 %v952, %v4594
      %v4596 = vpop.f32.mrb[0].mxu0
      %4597 = vmatprep.mubr.f32.mxu0 0.0
      %4598 = vmatmul.mubr.f32.gmra.mrb[0].mxu0 %v1718
      %v4599 = vpop.f32.mrb[0].mxu0
      %v4600 = vadd.f32 %v952, %v4599
      %v4601 = vpop.f32.mrb[0].mxu0
      %4602 = vmatprep.mubr.f32.mxu0 0.0
      %4603 = vmatmul.mubr.f32.gmra.mrb[0].mxu0 %v1721
      %v4604 = vpop.f32.mrb[0].mxu0
      %v4605 = vadd.f32 %v952, %v4604
      %v4606 = vpop.f32.mrb[0].mxu0
      %4607 = vmatprep.mubr.f32.mxu0 0.0
      %4608 = vmatmul.mubr.f32.gmra.mrb[0].mxu0 %v1724
      %v4609 = vpop.f32.mrb[0].mxu0
      %v4610 = vadd.f32 %v952, %v4609
      %v4611 = vpop.f32.mrb[0].mxu0
      %4612 = vmatprep.mubr.f32.mxu0 0.0
      %4613 = vmatmul.mubr.f32.gmra.mrb[0].mxu0 %v1727
      %v4614 = vpop.f32.mrb[0].mxu0
      %v4615 = vadd.f32 %v952, %v4614
      %v4616 = vpop.f32.mrb[0].mxu0
      %4617 = vmatprep.mubr.f32.mxu0 0.0
      %4618 = vmatmul.mubr.f32.gmra.mrb[0].mxu0 %v1730
      %v4619 = vpop.f32.mrb[0].mxu0
      %v4620 = vadd.f32 %v952, %v4619
      %v4621 = vpop.f32.mrb[0].mxu0
      %4622 = vmatprep.mubr.f32.mxu0 0.0
      %4623 = vmatmul.mubr.f32.gmra.mrb[0].mxu0 %v1733
      %v4624 = vpop.f32.mrb[0].mxu0
      %v4625 = vadd.f32 %v952, %v4624
      %v4626 = vpop.f32.mrb[0].mxu0
      %4627 = vmatprep.mubr.f32.mxu0 0.0
      %4628 = vmatmul.mubr.f32.gmra.mrb[0].mxu0 %v1736
      %v4629 = vpop.f32.mrb[0].mxu0
      %v4630 = vadd.f32 %v952, %v4629
      %v4631 = vpop.f32.mrb[0].mxu0
      %4632 = vmatprep.mubr.f32.mxu0 0.0
      %4633 = vmatmul.mubr.f32.gmra.mrb[0].mxu0 %v1739
      %v4634 = vpop.f32.mrb[0].mxu0
      %v4635 = vadd.f32 %v952, %v4634
      %v4636 = vpop.f32.mrb[0].mxu0
      %4637 = vmatprep.mubr.f32.mxu0 0.0
      %4638 = vmatmul.mubr.f32.gmra.mrb[0].mxu0 %v1742
      %v4639 = vpop.f32.mrb[0].mxu0
      %v4640 = vadd.f32 %v952, %v4639
      %v4641 = vpop.f32.mrb[0].mxu0
      %4642 = vmatprep.mubr.f32.mxu0 0.0
      %4643 = vmatmul.mubr.f32.gmra.mrb[0].mxu0 %v1745
      %v4644 = vpop.f32.mrb[0].mxu0
      %v4645 = vadd.f32 %v952, %v4644
      %v4646 = vpop.f32.mrb[0].mxu0
      %4647 = vmatprep.mubr.f32.mxu0 0.0
      %4648 = vmatmul.mubr.f32.gmra.mrb[0].mxu0 %v1748
      %v4649 = vpop.f32.mrb[0].mxu0
      %v4650 = vadd.f32 %v952, %v4649
      %v4651 = vpop.f32.mrb[0].mxu0
      %4652 = vmatprep.mubr.f32.mxu0 0.0
      %4653 = vmatmul.mubr.f32.gmra.mrb[0].mxu0 %v1751
      %v4654 = vpop.f32.mrb[0].mxu0
      %v4655 = vadd.f32 %v952, %v4654
      %v4656 = vpop.f32.mrb[0].mxu0
      %4657 = vmatprep.mubr.f32.mxu0 0.0
      %4658 = vmatmul.mubr.f32.gmra.mrb[0].mxu0 %v1754
      %v4659 = vpop.f32.mrb[0].mxu0
      %v4660 = vadd.f32 %v952, %v4659
      %v4661 = vpop.f32.mrb[0].mxu0
      %4662 = vmatprep.mubr.f32.mxu0 0.0
      %4663 = vmatmul.mubr.f32.gmra.mrb[0].mxu0 %v1757
      %v4664 = vpop.f32.mrb[0].mxu0
      %v4665 = vadd.f32 %v952, %v4664
      %v4666 = vpop.f32.mrb[0].mxu0
      %4667 = vmatprep.mubr.f32.mxu0 0.0
      %4668 = vmatmul.mubr.f32.gmra.mrb[0].mxu0 %v1760
      %v4669 = vpop.f32.mrb[0].mxu0
      %v4670 = vadd.f32 %v952, %v4669
      %v4671 = vpop.f32.mrb[0].mxu0
      %4672 = vmatprep.mubr.f32.mxu0 0.0
      %4673 = vmatmul.mubr.f32.gmra.mrb[0].mxu0 %v1763
      %v4674 = vpop.f32.mrb[0].mxu0
      %v4675 = vadd.f32 %v952, %v4674
      %v4676 = vpop.f32.mrb[0].mxu0
      %4677 = vmatprep.mubr.f32.mxu0 0.0
      %4678 = vmatmul.mubr.f32.gmra.mrb[0].mxu0 %v1766
      %v4679 = vpop.f32.mrb[0].mxu0
      %v4680 = vadd.f32 %v952, %v4679
      %v4681 = vpop.f32.mrb[0].mxu0
      %4682 = vmatprep.mubr.f32.mxu0 0.0
      %4683 = vmatmul.mubr.f32.gmra.mrb[0].mxu0 %v1769
      %v4684 = vpop.f32.mrb[0].mxu0
      %v4685 = vadd.f32 %v952, %v4684
      %v4686 = vpop.f32.mrb[0].mxu0
      %4687 = vmatprep.mubr.f32.mxu0 0.0
      %4688 = vmatmul.mubr.f32.gmra.mrb[0].mxu0 %v1772
      %v4689 = vpop.f32.mrb[0].mxu0
      %v4690 = vadd.f32 %v952, %v4689
      %v4691 = vpop.f32.mrb[0].mxu0
      %4692 = vmatprep.mubr.f32.mxu0 0.0
      %4693 = vmatmul.mubr.f32.gmra.mrb[0].mxu0 %v1775
      %v4694 = vpop.f32.mrb[0].mxu0
      %v4695 = vadd.f32 %v952, %v4694
      %v4696 = vpop.f32.mrb[0].mxu0
      %4697 = vmatprep.mubr.f32.mxu0 0.0
      %4698 = vmatmul.mubr.f32.gmra.mrb[0].mxu0 %v1778
      %v4699 = vpop.f32.mrb[0].mxu0
      %v4700 = vadd.f32 %v952, %v4699
      %v4701 = vpop.f32.mrb[0].mxu0
      %4702 = vmatprep.mubr.f32.mxu0 0.0
      %4703 = vmatmul.mubr.f32.gmra.mrb[0].mxu0 %v1781
      %v4704 = vpop.f32.mrb[0].mxu0
      %v4705 = vadd.f32 %v952, %v4704
      %v4706 = vpop.f32.mrb[0].mxu0
      %4707 = vmatprep.mubr.f32.mxu0 0.0
      %4708 = vmatmul.mubr.f32.gmra.mrb[0].mxu0 %v1784
      %v4709 = vpop.f32.mrb[0].mxu0
      %v4710 = vadd.f32 %v952, %v4709
      %v4711 = vpop.f32.mrb[0].mxu0
      %4712 = vmatprep.mubr.f32.mxu0 0.0
      %4713 = vmatmul.mubr.f32.gmra.mrb[0].mxu0 %v1787
      %v4714 = vpop.f32.mrb[0].mxu0
      %v4715 = vadd.f32 %v952, %v4714
      %v4716 = vpop.f32.mrb[0].mxu0
      %4717 = vmatprep.mubr.f32.mxu0 0.0
      %4718 = vmatmul.mubr.f32.gmra.mrb[0].mxu0 %v1790
      %v4719 = vpop.f32.mrb[0].mxu0
      %v4720 = vadd.f32 %v952, %v4719
      %v4721 = vpop.f32.mrb[0].mxu0
      %4722 = vmatprep.mubr.f32.mxu0 0.0
      %4723 = vmatmul.mubr.f32.gmra.mrb[0].mxu0 %v1793
      %v4724 = vpop.f32.mrb[0].mxu0
      %v4725 = vadd.f32 %v952, %v4724
      %v4726 = vpop.f32.mrb[0].mxu0
      %4727 = vmatprep.mubr.f32.mxu0 0.0
      %4728 = vmatmul.mubr.f32.gmra.mrb[0].mxu0 %v1796
      %v4729 = vpop.f32.mrb[0].mxu0
      %v4730 = vadd.f32 %v952, %v4729
      %v4731 = vpop.f32.mrb[0].mxu0
      %4732 = vmatprep.mubr.f32.mxu0 0.0
      %4733 = vmatmul.mubr.f32.gmra.mrb[0].mxu0 %v1799
      %v4734 = vpop.f32.mrb[0].mxu0
      %v4735 = vadd.f32 %v952, %v4734
      %v4736 = vpop.f32.mrb[0].mxu0
      %4737 = vmatprep.mubr.f32.mxu0 0.0
      %4738 = vmatmul.mubr.f32.gmra.mrb[0].mxu0 %v1802
      %v4739 = vpop.f32.mrb[0].mxu0
      %v4740 = vadd.f32 %v952, %v4739
      %v4741 = vpop.f32.mrb[0].mxu0
      %4742 = vmatprep.mubr.f32.mxu0 0.0
      %4743 = vmatmul.mubr.f32.gmra.mrb[0].mxu0 %v1805
      %v4744 = vpop.f32.mrb[0].mxu0
      %v4745 = vadd.f32 %v952, %v4744
      %v4746 = vpop.f32.mrb[0].mxu0
      %4747 = vmatprep.mubr.f32.mxu0 0.0
      %4748 = vmatmul.mubr.f32.gmra.mrb[0].mxu0 %v1808
      %v4749 = vpop.f32.mrb[0].mxu0
      %v4750 = vadd.f32 %v952, %v4749
      %v4751 = vpop.f32.mrb[0].mxu0
      %4752 = vmatprep.mubr.f32.mxu0 0.0
      %4753 = vmatmul.mubr.f32.gmra.mrb[0].mxu0 %v1811
      %v4754 = vpop.f32.mrb[0].mxu0
      %v4755 = vadd.f32 %v952, %v4754
      %v4756 = vpop.f32.mrb[0].mxu0
      %4757 = vmatprep.mubr.f32.mxu0 0.0
      %4758 = vmatmul.mubr.f32.gmra.mrb[0].mxu0 %v1814
      %v4759 = vpop.f32.mrb[0].mxu0
      %v4760 = vadd.f32 %v952, %v4759
      %v4761 = vpop.f32.mrb[0].mxu0
      %4762 = vmatprep.mubr.f32.mxu0 0.0
      %4763 = vmatmul.mubr.f32.gmra.mrb[0].mxu0 %v1817
      %v4764 = vpop.f32.mrb[0].mxu0
      %v4765 = vadd.f32 %v952, %v4764
      %v4766 = vpop.f32.mrb[0].mxu0
      %4767 = vmatprep.mubr.f32.mxu0 0.0
      %4768 = vmatmul.mubr.f32.gmra.mrb[0].mxu0 %v1820
      %v4769 = vpop.f32.mrb[0].mxu0
      %v4770 = vadd.f32 %v952, %v4769
      %v4771 = vpop.f32.mrb[0].mxu0
      %4772 = vmatprep.mubr.f32.mxu0 0.0
      %4773 = vmatmul.mubr.f32.gmra.mrb[0].mxu0 %v1823
      %v4774 = vpop.f32.mrb[0].mxu0
      %v4775 = vadd.f32 %v952, %v4774
      %v4776 = vpop.f32.mrb[0].mxu0
      %4777 = vmatprep.mubr.f32.mxu0 0.0
      %4778 = vmatmul.mubr.f32.gmra.mrb[0].mxu0 %v1826
      %v4779 = vpop.f32.mrb[0].mxu0
      %v4780 = vadd.f32 %v952, %v4779
      %v4781 = vpop.f32.mrb[0].mxu0
      %4782 = vmatprep.mubr.f32.mxu0 0.0
      %4783 = vmatmul.mubr.f32.gmra.mrb[0].mxu0 %v1829
      %v4784 = vpop.f32.mrb[0].mxu0
      %v4785 = vadd.f32 %v952, %v4784
      %v4786 = vpop.f32.mrb[0].mxu0
      %4787 = vmatprep.mubr.f32.mxu0 0.0
      %4788 = vmatmul.mubr.f32.gmra.mrb[0].mxu0 %v1832
      %v4789 = vpop.f32.mrb[0].mxu0
      %v4790 = vadd.f32 %v952, %v4789
      %v4791 = vpop.f32.mrb[0].mxu0
      %4792 = vmatprep.mubr.f32.mxu0 0.0
      %4793 = vmatmul.mubr.f32.gmra.mrb[0].mxu0 %v1835
      %v4794 = vpop.f32.mrb[0].mxu0
      %v4795 = vadd.f32 %v952, %v4794
      %v4796 = vpop.f32.mrb[0].mxu0
      %4797 = vmatprep.mubr.f32.mxu0 0.0
      %4798 = vmatmul.mubr.f32.gmra.mrb[0].mxu0 %v1838
      %v4799 = vpop.f32.mrb[0].mxu0
      %v4800 = vadd.f32 %v952, %v4799
      %v4801 = vpop.f32.mrb[0].mxu0
      %4802 = vmatprep.mubr.f32.mxu0 0.0
      %4803 = vmatmul.mubr.f32.gmra.mrb[0].mxu0 %v1841
      %v4804 = vpop.f32.mrb[0].mxu0
      %v4805 = vadd.f32 %v952, %v4804
      %v4806 = vpop.f32.mrb[0].mxu0
      %4807 = vmatprep.mubr.f32.mxu0 0.0
      %4808 = vmatmul.mubr.f32.gmra.mrb[0].mxu0 %v1844
      %v4809 = vpop.f32.mrb[0].mxu0
      %v4810 = vadd.f32 %v952, %v4809
      %v4811 = vpop.f32.mrb[0].mxu0
      %4812 = vmatprep.mubr.f32.mxu0 0.0
      %4813 = vmatmul.mubr.f32.gmra.mrb[0].mxu0 %v1847
      %v4814 = vpop.f32.mrb[0].mxu0
      %v4815 = vadd.f32 %v952, %v4814
      %v4816 = vpop.f32.mrb[0].mxu0
      %4817 = vmatprep.mubr.f32.mxu0 0.0
      %4818 = vmatmul.mubr.f32.gmra.mrb[0].mxu0 %v1850
      %v4819 = vpop.f32.mrb[0].mxu0
      %v4820 = vadd.f32 %v952, %v4819
      %v4821 = vpop.f32.mrb[0].mxu0
      %4822 = vmatprep.mubr.f32.mxu0 0.0
      %4823 = vmatmul.mubr.f32.gmra.mrb[0].mxu0 %v1853
      %v4824 = vpop.f32.mrb[0].mxu0
      %v4825 = vadd.f32 %v952, %v4824
      %v4826 = vpop.f32.mrb[0].mxu0
      %4827 = vmatprep.mubr.f32.mxu0 0.0
      %4828 = vmatmul.mubr.f32.gmra.mrb[0].mxu0 %v1856
      %v4829 = vpop.f32.mrb[0].mxu0
      %v4830 = vadd.f32 %v952, %v4829
      %v4831 = vpop.f32.mrb[0].mxu0
      %4832 = vmatprep.mubr.f32.mxu0 0.0
      %4833 = vmatmul.mubr.f32.gmra.mrb[0].mxu0 %v1859
      %v4834 = vpop.f32.mrb[0].mxu0
      %v4835 = vadd.f32 %v952, %v4834
      %v4836 = vpop.f32.mrb[0].mxu0
      %4837 = vmatprep.mubr.f32.mxu0 0.0
      %4838 = vmatmul.mubr.f32.gmra.mrb[0].mxu0 %v1862
      %v4839 = vpop.f32.mrb[0].mxu0
      %v4840 = vadd.f32 %v952, %v4839
      %v4841 = vpop.f32.mrb[0].mxu0
      %4842 = vmatprep.mubr.f32.mxu0 0.0
      %4843 = vmatmul.mubr.f32.gmra.mrb[0].mxu0 %v1865
      %v4844 = vpop.f32.mrb[0].mxu0
      %v4845 = vadd.f32 %v952, %v4844
      %v4846 = vpop.f32.mrb[0].mxu0
      %4847 = vmatprep.mubr.f32.mxu0 0.0
      %4848 = vmatmul.mubr.f32.gmra.mrb[0].mxu0 %v1868
      %v4849 = vpop.f32.mrb[0].mxu0
      %v4850 = vadd.f32 %v952, %v4849
      %v4851 = vpop.f32.mrb[0].mxu0
      %4852 = vmatprep.mubr.f32.mxu0 0.0
      %4853 = vmatmul.mubr.f32.gmra.mrb[0].mxu0 %v1871
      %v4854 = vpop.f32.mrb[0].mxu0
      %v4855 = vadd.f32 %v952, %v4854
      %v4856 = vpop.f32.mrb[0].mxu0
      %4857 = vmatprep.mubr.f32.mxu0 0.0
      %4858 = vmatmul.mubr.f32.gmra.mrb[0].mxu0 %v1874
      %v4859 = vpop.f32.mrb[0].mxu0
      %v4860 = vadd.f32 %v952, %v4859
      %v4861 = vpop.f32.mrb[0].mxu0
      %4862 = vmatprep.mubr.f32.mxu0 0.0
      %4863 = vmatmul.mubr.f32.gmra.mrb[0].mxu0 %v1877
      %v4864 = vpop.f32.mrb[0].mxu0
      %v4865 = vadd.f32 %v952, %v4864
      %v4866 = vpop.f32.mrb[0].mxu0
      %4867 = vmatprep.mubr.f32.mxu0 0.0
      %4868 = vmatmul.mubr.f32.gmra.mrb[0].mxu0 %v1880
      %v4869 = vpop.f32.mrb[0].mxu0
      %v4870 = vadd.f32 %v952, %v4869
      %v4871 = vpop.f32.mrb[0].mxu0
      %4872 = vmatprep.mubr.f32.mxu0 0.0
      %4873 = vmatmul.mubr.f32.gmra.mrb[0].mxu0 %v1883
      %v4874 = vpop.f32.mrb[0].mxu0
      %v4875 = vadd.f32 %v952, %v4874
      %v4876 = vpop.f32.mrb[0].mxu0
      %4877 = vmatprep.mubr.f32.mxu0 0.0
      %4878 = vmatmul.mubr.f32.gmra.mrb[0].mxu0 %v1886
      %v4879 = vpop.f32.mrb[0].mxu0
      %v4880 = vadd.f32 %v952, %v4879
      %v4881 = vpop.f32.mrb[0].mxu0
      %4882 = vmatprep.mubr.f32.mxu0 0.0
      %4883 = vmatmul.mubr.f32.gmra.mrb[0].mxu0 %v1889
      %v4884 = vpop.f32.mrb[0].mxu0
      %v4885 = vadd.f32 %v952, %v4884
      %v4886 = vpop.f32.mrb[0].mxu0
      %4887 = vmatprep.mubr.f32.mxu0 0.0
      %4888 = vmatmul.mubr.f32.gmra.mrb[0].mxu0 %v1892
      %v4889 = vpop.f32.mrb[0].mxu0
      %v4890 = vadd.f32 %v952, %v4889
      %v4891 = vpop.f32.mrb[0].mxu0
      %4892 = vmatprep.mubr.f32.mxu0 0.0
      %4893 = vmatmul.mubr.f32.gmra.mrb[0].mxu0 %v1895
      %v4894 = vpop.f32.mrb[0].mxu0
      %v4895 = vadd.f32 %v952, %v4894
      %v4896 = vpop.f32.mrb[0].mxu0
      %4897 = vmatprep.mubr.f32.mxu0 0.0
      %4898 = vmatmul.mubr.f32.gmra.mrb[0].mxu0 %v1898
      %v4899 = vpop.f32.mrb[0].mxu0
      %v4900 = vadd.f32 %v952, %v4899
      %v4901 = vpop.f32.mrb[0].mxu0
      %4902 = vmatprep.mubr.f32.mxu0 0.0
      %4903 = vmatmul.mubr.f32.gmra.mrb[0].mxu0 %v1901
      %v4904 = vpop.f32.mrb[0].mxu0
      %v4905 = vadd.f32 %v952, %v4904
      %v4906 = vpop.f32.mrb[0].mxu0
      %4907 = vmatprep.mubr.f32.mxu0 0.0
      %4908 = vmatmul.mubr.f32.gmra.mrb[0].mxu0 %v1904
      %v4909 = vpop.f32.mrb[0].mxu0
      %v4910 = vadd.f32 %v952, %v4909
      %v4911 = vpop.f32.mrb[0].mxu0
      %4912 = vmatprep.mubr.f32.mxu0 0.0
      %4913 = vmatmul.mubr.f32.gmra.mrb[0].mxu0 %v1907
      %v4914 = vpop.f32.mrb[0].mxu0
      %v4915 = vadd.f32 %v952, %v4914
      %v4916 = vpop.f32.mrb[0].mxu0
      %4917 = vmatprep.mubr.f32.mxu0 0.0
      %4918 = vmatmul.mubr.f32.gmra.mrb[0].mxu0 %v1910
      %v4919 = vpop.f32.mrb[0].mxu0
      %v4920 = vadd.f32 %v952, %v4919
      %v4921 = vpop.f32.mrb[0].mxu0
      %4922 = vmatprep.mubr.f32.mxu0 0.0
      %4923 = vmatmul.mubr.f32.gmra.mrb[0].mxu0 %v1913
      %v4924 = vpop.f32.mrb[0].mxu0
      %v4925 = vadd.f32 %v952, %v4924
      %v4926 = vpop.f32.mrb[0].mxu0
      %4927 = vmatprep.mubr.f32.mxu0 0.0
      %4928 = vmatmul.mubr.f32.gmra.mrb[0].mxu0 %v1916
      %v4929 = vpop.f32.mrb[0].mxu0
      %v4930 = vadd.f32 %v952, %v4929
      %v4931 = vpop.f32.mrb[0].mxu0
      %4932 = vmatprep.mubr.f32.mxu0 0.0
      %4933 = vmatmul.mubr.f32.gmra.mrb[0].mxu0 %v1919
      %v4934 = vpop.f32.mrb[0].mxu0
      %v4935 = vadd.f32 %v952, %v4934
      %v4936 = vpop.f32.mrb[0].mxu0
      %4937 = vmatprep.mubr.f32.mxu0 0.0
      %4938 = vmatmul.mubr.f32.gmra.mrb[0].mxu0 %v1922
      %v4939 = vpop.f32.mrb[0].mxu0
      %v4940 = vadd.f32 %v952, %v4939
      %v4941 = vpop.f32.mrb[0].mxu0
      %4942 = vmatprep.mubr.f32.mxu0 0.0
      %4943 = vmatmul.mubr.f32.gmra.mrb[0].mxu0 %v1925
      %v4944 = vpop.f32.mrb[0].mxu0
      %v4945 = vadd.f32 %v952, %v4944
      %v4946 = vpop.f32.mrb[0].mxu0
      %4947 = vmatprep.mubr.f32.mxu0 0.0
      %4948 = vmatmul.mubr.f32.gmra.mrb[0].mxu0 %v1928
      %v4949 = vpop.f32.mrb[0].mxu0
      %v4950 = vadd.f32 %v952, %v4949
      %v4951 = vpop.f32.mrb[0].mxu0
      %4952 = vmatprep.mubr.f32.mxu0 0.0
      %4953 = vmatmul.mubr.f32.gmra.mrb[0].mxu0 %v1931
      %v4954 = vpop.f32.mrb[0].mxu0
      %v4955 = vadd.f32 %v952, %v4954
      %v4956 = vpop.f32.mrb[0].mxu0
      %4957 = vmatprep.mubr.f32.mxu0 0.0
      %4958 = vmatmul.mubr.f32.gmra.mrb[0].mxu0 %v1934
      %v4959 = vpop.f32.mrb[0].mxu0
      %v4960 = vadd.f32 %v952, %v4959
      %v4961 = vpop.f32.mrb[0].mxu0
      %4962 = vmatprep.mubr.f32.mxu0 0.0
      %4963 = vmatmul.mubr.f32.gmra.mrb[0].mxu0 %v1937
      %v4964 = vpop.f32.mrb[0].mxu0
      %v4965 = vadd.f32 %v952, %v4964
      %v4966 = vpop.f32.mrb[0].mxu0
      %4967 = vmatprep.mubr.f32.mxu0 0.0
      %4968 = vmatmul.mubr.f32.gmra.mrb[0].mxu0 %v1940
      %v4969 = vpop.f32.mrb[0].mxu0
      %v4970 = vadd.f32 %v952, %v4969
      %v4971 = vpop.f32.mrb[0].mxu0
      %4972 = vmatprep.mubr.f32.mxu0 0.0
      %4973 = vmatmul.mubr.f32.gmra.mrb[0].mxu0 %v1943
      %v4974 = vpop.f32.mrb[0].mxu0
      %v4975 = vadd.f32 %v952, %v4974
      %v4976 = vpop.f32.mrb[0].mxu0
      %4977 = vmatprep.mubr.f32.mxu0 0.0
      %4978 = vmatmul.mubr.f32.gmra.mrb[0].mxu0 %v1946
      %v4979 = vpop.f32.mrb[0].mxu0
      %v4980 = vadd.f32 %v952, %v4979
      %v4981 = vpop.f32.mrb[0].mxu0
      %4982 = vmatprep.mubr.f32.mxu0 0.0
      %4983 = vmatmul.mubr.f32.gmra.mrb[0].mxu0 %v1949
      %v4984 = vpop.f32.mrb[0].mxu0
      %v4985 = vadd.f32 %v952, %v4984
      %v4986 = vpop.f32.mrb[0].mxu0
      %4987 = vmatprep.mubr.f32.mxu0 0.0
      %4988 = vmatmul.mubr.f32.gmra.mrb[0].mxu0 %v1952
      %v4989 = vpop.f32.mrb[0].mxu0
      %v4990 = vadd.f32 %v952, %v4989
      %v4991 = vpop.f32.mrb[0].mxu0
      %4992 = vmatprep.mubr.f32.mxu0 0.0
      %4993 = vmatmul.mubr.f32.gmra.mrb[0].mxu0 %v1955
      %v4994 = vpop.f32.mrb[0].mxu0
      %v4995 = vadd.f32 %v952, %v4994
      %v4996 = vpop.f32.mrb[0].mxu0
      %4997 = vmatprep.mubr.f32.mxu0 0.0
      %4998 = vmatmul.mubr.f32.gmra.mrb[0].mxu0 %v1958
      %v4999 = vpop.f32.mrb[0].mxu0
      %v5000 = vadd.f32 %v952, %v4999
      %v5001 = vpop.f32.mrb[0].mxu0
      %5002 = vmatprep.mubr.f32.mxu0 0.0
      %5003 = vmatmul.mubr.f32.gmra.mrb[0].mxu0 %v1961
      %v5004 = vpop.f32.mrb[0].mxu0
      %v5005 = vadd.f32 %v952, %v5004
      %v5006 = vpop.f32.mrb[0].mxu0
      %5007 = vmatprep.mubr.f32.mxu0 0.0
      %5008 = vmatmul.mubr.f32.gmra.mrb[0].mxu0 %v1964
      %v5009 = vpop.f32.mrb[0].mxu0
      %v5010 = vadd.f32 %v952, %v5009
      %v5011 = vpop.f32.mrb[0].mxu0
      %5012 = vmatprep.mubr.f32.mxu0 0.0
      %5013 = vmatmul.mubr.f32.gmra.mrb[0].mxu0 %v1967
      %v5014 = vpop.f32.mrb[0].mxu0
      %v5015 = vadd.f32 %v952, %v5014
      %v5016 = vpop.f32.mrb[0].mxu0
      %5017 = vmatprep.mubr.f32.mxu0 0.0
      %5018 = vmatmul.mubr.f32.gmra.mrb[0].mxu0 %v1970
      %v5019 = vpop.f32.mrb[0].mxu0
      %v5020 = vadd.f32 %v952, %v5019
      %v5021 = vpop.f32.mrb[0].mxu0
      %5022 = vmatprep.mubr.f32.mxu0 0.0
      %5023 = vmatmul.mubr.f32.gmra.mrb[0].mxu0 %v1973
      %v5024 = vpop.f32.mrb[0].mxu0
      %v5025 = vadd.f32 %v952, %v5024
      %v5026 = vpop.f32.mrb[0].mxu0
      %5027 = vmatprep.mubr.f32.mxu0 0.0
      %5028 = vmatmul.mubr.f32.gmra.mrb[0].mxu0 %v1976
      %v5029 = vpop.f32.mrb[0].mxu0
      %v5030 = vadd.f32 %v952, %v5029
      %v5031 = vpop.f32.mrb[0].mxu0
      %5032 = vmatprep.mubr.f32.mxu0 0.0
      %5033 = vmatmul.mubr.f32.gmra.mrb[0].mxu0 %v1979
      %v5034 = vpop.f32.mrb[0].mxu0
      %v5035 = vadd.f32 %v952, %v5034
      %v5036 = vpop.f32.mrb[0].mxu0
      %5037 = vmatprep.mubr.f32.mxu0 0.0
      %5038 = vmatmul.mubr.f32.gmra.mrb[0].mxu0 %v1982
      %v5039 = vpop.f32.mrb[0].mxu0
      %v5040 = vadd.f32 %v952, %v5039
      %v5041 = vpop.f32.mrb[0].mxu0
      %5042 = vmatprep.mubr.f32.mxu0 0.0
      %5043 = vmatmul.mubr.f32.gmra.mrb[0].mxu0 %v1985
      %v5044 = vpop.f32.mrb[0].mxu0
      %v5045 = vadd.f32 %v952, %v5044
      %v5046 = vpop.f32.mrb[0].mxu0
      %5047 = vmatprep.mubr.f32.mxu0 0.0
      %5048 = vmatmul.mubr.f32.gmra.mrb[0].mxu0 %v1988
      %v5049 = vpop.f32.mrb[0].mxu0
      %v5050 = vadd.f32 %v952, %v5049
      %v5051 = vpop.f32.mrb[0].mxu0
      %5052 = vmatprep.mubr.f32.mxu0 0.0
      %5053 = vmatmul.mubr.f32.gmra.mrb[0].mxu0 %v1991
      %v5054 = vpop.f32.mrb[0].mxu0
      %v5055 = vadd.f32 %v952, %v5054
      %v5056 = vpop.f32.mrb[0].mxu0
      %5057 = vmatprep.mubr.f32.mxu0 0.0
      %5058 = vmatmul.mubr.f32.gmra.mrb[0].mxu0 %v1994
      %v5059 = vpop.f32.mrb[0].mxu0
      %v5060 = vadd.f32 %v952, %v5059
      %v5061 = vpop.f32.mrb[0].mxu0
      %5062 = vmatprep.mubr.f32.mxu0 0.0
      %5063 = vmatmul.mubr.f32.gmra.mrb[0].mxu0 %v1997
      %v5064 = vpop.f32.mrb[0].mxu0
      %v5065 = vadd.f32 %v952, %v5064
      %v5066 = vpop.f32.mrb[0].mxu0
      %5067 = vmatprep.mubr.f32.mxu0 0.0
      %5068 = vmatmul.mubr.f32.gmra.mrb[0].mxu0 %v2000
      %v5069 = vpop.f32.mrb[0].mxu0
      %v5070 = vadd.f32 %v952, %v5069
      %v5071 = vpop.f32.mrb[0].mxu0
      %5072 = vmatprep.mubr.f32.mxu0 0.0
      %5073 = vmatmul.mubr.f32.gmra.mrb[0].mxu0 %v2003
      %v5074 = vpop.f32.mrb[0].mxu0
      %v5075 = vadd.f32 %v952, %v5074
      %v5076 = vpop.f32.mrb[0].mxu0
      %5077 = vmatprep.mubr.f32.mxu0 0.0
      %5078 = vmatmul.mubr.f32.gmra.mrb[0].mxu0 %v2006
      %v5079 = vpop.f32.mrb[0].mxu0
      %v5080 = vadd.f32 %v952, %v5079
      %v5081 = vpop.f32.mrb[0].mxu0
      %5082 = vmatprep.mubr.f32.mxu0 0.0
      %5083 = vmatmul.mubr.f32.gmra.mrb[0].mxu0 %v2009
      %v5084 = vpop.f32.mrb[0].mxu0
      %v5085 = vadd.f32 %v952, %v5084
      %v5086 = vpop.f32.mrb[0].mxu0
      %5087 = vmatprep.mubr.f32.mxu0 0.0
      %5088 = vmatmul.mubr.f32.gmra.mrb[0].mxu0 %v2012
      %v5089 = vpop.f32.mrb[0].mxu0
      %v5090 = vadd.f32 %v952, %v5089
      %v5091 = vpop.f32.mrb[0].mxu0
      %5092 = vmatprep.mubr.f32.mxu0 0.0
      %5093 = vmatmul.mubr.f32.gmra.mrb[0].mxu0 %v2015
      %v5094 = vpop.f32.mrb[0].mxu0
      %v5095 = vadd.f32 %v952, %v5094
      %v5096 = vpop.f32.mrb[0].mxu0
      %5097 = vmatprep.mubr.f32.mxu0 0.0
      %5098 = vmatmul.mubr.f32.gmra.mrb[0].mxu0 %v2018
      %v5099 = vpop.f32.mrb[0].mxu0
      %v5100 = vadd.f32 %v952, %v5099
      %v5101 = vpop.f32.mrb[0].mxu0
      %5102 = vmatprep.mubr.f32.mxu0 0.0
      %5103 = vmatmul.mubr.f32.gmra.mrb[0].mxu0 %v2021
      %v5104 = vpop.f32.mrb[0].mxu0
      %v5105 = vadd.f32 %v952, %v5104
      %v5106 = vpop.f32.mrb[0].mxu0
      %5107 = vmatprep.mubr.f32.mxu0 0.0
      %5108 = vmatmul.mubr.f32.gmra.mrb[0].mxu0 %v2024
      %v5109 = vpop.f32.mrb[0].mxu0
      %v5110 = vadd.f32 %v952, %v5109
      %v5111 = vpop.f32.mrb[0].mxu0
      %5112 = vmatprep.mubr.f32.mxu0 0.0
      %5113 = vmatmul.mubr.f32.gmra.mrb[0].mxu0 %v2027
      %v5114 = vpop.f32.mrb[0].mxu0
      %v5115 = vadd.f32 %v952, %v5114
      %v5116 = vpop.f32.mrb[0].mxu0
      %5117 = vmatprep.mubr.f32.mxu0 0.0
      %5118 = vmatmul.mubr.f32.gmra.mrb[0].mxu0 %v2030
      %v5119 = vpop.f32.mrb[0].mxu0
      %v5120 = vadd.f32 %v952, %v5119
      %v5121 = vpop.f32.mrb[0].mxu0
      %5122 = vmatprep.mubr.f32.mxu0 0.0
      %5123 = vmatmul.mubr.f32.gmra.mrb[0].mxu0 %v2033
      %v5124 = vpop.f32.mrb[0].mxu0
      %v5125 = vadd.f32 %v952, %v5124
      %v5126 = vpop.f32.mrb[0].mxu0
      %5127 = vmatprep.mubr.f32.mxu0 0.0
      %5128 = vmatmul.mubr.f32.gmra.mrb[0].mxu0 %v2036
      %v5129 = vpop.f32.mrb[0].mxu0
      %v5130 = vadd.f32 %v952, %v5129
      %v5131 = vpop.f32.mrb[0].mxu0
      %5132 = vmatprep.mubr.f32.mxu0 0.0
      %5133 = vmatmul.mubr.f32.gmra.mrb[0].mxu0 %v2039
      %v5134 = vpop.f32.mrb[0].mxu0
      %v5135 = vadd.f32 %v952, %v5134
      %v5136 = vpop.f32.mrb[0].mxu0
      %5137 = vmatprep.mubr.f32.mxu0 0.0
      %5138 = vmatmul.mubr.f32.gmra.mrb[0].mxu0 %v2042
      %v5139 = vpop.f32.mrb[0].mxu0
      %v5140 = vadd.f32 %v952, %v5139
      %v5141 = vpop.f32.mrb[0].mxu0
      %5142 = vmatprep.mubr.f32.mxu0 0.0
      %5143 = vmatmul.mubr.f32.gmra.mrb[0].mxu0 %v2045
      %v5144 = vpop.f32.mrb[0].mxu0
      %v5145 = vadd.f32 %v952, %v5144
      %v5146 = vpop.f32.mrb[0].mxu0
      %5147 = vmatprep.mubr.f32.mxu0 0.0
      %5148 = vmatmul.mubr.f32.gmra.mrb[0].mxu0 %v2048
      %v5149 = vpop.f32.mrb[0].mxu0
      %v5150 = vadd.f32 %v952, %v5149
      %v5151 = vpop.f32.mrb[0].mxu0
      %5152 = vmatprep.mubr.f32.mxu0 0.0
      %5153 = vmatmul.mubr.f32.gmra.mrb[0].mxu0 %v2051
      %v5154 = vpop.f32.mrb[0].mxu0
      %v5155 = vadd.f32 %v952, %v5154
      %v5156 = vpop.f32.mrb[0].mxu0
      %5157 = vmatprep.mubr.f32.mxu0 0.0
      %5158 = vmatmul.mubr.f32.gmra.mrb[0].mxu0 %v2054
      %v5159 = vpop.f32.mrb[0].mxu0
      %v5160 = vadd.f32 %v952, %v5159
      %v5161 = vpop.f32.mrb[0].mxu0
      %5162 = vmatprep.mubr.f32.mxu0 0.0
      %5163 = vmatmul.mubr.f32.gmra.mrb[0].mxu0 %v2057
      %v5164 = vpop.f32.mrb[0].mxu0
      %v5165 = vadd.f32 %v952, %v5164
      %v5166 = vpop.f32.mrb[0].mxu0
      %5167 = vmatprep.mubr.f32.mxu0 0.0
      %5168 = vmatmul.mubr.f32.gmra.mrb[0].mxu0 %v2060
      %v5169 = vpop.f32.mrb[0].mxu0
      %v5170 = vadd.f32 %v952, %v5169
      %v5171 = vpop.f32.mrb[0].mxu0
      %5172 = vmatprep.mubr.f32.mxu0 0.0
      %5173 = vmatmul.mubr.f32.gmra.mrb[0].mxu0 %v2063
      %v5174 = vpop.f32.mrb[0].mxu0
      %v5175 = vadd.f32 %v952, %v5174
      %v5176 = vpop.f32.mrb[0].mxu0
      %5177 = vmatprep.mubr.f32.mxu0 0.0
      %5178 = vmatmul.mubr.f32.gmra.mrb[0].mxu0 %v2066
      %v5179 = vpop.f32.mrb[0].mxu0
      %v5180 = vadd.f32 %v952, %v5179
      %v5181 = vpop.f32.mrb[0].mxu0
      %5182 = vmatprep.mubr.f32.mxu0 0.0
      %5183 = vmatmul.mubr.f32.gmra.mrb[0].mxu0 %v2069
      %v5184 = vpop.f32.mrb[0].mxu0
      %v5185 = vadd.f32 %v952, %v5184
      %v5186 = vpop.f32.mrb[0].mxu0
      %5187 = vmatprep.mubr.f32.mxu0 0.0
      %5188 = vmatmul.mubr.f32.gmra.mrb[0].mxu0 %v2072
      %v5189 = vpop.f32.mrb[0].mxu0
      %v5190 = vadd.f32 %v952, %v5189
      %v5191 = vpop.f32.mrb[0].mxu0
      %5192 = vmatprep.mubr.f32.mxu0 0.0
      %5193 = vmatmul.mubr.f32.gmra.mrb[0].mxu0 %v2075
      %v5194 = vpop.f32.mrb[0].mxu0
      %v5195 = vadd.f32 %v952, %v5194
      %v5196 = vpop.f32.mrb[0].mxu0
      %5197 = vmatprep.mubr.f32.mxu0 0.0
      %5198 = vmatmul.mubr.f32.gmra.mrb[0].mxu0 %v2078
      %v5199 = vpop.f32.mrb[0].mxu0
      %v5200 = vadd.f32 %v952, %v5199
      %v5201 = vpop.f32.mrb[0].mxu0
      %5202 = vmatprep.mubr.f32.mxu0 0.0
      %5203 = vmatmul.mubr.f32.gmra.mrb[0].mxu0 %v2081
      %v5204 = vpop.f32.mrb[0].mxu0
      %v5205 = vadd.f32 %v952, %v5204
      %v5206 = vpop.f32.mrb[0].mxu0
      %5207 = vmatprep.mubr.f32.mxu0 0.0
      %5208 = vmatmul.mubr.f32.gmra.mrb[0].mxu0 %v2084
      %v5209 = vpop.f32.mrb[0].mxu0
      %v5210 = vadd.f32 %v952, %v5209
      %v5211 = vpop.f32.mrb[0].mxu0
      %5212 = vmatprep.mubr.f32.mxu0 0.0
      %5213 = vmatmul.mubr.f32.gmra.mrb[0].mxu0 %v2087
      %v5214 = vpop.f32.mrb[0].mxu0
      %v5215 = vadd.f32 %v952, %v5214
      %v5216 = vpop.f32.mrb[0].mxu0
      %5217 = vmatprep.mubr.f32.mxu0 0.0
      %5218 = vmatmul.mubr.f32.gmra.mrb[0].mxu0 %v2090
      %v5219 = vpop.f32.mrb[0].mxu0
      %v5220 = vadd.f32 %v952, %v5219
      %v5221 = vpop.f32.mrb[0].mxu0
      %5222 = vmatprep.mubr.f32.mxu0 0.0
      %5223 = vmatmul.mubr.f32.gmra.mrb[0].mxu0 %v2093
      %v5224 = vpop.f32.mrb[0].mxu0
      %v5225 = vadd.f32 %v952, %v5224
      %v5226 = vpop.f32.mrb[0].mxu0
      %5227 = vmatprep.mubr.f32.mxu0 0.0
      %5228 = vmatmul.mubr.f32.gmra.mrb[0].mxu0 %v2096
      %v5229 = vpop.f32.mrb[0].mxu0
      %v5230 = vadd.f32 %v952, %v5229
      %v5231 = vpop.f32.mrb[0].mxu0
      %5232 = vmatprep.mubr.f32.mxu0 0.0
      %5233 = vmatmul.mubr.f32.gmra.mrb[0].mxu0 %v2099
      %v5234 = vpop.f32.mrb[0].mxu0
      %v5235 = vadd.f32 %v952, %v5234
      %v5236 = vpop.f32.mrb[0].mxu0
      %5237 = vmatprep.mubr.f32.mxu0 0.0
      %5238 = vmatmul.mubr.f32.gmra.mrb[0].mxu0 %v2102
      %v5239 = vpop.f32.mrb[0].mxu0
      %v5240 = vadd.f32 %v952, %v5239
      %v5241 = vpop.f32.mrb[0].mxu0
      %5242 = vmatprep.mubr.f32.mxu0 0.0
      %5243 = vmatmul.mubr.f32.gmra.mrb[0].mxu0 %v2105
      %v5244 = vpop.f32.mrb[0].mxu0
      %v5245 = vadd.f32 %v952, %v5244
      %v5246 = vpop.f32.mrb[0].mxu0
      %5247 = vmatprep.mubr.f32.mxu0 0.0
      %5248 = vmatmul.mubr.f32.gmra.mrb[0].mxu0 %v2108
      %v5249 = vpop.f32.mrb[0].mxu0
      %v5250 = vadd.f32 %v952, %v5249
      %v5251 = vpop.f32.mrb[0].mxu0
      %5252 = vmatprep.mubr.f32.mxu0 0.0
      %5253 = vmatmul.mubr.f32.gmra.mrb[0].mxu0 %v2111
      %v5254 = vpop.f32.mrb[0].mxu0
      %v5255 = vadd.f32 %v952, %v5254
      %v5256 = vpop.f32.mrb[0].mxu0
      %5257 = vmatprep.mubr.f32.mxu0 0.0
      %5258 = vmatmul.mubr.f32.gmra.mrb[0].mxu0 %v2114
      %v5259 = vpop.f32.mrb[0].mxu0
      %v5260 = vadd.f32 %v952, %v5259
      %v5261 = vpop.f32.mrb[0].mxu0
      %5262 = vmatprep.mubr.f32.mxu0 0.0
      %5263 = vmatmul.mubr.f32.gmra.mrb[0].mxu0 %v2117
      %v5264 = vpop.f32.mrb[0].mxu0
      %v5265 = vadd.f32 %v952, %v5264
      %v5266 = vpop.f32.mrb[0].mxu0
      %5267 = vmatprep.mubr.f32.mxu0 0.0
      %5268 = vmatmul.mubr.f32.gmra.mrb[0].mxu0 %v2120
      %v5269 = vpop.f32.mrb[0].mxu0
      %v5270 = vadd.f32 %v952, %v5269
      %v5271 = vpop.f32.mrb[0].mxu0
      %5272 = vmatprep.mubr.f32.mxu0 0.0
      %5273 = vmatmul.mubr.f32.gmra.mrb[0].mxu0 %v2123
      %v5274 = vpop.f32.mrb[0].mxu0
      %v5275 = vadd.f32 %v952, %v5274
      %v5276 = vpop.f32.mrb[0].mxu0
      %5277 = vmatprep.mubr.f32.mxu0 0.0
      %5278 = vmatmul.mubr.f32.gmra.mrb[0].mxu0 %v2126
      %v5279 = vpop.f32.mrb[0].mxu0
      %v5280 = vadd.f32 %v952, %v5279
      %v5281 = vpop.f32.mrb[0].mxu0
      %5282 = vmatprep.mubr.f32.mxu0 0.0
      %5283 = vmatmul.mubr.f32.gmra.mrb[0].mxu0 %v2129
      %v5284 = vpop.f32.mrb[0].mxu0
      %v5285 = vadd.f32 %v952, %v5284
      %v5286 = vpop.f32.mrb[0].mxu0
      %5287 = vmatprep.mubr.f32.mxu0 0.0
      %5288 = vmatmul.mubr.f32.gmra.mrb[0].mxu0 %v2132
      %v5289 = vpop.f32.mrb[0].mxu0
      %v5290 = vadd.f32 %v952, %v5289
      %v5291 = vpop.f32.mrb[0].mxu0
      %5292 = vmatprep.mubr.f32.mxu0 0.0
      %5293 = vmatmul.mubr.f32.gmra.mrb[0].mxu0 %v2135
      %v5294 = vpop.f32.mrb[0].mxu0
      %v5295 = vadd.f32 %v952, %v5294
      %v5296 = vpop.f32.mrb[0].mxu0
      %5297 = vmatprep.mubr.f32.mxu0 0.0
      %5298 = vmatmul.mubr.f32.gmra.mrb[0].mxu0 %v2138
      %v5299 = vpop.f32.mrb[0].mxu0
      %v5300 = vadd.f32 %v952, %v5299
      %v5301 = vpop.f32.mrb[0].mxu0
      %5302 = vmatprep.mubr.f32.mxu0 0.0
      %5303 = vmatmul.mubr.f32.gmra.mrb[0].mxu0 %v2141
      %v5304 = vpop.f32.mrb[0].mxu0
      %v5305 = vadd.f32 %v952, %v5304
      %v5306 = vpop.f32.mrb[0].mxu0
      %5307 = vmatprep.mubr.f32.mxu0 0.0
      %5308 = vmatmul.mubr.f32.gmra.mrb[0].mxu0 %v2144
      %v5309 = vpop.f32.mrb[0].mxu0
      %v5310 = vadd.f32 %v952, %v5309
      %v5311 = vpop.f32.mrb[0].mxu0
      %5312 = vmatprep.mubr.f32.mxu0 0.0
      %5313 = vmatmul.mubr.f32.gmra.mrb[0].mxu0 %v2147
      %v5314 = vpop.f32.mrb[0].mxu0
      %v5315 = vadd.f32 %v952, %v5314
      %v5316 = vpop.f32.mrb[0].mxu0
      %5317 = vmatprep.mubr.f32.mxu0 0.0
      %5318 = vmatmul.mubr.f32.gmra.mrb[0].mxu0 %v2150
      %v5319 = vpop.f32.mrb[0].mxu0
      %v5320 = vadd.f32 %v952, %v5319
      %v5321 = vpop.f32.mrb[0].mxu0
      %5322 = vmatprep.mubr.f32.mxu0 0.0
      %5323 = vmatmul.mubr.f32.gmra.mrb[0].mxu0 %v2153
      %v5324 = vpop.f32.mrb[0].mxu0
      %v5325 = vadd.f32 %v952, %v5324
      %v5326 = vpop.f32.mrb[0].mxu0
      %5327 = vmatprep.mubr.f32.mxu0 0.0
      %5328 = vmatmul.mubr.f32.gmra.mrb[0].mxu0 %v2156
      %v5329 = vpop.f32.mrb[0].mxu0
      %v5330 = vadd.f32 %v952, %v5329
      %v5331 = vpop.f32.mrb[0].mxu0
      %5332 = vmatprep.mubr.f32.mxu0 0.0
      %5333 = vmatmul.mubr.f32.gmra.mrb[0].mxu0 %v2159
      %v5334 = vpop.f32.mrb[0].mxu0
      %v5335 = vadd.f32 %v952, %v5334
      %v5336 = vpop.f32.mrb[0].mxu0
      %5337 = vmatprep.mubr.f32.mxu0 0.0
      %5338 = vmatmul.mubr.f32.gmra.mrb[0].mxu0 %v2162
      %v5339 = vpop.f32.mrb[0].mxu0
      %v5340 = vadd.f32 %v952, %v5339
      %v5341 = vpop.f32.mrb[0].mxu0
      %5342 = vmatprep.mubr.f32.mxu0 0.0
      %5343 = vmatmul.mubr.f32.gmra.mrb[0].mxu0 %v2165
      %v5344 = vpop.f32.mrb[0].mxu0
      %v5345 = vadd.f32 %v952, %v5344
      %v5346 = vpop.f32.mrb[0].mxu0
      %5347 = vmatprep.mubr.f32.mxu0 0.0
      %5348 = vmatmul.mubr.f32.gmra.mrb[0].mxu0 %v2168
      %v5349 = vpop.f32.mrb[0].mxu0
      %v5350 = vadd.f32 %v952, %v5349
      %v5351 = vpop.f32.mrb[0].mxu0
      %5352 = vmatprep.mubr.f32.mxu0 0.0
      %5353 = vmatmul.mubr.f32.gmra.mrb[0].mxu0 %v2171
      %v5354 = vpop.f32.mrb[0].mxu0
      %v5355 = vadd.f32 %v952, %v5354
      %v5356 = vpop.f32.mrb[0].mxu0
      %5357 = vmatprep.mubr.f32.mxu0 0.0
      %5358 = vmatmul.mubr.f32.gmra.mrb[0].mxu0 %v2174
      %v5359 = vpop.f32.mrb[0].mxu0
      %v5360 = vadd.f32 %v952, %v5359
      %v5361 = vpop.f32.mrb[0].mxu0
      %5362 = vmatprep.mubr.f32.mxu0 0.0
      %5363 = vmatmul.mubr.f32.gmra.mrb[0].mxu0 %v2177
      %v5364 = vpop.f32.mrb[0].mxu0
      %v5365 = vadd.f32 %v952, %v5364
      %v5366 = vpop.f32.mrb[0].mxu0
      %5367 = vmatprep.mubr.f32.mxu0 0.0
      %5368 = vmatmul.mubr.f32.gmra.mrb[0].mxu0 %v2180
      %v5369 = vpop.f32.mrb[0].mxu0
      %v5370 = vadd.f32 %v952, %v5369
      %v5371 = vpop.f32.mrb[0].mxu0
      %5372 = vmatprep.mubr.f32.mxu0 0.0
      %5373 = vmatmul.mubr.f32.gmra.mrb[0].mxu0 %v2183
      %v5374 = vpop.f32.mrb[0].mxu0
      %v5375 = vadd.f32 %v952, %v5374
      %v5376 = vpop.f32.mrb[0].mxu0
      %5377 = vmatprep.mubr.f32.mxu0 0.0
      %5378 = vmatmul.mubr.f32.gmra.mrb[0].mxu0 %v2186
      %v5379 = vpop.f32.mrb[0].mxu0
      %v5380 = vadd.f32 %v952, %v5379
      %v5381 = vpop.f32.mrb[0].mxu0
      %5382 = vmatprep.mubr.f32.mxu0 0.0
      %5383 = vmatmul.mubr.f32.gmra.mrb[0].mxu0 %v2189
      %v5384 = vpop.f32.mrb[0].mxu0
      %v5385 = vadd.f32 %v952, %v5384
      %v5386 = vpop.f32.mrb[0].mxu0
      %5387 = vmatprep.mubr.f32.mxu0 0.0
      %5388 = vmatmul.mubr.f32.gmra.mrb[0].mxu0 %v2192
      %v5389 = vpop.f32.mrb[0].mxu0
      %v5390 = vadd.f32 %v952, %v5389
      %v5391 = vpop.f32.mrb[0].mxu0
      %5392 = vmatprep.mubr.f32.mxu0 0.0
      %5393 = vmatmul.mubr.f32.gmra.mrb[0].mxu0 %v2195
      %v5394 = vpop.f32.mrb[0].mxu0
      %v5395 = vadd.f32 %v952, %v5394
      %v5396 = vpop.f32.mrb[0].mxu0
      %5397 = vmatprep.mubr.f32.mxu0 0.0
      %5398 = vmatmul.mubr.f32.gmra.mrb[0].mxu0 %v2198
      %v5399 = vpop.f32.mrb[0].mxu0
      %v5400 = vadd.f32 %v952, %v5399
      %v5401 = vpop.f32.mrb[0].mxu0
      %5402 = vmatprep.mubr.f32.mxu0 0.0
      %5403 = vmatmul.mubr.f32.gmra.mrb[0].mxu0 %v2201
      %v5404 = vpop.f32.mrb[0].mxu0
      %v5405 = vadd.f32 %v952, %v5404
      %v5406 = vpop.f32.mrb[0].mxu0
      %5407 = vmatprep.mubr.f32.mxu0 0.0
      %5408 = vmatmul.mubr.f32.gmra.mrb[0].mxu0 %v2204
      %v5409 = vpop.f32.mrb[0].mxu0
      %v5410 = vadd.f32 %v952, %v5409
      %v5411 = vpop.f32.mrb[0].mxu0
      %5412 = vmatprep.mubr.f32.mxu0 0.0
      %5413 = vmatmul.mubr.f32.gmra.mrb[0].mxu0 %v2207
      %v5414 = vpop.f32.mrb[0].mxu0
      %v5415 = vadd.f32 %v952, %v5414
      %v5416 = vpop.f32.mrb[0].mxu0
      %5417 = vmatprep.mubr.f32.mxu0 0.0
      %5418 = vmatmul.mubr.f32.gmra.mrb[0].mxu0 %v2210
      %v5419 = vpop.f32.mrb[0].mxu0
      %v5420 = vadd.f32 %v952, %v5419
      %v5421 = vpop.f32.mrb[0].mxu0
      %5422 = vmatprep.mubr.f32.mxu0 0.0
      %5423 = vmatmul.mubr.f32.gmra.mrb[0].mxu0 %v2213
      %v5424 = vpop.f32.mrb[0].mxu0
      %v5425 = vadd.f32 %v952, %v5424
      %v5426 = vpop.f32.mrb[0].mxu0
      %5427 = vmatprep.mubr.f32.mxu0 0.0
      %5428 = vmatmul.mubr.f32.gmra.mrb[0].mxu0 %v2216
      %v5429 = vpop.f32.mrb[0].mxu0
      %v5430 = vadd.f32 %v952, %v5429
      %v5431 = vpop.f32.mrb[0].mxu0
      %5432 = vmatprep.mubr.f32.mxu0 0.0
      %5433 = vmatmul.mubr.f32.gmra.mrb[0].mxu0 %v2219
      %v5434 = vpop.f32.mrb[0].mxu0
      %v5435 = vadd.f32 %v952, %v5434
      %v5436 = vpop.f32.mrb[0].mxu0
      %5437 = vmatprep.mubr.f32.mxu0 0.0
      %5438 = vmatmul.mubr.f32.gmra.mrb[0].mxu0 %v2222
      %v5439 = vpop.f32.mrb[0].mxu0
      %v5440 = vadd.f32 %v952, %v5439
      %v5441 = vpop.f32.mrb[0].mxu0
      %5442 = vmatprep.mubr.f32.mxu0 0.0
      %5443 = vmatmul.mubr.f32.gmra.mrb[0].mxu0 %v2225
      %v5444 = vpop.f32.mrb[0].mxu0
      %v5445 = vadd.f32 %v952, %v5444
      %v5446 = vpop.f32.mrb[0].mxu0
      %5447 = vmatprep.mubr.f32.mxu0 0.0
      %5448 = vmatmul.mubr.f32.gmra.mrb[0].mxu0 %v2228
      %v5449 = vpop.f32.mrb[0].mxu0
      %v5450 = vadd.f32 %v952, %v5449
      %v5451 = vpop.f32.mrb[0].mxu0
      %5452 = vmatprep.mubr.f32.mxu0 0.0
      %5453 = vmatmul.mubr.f32.gmra.mrb[0].mxu0 %v2231
      %v5454 = vpop.f32.mrb[0].mxu0
      %v5455 = vadd.f32 %v952, %v5454
      %v5456 = vpop.f32.mrb[0].mxu0
      %5457 = vmatprep.mubr.f32.mxu0 0.0
      %5458 = vmatmul.mubr.f32.gmra.mrb[0].mxu0 %v2234
      %v5459 = vpop.f32.mrb[0].mxu0
      %v5460 = vadd.f32 %v952, %v5459
      %v5461 = vpop.f32.mrb[0].mxu0
      %5462 = vmatprep.mubr.f32.mxu0 0.0
      %5463 = vmatmul.mubr.f32.gmra.mrb[0].mxu0 %v2237
      %v5464 = vpop.f32.mrb[0].mxu0
      %v5465 = vadd.f32 %v952, %v5464
      %v5466 = vpop.f32.mrb[0].mxu0
      %5467 = vmatprep.mubr.f32.mxu0 0.0
      %5468 = vmatmul.mubr.f32.gmra.mrb[0].mxu0 %v2240
      %v5469 = vpop.f32.mrb[0].mxu0
      %v5470 = vadd.f32 %v952, %v5469
      %v5471 = vpop.f32.mrb[0].mxu0
      %5472 = vmatprep.mubr.f32.mxu0 0.0
      %5473 = vmatmul.mubr.f32.gmra.mrb[0].mxu0 %v2243
      %v5474 = vpop.f32.mrb[0].mxu0
      %v5475 = vadd.f32 %v952, %v5474
      %v5476 = vpop.f32.mrb[0].mxu0
      %5477 = vmatprep.mubr.f32.mxu0 0.0
      %5478 = vmatmul.mubr.f32.gmra.mrb[0].mxu0 %v2246
      %v5479 = vpop.f32.mrb[0].mxu0
      %v5480 = vadd.f32 %v952, %v5479
      %v5481 = vpop.f32.mrb[0].mxu0
      %5482 = vmatprep.mubr.f32.mxu0 0.0
      %5483 = vmatmul.mubr.f32.gmra.mrb[0].mxu0 %v2249
      %v5484 = vpop.f32.mrb[0].mxu0
      %v5485 = vadd.f32 %v952, %v5484
      %v5486 = vpop.f32.mrb[0].mxu0
      %5487 = vmatprep.mubr.f32.mxu0 0.0
      %5488 = vmatmul.mubr.f32.gmra.mrb[0].mxu0 %v2252
      %v5489 = vpop.f32.mrb[0].mxu0
      %v5490 = vadd.f32 %v952, %v5489
      %v5491 = vpop.f32.mrb[0].mxu0
      %5492 = vmatprep.mubr.f32.mxu0 0.0
      %5493 = vmatmul.mubr.f32.gmra.mrb[0].mxu0 %v2255
      %v5494 = vpop.f32.mrb[0].mxu0
      %v5495 = vadd.f32 %v952, %v5494
      %v5496 = vpop.f32.mrb[0].mxu0
      %5497 = vmatprep.mubr.f32.mxu0 0.0
      %5498 = vmatmul.mubr.f32.gmra.mrb[0].mxu0 %v2258
      %v5499 = vpop.f32.mrb[0].mxu0
      %v5500 = vadd.f32 %v952, %v5499
      %v5501 = vpop.f32.mrb[0].mxu0
      %5502 = vmatprep.mubr.f32.mxu0 0.0
      %5503 = vmatmul.mubr.f32.gmra.mrb[0].mxu0 %v2261
      %v5504 = vpop.f32.mrb[0].mxu0
      %v5505 = vadd.f32 %v952, %v5504
      %v5506 = vpop.f32.mrb[0].mxu0
      %5507 = vmatprep.mubr.f32.mxu0 0.0
      %5508 = vmatmul.mubr.f32.gmra.mrb[0].mxu0 %v2264
      %v5509 = vpop.f32.mrb[0].mxu0
      %v5510 = vadd.f32 %v952, %v5509
      %v5511 = vpop.f32.mrb[0].mxu0
      %5512 = vmatprep.mubr.f32.mxu0 0.0
      %5513 = vmatmul.mubr.f32.gmra.mrb[0].mxu0 %v2267
      %v5514 = vpop.f32.mrb[0].mxu0
      %v5515 = vadd.f32 %v952, %v5514
      %v5516 = vpop.f32.mrb[0].mxu0
      %5517 = vmatprep.mubr.f32.mxu0 0.0
      %5518 = vmatmul.mubr.f32.gmra.mrb[0].mxu0 %v2270
      %v5519 = vpop.f32.mrb[0].mxu0
      %v5520 = vadd.f32 %v952, %v5519
      %v5521 = vpop.f32.mrb[0].mxu0
      %5522 = vmatprep.mubr.f32.mxu0 0.0
      %5523 = vmatmul.mubr.f32.gmra.mrb[0].mxu0 %v2273
      %v5524 = vpop.f32.mrb[0].mxu0
      %v5525 = vadd.f32 %v952, %v5524
      %v5526 = vpop.f32.mrb[0].mxu0
      %5527 = vmatprep.mubr.f32.mxu0 0.0
      %5528 = vmatmul.mubr.f32.gmra.mrb[0].mxu0 %v2276
      %v5529 = vpop.f32.mrb[0].mxu0
      %v5530 = vadd.f32 %v952, %v5529
      %v5531 = vpop.f32.mrb[0].mxu0
      %5532 = vmatprep.mubr.f32.mxu0 0.0
      %5533 = vmatmul.mubr.f32.gmra.mrb[0].mxu0 %v2279
      %v5534 = vpop.f32.mrb[0].mxu0
      %v5535 = vadd.f32 %v952, %v5534
      %v5536 = vpop.f32.mrb[0].mxu0
      %5537 = vmatprep.mubr.f32.mxu0 0.0
      %5538 = vmatmul.mubr.f32.gmra.mrb[0].mxu0 %v2282
      %v5539 = vpop.f32.mrb[0].mxu0
      %v5540 = vadd.f32 %v952, %v5539
      %v5541 = vpop.f32.mrb[0].mxu0
      %5542 = vmatprep.mubr.f32.mxu0 0.0
      %5543 = vmatmul.mubr.f32.gmra.mrb[0].mxu0 %v2285
      %v5544 = vpop.f32.mrb[0].mxu0
      %v5545 = vadd.f32 %v952, %v5544
      %v5546 = vpop.f32.mrb[0].mxu0
      %5547 = vmatprep.mubr.f32.mxu0 0.0
      %5548 = vmatmul.mubr.f32.gmra.mrb[0].mxu0 %v2288
      %v5549 = vpop.f32.mrb[0].mxu0
      %v5550 = vadd.f32 %v952, %v5549
      %v5551 = vpop.f32.mrb[0].mxu0
      %5552 = vmatprep.mubr.f32.mxu0 0.0
      %5553 = vmatmul.mubr.f32.gmra.mrb[0].mxu0 %v2291
      %v5554 = vpop.f32.mrb[0].mxu0
      %v5555 = vadd.f32 %v952, %v5554
      %v5556 = vpop.f32.mrb[0].mxu0
      %5557 = vmatprep.mubr.f32.mxu0 0.0
      %5558 = vmatmul.mubr.f32.gmra.mrb[0].mxu0 %v2294
      %v5559 = vpop.f32.mrb[0].mxu0
      %v5560 = vadd.f32 %v952, %v5559
      %v5561 = vpop.f32.mrb[0].mxu0
      %5562 = vmatprep.mubr.f32.mxu0 0.0
      %5563 = vmatmul.mubr.f32.gmra.mrb[0].mxu0 %v2297
      %v5564 = vpop.f32.mrb[0].mxu0
      %v5565 = vadd.f32 %v952, %v5564
      %v5566 = vpop.f32.mrb[0].mxu0
      %5567 = vmatprep.mubr.f32.mxu0 0.0
      %5568 = vmatmul.mubr.f32.gmra.mrb[0].mxu0 %v2300
      %v5569 = vpop.f32.mrb[0].mxu0
      %v5570 = vadd.f32 %v952, %v5569
      %v5571 = vpop.f32.mrb[0].mxu0
      %5572 = vmatprep.mubr.f32.mxu0 0.0
      %5573 = vmatmul.mubr.f32.gmra.mrb[0].mxu0 %v2303
      %v5574 = vpop.f32.mrb[0].mxu0
      %v5575 = vadd.f32 %v952, %v5574
      %v5576 = vpop.f32.mrb[0].mxu0
      %5577 = vmatprep.mubr.f32.mxu0 0.0
      %5578 = vmatmul.mubr.f32.gmra.mrb[0].mxu0 %v2306
      %v5579 = vpop.f32.mrb[0].mxu0
      %v5580 = vadd.f32 %v952, %v5579
      %v5581 = vpop.f32.mrb[0].mxu0
      %5582 = vmatprep.mubr.f32.mxu0 0.0
      %5583 = vmatmul.mubr.f32.gmra.mrb[0].mxu0 %v2309
      %v5584 = vpop.f32.mrb[0].mxu0
      %v5585 = vadd.f32 %v952, %v5584
      %v5586 = vpop.f32.mrb[0].mxu0
      %5587 = vmatprep.mubr.f32.mxu0 0.0
      %5588 = vmatmul.mubr.f32.gmra.mrb[0].mxu0 %v2312
      %v5589 = vpop.f32.mrb[0].mxu0
      %v5590 = vadd.f32 %v952, %v5589
      %v5591 = vpop.f32.mrb[0].mxu0
      %5592 = vmatprep.mubr.f32.mxu0 0.0
      %5593 = vmatmul.mubr.f32.gmra.mrb[0].mxu0 %v2315
      %v5594 = vpop.f32.mrb[0].mxu0
      %v5595 = vadd.f32 %v952, %v5594
      %v5596 = vpop.f32.mrb[0].mxu0
      %5597 = vmatprep.mubr.f32.mxu0 0.0
      %5598 = vmatmul.mubr.f32.gmra.mrb[0].mxu0 %v2318
      %v5599 = vpop.f32.mrb[0].mxu0
      %v5600 = vadd.f32 %v952, %v5599
      %v5601 = vpop.f32.mrb[0].mxu0
      %5602 = vmatprep.mubr.f32.mxu0 0.0
      %5603 = vmatmul.mubr.f32.gmra.mrb[0].mxu0 %v2321
      %v5604 = vpop.f32.mrb[0].mxu0
      %v5605 = vadd.f32 %v952, %v5604
      %v5606 = vpop.f32.mrb[0].mxu0
      %5607 = vmatprep.mubr.f32.mxu0 0.0
      %5608 = vmatmul.mubr.f32.gmra.mrb[0].mxu0 %v2324
      %v5609 = vpop.f32.mrb[0].mxu0
      %v5610 = vadd.f32 %v952, %v5609
      %v5611 = vpop.f32.mrb[0].mxu0
      %5612 = vmatprep.mubr.f32.mxu0 0.0
      %5613 = vmatmul.mubr.f32.gmra.mrb[0].mxu0 %v2327
      %v5614 = vpop.f32.mrb[0].mxu0
      %v5615 = vadd.f32 %v952, %v5614
      %v5616 = vpop.f32.mrb[0].mxu0
      %5617 = vmatprep.mubr.f32.mxu0 0.0
      %5618 = vmatmul.mubr.f32.gmra.mrb[0].mxu0 %v2330
      %v5619 = vpop.f32.mrb[0].mxu0
      %v5620 = vadd.f32 %v952, %v5619
      %v5621 = vpop.f32.mrb[0].mxu0
      %5622 = vmatprep.mubr.f32.mxu0 0.0
      %5623 = vmatmul.mubr.f32.gmra.mrb[0].mxu0 %v2333
      %v5624 = vpop.f32.mrb[0].mxu0
      %v5625 = vadd.f32 %v952, %v5624
      %v5626 = vpop.f32.mrb[0].mxu0
      %5627 = vmatprep.mubr.f32.mxu0 0.0
      %5628 = vmatmul.mubr.f32.gmra.mrb[0].mxu0 %v2336
      %v5629 = vpop.f32.mrb[0].mxu0
      %v5630 = vadd.f32 %v952, %v5629
      %v5631 = vpop.f32.mrb[0].mxu0
      %5632 = vmatprep.mubr.f32.mxu0 0.0
      %5633 = vmatmul.mubr.f32.gmra.mrb[0].mxu0 %v2339
      %v5634 = vpop.f32.mrb[0].mxu0
      %v5635 = vadd.f32 %v952, %v5634
      %v5636 = vpop.f32.mrb[0].mxu0
      %5637 = vmatprep.mubr.f32.mxu0 0.0
      %5638 = vmatmul.mubr.f32.gmra.mrb[0].mxu0 %v2342
      %v5639 = vpop.f32.mrb[0].mxu0
      %v5640 = vadd.f32 %v952, %v5639
      %v5641 = vpop.f32.mrb[0].mxu0
      %5642 = vmatprep.mubr.f32.mxu0 0.0
      %5643 = vmatmul.mubr.f32.gmra.mrb[0].mxu0 %v2345
      %v5644 = vpop.f32.mrb[0].mxu0
      %v5645 = vadd.f32 %v952, %v5644
      %v5646 = vpop.f32.mrb[0].mxu0
      %5647 = vmatprep.mubr.f32.mxu0 0.0
      %5648 = vmatmul.mubr.f32.gmra.mrb[0].mxu0 %v2348
      %v5649 = vpop.f32.mrb[0].mxu0
      %v5650 = vadd.f32 %v952, %v5649
      %v5651 = vpop.f32.mrb[0].mxu0
      %5652 = vmatprep.mubr.f32.mxu0 0.0
      %5653 = vmatmul.mubr.f32.gmra.mrb[0].mxu0 %v2351
      %v5654 = vpop.f32.mrb[0].mxu0
      %v5655 = vadd.f32 %v952, %v5654
      %v5656 = vpop.f32.mrb[0].mxu0
      %5657 = vmatprep.mubr.f32.mxu0 0.0
      %5658 = vmatmul.mubr.f32.gmra.mrb[0].mxu0 %v2354
      %v5659 = vpop.f32.mrb[0].mxu0
      %v5660 = vadd.f32 %v952, %v5659
      %v5661 = vpop.f32.mrb[0].mxu0
      %5662 = vmatprep.mubr.f32.mxu0 0.0
      %5663 = vmatmul.mubr.f32.gmra.mrb[0].mxu0 %v2357
      %v5664 = vpop.f32.mrb[0].mxu0
      %v5665 = vadd.f32 %v952, %v5664
      %v5666 = vpop.f32.mrb[0].mxu0
      %5667 = vmatprep.mubr.f32.mxu0 0.0
      %5668 = vmatmul.mubr.f32.gmra.mrb[0].mxu0 %v2360
      %v5669 = vpop.f32.mrb[0].mxu0
      %v5670 = vadd.f32 %v952, %v5669
      %v5671 = vpop.f32.mrb[0].mxu0
      %5672 = vmatprep.mubr.f32.mxu0 0.0
      %5673 = vmatmul.mubr.f32.gmra.mrb[0].mxu0 %v2363
      %v5674 = vpop.f32.mrb[0].mxu0
      %v5675 = vadd.f32 %v952, %v5674
      %v5676 = vpop.f32.mrb[0].mxu0
      %5677 = vmatprep.mubr.f32.mxu0 0.0
      %5678 = vmatmul.mubr.f32.gmra.mrb[0].mxu0 %v2366
      %v5679 = vpop.f32.mrb[0].mxu0
      %v5680 = vadd.f32 %v952, %v5679
      %v5681 = vpop.f32.mrb[0].mxu0
      %5682 = vmatprep.mubr.f32.mxu0 0.0
      %5683 = vmatmul.mubr.f32.gmra.mrb[0].mxu0 %v2369
      %v5684 = vpop.f32.mrb[0].mxu0
      %v5685 = vadd.f32 %v952, %v5684
      %v5686 = vpop.f32.mrb[0].mxu0
      %5687 = vmatprep.mubr.f32.mxu0 0.0
      %5688 = vmatmul.mubr.f32.gmra.mrb[0].mxu0 %v2372
      %v5689 = vpop.f32.mrb[0].mxu0
      %v5690 = vadd.f32 %v952, %v5689
      %v5691 = vpop.f32.mrb[0].mxu0
      %5692 = vmatprep.mubr.f32.mxu0 0.0
      %5693 = vmatmul.mubr.f32.gmra.mrb[0].mxu0 %v2375
      %v5694 = vpop.f32.mrb[0].mxu0
      %v5695 = vadd.f32 %v952, %v5694
      %v5696 = vpop.f32.mrb[0].mxu0
      %5697 = vmatprep.mubr.f32.mxu0 0.0
      %5698 = vmatmul.mubr.f32.gmra.mrb[0].mxu0 %v2378
      %v5699 = vpop.f32.mrb[0].mxu0
      %v5700 = vadd.f32 %v952, %v5699
      %v5701 = vpop.f32.mrb[0].mxu0
      %5702 = vmatprep.mubr.f32.mxu0 0.0
      %5703 = vmatmul.mubr.f32.gmra.mrb[0].mxu0 %v2381
      %v5704 = vpop.f32.mrb[0].mxu0
      %v5705 = vadd.f32 %v952, %v5704
      %v5706 = vpop.f32.mrb[0].mxu0
      %5707 = vmatprep.mubr.f32.mxu0 0.0
      %5708 = vmatmul.mubr.f32.gmra.mrb[0].mxu0 %v2384
      %v5709 = vpop.f32.mrb[0].mxu0
      %v5710 = vadd.f32 %v952, %v5709
      %v5711 = vpop.f32.mrb[0].mxu0
      %5712 = vmatprep.mubr.f32.mxu0 0.0
      %5713 = vmatmul.mubr.f32.gmra.mrb[0].mxu0 %v2387
      %v5714 = vpop.f32.mrb[0].mxu0
      %v5715 = vadd.f32 %v952, %v5714
      %v5716 = vpop.f32.mrb[0].mxu0
      %5717 = vmatprep.mubr.f32.mxu0 0.0
      %5718 = vmatmul.mubr.f32.gmra.mrb[0].mxu0 %v2390
      %v5719 = vpop.f32.mrb[0].mxu0
      %v5720 = vadd.f32 %v952, %v5719
      %v5721 = vpop.f32.mrb[0].mxu0
      %5722 = vmatprep.mubr.f32.mxu0 0.0
      %5723 = vmatmul.mubr.f32.gmra.mrb[0].mxu0 %v2393
      %v5724 = vpop.f32.mrb[0].mxu0
      %v5725 = vadd.f32 %v952, %v5724
      %v5726 = vpop.f32.mrb[0].mxu0
      %5727 = vmatprep.mubr.f32.mxu0 0.0
      %5728 = vmatmul.mubr.f32.gmra.mrb[0].mxu0 %v2396
      %v5729 = vpop.f32.mrb[0].mxu0
      %v5730 = vadd.f32 %v952, %v5729
      %v5731 = vpop.f32.mrb[0].mxu0
      %5732 = vmatprep.mubr.f32.mxu0 0.0
      %5733 = vmatmul.mubr.f32.gmra.mrb[0].mxu0 %v2399
      %v5734 = vpop.f32.mrb[0].mxu0
      %v5735 = vadd.f32 %v952, %v5734
      %v5736 = vpop.f32.mrb[0].mxu0
      %5737 = vmatprep.mubr.f32.mxu0 0.0
      %5738 = vmatmul.mubr.f32.gmra.mrb[0].mxu0 %v2402
      %v5739 = vpop.f32.mrb[0].mxu0
      %v5740 = vadd.f32 %v952, %v5739
      %v5741 = vpop.f32.mrb[0].mxu0
      %5742 = vmatprep.mubr.f32.mxu0 0.0
      %5743 = vmatmul.mubr.f32.gmra.mrb[0].mxu0 %v2405
      %v5744 = vpop.f32.mrb[0].mxu0
      %v5745 = vadd.f32 %v952, %v5744
      %v5746 = vpop.f32.mrb[0].mxu0
      %5747 = vmatprep.mubr.f32.mxu0 0.0
      %5748 = vmatmul.mubr.f32.gmra.mrb[0].mxu0 %v2408
      %v5749 = vpop.f32.mrb[0].mxu0
      %v5750 = vadd.f32 %v952, %v5749
      %v5751 = vpop.f32.mrb[0].mxu0
      %5752 = vmatprep.mubr.f32.mxu0 0.0
      %5753 = vmatmul.mubr.f32.gmra.mrb[0].mxu0 %v2411
      %v5754 = vpop.f32.mrb[0].mxu0
      %v5755 = vadd.f32 %v952, %v5754
      %v5756 = vpop.f32.mrb[0].mxu0
      %5757 = vmatprep.mubr.f32.mxu0 0.0
      %5758 = vmatmul.mubr.f32.gmra.mrb[0].mxu0 %v2414
      %v5759 = vpop.f32.mrb[0].mxu0
      %v5760 = vadd.f32 %v952, %v5759
      %v5761 = vpop.f32.mrb[0].mxu0
      %5762 = vmatprep.mubr.f32.mxu0 0.0
      %5763 = vmatmul.mubr.f32.gmra.mrb[0].mxu0 %v2417
      %v5764 = vpop.f32.mrb[0].mxu0
      %v5765 = vadd.f32 %v952, %v5764
      %v5766 = vpop.f32.mrb[0].mxu0
      %5767 = vmatprep.mubr.f32.mxu0 0.0
      %5768 = vmatmul.mubr.f32.gmra.mrb[0].mxu0 %v2420
      %v5769 = vpop.f32.mrb[0].mxu0
      %v5770 = vadd.f32 %v952, %v5769
      %v5771 = vpop.f32.mrb[0].mxu0
      %5772 = vmatprep.mubr.f32.mxu0 0.0
      %5773 = vmatmul.mubr.f32.gmra.mrb[0].mxu0 %v2423
      %v5774 = vpop.f32.mrb[0].mxu0
      %v5775 = vadd.f32 %v952, %v5774
      %v5776 = vpop.f32.mrb[0].mxu0
      %5777 = vmatprep.mubr.f32.mxu0 0.0
      %5778 = vmatmul.mubr.f32.gmra.mrb[0].mxu0 %v2426
      %v5779 = vpop.f32.mrb[0].mxu0
      %v5780 = vadd.f32 %v952, %v5779
      %v5781 = vpop.f32.mrb[0].mxu0
      %5782 = vmatprep.mubr.f32.mxu0 0.0
      %5783 = vmatmul.mubr.f32.gmra.mrb[0].mxu0 %v2429
      %v5784 = vpop.f32.mrb[0].mxu0
      %v5785 = vadd.f32 %v952, %v5784
      %v5786 = vpop.f32.mrb[0].mxu0
      %5787 = vmatprep.mubr.f32.mxu0 0.0
      %5788 = vmatmul.mubr.f32.gmra.mrb[0].mxu0 %v2432
      %v5789 = vpop.f32.mrb[0].mxu0
      %v5790 = vadd.f32 %v952, %v5789
      %v5791 = vpop.f32.mrb[0].mxu0
      %5792 = vmatprep.mubr.f32.mxu0 0.0
      %5793 = vmatmul.mubr.f32.gmra.mrb[0].mxu0 %v2435
      %v5794 = vpop.f32.mrb[0].mxu0
      %v5795 = vadd.f32 %v952, %v5794
      %v5796 = vpop.f32.mrb[0].mxu0
      %5797 = vmatprep.mubr.f32.mxu0 0.0
      %5798 = vmatmul.mubr.f32.gmra.mrb[0].mxu0 %v2438
      %v5799 = vpop.f32.mrb[0].mxu0
      %v5800 = vadd.f32 %v952, %v5799
      %v5801 = vpop.f32.mrb[0].mxu0
      %5802 = vmatprep.mubr.f32.mxu0 0.0
      %5803 = vmatmul.mubr.f32.gmra.mrb[0].mxu0 %v2441
      %v5804 = vpop.f32.mrb[0].mxu0
      %v5805 = vadd.f32 %v952, %v5804
      %v5806 = vpop.f32.mrb[0].mxu0
      %5807 = vmatprep.mubr.f32.mxu0 0.0
      %5808 = vmatmul.mubr.f32.gmra.mrb[0].mxu0 %v2444
      %v5809 = vpop.f32.mrb[0].mxu0
      %v5810 = vadd.f32 %v952, %v5809
      %v5811 = vpop.f32.mrb[0].mxu0
      %5812 = vmatprep.mubr.f32.mxu0 0.0
      %5813 = vmatmul.mubr.f32.gmra.mrb[0].mxu0 %v2447
      %v5814 = vpop.f32.mrb[0].mxu0
      %v5815 = vadd.f32 %v952, %v5814
      %v5816 = vpop.f32.mrb[0].mxu0
      %5817 = vmatprep.mubr.f32.mxu0 0.0
      %5818 = vmatmul.mubr.f32.gmra.mrb[0].mxu0 %v2450
      %v5819 = vpop.f32.mrb[0].mxu0
      %v5820 = vadd.f32 %v952, %v5819
      %v5821 = vpop.f32.mrb[0].mxu0
      %5822 = vmatprep.mubr.f32.mxu0 0.0
      %5823 = vmatmul.mubr.f32.gmra.mrb[0].mxu0 %v2453
      %v5824 = vpop.f32.mrb[0].mxu0
      %v5825 = vadd.f32 %v952, %v5824
      %v5826 = vpop.f32.mrb[0].mxu0
      %5827 = vmatprep.mubr.f32.mxu0 0.0
      %5828 = vmatmul.mubr.f32.gmra.mrb[0].mxu0 %v2456
      %v5829 = vpop.f32.mrb[0].mxu0
      %v5830 = vadd.f32 %v952, %v5829
      %v5831 = vpop.f32.mrb[0].mxu0
      %5832 = vmatprep.mubr.f32.mxu0 0.0
      %5833 = vmatmul.mubr.f32.gmra.mrb[0].mxu0 %v2459
      %v5834 = vpop.f32.mrb[0].mxu0
      %v5835 = vadd.f32 %v952, %v5834
      %v5836 = vpop.f32.mrb[0].mxu0
      %5837 = vmatprep.mubr.f32.mxu0 0.0
      %5838 = vmatmul.mubr.f32.gmra.mrb[0].mxu0 %v2462
      %v5839 = vpop.f32.mrb[0].mxu0
      %v5840 = vadd.f32 %v952, %v5839
      %v5841 = vpop.f32.mrb[0].mxu0
      %5842 = vmatprep.mubr.f32.mxu0 0.0
      %5843 = vmatmul.mubr.f32.gmra.mrb[0].mxu0 %v2465
      %v5844 = vpop.f32.mrb[0].mxu0
      %v5845 = vadd.f32 %v952, %v5844
      %v5846 = vpop.f32.mrb[0].mxu0
      %5847 = vmatprep.mubr.f32.mxu0 0.0
      %5848 = vmatmul.mubr.f32.gmra.mrb[0].mxu0 %v2468
      %v5849 = vpop.f32.mrb[0].mxu0
      %v5850 = vadd.f32 %v952, %v5849
      %v5851 = vpop.f32.mrb[0].mxu0
      %5852 = vmatprep.mubr.f32.mxu0 0.0
      %5853 = vmatmul.mubr.f32.gmra.mrb[0].mxu0 %v2471
      %v5854 = vpop.f32.mrb[0].mxu0
      %v5855 = vadd.f32 %v952, %v5854
      %v5856 = vpop.f32.mrb[0].mxu0
      %5857 = vmatprep.mubr.f32.mxu0 0.0
      %5858 = vmatmul.mubr.f32.gmra.mrb[0].mxu0 %v2474
      %v5859 = vpop.f32.mrb[0].mxu0
      %v5860 = vadd.f32 %v952, %v5859
      %v5861 = vpop.f32.mrb[0].mxu0
      %5862 = vmatprep.mubr.f32.mxu0 0.0
      %5863 = vmatmul.mubr.f32.gmra.mrb[0].mxu0 %v2477
      %v5864 = vpop.f32.mrb[0].mxu0
      %v5865 = vadd.f32 %v952, %v5864
      %v5866 = vpop.f32.mrb[0].mxu0
      %5867 = vmatprep.mubr.f32.mxu0 0.0
      %5868 = vmatmul.mubr.f32.gmra.mrb[0].mxu0 %v2480
      %v5869 = vpop.f32.mrb[0].mxu0
      %v5870 = vadd.f32 %v952, %v5869
      %v5871 = vpop.f32.mrb[0].mxu0
      %5872 = vmatprep.mubr.f32.mxu0 0.0
      %5873 = vmatmul.mubr.f32.gmra.mrb[0].mxu0 %v2483
      %v5874 = vpop.f32.mrb[0].mxu0
      %v5875 = vadd.f32 %v952, %v5874
      %v5876 = vpop.f32.mrb[0].mxu0
      %5877 = vmatprep.mubr.f32.mxu0 0.0
      %5878 = vmatmul.mubr.f32.gmra.mrb[0].mxu0 %v2486
      %v5879 = vpop.f32.mrb[0].mxu0
      %v5880 = vadd.f32 %v952, %v5879
      %v5881 = vpop.f32.mrb[0].mxu0
      %5882 = vmatprep.mubr.f32.mxu0 0.0
      %5883 = vmatmul.mubr.f32.gmra.mrb[0].mxu0 %v2489
      %v5884 = vpop.f32.mrb[0].mxu0
      %v5885 = vadd.f32 %v952, %v5884
      %v5886 = vpop.f32.mrb[0].mxu0
      %5887 = vmatprep.mubr.f32.mxu0 0.0
      %5888 = vmatmul.mubr.f32.gmra.mrb[0].mxu0 %v2492
      %v5889 = vpop.f32.mrb[0].mxu0
      %v5890 = vadd.f32 %v952, %v5889
      %v5891 = vpop.f32.mrb[0].mxu0
      %5892 = vmatprep.mubr.f32.mxu0 0.0
      %5893 = vmatmul.mubr.f32.gmra.mrb[0].mxu0 %v2495
      %v5894 = vpop.f32.mrb[0].mxu0
      %v5895 = vadd.f32 %v952, %v5894
      %v5896 = vpop.f32.mrb[0].mxu0
      %5897 = vmatprep.mubr.f32.mxu0 0.0
      %5898 = vmatmul.mubr.f32.gmra.mrb[0].mxu0 %v2498
      %v5899 = vpop.f32.mrb[0].mxu0
      %v5900 = vadd.f32 %v952, %v5899
      %v5901 = vpop.f32.mrb[0].mxu0
      %5902 = vmatprep.mubr.f32.mxu0 0.0
      %5903 = vmatmul.mubr.f32.gmra.mrb[0].mxu0 %v2501
      %v5904 = vpop.f32.mrb[0].mxu0
      %v5905 = vadd.f32 %v952, %v5904
      %v5906 = vpop.f32.mrb[0].mxu0
      %5907 = vmatprep.mubr.f32.mxu0 0.0
      %5908 = vmatmul.mubr.f32.gmra.mrb[0].mxu0 %v2504
      %v5909 = vpop.f32.mrb[0].mxu0
      %v5910 = vadd.f32 %v952, %v5909
      %v5911 = vpop.f32.mrb[0].mxu0
      %5912 = vmatprep.mubr.f32.mxu0 0.0
      %5913 = vmatmul.mubr.f32.gmra.mrb[0].mxu0 %v2507
      %v5914 = vpop.f32.mrb[0].mxu0
      %v5915 = vadd.f32 %v952, %v5914
      %v5916 = vpop.f32.mrb[0].mxu0
      %5917 = vmatprep.mubr.f32.mxu0 0.0
      %5918 = vmatmul.mubr.f32.gmra.mrb[0].mxu0 %v2510
      %v5919 = vpop.f32.mrb[0].mxu0
      %v5920 = vadd.f32 %v952, %v5919
      %v5921 = vpop.f32.mrb[0].mxu0
      %5922 = vmatprep.mubr.f32.mxu0 0.0
      %5923 = vmatmul.mubr.f32.gmra.mrb[0].mxu0 %v2513
      %v5924 = vpop.f32.mrb[0].mxu0
      %v5925 = vadd.f32 %v952, %v5924
      %v5926 = vpop.f32.mrb[0].mxu0
      %5927 = vmatprep.mubr.f32.mxu0 0.0
      %5928 = vmatmul.mubr.f32.gmra.mrb[0].mxu0 %v2516
      %v5929 = vpop.f32.mrb[0].mxu0
      %v5930 = vadd.f32 %v952, %v5929
      %v5931 = vpop.f32.mrb[0].mxu0
      %5932 = vmatprep.mubr.f32.mxu0 0.0
      %5933 = vmatmul.mubr.f32.gmra.mrb[0].mxu0 %v2519
      %v5934 = vpop.f32.mrb[0].mxu0
      %v5935 = vadd.f32 %v952, %v5934
      %v5936 = vpop.f32.mrb[0].mxu0
      %5937 = vmatprep.mubr.f32.mxu0 0.0
      %5938 = vmatmul.mubr.f32.gmra.mrb[0].mxu0 %v2522
      %v5939 = vpop.f32.mrb[0].mxu0
      %v5940 = vadd.f32 %v952, %v5939
      %v5941 = vpop.f32.mrb[0].mxu0
      %5942 = vmatprep.mubr.f32.mxu0 0.0
      %5943 = vmatmul.mubr.f32.gmra.mrb[0].mxu0 %v2525
      %v5944 = vpop.f32.mrb[0].mxu0
      %v5945 = vadd.f32 %v952, %v5944
      %v5946 = vpop.f32.mrb[0].mxu0
      %5947 = vmatprep.mubr.f32.mxu0 0.0
      %5948 = vmatmul.mubr.f32.gmra.mrb[0].mxu0 %v2528
      %v5949 = vpop.f32.mrb[0].mxu0
      %v5950 = vadd.f32 %v952, %v5949
      %v5951 = vpop.f32.mrb[0].mxu0
      %5952 = vmatprep.mubr.f32.mxu0 0.0
      %5953 = vmatmul.mubr.f32.gmra.mrb[0].mxu0 %v2531
      %v5954 = vpop.f32.mrb[0].mxu0
      %v5955 = vadd.f32 %v952, %v5954
      %v5956 = vpop.f32.mrb[0].mxu0
      %5957 = vmatprep.mubr.f32.mxu0 0.0
      %5958 = vmatmul.mubr.f32.gmra.mrb[0].mxu0 %v2534
      %v5959 = vpop.f32.mrb[0].mxu0
      %v5960 = vadd.f32 %v952, %v5959
      %v5961 = vpop.f32.mrb[0].mxu0
      %5962 = vmatprep.mubr.f32.mxu0 0.0
      %5963 = vmatmul.mubr.f32.gmra.mrb[0].mxu0 %v2537
      %v5964 = vpop.f32.mrb[0].mxu0
      %v5965 = vadd.f32 %v952, %v5964
      %v5966 = vpop.f32.mrb[0].mxu0
      %5967 = vmatprep.mubr.f32.mxu0 0.0
      %5968 = vmatmul.mubr.f32.gmra.mrb[0].mxu0 %v2540
      %v5969 = vpop.f32.mrb[0].mxu0
      %v5970 = vadd.f32 %v952, %v5969
      %v5971 = vpop.f32.mrb[0].mxu0
      %5972 = vmatprep.mubr.f32.mxu0 0.0
      %5973 = vmatmul.mubr.f32.gmra.mrb[0].mxu0 %v2543
      %v5974 = vpop.f32.mrb[0].mxu0
      %v5975 = vadd.f32 %v952, %v5974
      %v5976 = vpop.f32.mrb[0].mxu0
      %5977 = vmatprep.mubr.f32.mxu0 0.0
      %5978 = vmatmul.mubr.f32.gmra.mrb[0].mxu0 %v2546
      %v5979 = vpop.f32.mrb[0].mxu0
      %v5980 = vadd.f32 %v952, %v5979
      %v5981 = vpop.f32.mrb[0].mxu0
      %5982 = vmatprep.mubr.f32.mxu0 0.0
      %5983 = vmatmul.mubr.f32.gmra.mrb[0].mxu0 %v2549
      %v5984 = vpop.f32.mrb[0].mxu0
      %v5985 = vadd.f32 %v952, %v5984
      %v5986 = vpop.f32.mrb[0].mxu0
      %5987 = vmatprep.mubr.f32.mxu0 0.0
      %5988 = vmatmul.mubr.f32.gmra.mrb[0].mxu0 %v2552
      %v5989 = vpop.f32.mrb[0].mxu0
      %v5990 = vadd.f32 %v952, %v5989
      %v5991 = vpop.f32.mrb[0].mxu0
      %5992 = vmatprep.mubr.f32.mxu0 0.0
      %5993 = vmatmul.mubr.f32.gmra.mrb[0].mxu0 %v2555
      %v5994 = vpop.f32.mrb[0].mxu0
      %v5995 = vadd.f32 %v952, %v5994
      %v5996 = vpop.f32.mrb[0].mxu0
      %5997 = vmatprep.mubr.f32.mxu0 0.0
      %5998 = vmatmul.mubr.f32.gmra.mrb[0].mxu0 %v2558
      %v5999 = vpop.f32.mrb[0].mxu0
      %v6000 = vadd.f32 %v952, %v5999
      %v6001 = vpop.f32.mrb[0].mxu0
      %6002 = vmatprep.mubr.f32.mxu0 0.0
      %6003 = vmatmul.mubr.f32.gmra.mrb[0].mxu0 %v2561
      %v6004 = vpop.f32.mrb[0].mxu0
      %v6005 = vadd.f32 %v952, %v6004
      %v6006 = vpop.f32.mrb[0].mxu0
      %6007 = vmatprep.mubr.f32.mxu0 0.0
      %6008 = vmatmul.mubr.f32.gmra.mrb[0].mxu0 %v2564
      %v6009 = vpop.f32.mrb[0].mxu0
      %v6010 = vadd.f32 %v952, %v6009
      %v6011 = vpop.f32.mrb[0].mxu0
      %6012 = vmatprep.mubr.f32.mxu0 0.0
      %6013 = vmatmul.mubr.f32.gmra.mrb[0].mxu0 %v2567
      %v6014 = vpop.f32.mrb[0].mxu0
      %v6015 = vadd.f32 %v952, %v6014
      %v6016 = vpop.f32.mrb[0].mxu0
      %6017 = vmatprep.mubr.f32.mxu0 0.0
      %6018 = vmatmul.mubr.f32.gmra.mrb[0].mxu0 %v2570
      %v6019 = vpop.f32.mrb[0].mxu0
      %v6020 = vadd.f32 %v952, %v6019
      %v6021 = vpop.f32.mrb[0].mxu0
      %6022 = vmatprep.mubr.f32.mxu0 0.0
      %6023 = vmatmul.mubr.f32.gmra.mrb[0].mxu0 %v2573
      %v6024 = vpop.f32.mrb[0].mxu0
      %v6025 = vadd.f32 %v952, %v6024
      %v6026 = vpop.f32.mrb[0].mxu0
      %6027 = vmatprep.mubr.f32.mxu0 0.0
      %6028 = vmatmul.mubr.f32.gmra.mrb[0].mxu0 %v2576
      %v6029 = vpop.f32.mrb[0].mxu0
      %v6030 = vadd.f32 %v952, %v6029
      %v6031 = vpop.f32.mrb[0].mxu0
      %6032 = vmatprep.mubr.f32.mxu0 0.0
      %6033 = vmatmul.mubr.f32.gmra.mrb[0].mxu0 %v2579
      %v6034 = vpop.f32.mrb[0].mxu0
      %v6035 = vadd.f32 %v952, %v6034
      %v6036 = vpop.f32.mrb[0].mxu0
      %6037 = vmatprep.mubr.f32.mxu0 0.0
      %6038 = vmatmul.mubr.f32.gmra.mrb[0].mxu0 %v2582
      %v6039 = vpop.f32.mrb[0].mxu0
      %v6040 = vadd.f32 %v952, %v6039
      %v6041 = vpop.f32.mrb[0].mxu0
      %6042 = vmatprep.mubr.f32.mxu0 0.0
      %6043 = vmatmul.mubr.f32.gmra.mrb[0].mxu0 %v2585
      %v6044 = vpop.f32.mrb[0].mxu0
      %v6045 = vadd.f32 %v952, %v6044
      %v6046 = vpop.f32.mrb[0].mxu0
      %6047 = vmatprep.mubr.f32.mxu0 0.0
      %6048 = vmatmul.mubr.f32.gmra.mrb[0].mxu0 %v2588
      %v6049 = vpop.f32.mrb[0].mxu0
      %v6050 = vadd.f32 %v952, %v6049
      %v6051 = vpop.f32.mrb[0].mxu0
      %6052 = vmatprep.mubr.f32.mxu0 0.0
      %6053 = vmatmul.mubr.f32.gmra.mrb[0].mxu0 %v2591
      %v6054 = vpop.f32.mrb[0].mxu0
      %v6055 = vadd.f32 %v952, %v6054
      %v6056 = vpop.f32.mrb[0].mxu0
      %6057 = vmatprep.mubr.f32.mxu0 0.0
      %6058 = vmatmul.mubr.f32.gmra.mrb[0].mxu0 %v2594
      %v6059 = vpop.f32.mrb[0].mxu0
      %v6060 = vadd.f32 %v952, %v6059
      %v6061 = vpop.f32.mrb[0].mxu0
      %6062 = vmatprep.mubr.f32.mxu0 0.0
      %6063 = vmatmul.mubr.f32.gmra.mrb[0].mxu0 %v2597
      %v6064 = vpop.f32.mrb[0].mxu0
      %v6065 = vadd.f32 %v952, %v6064
      %v6066 = vpop.f32.mrb[0].mxu0
      %6067 = vmatprep.mubr.f32.mxu0 0.0
      %6068 = vmatmul.mubr.f32.gmra.mrb[0].mxu0 %v2600
      %v6069 = vpop.f32.mrb[0].mxu0
      %v6070 = vadd.f32 %v952, %v6069
      %v6071 = vpop.f32.mrb[0].mxu0
      %6072 = vmatprep.mubr.f32.mxu0 0.0
      %6073 = vmatmul.mubr.f32.gmra.mrb[0].mxu0 %v2603
      %v6074 = vpop.f32.mrb[0].mxu0
      %v6075 = vadd.f32 %v952, %v6074
      %v6076 = vpop.f32.mrb[0].mxu0
      %6077 = vmatprep.mubr.f32.mxu0 0.0
      %6078 = vmatmul.mubr.f32.gmra.mrb[0].mxu0 %v2606
      %v6079 = vpop.f32.mrb[0].mxu0
      %v6080 = vadd.f32 %v952, %v6079
      %v6081 = vpop.f32.mrb[0].mxu0
      %6082 = vmatprep.mubr.f32.mxu0 0.0
      %6083 = vmatmul.mubr.f32.gmra.mrb[0].mxu0 %v2609
      %v6084 = vpop.f32.mrb[0].mxu0
      %v6085 = vadd.f32 %v952, %v6084
      %v6086 = vpop.f32.mrb[0].mxu0
      %6087 = vmatprep.mubr.f32.mxu0 0.0
      %6088 = vmatmul.mubr.f32.gmra.mrb[0].mxu0 %v2612
      %v6089 = vpop.f32.mrb[0].mxu0
      %v6090 = vadd.f32 %v952, %v6089
      %v6091 = vpop.f32.mrb[0].mxu0
      %6092 = vmatprep.mubr.f32.mxu0 0.0
      %6093 = vmatmul.mubr.f32.gmra.mrb[0].mxu0 %v2615
      %v6094 = vpop.f32.mrb[0].mxu0
      %v6095 = vadd.f32 %v952, %v6094
      %v6096 = vpop.f32.mrb[0].mxu0
      %6097 = vmatprep.mubr.f32.mxu0 0.0
      %6098 = vmatmul.mubr.f32.gmra.mrb[0].mxu0 %v2618
      %v6099 = vpop.f32.mrb[0].mxu0
      %v6100 = vadd.f32 %v952, %v6099
      %v6101 = vpop.f32.mrb[0].mxu0
      %6102 = vmatprep.mubr.f32.mxu0 0.0
      %6103 = vmatmul.mubr.f32.gmra.mrb[0].mxu0 %v2621
      %v6104 = vpop.f32.mrb[0].mxu0
      %v6105 = vadd.f32 %v952, %v6104
      %v6106 = vpop.f32.mrb[0].mxu0
      %6107 = vmatprep.mubr.f32.mxu0 0.0
      %6108 = vmatmul.mubr.f32.gmra.mrb[0].mxu0 %v2624
      %v6109 = vpop.f32.mrb[0].mxu0
      %v6110 = vadd.f32 %v952, %v6109
      %v6111 = vpop.f32.mrb[0].mxu0
      %6112 = vmatprep.mubr.f32.mxu0 0.0
      %6113 = vmatmul.mubr.f32.gmra.mrb[0].mxu0 %v2627
      %v6114 = vpop.f32.mrb[0].mxu0
      %v6115 = vadd.f32 %v952, %v6114
      %v6116 = vpop.f32.mrb[0].mxu0
      %6117 = vmatprep.mubr.f32.mxu0 0.0
      %6118 = vmatmul.mubr.f32.gmra.mrb[0].mxu0 %v2630
      %v6119 = vpop.f32.mrb[0].mxu0
      %v6120 = vadd.f32 %v952, %v6119
      %v6121 = vpop.f32.mrb[0].mxu0
      %6122 = vmatprep.mubr.f32.mxu0 0.0
      %6123 = vmatmul.mubr.f32.gmra.mrb[0].mxu0 %v2633
      %v6124 = vpop.f32.mrb[0].mxu0
      %v6125 = vadd.f32 %v952, %v6124
      %v6126 = vpop.f32.mrb[0].mxu0
      %6127 = vmatprep.mubr.f32.mxu0 0.0
      %6128 = vmatmul.mubr.f32.gmra.mrb[0].mxu0 %v2636
      %v6129 = vpop.f32.mrb[0].mxu0
      %v6130 = vadd.f32 %v952, %v6129
      %v6131 = vpop.f32.mrb[0].mxu0
      %6132 = vmatprep.mubr.f32.mxu0 0.0
      %6133 = vmatmul.mubr.f32.gmra.mrb[0].mxu0 %v2639
      %v6134 = vpop.f32.mrb[0].mxu0
      %v6135 = vadd.f32 %v952, %v6134
      %v6136 = vpop.f32.mrb[0].mxu0
      %6137 = vmatprep.mubr.f32.mxu0 0.0
      %6138 = vmatmul.mubr.f32.gmra.mrb[0].mxu0 %v2642
      %v6139 = vpop.f32.mrb[0].mxu0
      %v6140 = vadd.f32 %v952, %v6139
      %v6141 = vpop.f32.mrb[0].mxu0
      %6142 = vmatprep.mubr.f32.mxu0 0.0
      %6143 = vmatmul.mubr.f32.gmra.mrb[0].mxu0 %v2645
      %v6144 = vpop.f32.mrb[0].mxu0
      %v6145 = vadd.f32 %v952, %v6144
      %v6146 = vpop.f32.mrb[0].mxu0
      %6147 = vmatprep.mubr.f32.mxu0 0.0
      %6148 = vmatmul.mubr.f32.gmra.mrb[0].mxu0 %v2648
      %v6149 = vpop.f32.mrb[0].mxu0
      %v6150 = vadd.f32 %v952, %v6149
      %v6151 = vpop.f32.mrb[0].mxu0
      %6152 = vmatprep.mubr.f32.mxu0 0.0
      %6153 = vmatmul.mubr.f32.gmra.mrb[0].mxu0 %v2651
      %v6154 = vpop.f32.mrb[0].mxu0
      %v6155 = vadd.f32 %v952, %v6154
      %v6156 = vpop.f32.mrb[0].mxu0
      %6157 = vmatprep.mubr.f32.mxu0 0.0
      %6158 = vmatmul.mubr.f32.gmra.mrb[0].mxu0 %v2654
      %v6159 = vpop.f32.mrb[0].mxu0
      %v6160 = vadd.f32 %v952, %v6159
      %v6161 = vpop.f32.mrb[0].mxu0
      %6162 = vmatprep.mubr.f32.mxu0 0.0
      %6163 = vmatmul.mubr.f32.gmra.mrb[0].mxu0 %v2657
      %v6164 = vpop.f32.mrb[0].mxu0
      %v6165 = vadd.f32 %v952, %v6164
      %v6166 = vpop.f32.mrb[0].mxu0
      %6167 = vmatprep.mubr.f32.mxu0 0.0
      %6168 = vmatmul.mubr.f32.gmra.mrb[0].mxu0 %v2660
      %v6169 = vpop.f32.mrb[0].mxu0
      %v6170 = vadd.f32 %v952, %v6169
      %v6171 = vpop.f32.mrb[0].mxu0
      %6172 = vmatprep.mubr.f32.mxu0 0.0
      %6173 = vmatmul.mubr.f32.gmra.mrb[0].mxu0 %v2663
      %v6174 = vpop.f32.mrb[0].mxu0
      %v6175 = vadd.f32 %v952, %v6174
      %v6176 = vpop.f32.mrb[0].mxu0
      %6177 = vmatprep.mubr.f32.mxu0 0.0
      %6178 = vmatmul.mubr.f32.gmra.mrb[0].mxu0 %v2666
      %v6179 = vpop.f32.mrb[0].mxu0
      %v6180 = vadd.f32 %v952, %v6179
      %v6181 = vpop.f32.mrb[0].mxu0
      %6182 = vmatprep.mubr.f32.mxu0 0.0
      %6183 = vmatmul.mubr.f32.gmra.mrb[0].mxu0 %v2669
      %v6184 = vpop.f32.mrb[0].mxu0
      %v6185 = vadd.f32 %v952, %v6184
      %v6186 = vpop.f32.mrb[0].mxu0
      %6187 = vmatprep.mubr.f32.mxu0 0.0
      %6188 = vmatmul.mubr.f32.gmra.mrb[0].mxu0 %v2672
      %v6189 = vpop.f32.mrb[0].mxu0
      %v6190 = vadd.f32 %v952, %v6189
      %v6191 = vpop.f32.mrb[0].mxu0
      %6192 = vmatprep.mubr.f32.mxu0 0.0
      %6193 = vmatmul.mubr.f32.gmra.mrb[0].mxu0 %v2675
      %v6194 = vpop.f32.mrb[0].mxu0
      %v6195 = vadd.f32 %v952, %v6194
      %v6196 = vpop.f32.mrb[0].mxu0
      %6197 = vmatprep.mubr.f32.mxu0 0.0
      %6198 = vmatmul.mubr.f32.gmra.mrb[0].mxu0 %v2678
      %v6199 = vpop.f32.mrb[0].mxu0
      %v6200 = vadd.f32 %v952, %v6199
      %v6201 = vpop.f32.mrb[0].mxu0
      %6202 = vmatprep.mubr.f32.mxu0 0.0
      %6203 = vmatmul.mubr.f32.gmra.mrb[0].mxu0 %v2681
      %v6204 = vpop.f32.mrb[0].mxu0
      %v6205 = vadd.f32 %v952, %v6204
      %v6206 = vpop.f32.mrb[0].mxu0
      %6207 = vmatprep.mubr.f32.mxu0 0.0
      %6208 = vmatmul.mubr.f32.gmra.mrb[0].mxu0 %v2684
      %v6209 = vpop.f32.mrb[0].mxu0
      %v6210 = vadd.f32 %v952, %v6209
      %v6211 = vpop.f32.mrb[0].mxu0
      %6212 = vmatprep.mubr.f32.mxu0 0.0
      %6213 = vmatmul.mubr.f32.gmra.mrb[0].mxu0 %v2687
      %v6214 = vpop.f32.mrb[0].mxu0
      %v6215 = vadd.f32 %v952, %v6214
      %v6216 = vpop.f32.mrb[0].mxu0
      %6217 = vmatprep.mubr.f32.mxu0 0.0
      %6218 = vmatmul.mubr.f32.gmra.mrb[0].mxu0 %v2690
      %v6219 = vpop.f32.mrb[0].mxu0
      %v6220 = vadd.f32 %v952, %v6219
      %v6221 = vpop.f32.mrb[0].mxu0
      %6222 = vmatprep.mubr.f32.mxu0 0.0
      %6223 = vmatmul.mubr.f32.gmra.mrb[0].mxu0 %v2693
      %v6224 = vpop.f32.mrb[0].mxu0
      %v6225 = vadd.f32 %v952, %v6224
      %v6226 = vpop.f32.mrb[0].mxu0
      %6227 = vmatprep.mubr.f32.mxu0 0.0
      %6228 = vmatmul.mubr.f32.gmra.mrb[0].mxu0 %v2696
      %v6229 = vpop.f32.mrb[0].mxu0
      %v6230 = vadd.f32 %v952, %v6229
      %v6231 = vpop.f32.mrb[0].mxu0
      %6232 = vmatprep.mubr.f32.mxu0 0.0
      %6233 = vmatmul.mubr.f32.gmra.mrb[0].mxu0 %v2699
      %v6234 = vpop.f32.mrb[0].mxu0
      %v6235 = vadd.f32 %v952, %v6234
      %v6236 = vpop.f32.mrb[0].mxu0
      %6237 = vmatprep.mubr.f32.mxu0 0.0
      %6238 = vmatmul.mubr.f32.gmra.mrb[0].mxu0 %v2702
      %v6239 = vpop.f32.mrb[0].mxu0
      %v6240 = vadd.f32 %v952, %v6239
      %v6241 = vpop.f32.mrb[0].mxu0
      %6242 = vmatprep.mubr.f32.mxu0 0.0
      %6243 = vmatmul.mubr.f32.gmra.mrb[0].mxu0 %v2705
      %v6244 = vpop.f32.mrb[0].mxu0
      %v6245 = vadd.f32 %v952, %v6244
      %v6246 = vpop.f32.mrb[0].mxu0
      %6247 = vmatprep.mubr.f32.mxu0 0.0
      %6248 = vmatmul.mubr.f32.gmra.mrb[0].mxu0 %v2708
      %v6249 = vpop.f32.mrb[0].mxu0
      %v6250 = vadd.f32 %v952, %v6249
      %v6251 = vpop.f32.mrb[0].mxu0
      %6252 = vmatprep.mubr.f32.mxu0 0.0
      %6253 = vmatmul.mubr.f32.gmra.mrb[0].mxu0 %v2711
      %v6254 = vpop.f32.mrb[0].mxu0
      %v6255 = vadd.f32 %v952, %v6254
      %v6256 = vpop.f32.mrb[0].mxu0
      %6257 = vmatprep.mubr.f32.mxu0 0.0
      %6258 = vmatmul.mubr.f32.gmra.mrb[0].mxu0 %v2714
      %v6259 = vpop.f32.mrb[0].mxu0
      %v6260 = vadd.f32 %v952, %v6259
      %v6261 = vpop.f32.mrb[0].mxu0
      %6262 = vmatprep.mubr.f32.mxu0 0.0
      %6263 = vmatmul.mubr.f32.gmra.mrb[0].mxu0 %v2717
      %v6264 = vpop.f32.mrb[0].mxu0
      %v6265 = vadd.f32 %v952, %v6264
      %v6266 = vpop.f32.mrb[0].mxu0
      %6267 = vmatprep.mubr.f32.mxu0 0.0
      %6268 = vmatmul.mubr.f32.gmra.mrb[0].mxu0 %v2720
      %v6269 = vpop.f32.mrb[0].mxu0
      %v6270 = vadd.f32 %v952, %v6269
      %v6271 = vpop.f32.mrb[0].mxu0
      %6272 = vmatprep.mubr.f32.mxu0 0.0
      %6273 = vmatmul.mubr.f32.gmra.mrb[0].mxu0 %v2723
      %v6274 = vpop.f32.mrb[0].mxu0
      %v6275 = vadd.f32 %v952, %v6274
      %v6276 = vpop.f32.mrb[0].mxu0
      %6277 = vmatprep.mubr.f32.mxu0 0.0
      %6278 = vmatmul.mubr.f32.gmra.mrb[0].mxu0 %v2726
      %v6279 = vpop.f32.mrb[0].mxu0
      %v6280 = vadd.f32 %v952, %v6279
      %v6281 = vpop.f32.mrb[0].mxu0
      %6282 = vmatprep.mubr.f32.mxu0 0.0
      %6283 = vmatmul.mubr.f32.gmra.mrb[0].mxu0 %v2729
      %v6284 = vpop.f32.mrb[0].mxu0
      %v6285 = vadd.f32 %v952, %v6284
      %v6286 = vpop.f32.mrb[0].mxu0
      %6287 = vmatprep.mubr.f32.mxu0 0.0
      %6288 = vmatmul.mubr.f32.gmra.mrb[0].mxu0 %v2732
      %v6289 = vpop.f32.mrb[0].mxu0
      %v6290 = vadd.f32 %v952, %v6289
      %v6291 = vpop.f32.mrb[0].mxu0
      %6292 = vmatprep.mubr.f32.mxu0 0.0
      %6293 = vmatmul.mubr.f32.gmra.mrb[0].mxu0 %v2735
      %v6294 = vpop.f32.mrb[0].mxu0
      %v6295 = vadd.f32 %v952, %v6294
      %v6296 = vpop.f32.mrb[0].mxu0
      %6297 = vmatprep.mubr.f32.mxu0 0.0
      %6298 = vmatmul.mubr.f32.gmra.mrb[0].mxu0 %v2738
      %v6299 = vpop.f32.mrb[0].mxu0
      %v6300 = vadd.f32 %v952, %v6299
      %v6301 = vpop.f32.mrb[0].mxu0
      %6302 = vmatprep.mubr.f32.mxu0 0.0
      %6303 = vmatmul.mubr.f32.gmra.mrb[0].mxu0 %v2741
      %v6304 = vpop.f32.mrb[0].mxu0
      %v6305 = vadd.f32 %v952, %v6304
      %v6306 = vpop.f32.mrb[0].mxu0
      %6307 = vmatprep.mubr.f32.mxu0 0.0
      %6308 = vmatmul.mubr.f32.gmra.mrb[0].mxu0 %v2744
      %v6309 = vpop.f32.mrb[0].mxu0
      %v6310 = vadd.f32 %v952, %v6309
      %v6311 = vpop.f32.mrb[0].mxu0
      %6312 = vmatprep.mubr.f32.mxu0 0.0
      %6313 = vmatmul.mubr.f32.gmra.mrb[0].mxu0 %v2747
      %v6314 = vpop.f32.mrb[0].mxu0
      %v6315 = vadd.f32 %v952, %v6314
      %v6316 = vpop.f32.mrb[0].mxu0
      %6317 = vmatprep.mubr.f32.mxu0 0.0
      %6318 = vmatmul.mubr.f32.gmra.mrb[0].mxu0 %v2750
      %v6319 = vpop.f32.mrb[0].mxu0
      %v6320 = vadd.f32 %v952, %v6319
      %v6321 = vpop.f32.mrb[0].mxu0
      %6322 = vmatprep.mubr.f32.mxu0 0.0
      %6323 = vmatmul.mubr.f32.gmra.mrb[0].mxu0 %v2753
      %v6324 = vpop.f32.mrb[0].mxu0
      %v6325 = vadd.f32 %v952, %v6324
      %v6326 = vpop.f32.mrb[0].mxu0
      %6327 = vmatprep.mubr.f32.mxu0 0.0
      %6328 = vmatmul.mubr.f32.gmra.mrb[0].mxu0 %v2756
      %v6329 = vpop.f32.mrb[0].mxu0
      %v6330 = vadd.f32 %v952, %v6329
      %v6331 = vpop.f32.mrb[0].mxu0
      %6332 = vmatprep.mubr.f32.mxu0 0.0
      %6333 = vmatmul.mubr.f32.gmra.mrb[0].mxu0 %v2759
      %v6334 = vpop.f32.mrb[0].mxu0
      %v6335 = vadd.f32 %v952, %v6334
      %v6336 = vpop.f32.mrb[0].mxu0
      %6337 = vmatprep.mubr.f32.mxu0 0.0
      %6338 = vmatmul.mubr.f32.gmra.mrb[0].mxu0 %v2762
      %v6339 = vpop.f32.mrb[0].mxu0
      %v6340 = vadd.f32 %v952, %v6339
      %v6341 = vpop.f32.mrb[0].mxu0
      %6342 = vmatprep.mubr.f32.mxu0 0.0
      %6343 = vmatmul.mubr.f32.gmra.mrb[0].mxu0 %v2765
      %v6344 = vpop.f32.mrb[0].mxu0
      %v6345 = vadd.f32 %v952, %v6344
      %v6346 = vpop.f32.mrb[0].mxu0
      %6347 = vmatprep.mubr.f32.mxu0 0.0
      %6348 = vmatmul.mubr.f32.gmra.mrb[0].mxu0 %v2768
      %v6349 = vpop.f32.mrb[0].mxu0
      %v6350 = vadd.f32 %v952, %v6349
      %v6351 = vpop.f32.mrb[0].mxu0
      %6352 = vmatprep.mubr.f32.mxu0 0.0
      %6353 = vmatmul.mubr.f32.gmra.mrb[0].mxu0 %v2771
      %v6354 = vpop.f32.mrb[0].mxu0
      %v6355 = vadd.f32 %v952, %v6354
      %v6356 = vpop.f32.mrb[0].mxu0
      %6357 = vmatprep.mubr.f32.mxu0 0.0
      %6358 = vmatmul.mubr.f32.gmra.mrb[0].mxu0 %v2774
      %v6359 = vpop.f32.mrb[0].mxu0
      %v6360 = vadd.f32 %v952, %v6359
      %v6361 = vpop.f32.mrb[0].mxu0
      %6362 = vmatprep.mubr.f32.mxu0 0.0
      %6363 = vmatmul.mubr.f32.gmra.mrb[0].mxu0 %v2777
      %v6364 = vpop.f32.mrb[0].mxu0
      %v6365 = vadd.f32 %v952, %v6364
      %v6366 = vpop.f32.mrb[0].mxu0
      %6367 = vmatprep.mubr.f32.mxu0 0.0
      %6368 = vmatmul.mubr.f32.gmra.mrb[0].mxu0 %v2780
      %v6369 = vpop.f32.mrb[0].mxu0
      %v6370 = vadd.f32 %v952, %v6369
      %v6371 = vpop.f32.mrb[0].mxu0
      %6372 = vmatprep.mubr.f32.mxu0 0.0
      %6373 = vmatmul.mubr.f32.gmra.mrb[0].mxu0 %v2783
      %v6374 = vpop.f32.mrb[0].mxu0
      %v6375 = vadd.f32 %v952, %v6374
      %v6376 = vpop.f32.mrb[0].mxu0
      %6377 = vmatprep.mubr.f32.mxu0 0.0
      %6378 = vmatmul.mubr.f32.gmra.mrb[0].mxu0 %v2786
      %v6379 = vpop.f32.mrb[0].mxu0
      %v6380 = vadd.f32 %v952, %v6379
      %v6381 = vpop.f32.mrb[0].mxu0
      %6382 = vmatprep.mubr.f32.mxu0 0.0
      %6383 = vmatmul.mubr.f32.gmra.mrb[0].mxu0 %v2789
      %v6384 = vpop.f32.mrb[0].mxu0
      %v6385 = vadd.f32 %v952, %v6384
      %v6386 = vpop.f32.mrb[0].mxu0
      %6387 = vmatprep.mubr.f32.mxu0 0.0
      %6388 = vmatmul.mubr.f32.gmra.mrb[0].mxu0 %v2792
      %v6389 = vpop.f32.mrb[0].mxu0
      %v6390 = vadd.f32 %v952, %v6389
      %v6391 = vpop.f32.mrb[0].mxu0
      %6392 = vmatprep.mubr.f32.mxu0 0.0
      %6393 = vmatmul.mubr.f32.gmra.mrb[0].mxu0 %v2795
      %v6394 = vpop.f32.mrb[0].mxu0
      %v6395 = vadd.f32 %v952, %v6394
      %v6396 = vpop.f32.mrb[0].mxu0
      %6397 = vmatprep.mubr.f32.mxu0 0.0
      %6398 = vmatmul.mubr.f32.gmra.mrb[0].mxu0 %v2798
      %v6399 = vpop.f32.mrb[0].mxu0
      %v6400 = vadd.f32 %v952, %v6399
      %v6401 = vpop.f32.mrb[0].mxu0
      %6402 = vmatprep.mubr.f32.mxu0 0.0
      %6403 = vmatmul.mubr.f32.gmra.mrb[0].mxu0 %v2801
      %v6404 = vpop.f32.mrb[0].mxu0
      %v6405 = vadd.f32 %v952, %v6404
      %v6406 = vpop.f32.mrb[0].mxu0
      %6407 = vmatprep.mubr.f32.mxu0 0.0
      %6408 = vmatmul.mubr.f32.gmra.mrb[0].mxu0 %v2804
      %v6409 = vpop.f32.mrb[0].mxu0
      %v6410 = vadd.f32 %v952, %v6409
      %v6411 = vpop.f32.mrb[0].mxu0
      %6412 = vmatprep.mubr.f32.mxu0 0.0
      %6413 = vmatmul.mubr.f32.gmra.mrb[0].mxu0 %v2807
      %v6414 = vpop.f32.mrb[0].mxu0
      %v6415 = vadd.f32 %v952, %v6414
      %v6416 = vpop.f32.mrb[0].mxu0
      %6417 = vmatprep.mubr.f32.mxu0 0.0
      %6418 = vmatmul.mubr.f32.gmra.mrb[0].mxu0 %v2810
      %v6419 = vpop.f32.mrb[0].mxu0
      %v6420 = vadd.f32 %v952, %v6419
      %v6421 = vpop.f32.mrb[0].mxu0
      %6422 = vmatprep.mubr.f32.mxu0 0.0
      %6423 = vmatmul.mubr.f32.gmra.mrb[0].mxu0 %v2813
      %v6424 = vpop.f32.mrb[0].mxu0
      %v6425 = vadd.f32 %v952, %v6424
      %v6426 = vpop.f32.mrb[0].mxu0
      %6427 = vmatprep.mubr.f32.mxu0 0.0
      %6428 = vmatmul.mubr.f32.gmra.mrb[0].mxu0 %v2816
      %v6429 = vpop.f32.mrb[0].mxu0
      %v6430 = vadd.f32 %v952, %v6429
      %v6431 = vpop.f32.mrb[0].mxu0
      %6432 = vmatprep.mubr.f32.mxu0 0.0
      %6433 = vmatmul.mubr.f32.gmra.mrb[0].mxu0 %v2819
      %v6434 = vpop.f32.mrb[0].mxu0
      %v6435 = vadd.f32 %v952, %v6434
      %v6436 = vpop.f32.mrb[0].mxu0
      %6437 = vmatprep.mubr.f32.mxu0 0.0
      %6438 = vmatmul.mubr.f32.gmra.mrb[0].mxu0 %v2822
      %v6439 = vpop.f32.mrb[0].mxu0
      %v6440 = vadd.f32 %v952, %v6439
      %v6441 = vpop.f32.mrb[0].mxu0
      %6442 = vmatprep.mubr.f32.mxu0 0.0
      %6443 = vmatmul.mubr.f32.gmra.mrb[0].mxu0 %v2825
      %v6444 = vpop.f32.mrb[0].mxu0
      %v6445 = vadd.f32 %v952, %v6444
      %v6446 = vpop.f32.mrb[0].mxu0
      %6447 = vmatprep.mubr.f32.mxu0 0.0
      %6448 = vmatmul.mubr.f32.gmra.mrb[0].mxu0 %v2828
      %v6449 = vpop.f32.mrb[0].mxu0
      %v6450 = vadd.f32 %v952, %v6449
      %v6451 = vpop.f32.mrb[0].mxu0
      %6452 = vmatprep.mubr.f32.mxu0 0.0
      %6453 = vmatmul.mubr.f32.gmra.mrb[0].mxu0 %v2831
      %v6454 = vpop.f32.mrb[0].mxu0
      %v6455 = vadd.f32 %v952, %v6454
      %v6456 = vpop.f32.mrb[0].mxu0
      %6457 = vmatprep.mubr.f32.mxu0 0.0
      %6458 = vmatmul.mubr.f32.gmra.mrb[0].mxu0 %v2834
      %v6459 = vpop.f32.mrb[0].mxu0
      %v6460 = vadd.f32 %v952, %v6459
      %v6461 = vpop.f32.mrb[0].mxu0
      %6462 = vmatprep.mubr.f32.mxu0 0.0
      %6463 = vmatmul.mubr.f32.gmra.mrb[0].mxu0 %v2837
      %v6464 = vpop.f32.mrb[0].mxu0
      %v6465 = vadd.f32 %v952, %v6464
      %v6466 = vpop.f32.mrb[0].mxu0
      %6467 = vmatprep.mubr.f32.mxu0 0.0
      %6468 = vmatmul.mubr.f32.gmra.mrb[0].mxu0 %v2840
      %v6469 = vpop.f32.mrb[0].mxu0
      %v6470 = vadd.f32 %v952, %v6469
      %v6471 = vpop.f32.mrb[0].mxu0
      %6472 = vmatprep.mubr.f32.mxu0 0.0
      %6473 = vmatmul.mubr.f32.gmra.mrb[0].mxu0 %v2843
      %v6474 = vpop.f32.mrb[0].mxu0
      %v6475 = vadd.f32 %v952, %v6474
      %v6476 = vpop.f32.mrb[0].mxu0
      %6477 = vmatprep.mubr.f32.mxu0 0.0
      %6478 = vmatmul.mubr.f32.gmra.mrb[0].mxu0 %v2846
      %v6479 = vpop.f32.mrb[0].mxu0
      %v6480 = vadd.f32 %v952, %v6479
      %v6481 = vpop.f32.mrb[0].mxu0
      %6482 = vmatprep.mubr.f32.mxu0 0.0
      %6483 = vmatmul.mubr.f32.gmra.mrb[0].mxu0 %v2849
      %v6484 = vpop.f32.mrb[0].mxu0
      %v6485 = vadd.f32 %v952, %v6484
      %v6486 = vpop.f32.mrb[0].mxu0
      %6487 = vmatprep.mubr.f32.mxu0 0.0
      %6488 = vmatmul.mubr.f32.gmra.mrb[0].mxu0 %v2852
      %v6489 = vpop.f32.mrb[0].mxu0
      %v6490 = vadd.f32 %v952, %v6489
      %v6491 = vpop.f32.mrb[0].mxu0
      %6492 = vmatprep.mubr.f32.mxu0 0.0
      %6493 = vmatmul.mubr.f32.gmra.mrb[0].mxu0 %v2855
      %v6494 = vpop.f32.mrb[0].mxu0
      %v6495 = vadd.f32 %v952, %v6494
      %v6496 = vpop.f32.mrb[0].mxu0
      %6497 = vmatprep.mubr.f32.mxu0 0.0
      %6498 = vmatmul.mubr.f32.gmra.mrb[0].mxu0 %v2858
      %v6499 = vpop.f32.mrb[0].mxu0
      %v6500 = vadd.f32 %v952, %v6499
      %v6501 = vpop.f32.mrb[0].mxu0
      %6502 = vmatprep.mubr.f32.mxu0 0.0
      %6503 = vmatmul.mubr.f32.gmra.mrb[0].mxu0 %v2861
      %v6504 = vpop.f32.mrb[0].mxu0
      %v6505 = vadd.f32 %v952, %v6504
      %v6506 = vpop.f32.mrb[0].mxu0
      %6507 = vmatprep.mubr.f32.mxu0 0.0
      %6508 = vmatmul.mubr.f32.gmra.mrb[0].mxu0 %v2864
      %v6509 = vpop.f32.mrb[0].mxu0
      %v6510 = vadd.f32 %v952, %v6509
      %v6511 = vpop.f32.mrb[0].mxu0
      %6512 = vmatprep.mubr.f32.mxu0 0.0
      %6513 = vmatmul.mubr.f32.gmra.mrb[0].mxu0 %v2867
      %v6514 = vpop.f32.mrb[0].mxu0
      %v6515 = vadd.f32 %v952, %v6514
      %v6516 = vpop.f32.mrb[0].mxu0
      %6517 = vmatprep.mubr.f32.mxu0 0.0
      %6518 = vmatmul.mubr.f32.gmra.mrb[0].mxu0 %v2870
      %v6519 = vpop.f32.mrb[0].mxu0
      %v6520 = vadd.f32 %v952, %v6519
      %v6521 = vpop.f32.mrb[0].mxu0
      %6522 = vmatprep.mubr.f32.mxu0 0.0
      %6523 = vmatmul.mubr.f32.gmra.mrb[0].mxu0 %v2873
      %v6524 = vpop.f32.mrb[0].mxu0
      %v6525 = vadd.f32 %v952, %v6524
      %v6526 = vpop.f32.mrb[0].mxu0
      %6527 = vmatprep.mubr.f32.mxu0 0.0
      %6528 = vmatmul.mubr.f32.gmra.mrb[0].mxu0 %v2876
      %v6529 = vpop.f32.mrb[0].mxu0
      %v6530 = vadd.f32 %v952, %v6529
      %v6531 = vpop.f32.mrb[0].mxu0
      %6532 = vmatprep.mubr.f32.mxu0 0.0
      %6533 = vmatmul.mubr.f32.gmra.mrb[0].mxu0 %v2879
      %v6534 = vpop.f32.mrb[0].mxu0
      %v6535 = vadd.f32 %v952, %v6534
      %v6536 = vpop.f32.mrb[0].mxu0
      %6537 = vmatprep.mubr.f32.mxu0 0.0
      %6538 = vmatmul.mubr.f32.gmra.mrb[0].mxu0 %v2882
      %v6539 = vpop.f32.mrb[0].mxu0
      %v6540 = vadd.f32 %v952, %v6539
      %v6541 = vpop.f32.mrb[0].mxu0
      %6542 = vmatprep.mubr.f32.mxu0 0.0
      %6543 = vmatmul.mubr.f32.gmra.mrb[0].mxu0 %v2885
      %v6544 = vpop.f32.mrb[0].mxu0
      %v6545 = vadd.f32 %v952, %v6544
      %v6546 = vpop.f32.mrb[0].mxu0
      %6547 = vmatprep.mubr.f32.mxu0 0.0
      %6548 = vmatmul.mubr.f32.gmra.mrb[0].mxu0 %v2888
      %v6549 = vpop.f32.mrb[0].mxu0
      %v6550 = vadd.f32 %v952, %v6549
      %v6551 = vpop.f32.mrb[0].mxu0
      %6552 = vmatprep.mubr.f32.mxu0 0.0
      %6553 = vmatmul.mubr.f32.gmra.mrb[0].mxu0 %v2891
      %v6554 = vpop.f32.mrb[0].mxu0
      %v6555 = vadd.f32 %v952, %v6554
      %v6556 = vpop.f32.mrb[0].mxu0
      %6557 = vmatprep.mubr.f32.mxu0 0.0
      %6558 = vmatmul.mubr.f32.gmra.mrb[0].mxu0 %v2894
      %v6559 = vpop.f32.mrb[0].mxu0
      %v6560 = vadd.f32 %v952, %v6559
      %v6561 = vpop.f32.mrb[0].mxu0
      %6562 = vmatprep.mubr.f32.mxu0 0.0
      %6563 = vmatmul.mubr.f32.gmra.mrb[0].mxu0 %v2897
      %v6564 = vpop.f32.mrb[0].mxu0
      %v6565 = vadd.f32 %v952, %v6564
      %v6566 = vpop.f32.mrb[0].mxu0
      %6567 = vmatprep.mubr.f32.mxu0 0.0
      %6568 = vmatmul.mubr.f32.gmra.mrb[0].mxu0 %v2900
      %v6569 = vpop.f32.mrb[0].mxu0
      %v6570 = vadd.f32 %v952, %v6569
      %v6571 = vpop.f32.mrb[0].mxu0
      %6572 = vmatprep.mubr.f32.mxu0 0.0
      %6573 = vmatmul.mubr.f32.gmra.mrb[0].mxu0 %v2903
      %v6574 = vpop.f32.mrb[0].mxu0
      %v6575 = vadd.f32 %v952, %v6574
      %v6576 = vpop.f32.mrb[0].mxu0
      %6577 = vmatprep.mubr.f32.mxu0 0.0
      %6578 = vmatmul.mubr.f32.gmra.mrb[0].mxu0 %v2906
      %v6579 = vpop.f32.mrb[0].mxu0
      %v6580 = vadd.f32 %v952, %v6579
      %v6581 = vpop.f32.mrb[0].mxu0
      %6582 = vmatprep.mubr.f32.mxu0 0.0
      %6583 = vmatmul.mubr.f32.gmra.mrb[0].mxu0 %v2909
      %v6584 = vpop.f32.mrb[0].mxu0
      %v6585 = vadd.f32 %v952, %v6584
      %v6586 = vpop.f32.mrb[0].mxu0
      %6587 = vmatprep.mubr.f32.mxu0 0.0
      %6588 = vmatmul.mubr.f32.gmra.mrb[0].mxu0 %v2912
      %v6589 = vpop.f32.mrb[0].mxu0
      %v6590 = vadd.f32 %v952, %v6589
      %v6591 = vpop.f32.mrb[0].mxu0
      %6592 = vmatprep.mubr.f32.mxu0 0.0
      %6593 = vmatmul.mubr.f32.gmra.mrb[0].mxu0 %v2915
      %v6594 = vpop.f32.mrb[0].mxu0
      %v6595 = vadd.f32 %v952, %v6594
      %v6596 = vpop.f32.mrb[0].mxu0
      %6597 = vmatprep.mubr.f32.mxu0 0.0
      %6598 = vmatmul.mubr.f32.gmra.mrb[0].mxu0 %v2918
      %v6599 = vpop.f32.mrb[0].mxu0
      %v6600 = vadd.f32 %v952, %v6599
      %v6601 = vpop.f32.mrb[0].mxu0
      %6602 = vmatprep.mubr.f32.mxu0 0.0
      %6603 = vmatmul.mubr.f32.gmra.mrb[0].mxu0 %v2921
      %v6604 = vpop.f32.mrb[0].mxu0
      %v6605 = vadd.f32 %v952, %v6604
      %v6606 = vpop.f32.mrb[0].mxu0
      %6607 = vmatprep.mubr.f32.mxu0 0.0
      %6608 = vmatmul.mubr.f32.gmra.mrb[0].mxu0 %v2924
      %v6609 = vpop.f32.mrb[0].mxu0
      %v6610 = vadd.f32 %v952, %v6609
      %v6611 = vpop.f32.mrb[0].mxu0
      %6612 = vmatprep.mubr.f32.mxu0 0.0
      %6613 = vmatmul.mubr.f32.gmra.mrb[0].mxu0 %v2927
      %v6614 = vpop.f32.mrb[0].mxu0
      %v6615 = vadd.f32 %v952, %v6614
      %v6616 = vpop.f32.mrb[0].mxu0
      %6617 = vmatprep.mubr.f32.mxu0 0.0
      %6618 = vmatmul.mubr.f32.gmra.mrb[0].mxu0 %v2930
      %v6619 = vpop.f32.mrb[0].mxu0
      %v6620 = vadd.f32 %v952, %v6619
      %v6621 = vpop.f32.mrb[0].mxu0
      %6622 = vmatprep.mubr.f32.mxu0 0.0
      %6623 = vmatmul.mubr.f32.gmra.mrb[0].mxu0 %v2933
      %v6624 = vpop.f32.mrb[0].mxu0
      %v6625 = vadd.f32 %v952, %v6624
      %v6626 = vpop.f32.mrb[0].mxu0
      %6627 = vmatprep.mubr.f32.mxu0 0.0
      %6628 = vmatmul.mubr.f32.gmra.mrb[0].mxu0 %v2936
      %v6629 = vpop.f32.mrb[0].mxu0
      %v6630 = vadd.f32 %v952, %v6629
      %v6631 = vpop.f32.mrb[0].mxu0
      %6632 = vmatprep.mubr.f32.mxu0 0.0
      %6633 = vmatmul.mubr.f32.gmra.mrb[0].mxu0 %v2939
      %v6634 = vpop.f32.mrb[0].mxu0
      %v6635 = vadd.f32 %v952, %v6634
      %v6636 = vpop.f32.mrb[0].mxu0
      %6637 = vmatprep.mubr.f32.mxu0 0.0
      %6638 = vmatmul.mubr.f32.gmra.mrb[0].mxu0 %v2942
      %v6639 = vpop.f32.mrb[0].mxu0
      %v6640 = vadd.f32 %v952, %v6639
      %v6641 = vpop.f32.mrb[0].mxu0
      %6642 = vmatprep.mubr.f32.mxu0 0.0
      %6643 = vmatmul.mubr.f32.gmra.mrb[0].mxu0 %v2945
      %v6644 = vpop.f32.mrb[0].mxu0
      %v6645 = vadd.f32 %v952, %v6644
      %v6646 = vpop.f32.mrb[0].mxu0
      %6647 = vmatprep.mubr.f32.mxu0 0.0
      %6648 = vmatmul.mubr.f32.gmra.mrb[0].mxu0 %v2948
      %v6649 = vpop.f32.mrb[0].mxu0
      %v6650 = vadd.f32 %v952, %v6649
      %v6651 = vpop.f32.mrb[0].mxu0
      %6652 = vmatprep.mubr.f32.mxu0 0.0
      %6653 = vmatmul.mubr.f32.gmra.mrb[0].mxu0 %v2951
      %v6654 = vpop.f32.mrb[0].mxu0
      %v6655 = vadd.f32 %v952, %v6654
      %v6656 = vpop.f32.mrb[0].mxu0
      %6657 = vmatprep.mubr.f32.mxu0 0.0
      %6658 = vmatmul.mubr.f32.gmra.mrb[0].mxu0 %v2954
      %v6659 = vpop.f32.mrb[0].mxu0
      %v6660 = vadd.f32 %v952, %v6659
      %v6661 = vpop.f32.mrb[0].mxu0
      %6662 = vmatprep.mubr.f32.mxu0 0.0
      %6663 = vmatmul.mubr.f32.gmra.mrb[0].mxu0 %v2957
      %v6664 = vpop.f32.mrb[0].mxu0
      %v6665 = vadd.f32 %v952, %v6664
      %v6666 = vpop.f32.mrb[0].mxu0
      %6667 = vmatprep.mubr.f32.mxu0 0.0
      %6668 = vmatmul.mubr.f32.gmra.mrb[0].mxu0 %v2960
      %v6669 = vpop.f32.mrb[0].mxu0
      %v6670 = vadd.f32 %v952, %v6669
      %v6671 = vpop.f32.mrb[0].mxu0
      %6672 = vmatprep.mubr.f32.mxu0 0.0
      %6673 = vmatmul.mubr.f32.gmra.mrb[0].mxu0 %v2963
      %v6674 = vpop.f32.mrb[0].mxu0
      %v6675 = vadd.f32 %v952, %v6674
      %v6676 = vpop.f32.mrb[0].mxu0
      %6677 = vmatprep.mubr.f32.mxu0 0.0
      %6678 = vmatmul.mubr.f32.gmra.mrb[0].mxu0 %v2966
      %v6679 = vpop.f32.mrb[0].mxu0
      %v6680 = vadd.f32 %v952, %v6679
      %v6681 = vpop.f32.mrb[0].mxu0
      %6682 = vmatprep.mubr.f32.mxu0 0.0
      %6683 = vmatmul.mubr.f32.gmra.mrb[0].mxu0 %v2969
      %v6684 = vpop.f32.mrb[0].mxu0
      %v6685 = vadd.f32 %v952, %v6684
      %v6686 = vpop.f32.mrb[0].mxu0
      %6687 = vmatprep.mubr.f32.mxu0 0.0
      %6688 = vmatmul.mubr.f32.gmra.mrb[0].mxu0 %v2972
      %v6689 = vpop.f32.mrb[0].mxu0
      %v6690 = vadd.f32 %v952, %v6689
      %v6691 = vpop.f32.mrb[0].mxu0
      %6692 = vmatprep.mubr.f32.mxu0 0.0
      %6693 = vmatmul.mubr.f32.gmra.mrb[0].mxu0 %v2975
      %v6694 = vpop.f32.mrb[0].mxu0
      %v6695 = vadd.f32 %v952, %v6694
      %v6696 = vpop.f32.mrb[0].mxu0
      %6697 = vmatprep.mubr.f32.mxu0 0.0
      %6698 = vmatmul.mubr.f32.gmra.mrb[0].mxu0 %v2978
      %v6699 = vpop.f32.mrb[0].mxu0
      %v6700 = vadd.f32 %v952, %v6699
      %v6701 = vpop.f32.mrb[0].mxu0
      %6702 = vmatprep.mubr.f32.mxu0 0.0
      %6703 = vmatmul.mubr.f32.gmra.mrb[0].mxu0 %v2981
      %v6704 = vpop.f32.mrb[0].mxu0
      %v6705 = vadd.f32 %v952, %v6704
      %v6706 = vpop.f32.mrb[0].mxu0
      %6707 = vmatprep.mubr.f32.mxu0 0.0
      %6708 = vmatmul.mubr.f32.gmra.mrb[0].mxu0 %v2984
      %v6709 = vpop.f32.mrb[0].mxu0
      %v6710 = vadd.f32 %v952, %v6709
      %v6711 = vpop.f32.mrb[0].mxu0
      %6712 = vmatprep.mubr.f32.mxu0 0.0
      %6713 = vmatmul.mubr.f32.gmra.mrb[0].mxu0 %v2987
      %v6714 = vpop.f32.mrb[0].mxu0
      %v6715 = vadd.f32 %v952, %v6714
      %v6716 = vpop.f32.mrb[0].mxu0
      %6717 = vmatprep.mubr.f32.mxu0 0.0
      %6718 = vmatmul.mubr.f32.gmra.mrb[0].mxu0 %v2990
      %v6719 = vpop.f32.mrb[0].mxu0
      %v6720 = vadd.f32 %v952, %v6719
      %v6721 = vpop.f32.mrb[0].mxu0
      %6722 = vmatprep.mubr.f32.mxu0 0.0
      %6723 = vmatmul.mubr.f32.gmra.mrb[0].mxu0 %v2993
      %v6724 = vpop.f32.mrb[0].mxu0
      %v6725 = vadd.f32 %v952, %v6724
      %v6726 = vpop.f32.mrb[0].mxu0
      %6727 = vmatprep.mubr.f32.mxu0 0.0
      %6728 = vmatmul.mubr.f32.gmra.mrb[0].mxu0 %v2996
      %v6729 = vpop.f32.mrb[0].mxu0
      %v6730 = vadd.f32 %v952, %v6729
      %v6731 = vpop.f32.mrb[0].mxu0
      %6732 = vmatprep.mubr.f32.mxu0 0.0
      %6733 = vmatmul.mubr.f32.gmra.mrb[0].mxu0 %v2999
      %v6734 = vpop.f32.mrb[0].mxu0
      %v6735 = vadd.f32 %v952, %v6734
      %v6736 = vpop.f32.mrb[0].mxu0
      %6737 = vmatprep.mubr.f32.mxu0 0.0
      %6738 = vmatmul.mubr.f32.gmra.mrb[0].mxu0 %v3002
      %v6739 = vpop.f32.mrb[0].mxu0
      %v6740 = vadd.f32 %v952, %v6739
      %v6741 = vpop.f32.mrb[0].mxu0
      %6742 = vmatprep.mubr.f32.mxu0 0.0
      %6743 = vmatmul.mubr.f32.gmra.mrb[0].mxu0 %v3005
      %v6744 = vpop.f32.mrb[0].mxu0
      %v6745 = vadd.f32 %v952, %v6744
      %v6746 = vpop.f32.mrb[0].mxu0
      %6747 = vmatprep.mubr.f32.mxu0 0.0
      %6748 = vmatmul.mubr.f32.gmra.mrb[0].mxu0 %v3008
      %v6749 = vpop.f32.mrb[0].mxu0
      %v6750 = vadd.f32 %v952, %v6749
      %v6751 = vpop.f32.mrb[0].mxu0
      %6752 = vmatprep.mubr.f32.mxu0 0.0
      %6753 = vmatmul.mubr.f32.gmra.mrb[0].mxu0 %v3011
      %v6754 = vpop.f32.mrb[0].mxu0
      %v6755 = vadd.f32 %v952, %v6754
      %v6756 = vpop.f32.mrb[0].mxu0
      %6757 = vmatprep.mubr.f32.mxu0 0.0
      %6758 = vmatmul.mubr.f32.gmra.mrb[0].mxu0 %v3014
      %v6759 = vpop.f32.mrb[0].mxu0
      %v6760 = vadd.f32 %v952, %v6759
      %v6761 = vpop.f32.mrb[0].mxu0
      %6762 = vmatprep.mubr.f32.mxu0 0.0
      %6763 = vmatmul.mubr.f32.gmra.mrb[0].mxu0 %v3017
      %v6764 = vpop.f32.mrb[0].mxu0
      %v6765 = vadd.f32 %v952, %v6764
      %v6766 = vpop.f32.mrb[0].mxu0
      %6767 = vmatprep.mubr.f32.mxu0 0.0
      %6768 = vmatmul.mubr.f32.gmra.mrb[0].mxu0 %v3020
      %v6769 = vpop.f32.mrb[0].mxu0
      %v6770 = vadd.f32 %v952, %v6769
      %v6771 = vpop.f32.mrb[0].mxu0
      %6772 = vmatprep.mubr.f32.mxu0 0.0
      %6773 = vmatmul.mubr.f32.gmra.mrb[0].mxu0 %v3023
      %v6774 = vpop.f32.mrb[0].mxu0
      %v6775 = vadd.f32 %v952, %v6774
      %v6776 = vpop.f32.mrb[0].mxu0
      %6777 = vmatprep.mubr.f32.mxu0 0.0
      %6778 = vmatmul.mubr.f32.gmra.mrb[0].mxu0 %v3026
      %v6779 = vpop.f32.mrb[0].mxu0
      %v6780 = vadd.f32 %v952, %v6779
      %v6781 = vpop.f32.mrb[0].mxu0
      %6782 = vmatprep.mubr.f32.mxu0 0.0
      %6783 = vmatmul.mubr.f32.gmra.mrb[0].mxu0 %v3029
      %v6784 = vpop.f32.mrb[0].mxu0
      %v6785 = vadd.f32 %v952, %v6784
      %v6786 = vpop.f32.mrb[0].mxu0
      %6787 = vmatprep.mubr.f32.mxu0 0.0
      %6788 = vmatmul.mubr.f32.gmra.mrb[0].mxu0 %v3032
      %v6789 = vpop.f32.mrb[0].mxu0
      %v6790 = vadd.f32 %v952, %v6789
      %v6791 = vpop.f32.mrb[0].mxu0
      %6792 = vmatprep.mubr.f32.mxu0 0.0
      %6793 = vmatmul.mubr.f32.gmra.mrb[0].mxu0 %v3035
      %v6794 = vpop.f32.mrb[0].mxu0
      %v6795 = vadd.f32 %v952, %v6794
      %v6796 = vpop.f32.mrb[0].mxu0
      %6797 = vmatprep.mubr.f32.mxu0 0.0
      %6798 = vmatmul.mubr.f32.gmra.mrb[0].mxu0 %v3038
      %v6799 = vpop.f32.mrb[0].mxu0
      %v6800 = vadd.f32 %v952, %v6799
      %v6801 = vpop.f32.mrb[0].mxu0
      %6802 = vmatprep.mubr.f32.mxu0 0.0
      %6803 = vmatmul.mubr.f32.gmra.mrb[0].mxu0 %v3041
      %v6804 = vpop.f32.mrb[0].mxu0
      %v6805 = vadd.f32 %v952, %v6804
      %v6806 = vpop.f32.mrb[0].mxu0
      %6807 = vmatprep.mubr.f32.mxu0 0.0
      %6808 = vmatmul.mubr.f32.gmra.mrb[0].mxu0 %v3044
      %v6809 = vpop.f32.mrb[0].mxu0
      %v6810 = vadd.f32 %v952, %v6809
      %v6811 = vpop.f32.mrb[0].mxu0
      %6812 = vmatprep.mubr.f32.mxu0 0.0
      %6813 = vmatmul.mubr.f32.gmra.mrb[0].mxu0 %v3047
      %v6814 = vpop.f32.mrb[0].mxu0
      %v6815 = vadd.f32 %v952, %v6814
      %v6816 = vpop.f32.mrb[0].mxu0
      %6817 = vmatprep.mubr.f32.mxu0 0.0
      %6818 = vmatmul.mubr.f32.gmra.mrb[0].mxu0 %v3050
      %v6819 = vpop.f32.mrb[0].mxu0
      %v6820 = vadd.f32 %v952, %v6819
      %v6821 = vpop.f32.mrb[0].mxu0
      %6822 = vmatprep.mubr.f32.mxu0 0.0
      %6823 = vmatmul.mubr.f32.gmra.mrb[0].mxu0 %v3053
      %v6824 = vpop.f32.mrb[0].mxu0
      %v6825 = vadd.f32 %v952, %v6824
      %v6826 = vpop.f32.mrb[0].mxu0
      %6827 = vmatprep.mubr.f32.mxu0 0.0
      %6828 = vmatmul.mubr.f32.gmra.mrb[0].mxu0 %v3056
      %v6829 = vpop.f32.mrb[0].mxu0
      %v6830 = vadd.f32 %v952, %v6829
      %v6831 = vpop.f32.mrb[0].mxu0
      %6832 = vmatprep.mubr.f32.mxu0 0.0
      %6833 = vmatmul.mubr.f32.gmra.mrb[0].mxu0 %v3059
      %v6834 = vpop.f32.mrb[0].mxu0
      %v6835 = vadd.f32 %v952, %v6834
      %v6836 = vpop.f32.mrb[0].mxu0
      %6837 = vmatprep.mubr.f32.mxu0 0.0
      %6838 = vmatmul.mubr.f32.gmra.mrb[0].mxu0 %v3062
      %v6839 = vpop.f32.mrb[0].mxu0
      %v6840 = vadd.f32 %v952, %v6839
      %v6841 = vpop.f32.mrb[0].mxu0
      %6842 = vmatprep.mubr.f32.mxu0 0.0
      %6843 = vmatmul.mubr.f32.gmra.mrb[0].mxu0 %v3065
      %v6844 = vpop.f32.mrb[0].mxu0
      %v6845 = vadd.f32 %v952, %v6844
      %v6846 = vpop.f32.mrb[0].mxu0
      %6847 = vmatprep.mubr.f32.mxu0 0.0
      %6848 = vmatmul.mubr.f32.gmra.mrb[0].mxu0 %v3068
      %v6849 = vpop.f32.mrb[0].mxu0
      %v6850 = vadd.f32 %v952, %v6849
      %v6851 = vpop.f32.mrb[0].mxu0
      %6852 = vmatprep.mubr.f32.mxu0 0.0
      %6853 = vmatmul.mubr.f32.gmra.mrb[0].mxu0 %v3071
      %v6854 = vpop.f32.mrb[0].mxu0
      %v6855 = vadd.f32 %v952, %v6854
      %v6856 = vpop.f32.mrb[0].mxu0
      %6857 = vmatprep.mubr.f32.mxu0 0.0
      %6858 = vmatmul.mubr.f32.gmra.mrb[0].mxu0 %v3074
      %v6859 = vpop.f32.mrb[0].mxu0
      %v6860 = vadd.f32 %v952, %v6859
      %v6861 = vpop.f32.mrb[0].mxu0
      %6862 = vmatprep.mubr.f32.mxu0 0.0
      %6863 = vmatmul.mubr.f32.gmra.mrb[0].mxu0 %v3077
      %v6864 = vpop.f32.mrb[0].mxu0
      %v6865 = vadd.f32 %v952, %v6864
      %v6866 = vpop.f32.mrb[0].mxu0
      %6867 = vmatprep.mubr.f32.mxu0 0.0
      %6868 = vmatmul.mubr.f32.gmra.mrb[0].mxu0 %v3080
      %v6869 = vpop.f32.mrb[0].mxu0
      %v6870 = vadd.f32 %v952, %v6869
      %v6871 = vpop.f32.mrb[0].mxu0
      %6872 = vmatprep.mubr.f32.mxu0 0.0
      %6873 = vmatmul.mubr.f32.gmra.mrb[0].mxu0 %v3083
      %v6874 = vpop.f32.mrb[0].mxu0
      %v6875 = vadd.f32 %v952, %v6874
      %v6876 = vpop.f32.mrb[0].mxu0
      %6877 = vmatprep.mubr.f32.mxu0 0.0
      %6878 = vmatmul.mubr.f32.gmra.mrb[0].mxu0 %v3086
      %v6879 = vpop.f32.mrb[0].mxu0
      %v6880 = vadd.f32 %v952, %v6879
      %v6881 = vpop.f32.mrb[0].mxu0
      %6882 = vmatprep.mubr.f32.mxu0 0.0
      %6883 = vmatmul.mubr.f32.gmra.mrb[0].mxu0 %v3089
      %v6884 = vpop.f32.mrb[0].mxu0
      %v6885 = vadd.f32 %v952, %v6884
      %v6886 = vpop.f32.mrb[0].mxu0
      %6887 = vmatprep.mubr.f32.mxu0 0.0
      %6888 = vmatmul.mubr.f32.gmra.mrb[0].mxu0 %v3092
      %v6889 = vpop.f32.mrb[0].mxu0
      %v6890 = vadd.f32 %v952, %v6889
      %v6891 = vpop.f32.mrb[0].mxu0
      %6892 = vmatprep.mubr.f32.mxu0 0.0
      %6893 = vmatmul.mubr.f32.gmra.mrb[0].mxu0 %v3095
      %v6894 = vpop.f32.mrb[0].mxu0
      %v6895 = vadd.f32 %v952, %v6894
      %v6896 = vpop.f32.mrb[0].mxu0
      %6897 = vmatprep.mubr.f32.mxu0 0.0
      %6898 = vmatmul.mubr.f32.gmra.mrb[0].mxu0 %v3098
      %v6899 = vpop.f32.mrb[0].mxu0
      %v6900 = vadd.f32 %v952, %v6899
      %v6901 = vpop.f32.mrb[0].mxu0
      %6902 = vmatprep.mubr.f32.mxu0 0.0
      %6903 = vmatmul.mubr.f32.gmra.mrb[0].mxu0 %v3101
      %v6904 = vpop.f32.mrb[0].mxu0
      %v6905 = vadd.f32 %v952, %v6904
      %v6906 = vpop.f32.mrb[0].mxu0
      %6907 = vmatprep.mubr.f32.mxu0 0.0
      %6908 = vmatmul.mubr.f32.gmra.mrb[0].mxu0 %v3104
      %v6909 = vpop.f32.mrb[0].mxu0
      %v6910 = vadd.f32 %v952, %v6909
      %v6911 = vpop.f32.mrb[0].mxu0
      %6912 = vmatprep.mubr.f32.mxu0 0.0
      %6913 = vmatmul.mubr.f32.gmra.mrb[0].mxu0 %v3107
      %v6914 = vpop.f32.mrb[0].mxu0
      %v6915 = vadd.f32 %v952, %v6914
      %v6916 = vpop.f32.mrb[0].mxu0
      %6917 = vmatprep.mubr.f32.mxu0 0.0
      %6918 = vmatmul.mubr.f32.gmra.mrb[0].mxu0 %v3110
      %v6919 = vpop.f32.mrb[0].mxu0
      %v6920 = vadd.f32 %v952, %v6919
      %v6921 = vpop.f32.mrb[0].mxu0
      %6922 = vmatprep.mubr.f32.mxu0 0.0
      %6923 = vmatmul.mubr.f32.gmra.mrb[0].mxu0 %v3113
      %v6924 = vpop.f32.mrb[0].mxu0
      %v6925 = vadd.f32 %v952, %v6924
      %v6926 = vpop.f32.mrb[0].mxu0
      %6927 = vmatprep.mubr.f32.mxu0 0.0
      %6928 = vmatmul.mubr.f32.gmra.mrb[0].mxu0 %v3116
      %v6929 = vpop.f32.mrb[0].mxu0
      %v6930 = vadd.f32 %v952, %v6929
      %v6931 = vpop.f32.mrb[0].mxu0
      %6932 = vmatprep.mubr.f32.mxu0 0.0
      %6933 = vmatmul.mubr.f32.gmra.mrb[0].mxu0 %v3119
      %v6934 = vpop.f32.mrb[0].mxu0
      %v6935 = vadd.f32 %v952, %v6934
      %v6936 = vpop.f32.mrb[0].mxu0
      %6937 = vmatprep.mubr.f32.mxu0 0.0
      %6938 = vmatmul.mubr.f32.gmra.mrb[0].mxu0 %v3122
      %v6939 = vpop.f32.mrb[0].mxu0
      %v6940 = vadd.f32 %v952, %v6939
      %v6941 = vpop.f32.mrb[0].mxu0
      %6942 = vmatprep.mubr.f32.mxu0 0.0
      %6943 = vmatmul.mubr.f32.gmra.mrb[0].mxu0 %v3125
      %v6944 = vpop.f32.mrb[0].mxu0
      %v6945 = vadd.f32 %v952, %v6944
      %v6946 = vpop.f32.mrb[0].mxu0
      %6947 = vmatprep.mubr.f32.mxu0 0.0
      %6948 = vmatmul.mubr.f32.gmra.mrb[0].mxu0 %v3128
      %v6949 = vpop.f32.mrb[0].mxu0
      %v6950 = vadd.f32 %v952, %v6949
      %v6951 = vpop.f32.mrb[0].mxu0
      %6952 = vmatprep.mubr.f32.mxu0 0.0
      %6953 = vmatmul.mubr.f32.gmra.mrb[0].mxu0 %v3131
      %v6954 = vpop.f32.mrb[0].mxu0
      %v6955 = vadd.f32 %v952, %v6954
      %v6956 = vpop.f32.mrb[0].mxu0
      %6957 = vmatprep.mubr.f32.mxu0 0.0
      %6958 = vmatmul.mubr.f32.gmra.mrb[0].mxu0 %v3134
      %v6959 = vpop.f32.mrb[0].mxu0
      %v6960 = vadd.f32 %v952, %v6959
      %v6961 = vpop.f32.mrb[0].mxu0
      %6962 = vmatprep.mubr.f32.mxu0 0.0
      %6963 = vmatmul.mubr.f32.gmra.mrb[0].mxu0 %v3137
      %v6964 = vpop.f32.mrb[0].mxu0
      %v6965 = vadd.f32 %v952, %v6964
      %v6966 = vpop.f32.mrb[0].mxu0
      %6967 = vmatprep.mubr.f32.mxu0 0.0
      %6968 = vmatmul.mubr.f32.gmra.mrb[0].mxu0 %v3140
      %v6969 = vpop.f32.mrb[0].mxu0
      %v6970 = vadd.f32 %v952, %v6969
      %v6971 = vpop.f32.mrb[0].mxu0
      %6972 = vmatprep.mubr.f32.mxu0 0.0
      %6973 = vmatmul.mubr.f32.gmra.mrb[0].mxu0 %v3143
      %v6974 = vpop.f32.mrb[0].mxu0
      %v6975 = vadd.f32 %v952, %v6974
      %v6976 = vpop.f32.mrb[0].mxu0
      %6977 = vmatprep.mubr.f32.mxu0 0.0
      %6978 = vmatmul.mubr.f32.gmra.mrb[0].mxu0 %v3146
      %v6979 = vpop.f32.mrb[0].mxu0
      %v6980 = vadd.f32 %v952, %v6979
      %v6981 = vpop.f32.mrb[0].mxu0
      %6982 = vmatprep.mubr.f32.mxu0 0.0
      %6983 = vmatmul.mubr.f32.gmra.mrb[0].mxu0 %v3149
      %v6984 = vpop.f32.mrb[0].mxu0
      %v6985 = vadd.f32 %v952, %v6984
      %v6986 = vpop.f32.mrb[0].mxu0
      %6987 = vmatprep.mubr.f32.mxu0 0.0
      %6988 = vmatmul.mubr.f32.gmra.mrb[0].mxu0 %v3152
      %v6989 = vpop.f32.mrb[0].mxu0
      %v6990 = vadd.f32 %v952, %v6989
      %v6991 = vpop.f32.mrb[0].mxu0
      %6992 = vmatprep.mubr.f32.mxu0 0.0
      %6993 = vmatmul.mubr.f32.gmra.mrb[0].mxu0 %v3155
      %v6994 = vpop.f32.mrb[0].mxu0
      %v6995 = vadd.f32 %v952, %v6994
      %v6996 = vpop.f32.mrb[0].mxu0
      %6997 = vmatprep.mubr.f32.mxu0 0.0
      %6998 = vmatmul.mubr.f32.gmra.mrb[0].mxu0 %v3158
      %v6999 = vpop.f32.mrb[0].mxu0
      %v7000 = vadd.f32 %v952, %v6999
      %v7001 = vpop.f32.mrb[0].mxu0
      %7002 = vmatprep.mubr.f32.mxu0 0.0
      %7003 = vmatmul.mubr.f32.gmra.mrb[0].mxu0 %v3161
      %v7004 = vpop.f32.mrb[0].mxu0
      %v7005 = vadd.f32 %v952, %v7004
      %v7006 = vpop.f32.mrb[0].mxu0
      %7007 = vmatprep.mubr.f32.mxu0 0.0
      %7008 = vmatmul.mubr.f32.gmra.mrb[0].mxu0 %v3164
      %v7009 = vpop.f32.mrb[0].mxu0
      %v7010 = vadd.f32 %v952, %v7009
      %v7011 = vpop.f32.mrb[0].mxu0
      %7012 = vmatprep.mubr.f32.mxu0 0.0
      %7013 = vmatmul.mubr.f32.gmra.mrb[0].mxu0 %v3167
      %v7014 = vpop.f32.mrb[0].mxu0
      %v7015 = vadd.f32 %v952, %v7014
      %v7016 = vpop.f32.mrb[0].mxu0
      %7017 = vmatprep.mubr.f32.mxu0 0.0
      %7018 = vmatmul.mubr.f32.gmra.mrb[0].mxu0 %v3170
      %v7019 = vpop.f32.mrb[0].mxu0
      %v7020 = vadd.f32 %v952, %v7019
      %v7021 = vpop.f32.mrb[0].mxu0
      %7022 = vmatprep.mubr.f32.mxu0 0.0
      %7023 = vmatmul.mubr.f32.gmra.mrb[0].mxu0 %v3173
      %v7024 = vpop.f32.mrb[0].mxu0
      %v7025 = vadd.f32 %v952, %v7024
      %v7026 = vpop.f32.mrb[0].mxu0
      %7027 = vmatprep.mubr.f32.mxu0 0.0
      %7028 = vmatmul.mubr.f32.gmra.mrb[0].mxu0 %v3176
      %v7029 = vpop.f32.mrb[0].mxu0
      %v7030 = vadd.f32 %v952, %v7029
      %v7031 = vpop.f32.mrb[0].mxu0
      %7032 = vmatprep.mubr.f32.mxu0 0.0
      %7033 = vmatmul.mubr.f32.gmra.mrb[0].mxu0 %v3179
      %v7034 = vpop.f32.mrb[0].mxu0
      %v7035 = vadd.f32 %v952, %v7034
      %v7036 = vpop.f32.mrb[0].mxu0
      %7037 = vmatprep.mubr.f32.mxu0 0.0
      %7038 = vmatmul.mubr.f32.gmra.mrb[0].mxu0 %v3182
      %v7039 = vpop.f32.mrb[0].mxu0
      %v7040 = vadd.f32 %v952, %v7039
      %v7041 = vpop.f32.mrb[0].mxu0
      %7042 = vmatprep.mubr.f32.mxu0 0.0
      %7043 = vmatmul.mubr.f32.gmra.mrb[0].mxu0 %v3185
      %v7044 = vpop.f32.mrb[0].mxu0
      %v7045 = vadd.f32 %v952, %v7044
      %v7046 = vpop.f32.mrb[0].mxu0
      %7047 = vmatprep.mubr.f32.mxu0 0.0
      %7048 = vmatmul.mubr.f32.gmra.mrb[0].mxu0 %v3188
      %v7049 = vpop.f32.mrb[0].mxu0
      %v7050 = vadd.f32 %v952, %v7049
      %v7051 = vpop.f32.mrb[0].mxu0
      %7052 = vmatprep.mubr.f32.mxu0 0.0
      %7053 = vmatmul.mubr.f32.gmra.mrb[0].mxu0 %v3191
      %v7054 = vpop.f32.mrb[0].mxu0
      %v7055 = vadd.f32 %v952, %v7054
      %v7056 = vpop.f32.mrb[0].mxu0
      %7057 = vmatprep.mubr.f32.mxu0 0.0
      %7058 = vmatmul.mubr.f32.gmra.mrb[0].mxu0 %v3194
      %v7059 = vpop.f32.mrb[0].mxu0
      %v7060 = vadd.f32 %v952, %v7059
      %v7061 = vpop.f32.mrb[0].mxu0
      %7062 = vmatprep.mubr.f32.mxu0 0.0
      %7063 = vmatmul.mubr.f32.gmra.mrb[0].mxu0 %v3197
      %v7064 = vpop.f32.mrb[0].mxu0
      %v7065 = vadd.f32 %v952, %v7064
      %v7066 = vpop.f32.mrb[0].mxu0
      %7067 = vmatprep.mubr.f32.mxu0 0.0
      %7068 = vmatmul.mubr.f32.gmra.mrb[0].mxu0 %v3200
      %v7069 = vpop.f32.mrb[0].mxu0
      %v7070 = vadd.f32 %v952, %v7069
      %v7071 = vpop.f32.mrb[0].mxu0
      %7072 = vmatprep.mubr.f32.mxu0 0.0
      %7073 = vmatmul.mubr.f32.gmra.mrb[0].mxu0 %v3203
      %v7074 = vpop.f32.mrb[0].mxu0
      %v7075 = vadd.f32 %v952, %v7074
      %v7076 = vpop.f32.mrb[0].mxu0
      %7077 = vmatprep.mubr.f32.mxu0 0.0
      %7078 = vmatmul.mubr.f32.gmra.mrb[0].mxu0 %v3206
      %v7079 = vpop.f32.mrb[0].mxu0
      %v7080 = vadd.f32 %v952, %v7079
      %v7081 = vpop.f32.mrb[0].mxu0
      %7082 = vmatprep.mubr.f32.mxu0 0.0
      %7083 = vmatmul.mubr.f32.gmra.mrb[0].mxu0 %v3209
      %v7084 = vpop.f32.mrb[0].mxu0
      %v7085 = vadd.f32 %v952, %v7084
      %v7086 = vpop.f32.mrb[0].mxu0
      %7087 = vmatprep.mubr.f32.mxu0 0.0
      %7088 = vmatmul.mubr.f32.gmra.mrb[0].mxu0 %v3212
      %v7089 = vpop.f32.mrb[0].mxu0
      %v7090 = vadd.f32 %v952, %v7089
      %v7091 = vpop.f32.mrb[0].mxu0
      %7092 = vmatprep.mubr.f32.mxu0 0.0
      %7093 = vmatmul.mubr.f32.gmra.mrb[0].mxu0 %v3215
      %v7094 = vpop.f32.mrb[0].mxu0
      %v7095 = vadd.f32 %v952, %v7094
      %v7096 = vpop.f32.mrb[0].mxu0
      %7097 = vmatprep.mubr.f32.mxu0 0.0
      %7098 = vmatmul.mubr.f32.gmra.mrb[0].mxu0 %v3218
      %v7099 = vpop.f32.mrb[0].mxu0
      %v7100 = vadd.f32 %v952, %v7099
      %v7101 = vpop.f32.mrb[0].mxu0
      %7102 = vmatprep.mubr.f32.mxu0 0.0
      %7103 = vmatmul.mubr.f32.gmra.mrb[0].mxu0 %v3221
      %v7104 = vpop.f32.mrb[0].mxu0
      %v7105 = vadd.f32 %v952, %v7104
      %v7106 = vpop.f32.mrb[0].mxu0
      %7107 = vmatprep.mubr.f32.mxu0 0.0
      %7108 = vmatmul.mubr.f32.gmra.mrb[0].mxu0 %v3224
      %v7109 = vpop.f32.mrb[0].mxu0
      %v7110 = vadd.f32 %v952, %v7109
      %v7111 = vpop.f32.mrb[0].mxu0
      %7112 = vmatprep.mubr.f32.mxu0 0.0
      %7113 = vmatmul.mubr.f32.gmra.mrb[0].mxu0 %v3227
      %v7114 = vpop.f32.mrb[0].mxu0
      %v7115 = vadd.f32 %v952, %v7114
      %v7116 = vpop.f32.mrb[0].mxu0
      %7117 = vmatprep.mubr.f32.mxu0 0.0
      %7118 = vmatmul.mubr.f32.gmra.mrb[0].mxu0 %v3230
      %v7119 = vpop.f32.mrb[0].mxu0
      %v7120 = vadd.f32 %v952, %v7119
      %v7121 = vpop.f32.mrb[0].mxu0
      %7122 = vmatprep.mubr.f32.mxu0 0.0
      %7123 = vmatmul.mubr.f32.gmra.mrb[0].mxu0 %v3233
      %v7124 = vpop.f32.mrb[0].mxu0
      %v7125 = vadd.f32 %v952, %v7124
      %v7126 = vpop.f32.mrb[0].mxu0
      %7127 = vmatprep.mubr.f32.mxu0 0.0
      %7128 = vmatmul.mubr.f32.gmra.mrb[0].mxu0 %v3236
      %v7129 = vpop.f32.mrb[0].mxu0
      %v7130 = vadd.f32 %v952, %v7129
      %v7131 = vpop.f32.mrb[0].mxu0
      %7132 = vmatprep.mubr.f32.mxu0 0.0
      %7133 = vmatmul.mubr.f32.gmra.mrb[0].mxu0 %v3239
      %v7134 = vpop.f32.mrb[0].mxu0
      %v7135 = vadd.f32 %v952, %v7134
      %v7136 = vpop.f32.mrb[0].mxu0
      %7137 = vmatprep.mubr.f32.mxu0 0.0
      %7138 = vmatmul.mubr.f32.gmra.mrb[0].mxu0 %v3242
      %v7139 = vpop.f32.mrb[0].mxu0
      %v7140 = vadd.f32 %v952, %v7139
      %v7141 = vpop.f32.mrb[0].mxu0
      %7142 = vmatprep.mubr.f32.mxu0 0.0
      %7143 = vmatmul.mubr.f32.gmra.mrb[0].mxu0 %v3245
      %v7144 = vpop.f32.mrb[0].mxu0
      %v7145 = vadd.f32 %v952, %v7144
      %v7146 = vpop.f32.mrb[0].mxu0
      %7147 = vmatprep.mubr.f32.mxu0 0.0
      %7148 = vmatmul.mubr.f32.gmra.mrb[0].mxu0 %v3248
      %v7149 = vpop.f32.mrb[0].mxu0
      %v7150 = vadd.f32 %v952, %v7149
      %v7151 = vpop.f32.mrb[0].mxu0
      %7152 = vmatprep.mubr.f32.mxu0 0.0
      %7153 = vmatmul.mubr.f32.gmra.mrb[0].mxu0 %v3251
      %v7154 = vpop.f32.mrb[0].mxu0
      %v7155 = vadd.f32 %v952, %v7154
      %v7156 = vpop.f32.mrb[0].mxu0
      %7157 = vmatprep.mubr.f32.mxu0 0.0
      %7158 = vmatmul.mubr.f32.gmra.mrb[0].mxu0 %v3254
      %v7159 = vpop.f32.mrb[0].mxu0
      %v7160 = vadd.f32 %v952, %v7159
      %v7161 = vpop.f32.mrb[0].mxu0
      %7162 = vmatprep.mubr.f32.mxu0 0.0
      %7163 = vmatmul.mubr.f32.gmra.mrb[0].mxu0 %v3257
      %v7164 = vpop.f32.mrb[0].mxu0
      %v7165 = vadd.f32 %v952, %v7164
      %v7166 = vpop.f32.mrb[0].mxu0
      %7167 = vdwg.mxu0
      %v7168 = vmax.f32 %v3330, 0.0
      %v7169 = vmax.f32 %v3335, 0.0
      %v7170 = vmax.f32 %v3340, 0.0
      %v7171 = vmax.f32 %v3345, 0.0
      %v7172 = vmax.f32 %v3350, 0.0
      %v7173 = vmax.f32 %v3355, 0.0
      %v7174 = vmax.f32 %v3360, 0.0
      %v7175 = vmax.f32 %v3365, 0.0
      %v7176 = vmax.f32 %v3370, 0.0
      %v7177 = vmax.f32 %v3375, 0.0
      %v7178 = vmax.f32 %v3380, 0.0
      %v7179 = vmax.f32 %v3385, 0.0
      %v7180 = vmax.f32 %v3390, 0.0
      %v7181 = vmax.f32 %v3395, 0.0
      %v7182 = vmax.f32 %v3400, 0.0
      %v7183 = vmax.f32 %v3405, 0.0
      %v7184 = vmax.f32 %v3410, 0.0
      %v7185 = vmax.f32 %v3415, 0.0
      %v7186 = vmax.f32 %v3420, 0.0
      %v7187 = vmax.f32 %v3425, 0.0
      %v7188 = vmax.f32 %v3430, 0.0
      %v7189 = vmax.f32 %v3435, 0.0
      %v7190 = vmax.f32 %v3440, 0.0
      %v7191 = vmax.f32 %v3445, 0.0
      %v7192 = vmax.f32 %v3450, 0.0
      %v7193 = vmax.f32 %v3455, 0.0
      %v7194 = vmax.f32 %v3460, 0.0
      %v7195 = vmax.f32 %v3465, 0.0
      %v7196 = vmax.f32 %v3470, 0.0
      %v7197 = vmax.f32 %v3475, 0.0
      %v7198 = vmax.f32 %v3480, 0.0
      %v7199 = vmax.f32 %v3485, 0.0
      %v7200 = vmax.f32 %v3490, 0.0
      %v7201 = vmax.f32 %v3495, 0.0
      %v7202 = vmax.f32 %v3500, 0.0
      %v7203 = vmax.f32 %v3505, 0.0
      %v7204 = vmax.f32 %v3510, 0.0
      %v7205 = vmax.f32 %v3515, 0.0
      %v7206 = vmax.f32 %v3520, 0.0
      %v7207 = vmax.f32 %v3525, 0.0
      %v7208 = vmax.f32 %v3530, 0.0
      %v7209 = vmax.f32 %v3535, 0.0
      %v7210 = vmax.f32 %v3540, 0.0
      %v7211 = vmax.f32 %v3545, 0.0
      %v7212 = vmax.f32 %v3550, 0.0
      %v7213 = vmax.f32 %v3555, 0.0
      %v7214 = vmax.f32 %v3560, 0.0
      %v7215 = vmax.f32 %v3565, 0.0
      %v7216 = vmax.f32 %v3570, 0.0
      %v7217 = vmax.f32 %v3575, 0.0
      %v7218 = vmax.f32 %v3580, 0.0
      %v7219 = vmax.f32 %v3585, 0.0
      %v7220 = vmax.f32 %v3590, 0.0
      %v7221 = vmax.f32 %v3595, 0.0
      %v7222 = vmax.f32 %v3600, 0.0
      %v7223 = vmax.f32 %v3605, 0.0
      %v7224 = vmax.f32 %v3610, 0.0
      %v7225 = vmax.f32 %v3615, 0.0
      %v7226 = vmax.f32 %v3620, 0.0
      %v7227 = vmax.f32 %v3625, 0.0
      %v7228 = vmax.f32 %v3630, 0.0
      %v7229 = vmax.f32 %v3635, 0.0
      %v7230 = vmax.f32 %v3640, 0.0
      %v7231 = vmax.f32 %v3645, 0.0
      %v7232 = vmax.f32 %v3650, 0.0
      %v7233 = vmax.f32 %v3655, 0.0
      %v7234 = vmax.f32 %v3660, 0.0
      %v7235 = vmax.f32 %v3665, 0.0
      %v7236 = vmax.f32 %v3670, 0.0
      %v7237 = vmax.f32 %v3675, 0.0
      %v7238 = vmax.f32 %v3680, 0.0
      %v7239 = vmax.f32 %v3685, 0.0
      %v7240 = vmax.f32 %v3690, 0.0
      %v7241 = vmax.f32 %v3695, 0.0
      %v7242 = vmax.f32 %v3700, 0.0
      %v7243 = vmax.f32 %v3705, 0.0
      %v7244 = vmax.f32 %v3710, 0.0
      %v7245 = vmax.f32 %v3715, 0.0
      %v7246 = vmax.f32 %v3720, 0.0
      %v7247 = vmax.f32 %v3725, 0.0
      %v7248 = vmax.f32 %v3730, 0.0
      %v7249 = vmax.f32 %v3735, 0.0
      %v7250 = vmax.f32 %v3740, 0.0
      %v7251 = vmax.f32 %v3745, 0.0
      %v7252 = vmax.f32 %v3750, 0.0
      %v7253 = vmax.f32 %v3755, 0.0
      %v7254 = vmax.f32 %v3760, 0.0
      %v7255 = vmax.f32 %v3765, 0.0
      %v7256 = vmax.f32 %v3770, 0.0
      %v7257 = vmax.f32 %v3775, 0.0
      %v7258 = vmax.f32 %v3780, 0.0
      %v7259 = vmax.f32 %v3785, 0.0
      %v7260 = vmax.f32 %v3790, 0.0
      %v7261 = vmax.f32 %v3795, 0.0
      %v7262 = vmax.f32 %v3800, 0.0
      %v7263 = vmax.f32 %v3805, 0.0
      %v7264 = vmax.f32 %v3810, 0.0
      %v7265 = vmax.f32 %v3815, 0.0
      %v7266 = vmax.f32 %v3820, 0.0
      %v7267 = vmax.f32 %v3825, 0.0
      %v7268 = vmax.f32 %v3830, 0.0
      %v7269 = vmax.f32 %v3835, 0.0
      %v7270 = vmax.f32 %v3840, 0.0
      %v7271 = vmax.f32 %v3845, 0.0
      %v7272 = vmax.f32 %v3850, 0.0
      %v7273 = vmax.f32 %v3855, 0.0
      %v7274 = vmax.f32 %v3860, 0.0
      %v7275 = vmax.f32 %v3865, 0.0
      %v7276 = vmax.f32 %v3870, 0.0
      %v7277 = vmax.f32 %v3875, 0.0
      %v7278 = vmax.f32 %v3880, 0.0
      %v7279 = vmax.f32 %v3885, 0.0
      %v7280 = vmax.f32 %v3890, 0.0
      %v7281 = vmax.f32 %v3895, 0.0
      %v7282 = vmax.f32 %v3900, 0.0
      %v7283 = vmax.f32 %v3905, 0.0
      %v7284 = vmax.f32 %v3910, 0.0
      %v7285 = vmax.f32 %v3915, 0.0
      %v7286 = vmax.f32 %v3920, 0.0
      %v7287 = vmax.f32 %v3925, 0.0
      %v7288 = vmax.f32 %v3930, 0.0
      %v7289 = vmax.f32 %v3935, 0.0
      %v7290 = vmax.f32 %v3940, 0.0
      %v7291 = vmax.f32 %v3945, 0.0
      %v7292 = vmax.f32 %v3950, 0.0
      %v7293 = vmax.f32 %v3955, 0.0
      %v7294 = vmax.f32 %v3960, 0.0
      %v7295 = vmax.f32 %v3965, 0.0
      %v7296 = vmax.f32 %v3970, 0.0
      %v7297 = vmax.f32 %v3975, 0.0
      %v7298 = vmax.f32 %v3980, 0.0
      %v7299 = vmax.f32 %v3985, 0.0
      %v7300 = vmax.f32 %v3990, 0.0
      %v7301 = vmax.f32 %v3995, 0.0
      %v7302 = vmax.f32 %v4000, 0.0
      %v7303 = vmax.f32 %v4005, 0.0
      %v7304 = vmax.f32 %v4010, 0.0
      %v7305 = vmax.f32 %v4015, 0.0
      %v7306 = vmax.f32 %v4020, 0.0
      %v7307 = vmax.f32 %v4025, 0.0
      %v7308 = vmax.f32 %v4030, 0.0
      %v7309 = vmax.f32 %v4035, 0.0
      %v7310 = vmax.f32 %v4040, 0.0
      %v7311 = vmax.f32 %v4045, 0.0
      %v7312 = vmax.f32 %v4050, 0.0
      %v7313 = vmax.f32 %v4055, 0.0
      %v7314 = vmax.f32 %v4060, 0.0
      %v7315 = vmax.f32 %v4065, 0.0
      %v7316 = vmax.f32 %v4070, 0.0
      %v7317 = vmax.f32 %v4075, 0.0
      %v7318 = vmax.f32 %v4080, 0.0
      %v7319 = vmax.f32 %v4085, 0.0
      %v7320 = vmax.f32 %v4090, 0.0
      %v7321 = vmax.f32 %v4095, 0.0
      %v7322 = vmax.f32 %v4100, 0.0
      %v7323 = vmax.f32 %v4105, 0.0
      %v7324 = vmax.f32 %v4110, 0.0
      %v7325 = vmax.f32 %v4115, 0.0
      %v7326 = vmax.f32 %v4120, 0.0
      %v7327 = vmax.f32 %v4125, 0.0
      %v7328 = vmax.f32 %v4130, 0.0
      %v7329 = vmax.f32 %v4135, 0.0
      %v7330 = vmax.f32 %v4140, 0.0
      %v7331 = vmax.f32 %v4145, 0.0
      %v7332 = vmax.f32 %v4150, 0.0
      %v7333 = vmax.f32 %v4155, 0.0
      %v7334 = vmax.f32 %v4160, 0.0
      %v7335 = vmax.f32 %v4165, 0.0
      %v7336 = vmax.f32 %v4170, 0.0
      %v7337 = vmax.f32 %v4175, 0.0
      %v7338 = vmax.f32 %v4180, 0.0
      %v7339 = vmax.f32 %v4185, 0.0
      %v7340 = vmax.f32 %v4190, 0.0
      %v7341 = vmax.f32 %v4195, 0.0
      %v7342 = vmax.f32 %v4200, 0.0
      %v7343 = vmax.f32 %v4205, 0.0
      %v7344 = vmax.f32 %v4210, 0.0
      %v7345 = vmax.f32 %v4215, 0.0
      %v7346 = vmax.f32 %v4220, 0.0
      %v7347 = vmax.f32 %v4225, 0.0
      %v7348 = vmax.f32 %v4230, 0.0
      %v7349 = vmax.f32 %v4235, 0.0
      %v7350 = vmax.f32 %v4240, 0.0
      %v7351 = vmax.f32 %v4245, 0.0
      %v7352 = vmax.f32 %v4250, 0.0
      %v7353 = vmax.f32 %v4255, 0.0
      %v7354 = vmax.f32 %v4260, 0.0
      %v7355 = vmax.f32 %v4265, 0.0
      %v7356 = vmax.f32 %v4270, 0.0
      %v7357 = vmax.f32 %v4275, 0.0
      %v7358 = vmax.f32 %v4280, 0.0
      %v7359 = vmax.f32 %v4285, 0.0
      %v7360 = vmax.f32 %v4290, 0.0
      %v7361 = vmax.f32 %v4295, 0.0
      %v7362 = vmax.f32 %v4300, 0.0
      %v7363 = vmax.f32 %v4305, 0.0
      %v7364 = vmax.f32 %v4310, 0.0
      %v7365 = vmax.f32 %v4315, 0.0
      %v7366 = vmax.f32 %v4320, 0.0
      %v7367 = vmax.f32 %v4325, 0.0
      %v7368 = vmax.f32 %v4330, 0.0
      %v7369 = vmax.f32 %v4335, 0.0
      %v7370 = vmax.f32 %v4340, 0.0
      %v7371 = vmax.f32 %v4345, 0.0
      %v7372 = vmax.f32 %v4350, 0.0
      %v7373 = vmax.f32 %v4355, 0.0
      %v7374 = vmax.f32 %v4360, 0.0
      %v7375 = vmax.f32 %v4365, 0.0
      %v7376 = vmax.f32 %v4370, 0.0
      %v7377 = vmax.f32 %v4375, 0.0
      %v7378 = vmax.f32 %v4380, 0.0
      %v7379 = vmax.f32 %v4385, 0.0
      %v7380 = vmax.f32 %v4390, 0.0
      %v7381 = vmax.f32 %v4395, 0.0
      %v7382 = vmax.f32 %v4400, 0.0
      %v7383 = vmax.f32 %v4405, 0.0
      %v7384 = vmax.f32 %v4410, 0.0
      %v7385 = vmax.f32 %v4415, 0.0
      %v7386 = vmax.f32 %v4420, 0.0
      %v7387 = vmax.f32 %v4425, 0.0
      %v7388 = vmax.f32 %v4430, 0.0
      %v7389 = vmax.f32 %v4435, 0.0
      %v7390 = vmax.f32 %v4440, 0.0
      %v7391 = vmax.f32 %v4445, 0.0
      %v7392 = vmax.f32 %v4450, 0.0
      %v7393 = vmax.f32 %v4455, 0.0
      %v7394 = vmax.f32 %v4460, 0.0
      %v7395 = vmax.f32 %v4465, 0.0
      %v7396 = vmax.f32 %v4470, 0.0
      %v7397 = vmax.f32 %v4475, 0.0
      %v7398 = vmax.f32 %v4480, 0.0
      %v7399 = vmax.f32 %v4485, 0.0
      %v7400 = vmax.f32 %v4490, 0.0
      %v7401 = vmax.f32 %v4495, 0.0
      %v7402 = vmax.f32 %v4500, 0.0
      %v7403 = vmax.f32 %v4505, 0.0
      %v7404 = vmax.f32 %v4510, 0.0
      %v7405 = vmax.f32 %v4515, 0.0
      %v7406 = vmax.f32 %v4520, 0.0
      %v7407 = vmax.f32 %v4525, 0.0
      %v7408 = vmax.f32 %v4530, 0.0
      %v7409 = vmax.f32 %v4535, 0.0
      %v7410 = vmax.f32 %v4540, 0.0
      %v7411 = vmax.f32 %v4545, 0.0
      %v7412 = vmax.f32 %v4550, 0.0
      %v7413 = vmax.f32 %v4555, 0.0
      %v7414 = vmax.f32 %v4560, 0.0
      %v7415 = vmax.f32 %v4565, 0.0
      %v7416 = vmax.f32 %v4570, 0.0
      %v7417 = vmax.f32 %v4575, 0.0
      %v7418 = vmax.f32 %v4580, 0.0
      %v7419 = vmax.f32 %v4585, 0.0
      %v7420 = vmax.f32 %v4590, 0.0
      %v7421 = vmax.f32 %v4595, 0.0
      %v7422 = vmax.f32 %v4600, 0.0
      %v7423 = vmax.f32 %v4605, 0.0
      %v7424 = vmax.f32 %v4610, 0.0
      %v7425 = vmax.f32 %v4615, 0.0
      %v7426 = vmax.f32 %v4620, 0.0
      %v7427 = vmax.f32 %v4625, 0.0
      %v7428 = vmax.f32 %v4630, 0.0
      %v7429 = vmax.f32 %v4635, 0.0
      %v7430 = vmax.f32 %v4640, 0.0
      %v7431 = vmax.f32 %v4645, 0.0
      %v7432 = vmax.f32 %v4650, 0.0
      %v7433 = vmax.f32 %v4655, 0.0
      %v7434 = vmax.f32 %v4660, 0.0
      %v7435 = vmax.f32 %v4665, 0.0
      %v7436 = vmax.f32 %v4670, 0.0
      %v7437 = vmax.f32 %v4675, 0.0
      %v7438 = vmax.f32 %v4680, 0.0
      %v7439 = vmax.f32 %v4685, 0.0
      %v7440 = vmax.f32 %v4690, 0.0
      %v7441 = vmax.f32 %v4695, 0.0
      %v7442 = vmax.f32 %v4700, 0.0
      %v7443 = vmax.f32 %v4705, 0.0
      %v7444 = vmax.f32 %v4710, 0.0
      %v7445 = vmax.f32 %v4715, 0.0
      %v7446 = vmax.f32 %v4720, 0.0
      %v7447 = vmax.f32 %v4725, 0.0
      %v7448 = vmax.f32 %v4730, 0.0
      %v7449 = vmax.f32 %v4735, 0.0
      %v7450 = vmax.f32 %v4740, 0.0
      %v7451 = vmax.f32 %v4745, 0.0
      %v7452 = vmax.f32 %v4750, 0.0
      %v7453 = vmax.f32 %v4755, 0.0
      %v7454 = vmax.f32 %v4760, 0.0
      %v7455 = vmax.f32 %v4765, 0.0
      %v7456 = vmax.f32 %v4770, 0.0
      %v7457 = vmax.f32 %v4775, 0.0
      %v7458 = vmax.f32 %v4780, 0.0
      %v7459 = vmax.f32 %v4785, 0.0
      %v7460 = vmax.f32 %v4790, 0.0
      %v7461 = vmax.f32 %v4795, 0.0
      %v7462 = vmax.f32 %v4800, 0.0
      %v7463 = vmax.f32 %v4805, 0.0
      %v7464 = vmax.f32 %v4810, 0.0
      %v7465 = vmax.f32 %v4815, 0.0
      %v7466 = vmax.f32 %v4820, 0.0
      %v7467 = vmax.f32 %v4825, 0.0
      %v7468 = vmax.f32 %v4830, 0.0
      %v7469 = vmax.f32 %v4835, 0.0
      %v7470 = vmax.f32 %v4840, 0.0
      %v7471 = vmax.f32 %v4845, 0.0
      %v7472 = vmax.f32 %v4850, 0.0
      %v7473 = vmax.f32 %v4855, 0.0
      %v7474 = vmax.f32 %v4860, 0.0
      %v7475 = vmax.f32 %v4865, 0.0
      %v7476 = vmax.f32 %v4870, 0.0
      %v7477 = vmax.f32 %v4875, 0.0
      %v7478 = vmax.f32 %v4880, 0.0
      %v7479 = vmax.f32 %v4885, 0.0
      %v7480 = vmax.f32 %v4890, 0.0
      %v7481 = vmax.f32 %v4895, 0.0
      %v7482 = vmax.f32 %v4900, 0.0
      %v7483 = vmax.f32 %v4905, 0.0
      %v7484 = vmax.f32 %v4910, 0.0
      %v7485 = vmax.f32 %v4915, 0.0
      %v7486 = vmax.f32 %v4920, 0.0
      %v7487 = vmax.f32 %v4925, 0.0
      %v7488 = vmax.f32 %v4930, 0.0
      %v7489 = vmax.f32 %v4935, 0.0
      %v7490 = vmax.f32 %v4940, 0.0
      %v7491 = vmax.f32 %v4945, 0.0
      %v7492 = vmax.f32 %v4950, 0.0
      %v7493 = vmax.f32 %v4955, 0.0
      %v7494 = vmax.f32 %v4960, 0.0
      %v7495 = vmax.f32 %v4965, 0.0
      %v7496 = vmax.f32 %v4970, 0.0
      %v7497 = vmax.f32 %v4975, 0.0
      %v7498 = vmax.f32 %v4980, 0.0
      %v7499 = vmax.f32 %v4985, 0.0
      %v7500 = vmax.f32 %v4990, 0.0
      %v7501 = vmax.f32 %v4995, 0.0
      %v7502 = vmax.f32 %v5000, 0.0
      %v7503 = vmax.f32 %v5005, 0.0
      %v7504 = vmax.f32 %v5010, 0.0
      %v7505 = vmax.f32 %v5015, 0.0
      %v7506 = vmax.f32 %v5020, 0.0
      %v7507 = vmax.f32 %v5025, 0.0
      %v7508 = vmax.f32 %v5030, 0.0
      %v7509 = vmax.f32 %v5035, 0.0
      %v7510 = vmax.f32 %v5040, 0.0
      %v7511 = vmax.f32 %v5045, 0.0
      %v7512 = vmax.f32 %v5050, 0.0
      %v7513 = vmax.f32 %v5055, 0.0
      %v7514 = vmax.f32 %v5060, 0.0
      %v7515 = vmax.f32 %v5065, 0.0
      %v7516 = vmax.f32 %v5070, 0.0
      %v7517 = vmax.f32 %v5075, 0.0
      %v7518 = vmax.f32 %v5080, 0.0
      %v7519 = vmax.f32 %v5085, 0.0
      %v7520 = vmax.f32 %v5090, 0.0
      %v7521 = vmax.f32 %v5095, 0.0
      %v7522 = vmax.f32 %v5100, 0.0
      %v7523 = vmax.f32 %v5105, 0.0
      %v7524 = vmax.f32 %v5110, 0.0
      %v7525 = vmax.f32 %v5115, 0.0
      %v7526 = vmax.f32 %v5120, 0.0
      %v7527 = vmax.f32 %v5125, 0.0
      %v7528 = vmax.f32 %v5130, 0.0
      %v7529 = vmax.f32 %v5135, 0.0
      %v7530 = vmax.f32 %v5140, 0.0
      %v7531 = vmax.f32 %v5145, 0.0
      %v7532 = vmax.f32 %v5150, 0.0
      %v7533 = vmax.f32 %v5155, 0.0
      %v7534 = vmax.f32 %v5160, 0.0
      %v7535 = vmax.f32 %v5165, 0.0
      %v7536 = vmax.f32 %v5170, 0.0
      %v7537 = vmax.f32 %v5175, 0.0
      %v7538 = vmax.f32 %v5180, 0.0
      %v7539 = vmax.f32 %v5185, 0.0
      %v7540 = vmax.f32 %v5190, 0.0
      %v7541 = vmax.f32 %v5195, 0.0
      %v7542 = vmax.f32 %v5200, 0.0
      %v7543 = vmax.f32 %v5205, 0.0
      %v7544 = vmax.f32 %v5210, 0.0
      %v7545 = vmax.f32 %v5215, 0.0
      %v7546 = vmax.f32 %v5220, 0.0
      %v7547 = vmax.f32 %v5225, 0.0
      %v7548 = vmax.f32 %v5230, 0.0
      %v7549 = vmax.f32 %v5235, 0.0
      %v7550 = vmax.f32 %v5240, 0.0
      %v7551 = vmax.f32 %v5245, 0.0
      %v7552 = vmax.f32 %v5250, 0.0
      %v7553 = vmax.f32 %v5255, 0.0
      %v7554 = vmax.f32 %v5260, 0.0
      %v7555 = vmax.f32 %v5265, 0.0
      %v7556 = vmax.f32 %v5270, 0.0
      %v7557 = vmax.f32 %v5275, 0.0
      %v7558 = vmax.f32 %v5280, 0.0
      %v7559 = vmax.f32 %v5285, 0.0
      %v7560 = vmax.f32 %v5290, 0.0
      %v7561 = vmax.f32 %v5295, 0.0
      %v7562 = vmax.f32 %v5300, 0.0
      %v7563 = vmax.f32 %v5305, 0.0
      %v7564 = vmax.f32 %v5310, 0.0
      %v7565 = vmax.f32 %v5315, 0.0
      %v7566 = vmax.f32 %v5320, 0.0
      %v7567 = vmax.f32 %v5325, 0.0
      %v7568 = vmax.f32 %v5330, 0.0
      %v7569 = vmax.f32 %v5335, 0.0
      %v7570 = vmax.f32 %v5340, 0.0
      %v7571 = vmax.f32 %v5345, 0.0
      %v7572 = vmax.f32 %v5350, 0.0
      %v7573 = vmax.f32 %v5355, 0.0
      %v7574 = vmax.f32 %v5360, 0.0
      %v7575 = vmax.f32 %v5365, 0.0
      %v7576 = vmax.f32 %v5370, 0.0
      %v7577 = vmax.f32 %v5375, 0.0
      %v7578 = vmax.f32 %v5380, 0.0
      %v7579 = vmax.f32 %v5385, 0.0
      %v7580 = vmax.f32 %v5390, 0.0
      %v7581 = vmax.f32 %v5395, 0.0
      %v7582 = vmax.f32 %v5400, 0.0
      %v7583 = vmax.f32 %v5405, 0.0
      %v7584 = vmax.f32 %v5410, 0.0
      %v7585 = vmax.f32 %v5415, 0.0
      %v7586 = vmax.f32 %v5420, 0.0
      %v7587 = vmax.f32 %v5425, 0.0
      %v7588 = vmax.f32 %v5430, 0.0
      %v7589 = vmax.f32 %v5435, 0.0
      %v7590 = vmax.f32 %v5440, 0.0
      %v7591 = vmax.f32 %v5445, 0.0
      %v7592 = vmax.f32 %v5450, 0.0
      %v7593 = vmax.f32 %v5455, 0.0
      %v7594 = vmax.f32 %v5460, 0.0
      %v7595 = vmax.f32 %v5465, 0.0
      %v7596 = vmax.f32 %v5470, 0.0
      %v7597 = vmax.f32 %v5475, 0.0
      %v7598 = vmax.f32 %v5480, 0.0
      %v7599 = vmax.f32 %v5485, 0.0
      %v7600 = vmax.f32 %v5490, 0.0
      %v7601 = vmax.f32 %v5495, 0.0
      %v7602 = vmax.f32 %v5500, 0.0
      %v7603 = vmax.f32 %v5505, 0.0
      %v7604 = vmax.f32 %v5510, 0.0
      %v7605 = vmax.f32 %v5515, 0.0
      %v7606 = vmax.f32 %v5520, 0.0
      %v7607 = vmax.f32 %v5525, 0.0
      %v7608 = vmax.f32 %v5530, 0.0
      %v7609 = vmax.f32 %v5535, 0.0
      %v7610 = vmax.f32 %v5540, 0.0
      %v7611 = vmax.f32 %v5545, 0.0
      %v7612 = vmax.f32 %v5550, 0.0
      %v7613 = vmax.f32 %v5555, 0.0
      %v7614 = vmax.f32 %v5560, 0.0
      %v7615 = vmax.f32 %v5565, 0.0
      %v7616 = vmax.f32 %v5570, 0.0
      %v7617 = vmax.f32 %v5575, 0.0
      %v7618 = vmax.f32 %v5580, 0.0
      %v7619 = vmax.f32 %v5585, 0.0
      %v7620 = vmax.f32 %v5590, 0.0
      %v7621 = vmax.f32 %v5595, 0.0
      %v7622 = vmax.f32 %v5600, 0.0
      %v7623 = vmax.f32 %v5605, 0.0
      %v7624 = vmax.f32 %v5610, 0.0
      %v7625 = vmax.f32 %v5615, 0.0
      %v7626 = vmax.f32 %v5620, 0.0
      %v7627 = vmax.f32 %v5625, 0.0
      %v7628 = vmax.f32 %v5630, 0.0
      %v7629 = vmax.f32 %v5635, 0.0
      %v7630 = vmax.f32 %v5640, 0.0
      %v7631 = vmax.f32 %v5645, 0.0
      %v7632 = vmax.f32 %v5650, 0.0
      %v7633 = vmax.f32 %v5655, 0.0
      %v7634 = vmax.f32 %v5660, 0.0
      %v7635 = vmax.f32 %v5665, 0.0
      %v7636 = vmax.f32 %v5670, 0.0
      %v7637 = vmax.f32 %v5675, 0.0
      %v7638 = vmax.f32 %v5680, 0.0
      %v7639 = vmax.f32 %v5685, 0.0
      %v7640 = vmax.f32 %v5690, 0.0
      %v7641 = vmax.f32 %v5695, 0.0
      %v7642 = vmax.f32 %v5700, 0.0
      %v7643 = vmax.f32 %v5705, 0.0
      %v7644 = vmax.f32 %v5710, 0.0
      %v7645 = vmax.f32 %v5715, 0.0
      %v7646 = vmax.f32 %v5720, 0.0
      %v7647 = vmax.f32 %v5725, 0.0
      %v7648 = vmax.f32 %v5730, 0.0
      %v7649 = vmax.f32 %v5735, 0.0
      %v7650 = vmax.f32 %v5740, 0.0
      %v7651 = vmax.f32 %v5745, 0.0
      %v7652 = vmax.f32 %v5750, 0.0
      %v7653 = vmax.f32 %v5755, 0.0
      %v7654 = vmax.f32 %v5760, 0.0
      %v7655 = vmax.f32 %v5765, 0.0
      %v7656 = vmax.f32 %v5770, 0.0
      %v7657 = vmax.f32 %v5775, 0.0
      %v7658 = vmax.f32 %v5780, 0.0
      %v7659 = vmax.f32 %v5785, 0.0
      %v7660 = vmax.f32 %v5790, 0.0
      %v7661 = vmax.f32 %v5795, 0.0
      %v7662 = vmax.f32 %v5800, 0.0
      %v7663 = vmax.f32 %v5805, 0.0
      %v7664 = vmax.f32 %v5810, 0.0
      %v7665 = vmax.f32 %v5815, 0.0
      %v7666 = vmax.f32 %v5820, 0.0
      %v7667 = vmax.f32 %v5825, 0.0
      %v7668 = vmax.f32 %v5830, 0.0
      %v7669 = vmax.f32 %v5835, 0.0
      %v7670 = vmax.f32 %v5840, 0.0
      %v7671 = vmax.f32 %v5845, 0.0
      %v7672 = vmax.f32 %v5850, 0.0
      %v7673 = vmax.f32 %v5855, 0.0
      %v7674 = vmax.f32 %v5860, 0.0
      %v7675 = vmax.f32 %v5865, 0.0
      %v7676 = vmax.f32 %v5870, 0.0
      %v7677 = vmax.f32 %v5875, 0.0
      %v7678 = vmax.f32 %v5880, 0.0
      %v7679 = vmax.f32 %v5885, 0.0
      %v7680 = vmax.f32 %v5890, 0.0
      %v7681 = vmax.f32 %v5895, 0.0
      %v7682 = vmax.f32 %v5900, 0.0
      %v7683 = vmax.f32 %v5905, 0.0
      %v7684 = vmax.f32 %v5910, 0.0
      %v7685 = vmax.f32 %v5915, 0.0
      %v7686 = vmax.f32 %v5920, 0.0
      %v7687 = vmax.f32 %v5925, 0.0
      %v7688 = vmax.f32 %v5930, 0.0
      %v7689 = vmax.f32 %v5935, 0.0
      %v7690 = vmax.f32 %v5940, 0.0
      %v7691 = vmax.f32 %v5945, 0.0
      %v7692 = vmax.f32 %v5950, 0.0
      %v7693 = vmax.f32 %v5955, 0.0
      %v7694 = vmax.f32 %v5960, 0.0
      %v7695 = vmax.f32 %v5965, 0.0
      %v7696 = vmax.f32 %v5970, 0.0
      %v7697 = vmax.f32 %v5975, 0.0
      %v7698 = vmax.f32 %v5980, 0.0
      %v7699 = vmax.f32 %v5985, 0.0
      %v7700 = vmax.f32 %v5990, 0.0
      %v7701 = vmax.f32 %v5995, 0.0
      %v7702 = vmax.f32 %v6000, 0.0
      %v7703 = vmax.f32 %v6005, 0.0
      %v7704 = vmax.f32 %v6010, 0.0
      %v7705 = vmax.f32 %v6015, 0.0
      %v7706 = vmax.f32 %v6020, 0.0
      %v7707 = vmax.f32 %v6025, 0.0
      %v7708 = vmax.f32 %v6030, 0.0
      %v7709 = vmax.f32 %v6035, 0.0
      %v7710 = vmax.f32 %v6040, 0.0
      %v7711 = vmax.f32 %v6045, 0.0
      %v7712 = vmax.f32 %v6050, 0.0
      %v7713 = vmax.f32 %v6055, 0.0
      %v7714 = vmax.f32 %v6060, 0.0
      %v7715 = vmax.f32 %v6065, 0.0
      %v7716 = vmax.f32 %v6070, 0.0
      %v7717 = vmax.f32 %v6075, 0.0
      %v7718 = vmax.f32 %v6080, 0.0
      %v7719 = vmax.f32 %v6085, 0.0
      %v7720 = vmax.f32 %v6090, 0.0
      %v7721 = vmax.f32 %v6095, 0.0
      %v7722 = vmax.f32 %v6100, 0.0
      %v7723 = vmax.f32 %v6105, 0.0
      %v7724 = vmax.f32 %v6110, 0.0
      %v7725 = vmax.f32 %v6115, 0.0
      %v7726 = vmax.f32 %v6120, 0.0
      %v7727 = vmax.f32 %v6125, 0.0
      %v7728 = vmax.f32 %v6130, 0.0
      %v7729 = vmax.f32 %v6135, 0.0
      %v7730 = vmax.f32 %v6140, 0.0
      %v7731 = vmax.f32 %v6145, 0.0
      %v7732 = vmax.f32 %v6150, 0.0
      %v7733 = vmax.f32 %v6155, 0.0
      %v7734 = vmax.f32 %v6160, 0.0
      %v7735 = vmax.f32 %v6165, 0.0
      %v7736 = vmax.f32 %v6170, 0.0
      %v7737 = vmax.f32 %v6175, 0.0
      %v7738 = vmax.f32 %v6180, 0.0
      %v7739 = vmax.f32 %v6185, 0.0
      %v7740 = vmax.f32 %v6190, 0.0
      %v7741 = vmax.f32 %v6195, 0.0
      %v7742 = vmax.f32 %v6200, 0.0
      %v7743 = vmax.f32 %v6205, 0.0
      %v7744 = vmax.f32 %v6210, 0.0
      %v7745 = vmax.f32 %v6215, 0.0
      %v7746 = vmax.f32 %v6220, 0.0
      %v7747 = vmax.f32 %v6225, 0.0
      %v7748 = vmax.f32 %v6230, 0.0
      %v7749 = vmax.f32 %v6235, 0.0
      %v7750 = vmax.f32 %v6240, 0.0
      %v7751 = vmax.f32 %v6245, 0.0
      %v7752 = vmax.f32 %v6250, 0.0
      %v7753 = vmax.f32 %v6255, 0.0
      %v7754 = vmax.f32 %v6260, 0.0
      %v7755 = vmax.f32 %v6265, 0.0
      %v7756 = vmax.f32 %v6270, 0.0
      %v7757 = vmax.f32 %v6275, 0.0
      %v7758 = vmax.f32 %v6280, 0.0
      %v7759 = vmax.f32 %v6285, 0.0
      %v7760 = vmax.f32 %v6290, 0.0
      %v7761 = vmax.f32 %v6295, 0.0
      %v7762 = vmax.f32 %v6300, 0.0
      %v7763 = vmax.f32 %v6305, 0.0
      %v7764 = vmax.f32 %v6310, 0.0
      %v7765 = vmax.f32 %v6315, 0.0
      %v7766 = vmax.f32 %v6320, 0.0
      %v7767 = vmax.f32 %v6325, 0.0
      %v7768 = vmax.f32 %v6330, 0.0
      %v7769 = vmax.f32 %v6335, 0.0
      %v7770 = vmax.f32 %v6340, 0.0
      %v7771 = vmax.f32 %v6345, 0.0
      %v7772 = vmax.f32 %v6350, 0.0
      %v7773 = vmax.f32 %v6355, 0.0
      %v7774 = vmax.f32 %v6360, 0.0
      %v7775 = vmax.f32 %v6365, 0.0
      %v7776 = vmax.f32 %v6370, 0.0
      %v7777 = vmax.f32 %v6375, 0.0
      %v7778 = vmax.f32 %v6380, 0.0
      %v7779 = vmax.f32 %v6385, 0.0
      %v7780 = vmax.f32 %v6390, 0.0
      %v7781 = vmax.f32 %v6395, 0.0
      %v7782 = vmax.f32 %v6400, 0.0
      %v7783 = vmax.f32 %v6405, 0.0
      %v7784 = vmax.f32 %v6410, 0.0
      %v7785 = vmax.f32 %v6415, 0.0
      %v7786 = vmax.f32 %v6420, 0.0
      %v7787 = vmax.f32 %v6425, 0.0
      %v7788 = vmax.f32 %v6430, 0.0
      %v7789 = vmax.f32 %v6435, 0.0
      %v7790 = vmax.f32 %v6440, 0.0
      %v7791 = vmax.f32 %v6445, 0.0
      %v7792 = vmax.f32 %v6450, 0.0
      %v7793 = vmax.f32 %v6455, 0.0
      %v7794 = vmax.f32 %v6460, 0.0
      %v7795 = vmax.f32 %v6465, 0.0
      %v7796 = vmax.f32 %v6470, 0.0
      %v7797 = vmax.f32 %v6475, 0.0
      %v7798 = vmax.f32 %v6480, 0.0
      %v7799 = vmax.f32 %v6485, 0.0
      %v7800 = vmax.f32 %v6490, 0.0
      %v7801 = vmax.f32 %v6495, 0.0
      %v7802 = vmax.f32 %v6500, 0.0
      %v7803 = vmax.f32 %v6505, 0.0
      %v7804 = vmax.f32 %v6510, 0.0
      %v7805 = vmax.f32 %v6515, 0.0
      %v7806 = vmax.f32 %v6520, 0.0
      %v7807 = vmax.f32 %v6525, 0.0
      %v7808 = vmax.f32 %v6530, 0.0
      %v7809 = vmax.f32 %v6535, 0.0
      %v7810 = vmax.f32 %v6540, 0.0
      %v7811 = vmax.f32 %v6545, 0.0
      %v7812 = vmax.f32 %v6550, 0.0
      %v7813 = vmax.f32 %v6555, 0.0
      %v7814 = vmax.f32 %v6560, 0.0
      %v7815 = vmax.f32 %v6565, 0.0
      %v7816 = vmax.f32 %v6570, 0.0
      %v7817 = vmax.f32 %v6575, 0.0
      %v7818 = vmax.f32 %v6580, 0.0
      %v7819 = vmax.f32 %v6585, 0.0
      %v7820 = vmax.f32 %v6590, 0.0
      %v7821 = vmax.f32 %v6595, 0.0
      %v7822 = vmax.f32 %v6600, 0.0
      %v7823 = vmax.f32 %v6605, 0.0
      %v7824 = vmax.f32 %v6610, 0.0
      %v7825 = vmax.f32 %v6615, 0.0
      %v7826 = vmax.f32 %v6620, 0.0
      %v7827 = vmax.f32 %v6625, 0.0
      %v7828 = vmax.f32 %v6630, 0.0
      %v7829 = vmax.f32 %v6635, 0.0
      %v7830 = vmax.f32 %v6640, 0.0
      %v7831 = vmax.f32 %v6645, 0.0
      %v7832 = vmax.f32 %v6650, 0.0
      %v7833 = vmax.f32 %v6655, 0.0
      %v7834 = vmax.f32 %v6660, 0.0
      %v7835 = vmax.f32 %v6665, 0.0
      %v7836 = vmax.f32 %v6670, 0.0
      %v7837 = vmax.f32 %v6675, 0.0
      %v7838 = vmax.f32 %v6680, 0.0
      %v7839 = vmax.f32 %v6685, 0.0
      %v7840 = vmax.f32 %v6690, 0.0
      %v7841 = vmax.f32 %v6695, 0.0
      %v7842 = vmax.f32 %v6700, 0.0
      %v7843 = vmax.f32 %v6705, 0.0
      %v7844 = vmax.f32 %v6710, 0.0
      %v7845 = vmax.f32 %v6715, 0.0
      %v7846 = vmax.f32 %v6720, 0.0
      %v7847 = vmax.f32 %v6725, 0.0
      %v7848 = vmax.f32 %v6730, 0.0
      %v7849 = vmax.f32 %v6735, 0.0
      %v7850 = vmax.f32 %v6740, 0.0
      %v7851 = vmax.f32 %v6745, 0.0
      %v7852 = vmax.f32 %v6750, 0.0
      %v7853 = vmax.f32 %v6755, 0.0
      %v7854 = vmax.f32 %v6760, 0.0
      %v7855 = vmax.f32 %v6765, 0.0
      %v7856 = vmax.f32 %v6770, 0.0
      %v7857 = vmax.f32 %v6775, 0.0
      %v7858 = vmax.f32 %v6780, 0.0
      %v7859 = vmax.f32 %v6785, 0.0
      %v7860 = vmax.f32 %v6790, 0.0
      %v7861 = vmax.f32 %v6795, 0.0
      %v7862 = vmax.f32 %v6800, 0.0
      %v7863 = vmax.f32 %v6805, 0.0
      %v7864 = vmax.f32 %v6810, 0.0
      %v7865 = vmax.f32 %v6815, 0.0
      %v7866 = vmax.f32 %v6820, 0.0
      %v7867 = vmax.f32 %v6825, 0.0
      %v7868 = vmax.f32 %v6830, 0.0
      %v7869 = vmax.f32 %v6835, 0.0
      %v7870 = vmax.f32 %v6840, 0.0
      %v7871 = vmax.f32 %v6845, 0.0
      %v7872 = vmax.f32 %v6850, 0.0
      %v7873 = vmax.f32 %v6855, 0.0
      %v7874 = vmax.f32 %v6860, 0.0
      %v7875 = vmax.f32 %v6865, 0.0
      %v7876 = vmax.f32 %v6870, 0.0
      %v7877 = vmax.f32 %v6875, 0.0
      %v7878 = vmax.f32 %v6880, 0.0
      %v7879 = vmax.f32 %v6885, 0.0
      %v7880 = vmax.f32 %v6890, 0.0
      %v7881 = vmax.f32 %v6895, 0.0
      %v7882 = vmax.f32 %v6900, 0.0
      %v7883 = vmax.f32 %v6905, 0.0
      %v7884 = vmax.f32 %v6910, 0.0
      %v7885 = vmax.f32 %v6915, 0.0
      %v7886 = vmax.f32 %v6920, 0.0
      %v7887 = vmax.f32 %v6925, 0.0
      %v7888 = vmax.f32 %v6930, 0.0
      %v7889 = vmax.f32 %v6935, 0.0
      %v7890 = vmax.f32 %v6940, 0.0
      %v7891 = vmax.f32 %v6945, 0.0
      %v7892 = vmax.f32 %v6950, 0.0
      %v7893 = vmax.f32 %v6955, 0.0
      %v7894 = vmax.f32 %v6960, 0.0
      %v7895 = vmax.f32 %v6965, 0.0
      %v7896 = vmax.f32 %v6970, 0.0
      %v7897 = vmax.f32 %v6975, 0.0
      %v7898 = vmax.f32 %v6980, 0.0
      %v7899 = vmax.f32 %v6985, 0.0
      %v7900 = vmax.f32 %v6990, 0.0
      %v7901 = vmax.f32 %v6995, 0.0
      %v7902 = vmax.f32 %v7000, 0.0
      %v7903 = vmax.f32 %v7005, 0.0
      %v7904 = vmax.f32 %v7010, 0.0
      %v7905 = vmax.f32 %v7015, 0.0
      %v7906 = vmax.f32 %v7020, 0.0
      %v7907 = vmax.f32 %v7025, 0.0
      %v7908 = vmax.f32 %v7030, 0.0
      %v7909 = vmax.f32 %v7035, 0.0
      %v7910 = vmax.f32 %v7040, 0.0
      %v7911 = vmax.f32 %v7045, 0.0
      %v7912 = vmax.f32 %v7050, 0.0
      %v7913 = vmax.f32 %v7055, 0.0
      %v7914 = vmax.f32 %v7060, 0.0
      %v7915 = vmax.f32 %v7065, 0.0
      %v7916 = vmax.f32 %v7070, 0.0
      %v7917 = vmax.f32 %v7075, 0.0
      %v7918 = vmax.f32 %v7080, 0.0
      %v7919 = vmax.f32 %v7085, 0.0
      %v7920 = vmax.f32 %v7090, 0.0
      %v7921 = vmax.f32 %v7095, 0.0
      %v7922 = vmax.f32 %v7100, 0.0
      %v7923 = vmax.f32 %v7105, 0.0
      %v7924 = vmax.f32 %v7110, 0.0
      %v7925 = vmax.f32 %v7115, 0.0
      %v7926 = vmax.f32 %v7120, 0.0
      %v7927 = vmax.f32 %v7125, 0.0
      %v7928 = vmax.f32 %v7130, 0.0
      %v7929 = vmax.f32 %v7135, 0.0
      %v7930 = vmax.f32 %v7140, 0.0
      %v7931 = vmax.f32 %v7145, 0.0
      %v7932 = vmax.f32 %v7150, 0.0
      %v7933 = vmax.f32 %v7155, 0.0
      %v7934 = vmax.f32 %v7160, 0.0
      %v7935 = vmax.f32 %v7165, 0.0
      %vm7936 = vcmask 261120
      %v7937 = vsel %vm7936, %v7168, -inf
      %v7938 = vsel %vm7936, %v7169, -inf
      %v7939 = vmax.f32 %v7937, %v7938
      %v7940 = vsel %vm7936, %v7170, -inf
      %v7941 = vmax.f32 %v7939, %v7940
      %v7942 = vsel %vm7936, %v7171, -inf
      %v7943 = vmax.f32 %v7941, %v7942
      %v7944 = vrot.slane %v7943, 4
      %v7945 = vmax.f32 %v7943, %v7944
      %v7946 = vrot.slane %v7945, 2
      %v7947 = vmax.f32 %v7945, %v7946
      %v7948 = vrot.slane %v7947, 1
      %v7949 = vmax.f32 %v7947, %v7948
      %v7950 = vsel %vm7936, %v7172, -inf
      %v7951 = vsel %vm7936, %v7173, -inf
      %v7952 = vmax.f32 %v7950, %v7951
      %v7953 = vsel %vm7936, %v7174, -inf
      %v7954 = vmax.f32 %v7952, %v7953
      %v7955 = vsel %vm7936, %v7175, -inf
      %v7956 = vmax.f32 %v7954, %v7955
      %v7957 = vrot.slane %v7956, 4
      %v7958 = vmax.f32 %v7956, %v7957
      %v7959 = vrot.slane %v7958, 2
      %v7960 = vmax.f32 %v7958, %v7959
      %v7961 = vrot.slane %v7960, 1
      %v7962 = vmax.f32 %v7960, %v7961
      %v7963 = vsel %vm7936, %v7176, -inf
      %v7964 = vsel %vm7936, %v7177, -inf
      %v7965 = vmax.f32 %v7963, %v7964
      %v7966 = vsel %vm7936, %v7178, -inf
      %v7967 = vmax.f32 %v7965, %v7966
      %v7968 = vsel %vm7936, %v7179, -inf
      %v7969 = vmax.f32 %v7967, %v7968
      %v7970 = vrot.slane %v7969, 4
      %v7971 = vmax.f32 %v7969, %v7970
      %v7972 = vrot.slane %v7971, 2
      %v7973 = vmax.f32 %v7971, %v7972
      %v7974 = vrot.slane %v7973, 1
      %v7975 = vmax.f32 %v7973, %v7974
      %v7976 = vsel %vm7936, %v7180, -inf
      %v7977 = vsel %vm7936, %v7181, -inf
      %v7978 = vmax.f32 %v7976, %v7977
      %v7979 = vsel %vm7936, %v7182, -inf
      %v7980 = vmax.f32 %v7978, %v7979
      %v7981 = vsel %vm7936, %v7183, -inf
      %v7982 = vmax.f32 %v7980, %v7981
      %v7983 = vrot.slane %v7982, 4
      %v7984 = vmax.f32 %v7982, %v7983
      %v7985 = vrot.slane %v7984, 2
      %v7986 = vmax.f32 %v7984, %v7985
      %v7987 = vrot.slane %v7986, 1
      %v7988 = vmax.f32 %v7986, %v7987
      %v7989 = vsel %vm7936, %v7184, -inf
      %v7990 = vsel %vm7936, %v7185, -inf
      %v7991 = vmax.f32 %v7989, %v7990
      %v7992 = vsel %vm7936, %v7186, -inf
      %v7993 = vmax.f32 %v7991, %v7992
      %v7994 = vsel %vm7936, %v7187, -inf
      %v7995 = vmax.f32 %v7993, %v7994
      %v7996 = vrot.slane %v7995, 4
      %v7997 = vmax.f32 %v7995, %v7996
      %v7998 = vrot.slane %v7997, 2
      %v7999 = vmax.f32 %v7997, %v7998
      %v8000 = vrot.slane %v7999, 1
      %v8001 = vmax.f32 %v7999, %v8000
      %v8002 = vsel %vm7936, %v7188, -inf
      %v8003 = vsel %vm7936, %v7189, -inf
      %v8004 = vmax.f32 %v8002, %v8003
      %v8005 = vsel %vm7936, %v7190, -inf
      %v8006 = vmax.f32 %v8004, %v8005
      %v8007 = vsel %vm7936, %v7191, -inf
      %v8008 = vmax.f32 %v8006, %v8007
      %v8009 = vrot.slane %v8008, 4
      %v8010 = vmax.f32 %v8008, %v8009
      %v8011 = vrot.slane %v8010, 2
      %v8012 = vmax.f32 %v8010, %v8011
      %v8013 = vrot.slane %v8012, 1
      %v8014 = vmax.f32 %v8012, %v8013
      %v8015 = vsel %vm7936, %v7192, -inf
      %v8016 = vsel %vm7936, %v7193, -inf
      %v8017 = vmax.f32 %v8015, %v8016
      %v8018 = vsel %vm7936, %v7194, -inf
      %v8019 = vmax.f32 %v8017, %v8018
      %v8020 = vsel %vm7936, %v7195, -inf
      %v8021 = vmax.f32 %v8019, %v8020
      %v8022 = vrot.slane %v8021, 4
      %v8023 = vmax.f32 %v8021, %v8022
      %v8024 = vrot.slane %v8023, 2
      %v8025 = vmax.f32 %v8023, %v8024
      %v8026 = vrot.slane %v8025, 1
      %v8027 = vmax.f32 %v8025, %v8026
      %v8028 = vsel %vm7936, %v7196, -inf
      %v8029 = vsel %vm7936, %v7197, -inf
      %v8030 = vmax.f32 %v8028, %v8029
      %v8031 = vsel %vm7936, %v7198, -inf
      %v8032 = vmax.f32 %v8030, %v8031
      %v8033 = vsel %vm7936, %v7199, -inf
      %v8034 = vmax.f32 %v8032, %v8033
      %v8035 = vrot.slane %v8034, 4
      %v8036 = vmax.f32 %v8034, %v8035
      %v8037 = vrot.slane %v8036, 2
      %v8038 = vmax.f32 %v8036, %v8037
      %v8039 = vrot.slane %v8038, 1
      %v8040 = vmax.f32 %v8038, %v8039
      %v8041 = vsel %vm7936, %v7200, -inf
      %v8042 = vsel %vm7936, %v7201, -inf
      %v8043 = vmax.f32 %v8041, %v8042
      %v8044 = vsel %vm7936, %v7202, -inf
      %v8045 = vmax.f32 %v8043, %v8044
      %v8046 = vsel %vm7936, %v7203, -inf
      %v8047 = vmax.f32 %v8045, %v8046
      %v8048 = vrot.slane %v8047, 4
      %v8049 = vmax.f32 %v8047, %v8048
      %v8050 = vrot.slane %v8049, 2
      %v8051 = vmax.f32 %v8049, %v8050
      %v8052 = vrot.slane %v8051, 1
      %v8053 = vmax.f32 %v8051, %v8052
      %v8054 = vsel %vm7936, %v7204, -inf
      %v8055 = vsel %vm7936, %v7205, -inf
      %v8056 = vmax.f32 %v8054, %v8055
      %v8057 = vsel %vm7936, %v7206, -inf
      %v8058 = vmax.f32 %v8056, %v8057
      %v8059 = vsel %vm7936, %v7207, -inf
      %v8060 = vmax.f32 %v8058, %v8059
      %v8061 = vrot.slane %v8060, 4
      %v8062 = vmax.f32 %v8060, %v8061
      %v8063 = vrot.slane %v8062, 2
      %v8064 = vmax.f32 %v8062, %v8063
      %v8065 = vrot.slane %v8064, 1
      %v8066 = vmax.f32 %v8064, %v8065
      %v8067 = vsel %vm7936, %v7208, -inf
      %v8068 = vsel %vm7936, %v7209, -inf
      %v8069 = vmax.f32 %v8067, %v8068
      %v8070 = vsel %vm7936, %v7210, -inf
      %v8071 = vmax.f32 %v8069, %v8070
      %v8072 = vsel %vm7936, %v7211, -inf
      %v8073 = vmax.f32 %v8071, %v8072
      %v8074 = vrot.slane %v8073, 4
      %v8075 = vmax.f32 %v8073, %v8074
      %v8076 = vrot.slane %v8075, 2
      %v8077 = vmax.f32 %v8075, %v8076
      %v8078 = vrot.slane %v8077, 1
      %v8079 = vmax.f32 %v8077, %v8078
      %v8080 = vsel %vm7936, %v7212, -inf
      %v8081 = vsel %vm7936, %v7213, -inf
      %v8082 = vmax.f32 %v8080, %v8081
      %v8083 = vsel %vm7936, %v7214, -inf
      %v8084 = vmax.f32 %v8082, %v8083
      %v8085 = vsel %vm7936, %v7215, -inf
      %v8086 = vmax.f32 %v8084, %v8085
      %v8087 = vrot.slane %v8086, 4
      %v8088 = vmax.f32 %v8086, %v8087
      %v8089 = vrot.slane %v8088, 2
      %v8090 = vmax.f32 %v8088, %v8089
      %v8091 = vrot.slane %v8090, 1
      %v8092 = vmax.f32 %v8090, %v8091
      %v8093 = vsel %vm7936, %v7216, -inf
      %v8094 = vsel %vm7936, %v7217, -inf
      %v8095 = vmax.f32 %v8093, %v8094
      %v8096 = vsel %vm7936, %v7218, -inf
      %v8097 = vmax.f32 %v8095, %v8096
      %v8098 = vsel %vm7936, %v7219, -inf
      %v8099 = vmax.f32 %v8097, %v8098
      %v8100 = vrot.slane %v8099, 4
      %v8101 = vmax.f32 %v8099, %v8100
      %v8102 = vrot.slane %v8101, 2
      %v8103 = vmax.f32 %v8101, %v8102
      %v8104 = vrot.slane %v8103, 1
      %v8105 = vmax.f32 %v8103, %v8104
      %v8106 = vsel %vm7936, %v7220, -inf
      %v8107 = vsel %vm7936, %v7221, -inf
      %v8108 = vmax.f32 %v8106, %v8107
      %v8109 = vsel %vm7936, %v7222, -inf
      %v8110 = vmax.f32 %v8108, %v8109
      %v8111 = vsel %vm7936, %v7223, -inf
      %v8112 = vmax.f32 %v8110, %v8111
      %v8113 = vrot.slane %v8112, 4
      %v8114 = vmax.f32 %v8112, %v8113
      %v8115 = vrot.slane %v8114, 2
      %v8116 = vmax.f32 %v8114, %v8115
      %v8117 = vrot.slane %v8116, 1
      %v8118 = vmax.f32 %v8116, %v8117
      %v8119 = vsel %vm7936, %v7224, -inf
      %v8120 = vsel %vm7936, %v7225, -inf
      %v8121 = vmax.f32 %v8119, %v8120
      %v8122 = vsel %vm7936, %v7226, -inf
      %v8123 = vmax.f32 %v8121, %v8122
      %v8124 = vsel %vm7936, %v7227, -inf
      %v8125 = vmax.f32 %v8123, %v8124
      %v8126 = vrot.slane %v8125, 4
      %v8127 = vmax.f32 %v8125, %v8126
      %v8128 = vrot.slane %v8127, 2
      %v8129 = vmax.f32 %v8127, %v8128
      %v8130 = vrot.slane %v8129, 1
      %v8131 = vmax.f32 %v8129, %v8130
      %v8132 = vsel %vm7936, %v7228, -inf
      %v8133 = vsel %vm7936, %v7229, -inf
      %v8134 = vmax.f32 %v8132, %v8133
      %v8135 = vsel %vm7936, %v7230, -inf
      %v8136 = vmax.f32 %v8134, %v8135
      %v8137 = vsel %vm7936, %v7231, -inf
      %v8138 = vmax.f32 %v8136, %v8137
      %v8139 = vrot.slane %v8138, 4
      %v8140 = vmax.f32 %v8138, %v8139
      %v8141 = vrot.slane %v8140, 2
      %v8142 = vmax.f32 %v8140, %v8141
      %v8143 = vrot.slane %v8142, 1
      %v8144 = vmax.f32 %v8142, %v8143
      %v8145 = vsel %vm7936, %v7232, -inf
      %v8146 = vsel %vm7936, %v7233, -inf
      %v8147 = vmax.f32 %v8145, %v8146
      %v8148 = vsel %vm7936, %v7234, -inf
      %v8149 = vmax.f32 %v8147, %v8148
      %v8150 = vsel %vm7936, %v7235, -inf
      %v8151 = vmax.f32 %v8149, %v8150
      %v8152 = vrot.slane %v8151, 4
      %v8153 = vmax.f32 %v8151, %v8152
      %v8154 = vrot.slane %v8153, 2
      %v8155 = vmax.f32 %v8153, %v8154
      %v8156 = vrot.slane %v8155, 1
      %v8157 = vmax.f32 %v8155, %v8156
      %v8158 = vsel %vm7936, %v7236, -inf
      %v8159 = vsel %vm7936, %v7237, -inf
      %v8160 = vmax.f32 %v8158, %v8159
      %v8161 = vsel %vm7936, %v7238, -inf
      %v8162 = vmax.f32 %v8160, %v8161
      %v8163 = vsel %vm7936, %v7239, -inf
      %v8164 = vmax.f32 %v8162, %v8163
      %v8165 = vrot.slane %v8164, 4
      %v8166 = vmax.f32 %v8164, %v8165
      %v8167 = vrot.slane %v8166, 2
      %v8168 = vmax.f32 %v8166, %v8167
      %v8169 = vrot.slane %v8168, 1
      %v8170 = vmax.f32 %v8168, %v8169
      %v8171 = vsel %vm7936, %v7240, -inf
      %v8172 = vsel %vm7936, %v7241, -inf
      %v8173 = vmax.f32 %v8171, %v8172
      %v8174 = vsel %vm7936, %v7242, -inf
      %v8175 = vmax.f32 %v8173, %v8174
      %v8176 = vsel %vm7936, %v7243, -inf
      %v8177 = vmax.f32 %v8175, %v8176
      %v8178 = vrot.slane %v8177, 4
      %v8179 = vmax.f32 %v8177, %v8178
      %v8180 = vrot.slane %v8179, 2
      %v8181 = vmax.f32 %v8179, %v8180
      %v8182 = vrot.slane %v8181, 1
      %v8183 = vmax.f32 %v8181, %v8182
      %v8184 = vsel %vm7936, %v7244, -inf
      %v8185 = vsel %vm7936, %v7245, -inf
      %v8186 = vmax.f32 %v8184, %v8185
      %v8187 = vsel %vm7936, %v7246, -inf
      %v8188 = vmax.f32 %v8186, %v8187
      %v8189 = vsel %vm7936, %v7247, -inf
      %v8190 = vmax.f32 %v8188, %v8189
      %v8191 = vrot.slane %v8190, 4
      %v8192 = vmax.f32 %v8190, %v8191
      %v8193 = vrot.slane %v8192, 2
      %v8194 = vmax.f32 %v8192, %v8193
      %v8195 = vrot.slane %v8194, 1
      %v8196 = vmax.f32 %v8194, %v8195
      %v8197 = vsel %vm7936, %v7248, -inf
      %v8198 = vsel %vm7936, %v7249, -inf
      %v8199 = vmax.f32 %v8197, %v8198
      %v8200 = vsel %vm7936, %v7250, -inf
      %v8201 = vmax.f32 %v8199, %v8200
      %v8202 = vsel %vm7936, %v7251, -inf
      %v8203 = vmax.f32 %v8201, %v8202
      %v8204 = vrot.slane %v8203, 4
      %v8205 = vmax.f32 %v8203, %v8204
      %v8206 = vrot.slane %v8205, 2
      %v8207 = vmax.f32 %v8205, %v8206
      %v8208 = vrot.slane %v8207, 1
      %v8209 = vmax.f32 %v8207, %v8208
      %v8210 = vsel %vm7936, %v7252, -inf
      %v8211 = vsel %vm7936, %v7253, -inf
      %v8212 = vmax.f32 %v8210, %v8211
      %v8213 = vsel %vm7936, %v7254, -inf
      %v8214 = vmax.f32 %v8212, %v8213
      %v8215 = vsel %vm7936, %v7255, -inf
      %v8216 = vmax.f32 %v8214, %v8215
      %v8217 = vrot.slane %v8216, 4
      %v8218 = vmax.f32 %v8216, %v8217
      %v8219 = vrot.slane %v8218, 2
      %v8220 = vmax.f32 %v8218, %v8219
      %v8221 = vrot.slane %v8220, 1
      %v8222 = vmax.f32 %v8220, %v8221
      %v8223 = vsel %vm7936, %v7256, -inf
      %v8224 = vsel %vm7936, %v7257, -inf
      %v8225 = vmax.f32 %v8223, %v8224
      %v8226 = vsel %vm7936, %v7258, -inf
      %v8227 = vmax.f32 %v8225, %v8226
      %v8228 = vsel %vm7936, %v7259, -inf
      %v8229 = vmax.f32 %v8227, %v8228
      %v8230 = vrot.slane %v8229, 4
      %v8231 = vmax.f32 %v8229, %v8230
      %v8232 = vrot.slane %v8231, 2
      %v8233 = vmax.f32 %v8231, %v8232
      %v8234 = vrot.slane %v8233, 1
      %v8235 = vmax.f32 %v8233, %v8234
      %v8236 = vsel %vm7936, %v7260, -inf
      %v8237 = vsel %vm7936, %v7261, -inf
      %v8238 = vmax.f32 %v8236, %v8237
      %v8239 = vsel %vm7936, %v7262, -inf
      %v8240 = vmax.f32 %v8238, %v8239
      %v8241 = vsel %vm7936, %v7263, -inf
      %v8242 = vmax.f32 %v8240, %v8241
      %v8243 = vrot.slane %v8242, 4
      %v8244 = vmax.f32 %v8242, %v8243
      %v8245 = vrot.slane %v8244, 2
      %v8246 = vmax.f32 %v8244, %v8245
      %v8247 = vrot.slane %v8246, 1
      %v8248 = vmax.f32 %v8246, %v8247
      %v8249 = vsel %vm7936, %v7264, -inf
      %v8250 = vsel %vm7936, %v7265, -inf
      %v8251 = vmax.f32 %v8249, %v8250
      %v8252 = vsel %vm7936, %v7266, -inf
      %v8253 = vmax.f32 %v8251, %v8252
      %v8254 = vsel %vm7936, %v7267, -inf
      %v8255 = vmax.f32 %v8253, %v8254
      %v8256 = vrot.slane %v8255, 4
      %v8257 = vmax.f32 %v8255, %v8256
      %v8258 = vrot.slane %v8257, 2
      %v8259 = vmax.f32 %v8257, %v8258
      %v8260 = vrot.slane %v8259, 1
      %v8261 = vmax.f32 %v8259, %v8260
      %v8262 = vsel %vm7936, %v7268, -inf
      %v8263 = vsel %vm7936, %v7269, -inf
      %v8264 = vmax.f32 %v8262, %v8263
      %v8265 = vsel %vm7936, %v7270, -inf
      %v8266 = vmax.f32 %v8264, %v8265
      %v8267 = vsel %vm7936, %v7271, -inf
      %v8268 = vmax.f32 %v8266, %v8267
      %v8269 = vrot.slane %v8268, 4
      %v8270 = vmax.f32 %v8268, %v8269
      %v8271 = vrot.slane %v8270, 2
      %v8272 = vmax.f32 %v8270, %v8271
      %v8273 = vrot.slane %v8272, 1
      %v8274 = vmax.f32 %v8272, %v8273
      %v8275 = vsel %vm7936, %v7272, -inf
      %v8276 = vsel %vm7936, %v7273, -inf
      %v8277 = vmax.f32 %v8275, %v8276
      %v8278 = vsel %vm7936, %v7274, -inf
      %v8279 = vmax.f32 %v8277, %v8278
      %v8280 = vsel %vm7936, %v7275, -inf
      %v8281 = vmax.f32 %v8279, %v8280
      %v8282 = vrot.slane %v8281, 4
      %v8283 = vmax.f32 %v8281, %v8282
      %v8284 = vrot.slane %v8283, 2
      %v8285 = vmax.f32 %v8283, %v8284
      %v8286 = vrot.slane %v8285, 1
      %v8287 = vmax.f32 %v8285, %v8286
      %v8288 = vsel %vm7936, %v7276, -inf
      %v8289 = vsel %vm7936, %v7277, -inf
      %v8290 = vmax.f32 %v8288, %v8289
      %v8291 = vsel %vm7936, %v7278, -inf
      %v8292 = vmax.f32 %v8290, %v8291
      %v8293 = vsel %vm7936, %v7279, -inf
      %v8294 = vmax.f32 %v8292, %v8293
      %v8295 = vrot.slane %v8294, 4
      %v8296 = vmax.f32 %v8294, %v8295
      %v8297 = vrot.slane %v8296, 2
      %v8298 = vmax.f32 %v8296, %v8297
      %v8299 = vrot.slane %v8298, 1
      %v8300 = vmax.f32 %v8298, %v8299
      %v8301 = vsel %vm7936, %v7280, -inf
      %v8302 = vsel %vm7936, %v7281, -inf
      %v8303 = vmax.f32 %v8301, %v8302
      %v8304 = vsel %vm7936, %v7282, -inf
      %v8305 = vmax.f32 %v8303, %v8304
      %v8306 = vsel %vm7936, %v7283, -inf
      %v8307 = vmax.f32 %v8305, %v8306
      %v8308 = vrot.slane %v8307, 4
      %v8309 = vmax.f32 %v8307, %v8308
      %v8310 = vrot.slane %v8309, 2
      %v8311 = vmax.f32 %v8309, %v8310
      %v8312 = vrot.slane %v8311, 1
      %v8313 = vmax.f32 %v8311, %v8312
      %v8314 = vsel %vm7936, %v7284, -inf
      %v8315 = vsel %vm7936, %v7285, -inf
      %v8316 = vmax.f32 %v8314, %v8315
      %v8317 = vsel %vm7936, %v7286, -inf
      %v8318 = vmax.f32 %v8316, %v8317
      %v8319 = vsel %vm7936, %v7287, -inf
      %v8320 = vmax.f32 %v8318, %v8319
      %v8321 = vrot.slane %v8320, 4
      %v8322 = vmax.f32 %v8320, %v8321
      %v8323 = vrot.slane %v8322, 2
      %v8324 = vmax.f32 %v8322, %v8323
      %v8325 = vrot.slane %v8324, 1
      %v8326 = vmax.f32 %v8324, %v8325
      %v8327 = vsel %vm7936, %v7288, -inf
      %v8328 = vsel %vm7936, %v7289, -inf
      %v8329 = vmax.f32 %v8327, %v8328
      %v8330 = vsel %vm7936, %v7290, -inf
      %v8331 = vmax.f32 %v8329, %v8330
      %v8332 = vsel %vm7936, %v7291, -inf
      %v8333 = vmax.f32 %v8331, %v8332
      %v8334 = vrot.slane %v8333, 4
      %v8335 = vmax.f32 %v8333, %v8334
      %v8336 = vrot.slane %v8335, 2
      %v8337 = vmax.f32 %v8335, %v8336
      %v8338 = vrot.slane %v8337, 1
      %v8339 = vmax.f32 %v8337, %v8338
      %v8340 = vsel %vm7936, %v7292, -inf
      %v8341 = vsel %vm7936, %v7293, -inf
      %v8342 = vmax.f32 %v8340, %v8341
      %v8343 = vsel %vm7936, %v7294, -inf
      %v8344 = vmax.f32 %v8342, %v8343
      %v8345 = vsel %vm7936, %v7295, -inf
      %v8346 = vmax.f32 %v8344, %v8345
      %v8347 = vrot.slane %v8346, 4
      %v8348 = vmax.f32 %v8346, %v8347
      %v8349 = vrot.slane %v8348, 2
      %v8350 = vmax.f32 %v8348, %v8349
      %v8351 = vrot.slane %v8350, 1
      %v8352 = vmax.f32 %v8350, %v8351
      %v8353 = vsel %vm7936, %v7296, -inf
      %v8354 = vsel %vm7936, %v7297, -inf
      %v8355 = vmax.f32 %v8353, %v8354
      %v8356 = vsel %vm7936, %v7298, -inf
      %v8357 = vmax.f32 %v8355, %v8356
      %v8358 = vsel %vm7936, %v7299, -inf
      %v8359 = vmax.f32 %v8357, %v8358
      %v8360 = vrot.slane %v8359, 4
      %v8361 = vmax.f32 %v8359, %v8360
      %v8362 = vrot.slane %v8361, 2
      %v8363 = vmax.f32 %v8361, %v8362
      %v8364 = vrot.slane %v8363, 1
      %v8365 = vmax.f32 %v8363, %v8364
      %v8366 = vsel %vm7936, %v7300, -inf
      %v8367 = vsel %vm7936, %v7301, -inf
      %v8368 = vmax.f32 %v8366, %v8367
      %v8369 = vsel %vm7936, %v7302, -inf
      %v8370 = vmax.f32 %v8368, %v8369
      %v8371 = vsel %vm7936, %v7303, -inf
      %v8372 = vmax.f32 %v8370, %v8371
      %v8373 = vrot.slane %v8372, 4
      %v8374 = vmax.f32 %v8372, %v8373
      %v8375 = vrot.slane %v8374, 2
      %v8376 = vmax.f32 %v8374, %v8375
      %v8377 = vrot.slane %v8376, 1
      %v8378 = vmax.f32 %v8376, %v8377
      %v8379 = vsel %vm7936, %v7304, -inf
      %v8380 = vsel %vm7936, %v7305, -inf
      %v8381 = vmax.f32 %v8379, %v8380
      %v8382 = vsel %vm7936, %v7306, -inf
      %v8383 = vmax.f32 %v8381, %v8382
      %v8384 = vsel %vm7936, %v7307, -inf
      %v8385 = vmax.f32 %v8383, %v8384
      %v8386 = vrot.slane %v8385, 4
      %v8387 = vmax.f32 %v8385, %v8386
      %v8388 = vrot.slane %v8387, 2
      %v8389 = vmax.f32 %v8387, %v8388
      %v8390 = vrot.slane %v8389, 1
      %v8391 = vmax.f32 %v8389, %v8390
      %v8392 = vsel %vm7936, %v7308, -inf
      %v8393 = vsel %vm7936, %v7309, -inf
      %v8394 = vmax.f32 %v8392, %v8393
      %v8395 = vsel %vm7936, %v7310, -inf
      %v8396 = vmax.f32 %v8394, %v8395
      %v8397 = vsel %vm7936, %v7311, -inf
      %v8398 = vmax.f32 %v8396, %v8397
      %v8399 = vrot.slane %v8398, 4
      %v8400 = vmax.f32 %v8398, %v8399
      %v8401 = vrot.slane %v8400, 2
      %v8402 = vmax.f32 %v8400, %v8401
      %v8403 = vrot.slane %v8402, 1
      %v8404 = vmax.f32 %v8402, %v8403
      %v8405 = vsel %vm7936, %v7312, -inf
      %v8406 = vsel %vm7936, %v7313, -inf
      %v8407 = vmax.f32 %v8405, %v8406
      %v8408 = vsel %vm7936, %v7314, -inf
      %v8409 = vmax.f32 %v8407, %v8408
      %v8410 = vsel %vm7936, %v7315, -inf
      %v8411 = vmax.f32 %v8409, %v8410
      %v8412 = vrot.slane %v8411, 4
      %v8413 = vmax.f32 %v8411, %v8412
      %v8414 = vrot.slane %v8413, 2
      %v8415 = vmax.f32 %v8413, %v8414
      %v8416 = vrot.slane %v8415, 1
      %v8417 = vmax.f32 %v8415, %v8416
      %v8418 = vsel %vm7936, %v7316, -inf
      %v8419 = vsel %vm7936, %v7317, -inf
      %v8420 = vmax.f32 %v8418, %v8419
      %v8421 = vsel %vm7936, %v7318, -inf
      %v8422 = vmax.f32 %v8420, %v8421
      %v8423 = vsel %vm7936, %v7319, -inf
      %v8424 = vmax.f32 %v8422, %v8423
      %v8425 = vrot.slane %v8424, 4
      %v8426 = vmax.f32 %v8424, %v8425
      %v8427 = vrot.slane %v8426, 2
      %v8428 = vmax.f32 %v8426, %v8427
      %v8429 = vrot.slane %v8428, 1
      %v8430 = vmax.f32 %v8428, %v8429
      %v8431 = vsel %vm7936, %v7320, -inf
      %v8432 = vsel %vm7936, %v7321, -inf
      %v8433 = vmax.f32 %v8431, %v8432
      %v8434 = vsel %vm7936, %v7322, -inf
      %v8435 = vmax.f32 %v8433, %v8434
      %v8436 = vsel %vm7936, %v7323, -inf
      %v8437 = vmax.f32 %v8435, %v8436
      %v8438 = vrot.slane %v8437, 4
      %v8439 = vmax.f32 %v8437, %v8438
      %v8440 = vrot.slane %v8439, 2
      %v8441 = vmax.f32 %v8439, %v8440
      %v8442 = vrot.slane %v8441, 1
      %v8443 = vmax.f32 %v8441, %v8442
      %v8444 = vsel %vm7936, %v7324, -inf
      %v8445 = vsel %vm7936, %v7325, -inf
      %v8446 = vmax.f32 %v8444, %v8445
      %v8447 = vsel %vm7936, %v7326, -inf
      %v8448 = vmax.f32 %v8446, %v8447
      %v8449 = vsel %vm7936, %v7327, -inf
      %v8450 = vmax.f32 %v8448, %v8449
      %v8451 = vrot.slane %v8450, 4
      %v8452 = vmax.f32 %v8450, %v8451
      %v8453 = vrot.slane %v8452, 2
      %v8454 = vmax.f32 %v8452, %v8453
      %v8455 = vrot.slane %v8454, 1
      %v8456 = vmax.f32 %v8454, %v8455
      %v8457 = vsel %vm7936, %v7328, -inf
      %v8458 = vsel %vm7936, %v7329, -inf
      %v8459 = vmax.f32 %v8457, %v8458
      %v8460 = vsel %vm7936, %v7330, -inf
      %v8461 = vmax.f32 %v8459, %v8460
      %v8462 = vsel %vm7936, %v7331, -inf
      %v8463 = vmax.f32 %v8461, %v8462
      %v8464 = vrot.slane %v8463, 4
      %v8465 = vmax.f32 %v8463, %v8464
      %v8466 = vrot.slane %v8465, 2
      %v8467 = vmax.f32 %v8465, %v8466
      %v8468 = vrot.slane %v8467, 1
      %v8469 = vmax.f32 %v8467, %v8468
      %v8470 = vsel %vm7936, %v7332, -inf
      %v8471 = vsel %vm7936, %v7333, -inf
      %v8472 = vmax.f32 %v8470, %v8471
      %v8473 = vsel %vm7936, %v7334, -inf
      %v8474 = vmax.f32 %v8472, %v8473
      %v8475 = vsel %vm7936, %v7335, -inf
      %v8476 = vmax.f32 %v8474, %v8475
      %v8477 = vrot.slane %v8476, 4
      %v8478 = vmax.f32 %v8476, %v8477
      %v8479 = vrot.slane %v8478, 2
      %v8480 = vmax.f32 %v8478, %v8479
      %v8481 = vrot.slane %v8480, 1
      %v8482 = vmax.f32 %v8480, %v8481
      %v8483 = vsel %vm7936, %v7336, -inf
      %v8484 = vsel %vm7936, %v7337, -inf
      %v8485 = vmax.f32 %v8483, %v8484
      %v8486 = vsel %vm7936, %v7338, -inf
      %v8487 = vmax.f32 %v8485, %v8486
      %v8488 = vsel %vm7936, %v7339, -inf
      %v8489 = vmax.f32 %v8487, %v8488
      %v8490 = vrot.slane %v8489, 4
      %v8491 = vmax.f32 %v8489, %v8490
      %v8492 = vrot.slane %v8491, 2
      %v8493 = vmax.f32 %v8491, %v8492
      %v8494 = vrot.slane %v8493, 1
      %v8495 = vmax.f32 %v8493, %v8494
      %v8496 = vsel %vm7936, %v7340, -inf
      %v8497 = vsel %vm7936, %v7341, -inf
      %v8498 = vmax.f32 %v8496, %v8497
      %v8499 = vsel %vm7936, %v7342, -inf
      %v8500 = vmax.f32 %v8498, %v8499
      %v8501 = vsel %vm7936, %v7343, -inf
      %v8502 = vmax.f32 %v8500, %v8501
      %v8503 = vrot.slane %v8502, 4
      %v8504 = vmax.f32 %v8502, %v8503
      %v8505 = vrot.slane %v8504, 2
      %v8506 = vmax.f32 %v8504, %v8505
      %v8507 = vrot.slane %v8506, 1
      %v8508 = vmax.f32 %v8506, %v8507
      %v8509 = vsel %vm7936, %v7344, -inf
      %v8510 = vsel %vm7936, %v7345, -inf
      %v8511 = vmax.f32 %v8509, %v8510
      %v8512 = vsel %vm7936, %v7346, -inf
      %v8513 = vmax.f32 %v8511, %v8512
      %v8514 = vsel %vm7936, %v7347, -inf
      %v8515 = vmax.f32 %v8513, %v8514
      %v8516 = vrot.slane %v8515, 4
      %v8517 = vmax.f32 %v8515, %v8516
      %v8518 = vrot.slane %v8517, 2
      %v8519 = vmax.f32 %v8517, %v8518
      %v8520 = vrot.slane %v8519, 1
      %v8521 = vmax.f32 %v8519, %v8520
      %v8522 = vsel %vm7936, %v7348, -inf
      %v8523 = vsel %vm7936, %v7349, -inf
      %v8524 = vmax.f32 %v8522, %v8523
      %v8525 = vsel %vm7936, %v7350, -inf
      %v8526 = vmax.f32 %v8524, %v8525
      %v8527 = vsel %vm7936, %v7351, -inf
      %v8528 = vmax.f32 %v8526, %v8527
      %v8529 = vrot.slane %v8528, 4
      %v8530 = vmax.f32 %v8528, %v8529
      %v8531 = vrot.slane %v8530, 2
      %v8532 = vmax.f32 %v8530, %v8531
      %v8533 = vrot.slane %v8532, 1
      %v8534 = vmax.f32 %v8532, %v8533
      %v8535 = vsel %vm7936, %v7352, -inf
      %v8536 = vsel %vm7936, %v7353, -inf
      %v8537 = vmax.f32 %v8535, %v8536
      %v8538 = vsel %vm7936, %v7354, -inf
      %v8539 = vmax.f32 %v8537, %v8538
      %v8540 = vsel %vm7936, %v7355, -inf
      %v8541 = vmax.f32 %v8539, %v8540
      %v8542 = vrot.slane %v8541, 4
      %v8543 = vmax.f32 %v8541, %v8542
      %v8544 = vrot.slane %v8543, 2
      %v8545 = vmax.f32 %v8543, %v8544
      %v8546 = vrot.slane %v8545, 1
      %v8547 = vmax.f32 %v8545, %v8546
      %v8548 = vsel %vm7936, %v7356, -inf
      %v8549 = vsel %vm7936, %v7357, -inf
      %v8550 = vmax.f32 %v8548, %v8549
      %v8551 = vsel %vm7936, %v7358, -inf
      %v8552 = vmax.f32 %v8550, %v8551
      %v8553 = vsel %vm7936, %v7359, -inf
      %v8554 = vmax.f32 %v8552, %v8553
      %v8555 = vrot.slane %v8554, 4
      %v8556 = vmax.f32 %v8554, %v8555
      %v8557 = vrot.slane %v8556, 2
      %v8558 = vmax.f32 %v8556, %v8557
      %v8559 = vrot.slane %v8558, 1
      %v8560 = vmax.f32 %v8558, %v8559
      %v8561 = vsel %vm7936, %v7360, -inf
      %v8562 = vsel %vm7936, %v7361, -inf
      %v8563 = vmax.f32 %v8561, %v8562
      %v8564 = vsel %vm7936, %v7362, -inf
      %v8565 = vmax.f32 %v8563, %v8564
      %v8566 = vsel %vm7936, %v7363, -inf
      %v8567 = vmax.f32 %v8565, %v8566
      %v8568 = vrot.slane %v8567, 4
      %v8569 = vmax.f32 %v8567, %v8568
      %v8570 = vrot.slane %v8569, 2
      %v8571 = vmax.f32 %v8569, %v8570
      %v8572 = vrot.slane %v8571, 1
      %v8573 = vmax.f32 %v8571, %v8572
      %v8574 = vsel %vm7936, %v7364, -inf
      %v8575 = vsel %vm7936, %v7365, -inf
      %v8576 = vmax.f32 %v8574, %v8575
      %v8577 = vsel %vm7936, %v7366, -inf
      %v8578 = vmax.f32 %v8576, %v8577
      %v8579 = vsel %vm7936, %v7367, -inf
      %v8580 = vmax.f32 %v8578, %v8579
      %v8581 = vrot.slane %v8580, 4
      %v8582 = vmax.f32 %v8580, %v8581
      %v8583 = vrot.slane %v8582, 2
      %v8584 = vmax.f32 %v8582, %v8583
      %v8585 = vrot.slane %v8584, 1
      %v8586 = vmax.f32 %v8584, %v8585
      %v8587 = vsel %vm7936, %v7368, -inf
      %v8588 = vsel %vm7936, %v7369, -inf
      %v8589 = vmax.f32 %v8587, %v8588
      %v8590 = vsel %vm7936, %v7370, -inf
      %v8591 = vmax.f32 %v8589, %v8590
      %v8592 = vsel %vm7936, %v7371, -inf
      %v8593 = vmax.f32 %v8591, %v8592
      %v8594 = vrot.slane %v8593, 4
      %v8595 = vmax.f32 %v8593, %v8594
      %v8596 = vrot.slane %v8595, 2
      %v8597 = vmax.f32 %v8595, %v8596
      %v8598 = vrot.slane %v8597, 1
      %v8599 = vmax.f32 %v8597, %v8598
      %v8600 = vsel %vm7936, %v7372, -inf
      %v8601 = vsel %vm7936, %v7373, -inf
      %v8602 = vmax.f32 %v8600, %v8601
      %v8603 = vsel %vm7936, %v7374, -inf
      %v8604 = vmax.f32 %v8602, %v8603
      %v8605 = vsel %vm7936, %v7375, -inf
      %v8606 = vmax.f32 %v8604, %v8605
      %v8607 = vrot.slane %v8606, 4
      %v8608 = vmax.f32 %v8606, %v8607
      %v8609 = vrot.slane %v8608, 2
      %v8610 = vmax.f32 %v8608, %v8609
      %v8611 = vrot.slane %v8610, 1
      %v8612 = vmax.f32 %v8610, %v8611
      %v8613 = vsel %vm7936, %v7376, -inf
      %v8614 = vsel %vm7936, %v7377, -inf
      %v8615 = vmax.f32 %v8613, %v8614
      %v8616 = vsel %vm7936, %v7378, -inf
      %v8617 = vmax.f32 %v8615, %v8616
      %v8618 = vsel %vm7936, %v7379, -inf
      %v8619 = vmax.f32 %v8617, %v8618
      %v8620 = vrot.slane %v8619, 4
      %v8621 = vmax.f32 %v8619, %v8620
      %v8622 = vrot.slane %v8621, 2
      %v8623 = vmax.f32 %v8621, %v8622
      %v8624 = vrot.slane %v8623, 1
      %v8625 = vmax.f32 %v8623, %v8624
      %v8626 = vsel %vm7936, %v7380, -inf
      %v8627 = vsel %vm7936, %v7381, -inf
      %v8628 = vmax.f32 %v8626, %v8627
      %v8629 = vsel %vm7936, %v7382, -inf
      %v8630 = vmax.f32 %v8628, %v8629
      %v8631 = vsel %vm7936, %v7383, -inf
      %v8632 = vmax.f32 %v8630, %v8631
      %v8633 = vrot.slane %v8632, 4
      %v8634 = vmax.f32 %v8632, %v8633
      %v8635 = vrot.slane %v8634, 2
      %v8636 = vmax.f32 %v8634, %v8635
      %v8637 = vrot.slane %v8636, 1
      %v8638 = vmax.f32 %v8636, %v8637
      %v8639 = vsel %vm7936, %v7384, -inf
      %v8640 = vsel %vm7936, %v7385, -inf
      %v8641 = vmax.f32 %v8639, %v8640
      %v8642 = vsel %vm7936, %v7386, -inf
      %v8643 = vmax.f32 %v8641, %v8642
      %v8644 = vsel %vm7936, %v7387, -inf
      %v8645 = vmax.f32 %v8643, %v8644
      %v8646 = vrot.slane %v8645, 4
      %v8647 = vmax.f32 %v8645, %v8646
      %v8648 = vrot.slane %v8647, 2
      %v8649 = vmax.f32 %v8647, %v8648
      %v8650 = vrot.slane %v8649, 1
      %v8651 = vmax.f32 %v8649, %v8650
      %v8652 = vsel %vm7936, %v7388, -inf
      %v8653 = vsel %vm7936, %v7389, -inf
      %v8654 = vmax.f32 %v8652, %v8653
      %v8655 = vsel %vm7936, %v7390, -inf
      %v8656 = vmax.f32 %v8654, %v8655
      %v8657 = vsel %vm7936, %v7391, -inf
      %v8658 = vmax.f32 %v8656, %v8657
      %v8659 = vrot.slane %v8658, 4
      %v8660 = vmax.f32 %v8658, %v8659
      %v8661 = vrot.slane %v8660, 2
      %v8662 = vmax.f32 %v8660, %v8661
      %v8663 = vrot.slane %v8662, 1
      %v8664 = vmax.f32 %v8662, %v8663
      %v8665 = vsel %vm7936, %v7392, -inf
      %v8666 = vsel %vm7936, %v7393, -inf
      %v8667 = vmax.f32 %v8665, %v8666
      %v8668 = vsel %vm7936, %v7394, -inf
      %v8669 = vmax.f32 %v8667, %v8668
      %v8670 = vsel %vm7936, %v7395, -inf
      %v8671 = vmax.f32 %v8669, %v8670
      %v8672 = vrot.slane %v8671, 4
      %v8673 = vmax.f32 %v8671, %v8672
      %v8674 = vrot.slane %v8673, 2
      %v8675 = vmax.f32 %v8673, %v8674
      %v8676 = vrot.slane %v8675, 1
      %v8677 = vmax.f32 %v8675, %v8676
      %v8678 = vsel %vm7936, %v7396, -inf
      %v8679 = vsel %vm7936, %v7397, -inf
      %v8680 = vmax.f32 %v8678, %v8679
      %v8681 = vsel %vm7936, %v7398, -inf
      %v8682 = vmax.f32 %v8680, %v8681
      %v8683 = vsel %vm7936, %v7399, -inf
      %v8684 = vmax.f32 %v8682, %v8683
      %v8685 = vrot.slane %v8684, 4
      %v8686 = vmax.f32 %v8684, %v8685
      %v8687 = vrot.slane %v8686, 2
      %v8688 = vmax.f32 %v8686, %v8687
      %v8689 = vrot.slane %v8688, 1
      %v8690 = vmax.f32 %v8688, %v8689
      %v8691 = vsel %vm7936, %v7400, -inf
      %v8692 = vsel %vm7936, %v7401, -inf
      %v8693 = vmax.f32 %v8691, %v8692
      %v8694 = vsel %vm7936, %v7402, -inf
      %v8695 = vmax.f32 %v8693, %v8694
      %v8696 = vsel %vm7936, %v7403, -inf
      %v8697 = vmax.f32 %v8695, %v8696
      %v8698 = vrot.slane %v8697, 4
      %v8699 = vmax.f32 %v8697, %v8698
      %v8700 = vrot.slane %v8699, 2
      %v8701 = vmax.f32 %v8699, %v8700
      %v8702 = vrot.slane %v8701, 1
      %v8703 = vmax.f32 %v8701, %v8702
      %v8704 = vsel %vm7936, %v7404, -inf
      %v8705 = vsel %vm7936, %v7405, -inf
      %v8706 = vmax.f32 %v8704, %v8705
      %v8707 = vsel %vm7936, %v7406, -inf
      %v8708 = vmax.f32 %v8706, %v8707
      %v8709 = vsel %vm7936, %v7407, -inf
      %v8710 = vmax.f32 %v8708, %v8709
      %v8711 = vrot.slane %v8710, 4
      %v8712 = vmax.f32 %v8710, %v8711
      %v8713 = vrot.slane %v8712, 2
      %v8714 = vmax.f32 %v8712, %v8713
      %v8715 = vrot.slane %v8714, 1
      %v8716 = vmax.f32 %v8714, %v8715
      %v8717 = vsel %vm7936, %v7408, -inf
      %v8718 = vsel %vm7936, %v7409, -inf
      %v8719 = vmax.f32 %v8717, %v8718
      %v8720 = vsel %vm7936, %v7410, -inf
      %v8721 = vmax.f32 %v8719, %v8720
      %v8722 = vsel %vm7936, %v7411, -inf
      %v8723 = vmax.f32 %v8721, %v8722
      %v8724 = vrot.slane %v8723, 4
      %v8725 = vmax.f32 %v8723, %v8724
      %v8726 = vrot.slane %v8725, 2
      %v8727 = vmax.f32 %v8725, %v8726
      %v8728 = vrot.slane %v8727, 1
      %v8729 = vmax.f32 %v8727, %v8728
      %v8730 = vsel %vm7936, %v7412, -inf
      %v8731 = vsel %vm7936, %v7413, -inf
      %v8732 = vmax.f32 %v8730, %v8731
      %v8733 = vsel %vm7936, %v7414, -inf
      %v8734 = vmax.f32 %v8732, %v8733
      %v8735 = vsel %vm7936, %v7415, -inf
      %v8736 = vmax.f32 %v8734, %v8735
      %v8737 = vrot.slane %v8736, 4
      %v8738 = vmax.f32 %v8736, %v8737
      %v8739 = vrot.slane %v8738, 2
      %v8740 = vmax.f32 %v8738, %v8739
      %v8741 = vrot.slane %v8740, 1
      %v8742 = vmax.f32 %v8740, %v8741
      %v8743 = vsel %vm7936, %v7416, -inf
      %v8744 = vsel %vm7936, %v7417, -inf
      %v8745 = vmax.f32 %v8743, %v8744
      %v8746 = vsel %vm7936, %v7418, -inf
      %v8747 = vmax.f32 %v8745, %v8746
      %v8748 = vsel %vm7936, %v7419, -inf
      %v8749 = vmax.f32 %v8747, %v8748
      %v8750 = vrot.slane %v8749, 4
      %v8751 = vmax.f32 %v8749, %v8750
      %v8752 = vrot.slane %v8751, 2
      %v8753 = vmax.f32 %v8751, %v8752
      %v8754 = vrot.slane %v8753, 1
      %v8755 = vmax.f32 %v8753, %v8754
      %v8756 = vsel %vm7936, %v7420, -inf
      %v8757 = vsel %vm7936, %v7421, -inf
      %v8758 = vmax.f32 %v8756, %v8757
      %v8759 = vsel %vm7936, %v7422, -inf
      %v8760 = vmax.f32 %v8758, %v8759
      %v8761 = vsel %vm7936, %v7423, -inf
      %v8762 = vmax.f32 %v8760, %v8761
      %v8763 = vrot.slane %v8762, 4
      %v8764 = vmax.f32 %v8762, %v8763
      %v8765 = vrot.slane %v8764, 2
      %v8766 = vmax.f32 %v8764, %v8765
      %v8767 = vrot.slane %v8766, 1
      %v8768 = vmax.f32 %v8766, %v8767
      %v8769 = vsel %vm7936, %v7424, -inf
      %v8770 = vsel %vm7936, %v7425, -inf
      %v8771 = vmax.f32 %v8769, %v8770
      %v8772 = vsel %vm7936, %v7426, -inf
      %v8773 = vmax.f32 %v8771, %v8772
      %v8774 = vsel %vm7936, %v7427, -inf
      %v8775 = vmax.f32 %v8773, %v8774
      %v8776 = vrot.slane %v8775, 4
      %v8777 = vmax.f32 %v8775, %v8776
      %v8778 = vrot.slane %v8777, 2
      %v8779 = vmax.f32 %v8777, %v8778
      %v8780 = vrot.slane %v8779, 1
      %v8781 = vmax.f32 %v8779, %v8780
      %v8782 = vsel %vm7936, %v7428, -inf
      %v8783 = vsel %vm7936, %v7429, -inf
      %v8784 = vmax.f32 %v8782, %v8783
      %v8785 = vsel %vm7936, %v7430, -inf
      %v8786 = vmax.f32 %v8784, %v8785
      %v8787 = vsel %vm7936, %v7431, -inf
      %v8788 = vmax.f32 %v8786, %v8787
      %v8789 = vrot.slane %v8788, 4
      %v8790 = vmax.f32 %v8788, %v8789
      %v8791 = vrot.slane %v8790, 2
      %v8792 = vmax.f32 %v8790, %v8791
      %v8793 = vrot.slane %v8792, 1
      %v8794 = vmax.f32 %v8792, %v8793
      %v8795 = vsel %vm7936, %v7432, -inf
      %v8796 = vsel %vm7936, %v7433, -inf
      %v8797 = vmax.f32 %v8795, %v8796
      %v8798 = vsel %vm7936, %v7434, -inf
      %v8799 = vmax.f32 %v8797, %v8798
      %v8800 = vsel %vm7936, %v7435, -inf
      %v8801 = vmax.f32 %v8799, %v8800
      %v8802 = vrot.slane %v8801, 4
      %v8803 = vmax.f32 %v8801, %v8802
      %v8804 = vrot.slane %v8803, 2
      %v8805 = vmax.f32 %v8803, %v8804
      %v8806 = vrot.slane %v8805, 1
      %v8807 = vmax.f32 %v8805, %v8806
      %v8808 = vsel %vm7936, %v7436, -inf
      %v8809 = vsel %vm7936, %v7437, -inf
      %v8810 = vmax.f32 %v8808, %v8809
      %v8811 = vsel %vm7936, %v7438, -inf
      %v8812 = vmax.f32 %v8810, %v8811
      %v8813 = vsel %vm7936, %v7439, -inf
      %v8814 = vmax.f32 %v8812, %v8813
      %v8815 = vrot.slane %v8814, 4
      %v8816 = vmax.f32 %v8814, %v8815
      %v8817 = vrot.slane %v8816, 2
      %v8818 = vmax.f32 %v8816, %v8817
      %v8819 = vrot.slane %v8818, 1
      %v8820 = vmax.f32 %v8818, %v8819
      %v8821 = vsel %vm7936, %v7440, -inf
      %v8822 = vsel %vm7936, %v7441, -inf
      %v8823 = vmax.f32 %v8821, %v8822
      %v8824 = vsel %vm7936, %v7442, -inf
      %v8825 = vmax.f32 %v8823, %v8824
      %v8826 = vsel %vm7936, %v7443, -inf
      %v8827 = vmax.f32 %v8825, %v8826
      %v8828 = vrot.slane %v8827, 4
      %v8829 = vmax.f32 %v8827, %v8828
      %v8830 = vrot.slane %v8829, 2
      %v8831 = vmax.f32 %v8829, %v8830
      %v8832 = vrot.slane %v8831, 1
      %v8833 = vmax.f32 %v8831, %v8832
      %v8834 = vsel %vm7936, %v7444, -inf
      %v8835 = vsel %vm7936, %v7445, -inf
      %v8836 = vmax.f32 %v8834, %v8835
      %v8837 = vsel %vm7936, %v7446, -inf
      %v8838 = vmax.f32 %v8836, %v8837
      %v8839 = vsel %vm7936, %v7447, -inf
      %v8840 = vmax.f32 %v8838, %v8839
      %v8841 = vrot.slane %v8840, 4
      %v8842 = vmax.f32 %v8840, %v8841
      %v8843 = vrot.slane %v8842, 2
      %v8844 = vmax.f32 %v8842, %v8843
      %v8845 = vrot.slane %v8844, 1
      %v8846 = vmax.f32 %v8844, %v8845
      %v8847 = vsel %vm7936, %v7448, -inf
      %v8848 = vsel %vm7936, %v7449, -inf
      %v8849 = vmax.f32 %v8847, %v8848
      %v8850 = vsel %vm7936, %v7450, -inf
      %v8851 = vmax.f32 %v8849, %v8850
      %v8852 = vsel %vm7936, %v7451, -inf
      %v8853 = vmax.f32 %v8851, %v8852
      %v8854 = vrot.slane %v8853, 4
      %v8855 = vmax.f32 %v8853, %v8854
      %v8856 = vrot.slane %v8855, 2
      %v8857 = vmax.f32 %v8855, %v8856
      %v8858 = vrot.slane %v8857, 1
      %v8859 = vmax.f32 %v8857, %v8858
      %v8860 = vsel %vm7936, %v7452, -inf
      %v8861 = vsel %vm7936, %v7453, -inf
      %v8862 = vmax.f32 %v8860, %v8861
      %v8863 = vsel %vm7936, %v7454, -inf
      %v8864 = vmax.f32 %v8862, %v8863
      %v8865 = vsel %vm7936, %v7455, -inf
      %v8866 = vmax.f32 %v8864, %v8865
      %v8867 = vrot.slane %v8866, 4
      %v8868 = vmax.f32 %v8866, %v8867
      %v8869 = vrot.slane %v8868, 2
      %v8870 = vmax.f32 %v8868, %v8869
      %v8871 = vrot.slane %v8870, 1
      %v8872 = vmax.f32 %v8870, %v8871
      %v8873 = vsel %vm7936, %v7456, -inf
      %v8874 = vsel %vm7936, %v7457, -inf
      %v8875 = vmax.f32 %v8873, %v8874
      %v8876 = vsel %vm7936, %v7458, -inf
      %v8877 = vmax.f32 %v8875, %v8876
      %v8878 = vsel %vm7936, %v7459, -inf
      %v8879 = vmax.f32 %v8877, %v8878
      %v8880 = vrot.slane %v8879, 4
      %v8881 = vmax.f32 %v8879, %v8880
      %v8882 = vrot.slane %v8881, 2
      %v8883 = vmax.f32 %v8881, %v8882
      %v8884 = vrot.slane %v8883, 1
      %v8885 = vmax.f32 %v8883, %v8884
      %v8886 = vsel %vm7936, %v7460, -inf
      %v8887 = vsel %vm7936, %v7461, -inf
      %v8888 = vmax.f32 %v8886, %v8887
      %v8889 = vsel %vm7936, %v7462, -inf
      %v8890 = vmax.f32 %v8888, %v8889
      %v8891 = vsel %vm7936, %v7463, -inf
      %v8892 = vmax.f32 %v8890, %v8891
      %v8893 = vrot.slane %v8892, 4
      %v8894 = vmax.f32 %v8892, %v8893
      %v8895 = vrot.slane %v8894, 2
      %v8896 = vmax.f32 %v8894, %v8895
      %v8897 = vrot.slane %v8896, 1
      %v8898 = vmax.f32 %v8896, %v8897
      %v8899 = vsel %vm7936, %v7464, -inf
      %v8900 = vsel %vm7936, %v7465, -inf
      %v8901 = vmax.f32 %v8899, %v8900
      %v8902 = vsel %vm7936, %v7466, -inf
      %v8903 = vmax.f32 %v8901, %v8902
      %v8904 = vsel %vm7936, %v7467, -inf
      %v8905 = vmax.f32 %v8903, %v8904
      %v8906 = vrot.slane %v8905, 4
      %v8907 = vmax.f32 %v8905, %v8906
      %v8908 = vrot.slane %v8907, 2
      %v8909 = vmax.f32 %v8907, %v8908
      %v8910 = vrot.slane %v8909, 1
      %v8911 = vmax.f32 %v8909, %v8910
      %v8912 = vsel %vm7936, %v7468, -inf
      %v8913 = vsel %vm7936, %v7469, -inf
      %v8914 = vmax.f32 %v8912, %v8913
      %v8915 = vsel %vm7936, %v7470, -inf
      %v8916 = vmax.f32 %v8914, %v8915
      %v8917 = vsel %vm7936, %v7471, -inf
      %v8918 = vmax.f32 %v8916, %v8917
      %v8919 = vrot.slane %v8918, 4
      %v8920 = vmax.f32 %v8918, %v8919
      %v8921 = vrot.slane %v8920, 2
      %v8922 = vmax.f32 %v8920, %v8921
      %v8923 = vrot.slane %v8922, 1
      %v8924 = vmax.f32 %v8922, %v8923
      %v8925 = vsel %vm7936, %v7472, -inf
      %v8926 = vsel %vm7936, %v7473, -inf
      %v8927 = vmax.f32 %v8925, %v8926
      %v8928 = vsel %vm7936, %v7474, -inf
      %v8929 = vmax.f32 %v8927, %v8928
      %v8930 = vsel %vm7936, %v7475, -inf
      %v8931 = vmax.f32 %v8929, %v8930
      %v8932 = vrot.slane %v8931, 4
      %v8933 = vmax.f32 %v8931, %v8932
      %v8934 = vrot.slane %v8933, 2
      %v8935 = vmax.f32 %v8933, %v8934
      %v8936 = vrot.slane %v8935, 1
      %v8937 = vmax.f32 %v8935, %v8936
      %v8938 = vsel %vm7936, %v7476, -inf
      %v8939 = vsel %vm7936, %v7477, -inf
      %v8940 = vmax.f32 %v8938, %v8939
      %v8941 = vsel %vm7936, %v7478, -inf
      %v8942 = vmax.f32 %v8940, %v8941
      %v8943 = vsel %vm7936, %v7479, -inf
      %v8944 = vmax.f32 %v8942, %v8943
      %v8945 = vrot.slane %v8944, 4
      %v8946 = vmax.f32 %v8944, %v8945
      %v8947 = vrot.slane %v8946, 2
      %v8948 = vmax.f32 %v8946, %v8947
      %v8949 = vrot.slane %v8948, 1
      %v8950 = vmax.f32 %v8948, %v8949
      %v8951 = vsel %vm7936, %v7480, -inf
      %v8952 = vsel %vm7936, %v7481, -inf
      %v8953 = vmax.f32 %v8951, %v8952
      %v8954 = vsel %vm7936, %v7482, -inf
      %v8955 = vmax.f32 %v8953, %v8954
      %v8956 = vsel %vm7936, %v7483, -inf
      %v8957 = vmax.f32 %v8955, %v8956
      %v8958 = vrot.slane %v8957, 4
      %v8959 = vmax.f32 %v8957, %v8958
      %v8960 = vrot.slane %v8959, 2
      %v8961 = vmax.f32 %v8959, %v8960
      %v8962 = vrot.slane %v8961, 1
      %v8963 = vmax.f32 %v8961, %v8962
      %v8964 = vsel %vm7936, %v7484, -inf
      %v8965 = vsel %vm7936, %v7485, -inf
      %v8966 = vmax.f32 %v8964, %v8965
      %v8967 = vsel %vm7936, %v7486, -inf
      %v8968 = vmax.f32 %v8966, %v8967
      %v8969 = vsel %vm7936, %v7487, -inf
      %v8970 = vmax.f32 %v8968, %v8969
      %v8971 = vrot.slane %v8970, 4
      %v8972 = vmax.f32 %v8970, %v8971
      %v8973 = vrot.slane %v8972, 2
      %v8974 = vmax.f32 %v8972, %v8973
      %v8975 = vrot.slane %v8974, 1
      %v8976 = vmax.f32 %v8974, %v8975
      %v8977 = vsel %vm7936, %v7488, -inf
      %v8978 = vsel %vm7936, %v7489, -inf
      %v8979 = vmax.f32 %v8977, %v8978
      %v8980 = vsel %vm7936, %v7490, -inf
      %v8981 = vmax.f32 %v8979, %v8980
      %v8982 = vsel %vm7936, %v7491, -inf
      %v8983 = vmax.f32 %v8981, %v8982
      %v8984 = vrot.slane %v8983, 4
      %v8985 = vmax.f32 %v8983, %v8984
      %v8986 = vrot.slane %v8985, 2
      %v8987 = vmax.f32 %v8985, %v8986
      %v8988 = vrot.slane %v8987, 1
      %v8989 = vmax.f32 %v8987, %v8988
      %v8990 = vsel %vm7936, %v7492, -inf
      %v8991 = vsel %vm7936, %v7493, -inf
      %v8992 = vmax.f32 %v8990, %v8991
      %v8993 = vsel %vm7936, %v7494, -inf
      %v8994 = vmax.f32 %v8992, %v8993
      %v8995 = vsel %vm7936, %v7495, -inf
      %v8996 = vmax.f32 %v8994, %v8995
      %v8997 = vrot.slane %v8996, 4
      %v8998 = vmax.f32 %v8996, %v8997
      %v8999 = vrot.slane %v8998, 2
      %v9000 = vmax.f32 %v8998, %v8999
      %v9001 = vrot.slane %v9000, 1
      %v9002 = vmax.f32 %v9000, %v9001
      %v9003 = vsel %vm7936, %v7496, -inf
      %v9004 = vsel %vm7936, %v7497, -inf
      %v9005 = vmax.f32 %v9003, %v9004
      %v9006 = vsel %vm7936, %v7498, -inf
      %v9007 = vmax.f32 %v9005, %v9006
      %v9008 = vsel %vm7936, %v7499, -inf
      %v9009 = vmax.f32 %v9007, %v9008
      %v9010 = vrot.slane %v9009, 4
      %v9011 = vmax.f32 %v9009, %v9010
      %v9012 = vrot.slane %v9011, 2
      %v9013 = vmax.f32 %v9011, %v9012
      %v9014 = vrot.slane %v9013, 1
      %v9015 = vmax.f32 %v9013, %v9014
      %v9016 = vsel %vm7936, %v7500, -inf
      %v9017 = vsel %vm7936, %v7501, -inf
      %v9018 = vmax.f32 %v9016, %v9017
      %v9019 = vsel %vm7936, %v7502, -inf
      %v9020 = vmax.f32 %v9018, %v9019
      %v9021 = vsel %vm7936, %v7503, -inf
      %v9022 = vmax.f32 %v9020, %v9021
      %v9023 = vrot.slane %v9022, 4
      %v9024 = vmax.f32 %v9022, %v9023
      %v9025 = vrot.slane %v9024, 2
      %v9026 = vmax.f32 %v9024, %v9025
      %v9027 = vrot.slane %v9026, 1
      %v9028 = vmax.f32 %v9026, %v9027
      %v9029 = vsel %vm7936, %v7504, -inf
      %v9030 = vsel %vm7936, %v7505, -inf
      %v9031 = vmax.f32 %v9029, %v9030
      %v9032 = vsel %vm7936, %v7506, -inf
      %v9033 = vmax.f32 %v9031, %v9032
      %v9034 = vsel %vm7936, %v7507, -inf
      %v9035 = vmax.f32 %v9033, %v9034
      %v9036 = vrot.slane %v9035, 4
      %v9037 = vmax.f32 %v9035, %v9036
      %v9038 = vrot.slane %v9037, 2
      %v9039 = vmax.f32 %v9037, %v9038
      %v9040 = vrot.slane %v9039, 1
      %v9041 = vmax.f32 %v9039, %v9040
      %v9042 = vsel %vm7936, %v7508, -inf
      %v9043 = vsel %vm7936, %v7509, -inf
      %v9044 = vmax.f32 %v9042, %v9043
      %v9045 = vsel %vm7936, %v7510, -inf
      %v9046 = vmax.f32 %v9044, %v9045
      %v9047 = vsel %vm7936, %v7511, -inf
      %v9048 = vmax.f32 %v9046, %v9047
      %v9049 = vrot.slane %v9048, 4
      %v9050 = vmax.f32 %v9048, %v9049
      %v9051 = vrot.slane %v9050, 2
      %v9052 = vmax.f32 %v9050, %v9051
      %v9053 = vrot.slane %v9052, 1
      %v9054 = vmax.f32 %v9052, %v9053
      %v9055 = vsel %vm7936, %v7512, -inf
      %v9056 = vsel %vm7936, %v7513, -inf
      %v9057 = vmax.f32 %v9055, %v9056
      %v9058 = vsel %vm7936, %v7514, -inf
      %v9059 = vmax.f32 %v9057, %v9058
      %v9060 = vsel %vm7936, %v7515, -inf
      %v9061 = vmax.f32 %v9059, %v9060
      %v9062 = vrot.slane %v9061, 4
      %v9063 = vmax.f32 %v9061, %v9062
      %v9064 = vrot.slane %v9063, 2
      %v9065 = vmax.f32 %v9063, %v9064
      %v9066 = vrot.slane %v9065, 1
      %v9067 = vmax.f32 %v9065, %v9066
      %v9068 = vsel %vm7936, %v7516, -inf
      %v9069 = vsel %vm7936, %v7517, -inf
      %v9070 = vmax.f32 %v9068, %v9069
      %v9071 = vsel %vm7936, %v7518, -inf
      %v9072 = vmax.f32 %v9070, %v9071
      %v9073 = vsel %vm7936, %v7519, -inf
      %v9074 = vmax.f32 %v9072, %v9073
      %v9075 = vrot.slane %v9074, 4
      %v9076 = vmax.f32 %v9074, %v9075
      %v9077 = vrot.slane %v9076, 2
      %v9078 = vmax.f32 %v9076, %v9077
      %v9079 = vrot.slane %v9078, 1
      %v9080 = vmax.f32 %v9078, %v9079
      %v9081 = vsel %vm7936, %v7520, -inf
      %v9082 = vsel %vm7936, %v7521, -inf
      %v9083 = vmax.f32 %v9081, %v9082
      %v9084 = vsel %vm7936, %v7522, -inf
      %v9085 = vmax.f32 %v9083, %v9084
      %v9086 = vsel %vm7936, %v7523, -inf
      %v9087 = vmax.f32 %v9085, %v9086
      %v9088 = vrot.slane %v9087, 4
      %v9089 = vmax.f32 %v9087, %v9088
      %v9090 = vrot.slane %v9089, 2
      %v9091 = vmax.f32 %v9089, %v9090
      %v9092 = vrot.slane %v9091, 1
      %v9093 = vmax.f32 %v9091, %v9092
      %v9094 = vsel %vm7936, %v7524, -inf
      %v9095 = vsel %vm7936, %v7525, -inf
      %v9096 = vmax.f32 %v9094, %v9095
      %v9097 = vsel %vm7936, %v7526, -inf
      %v9098 = vmax.f32 %v9096, %v9097
      %v9099 = vsel %vm7936, %v7527, -inf
      %v9100 = vmax.f32 %v9098, %v9099
      %v9101 = vrot.slane %v9100, 4
      %v9102 = vmax.f32 %v9100, %v9101
      %v9103 = vrot.slane %v9102, 2
      %v9104 = vmax.f32 %v9102, %v9103
      %v9105 = vrot.slane %v9104, 1
      %v9106 = vmax.f32 %v9104, %v9105
      %v9107 = vsel %vm7936, %v7528, -inf
      %v9108 = vsel %vm7936, %v7529, -inf
      %v9109 = vmax.f32 %v9107, %v9108
      %v9110 = vsel %vm7936, %v7530, -inf
      %v9111 = vmax.f32 %v9109, %v9110
      %v9112 = vsel %vm7936, %v7531, -inf
      %v9113 = vmax.f32 %v9111, %v9112
      %v9114 = vrot.slane %v9113, 4
      %v9115 = vmax.f32 %v9113, %v9114
      %v9116 = vrot.slane %v9115, 2
      %v9117 = vmax.f32 %v9115, %v9116
      %v9118 = vrot.slane %v9117, 1
      %v9119 = vmax.f32 %v9117, %v9118
      %v9120 = vsel %vm7936, %v7532, -inf
      %v9121 = vsel %vm7936, %v7533, -inf
      %v9122 = vmax.f32 %v9120, %v9121
      %v9123 = vsel %vm7936, %v7534, -inf
      %v9124 = vmax.f32 %v9122, %v9123
      %v9125 = vsel %vm7936, %v7535, -inf
      %v9126 = vmax.f32 %v9124, %v9125
      %v9127 = vrot.slane %v9126, 4
      %v9128 = vmax.f32 %v9126, %v9127
      %v9129 = vrot.slane %v9128, 2
      %v9130 = vmax.f32 %v9128, %v9129
      %v9131 = vrot.slane %v9130, 1
      %v9132 = vmax.f32 %v9130, %v9131
      %v9133 = vsel %vm7936, %v7536, -inf
      %v9134 = vsel %vm7936, %v7537, -inf
      %v9135 = vmax.f32 %v9133, %v9134
      %v9136 = vsel %vm7936, %v7538, -inf
      %v9137 = vmax.f32 %v9135, %v9136
      %v9138 = vsel %vm7936, %v7539, -inf
      %v9139 = vmax.f32 %v9137, %v9138
      %v9140 = vrot.slane %v9139, 4
      %v9141 = vmax.f32 %v9139, %v9140
      %v9142 = vrot.slane %v9141, 2
      %v9143 = vmax.f32 %v9141, %v9142
      %v9144 = vrot.slane %v9143, 1
      %v9145 = vmax.f32 %v9143, %v9144
      %v9146 = vsel %vm7936, %v7540, -inf
      %v9147 = vsel %vm7936, %v7541, -inf
      %v9148 = vmax.f32 %v9146, %v9147
      %v9149 = vsel %vm7936, %v7542, -inf
      %v9150 = vmax.f32 %v9148, %v9149
      %v9151 = vsel %vm7936, %v7543, -inf
      %v9152 = vmax.f32 %v9150, %v9151
      %v9153 = vrot.slane %v9152, 4
      %v9154 = vmax.f32 %v9152, %v9153
      %v9155 = vrot.slane %v9154, 2
      %v9156 = vmax.f32 %v9154, %v9155
      %v9157 = vrot.slane %v9156, 1
      %v9158 = vmax.f32 %v9156, %v9157
      %v9159 = vsel %vm7936, %v7544, -inf
      %v9160 = vsel %vm7936, %v7545, -inf
      %v9161 = vmax.f32 %v9159, %v9160
      %v9162 = vsel %vm7936, %v7546, -inf
      %v9163 = vmax.f32 %v9161, %v9162
      %v9164 = vsel %vm7936, %v7547, -inf
      %v9165 = vmax.f32 %v9163, %v9164
      %v9166 = vrot.slane %v9165, 4
      %v9167 = vmax.f32 %v9165, %v9166
      %v9168 = vrot.slane %v9167, 2
      %v9169 = vmax.f32 %v9167, %v9168
      %v9170 = vrot.slane %v9169, 1
      %v9171 = vmax.f32 %v9169, %v9170
      %v9172 = vsel %vm7936, %v7548, -inf
      %v9173 = vsel %vm7936, %v7549, -inf
      %v9174 = vmax.f32 %v9172, %v9173
      %v9175 = vsel %vm7936, %v7550, -inf
      %v9176 = vmax.f32 %v9174, %v9175
      %v9177 = vsel %vm7936, %v7551, -inf
      %v9178 = vmax.f32 %v9176, %v9177
      %v9179 = vrot.slane %v9178, 4
      %v9180 = vmax.f32 %v9178, %v9179
      %v9181 = vrot.slane %v9180, 2
      %v9182 = vmax.f32 %v9180, %v9181
      %v9183 = vrot.slane %v9182, 1
      %v9184 = vmax.f32 %v9182, %v9183
      %v9185 = vsel %vm7936, %v7552, -inf
      %v9186 = vsel %vm7936, %v7553, -inf
      %v9187 = vmax.f32 %v9185, %v9186
      %v9188 = vsel %vm7936, %v7554, -inf
      %v9189 = vmax.f32 %v9187, %v9188
      %v9190 = vsel %vm7936, %v7555, -inf
      %v9191 = vmax.f32 %v9189, %v9190
      %v9192 = vrot.slane %v9191, 4
      %v9193 = vmax.f32 %v9191, %v9192
      %v9194 = vrot.slane %v9193, 2
      %v9195 = vmax.f32 %v9193, %v9194
      %v9196 = vrot.slane %v9195, 1
      %v9197 = vmax.f32 %v9195, %v9196
      %v9198 = vsel %vm7936, %v7556, -inf
      %v9199 = vsel %vm7936, %v7557, -inf
      %v9200 = vmax.f32 %v9198, %v9199
      %v9201 = vsel %vm7936, %v7558, -inf
      %v9202 = vmax.f32 %v9200, %v9201
      %v9203 = vsel %vm7936, %v7559, -inf
      %v9204 = vmax.f32 %v9202, %v9203
      %v9205 = vrot.slane %v9204, 4
      %v9206 = vmax.f32 %v9204, %v9205
      %v9207 = vrot.slane %v9206, 2
      %v9208 = vmax.f32 %v9206, %v9207
      %v9209 = vrot.slane %v9208, 1
      %v9210 = vmax.f32 %v9208, %v9209
      %v9211 = vsel %vm7936, %v7560, -inf
      %v9212 = vsel %vm7936, %v7561, -inf
      %v9213 = vmax.f32 %v9211, %v9212
      %v9214 = vsel %vm7936, %v7562, -inf
      %v9215 = vmax.f32 %v9213, %v9214
      %v9216 = vsel %vm7936, %v7563, -inf
      %v9217 = vmax.f32 %v9215, %v9216
      %v9218 = vrot.slane %v9217, 4
      %v9219 = vmax.f32 %v9217, %v9218
      %v9220 = vrot.slane %v9219, 2
      %v9221 = vmax.f32 %v9219, %v9220
      %v9222 = vrot.slane %v9221, 1
      %v9223 = vmax.f32 %v9221, %v9222
      %v9224 = vsel %vm7936, %v7564, -inf
      %v9225 = vsel %vm7936, %v7565, -inf
      %v9226 = vmax.f32 %v9224, %v9225
      %v9227 = vsel %vm7936, %v7566, -inf
      %v9228 = vmax.f32 %v9226, %v9227
      %v9229 = vsel %vm7936, %v7567, -inf
      %v9230 = vmax.f32 %v9228, %v9229
      %v9231 = vrot.slane %v9230, 4
      %v9232 = vmax.f32 %v9230, %v9231
      %v9233 = vrot.slane %v9232, 2
      %v9234 = vmax.f32 %v9232, %v9233
      %v9235 = vrot.slane %v9234, 1
      %v9236 = vmax.f32 %v9234, %v9235
      %v9237 = vsel %vm7936, %v7568, -inf
      %v9238 = vsel %vm7936, %v7569, -inf
      %v9239 = vmax.f32 %v9237, %v9238
      %v9240 = vsel %vm7936, %v7570, -inf
      %v9241 = vmax.f32 %v9239, %v9240
      %v9242 = vsel %vm7936, %v7571, -inf
      %v9243 = vmax.f32 %v9241, %v9242
      %v9244 = vrot.slane %v9243, 4
      %v9245 = vmax.f32 %v9243, %v9244
      %v9246 = vrot.slane %v9245, 2
      %v9247 = vmax.f32 %v9245, %v9246
      %v9248 = vrot.slane %v9247, 1
      %v9249 = vmax.f32 %v9247, %v9248
      %v9250 = vsel %vm7936, %v7572, -inf
      %v9251 = vsel %vm7936, %v7573, -inf
      %v9252 = vmax.f32 %v9250, %v9251
      %v9253 = vsel %vm7936, %v7574, -inf
      %v9254 = vmax.f32 %v9252, %v9253
      %v9255 = vsel %vm7936, %v7575, -inf
      %v9256 = vmax.f32 %v9254, %v9255
      %v9257 = vrot.slane %v9256, 4
      %v9258 = vmax.f32 %v9256, %v9257
      %v9259 = vrot.slane %v9258, 2
      %v9260 = vmax.f32 %v9258, %v9259
      %v9261 = vrot.slane %v9260, 1
      %v9262 = vmax.f32 %v9260, %v9261
      %v9263 = vsel %vm7936, %v7576, -inf
      %v9264 = vsel %vm7936, %v7577, -inf
      %v9265 = vmax.f32 %v9263, %v9264
      %v9266 = vsel %vm7936, %v7578, -inf
      %v9267 = vmax.f32 %v9265, %v9266
      %v9268 = vsel %vm7936, %v7579, -inf
      %v9269 = vmax.f32 %v9267, %v9268
      %v9270 = vrot.slane %v9269, 4
      %v9271 = vmax.f32 %v9269, %v9270
      %v9272 = vrot.slane %v9271, 2
      %v9273 = vmax.f32 %v9271, %v9272
      %v9274 = vrot.slane %v9273, 1
      %v9275 = vmax.f32 %v9273, %v9274
      %v9276 = vsel %vm7936, %v7580, -inf
      %v9277 = vsel %vm7936, %v7581, -inf
      %v9278 = vmax.f32 %v9276, %v9277
      %v9279 = vsel %vm7936, %v7582, -inf
      %v9280 = vmax.f32 %v9278, %v9279
      %v9281 = vsel %vm7936, %v7583, -inf
      %v9282 = vmax.f32 %v9280, %v9281
      %v9283 = vrot.slane %v9282, 4
      %v9284 = vmax.f32 %v9282, %v9283
      %v9285 = vrot.slane %v9284, 2
      %v9286 = vmax.f32 %v9284, %v9285
      %v9287 = vrot.slane %v9286, 1
      %v9288 = vmax.f32 %v9286, %v9287
      %v9289 = vsel %vm7936, %v7584, -inf
      %v9290 = vsel %vm7936, %v7585, -inf
      %v9291 = vmax.f32 %v9289, %v9290
      %v9292 = vsel %vm7936, %v7586, -inf
      %v9293 = vmax.f32 %v9291, %v9292
      %v9294 = vsel %vm7936, %v7587, -inf
      %v9295 = vmax.f32 %v9293, %v9294
      %v9296 = vrot.slane %v9295, 4
      %v9297 = vmax.f32 %v9295, %v9296
      %v9298 = vrot.slane %v9297, 2
      %v9299 = vmax.f32 %v9297, %v9298
      %v9300 = vrot.slane %v9299, 1
      %v9301 = vmax.f32 %v9299, %v9300
      %v9302 = vsel %vm7936, %v7588, -inf
      %v9303 = vsel %vm7936, %v7589, -inf
      %v9304 = vmax.f32 %v9302, %v9303
      %v9305 = vsel %vm7936, %v7590, -inf
      %v9306 = vmax.f32 %v9304, %v9305
      %v9307 = vsel %vm7936, %v7591, -inf
      %v9308 = vmax.f32 %v9306, %v9307
      %v9309 = vrot.slane %v9308, 4
      %v9310 = vmax.f32 %v9308, %v9309
      %v9311 = vrot.slane %v9310, 2
      %v9312 = vmax.f32 %v9310, %v9311
      %v9313 = vrot.slane %v9312, 1
      %v9314 = vmax.f32 %v9312, %v9313
      %v9315 = vsel %vm7936, %v7592, -inf
      %v9316 = vsel %vm7936, %v7593, -inf
      %v9317 = vmax.f32 %v9315, %v9316
      %v9318 = vsel %vm7936, %v7594, -inf
      %v9319 = vmax.f32 %v9317, %v9318
      %v9320 = vsel %vm7936, %v7595, -inf
      %v9321 = vmax.f32 %v9319, %v9320
      %v9322 = vrot.slane %v9321, 4
      %v9323 = vmax.f32 %v9321, %v9322
      %v9324 = vrot.slane %v9323, 2
      %v9325 = vmax.f32 %v9323, %v9324
      %v9326 = vrot.slane %v9325, 1
      %v9327 = vmax.f32 %v9325, %v9326
      %v9328 = vsel %vm7936, %v7596, -inf
      %v9329 = vsel %vm7936, %v7597, -inf
      %v9330 = vmax.f32 %v9328, %v9329
      %v9331 = vsel %vm7936, %v7598, -inf
      %v9332 = vmax.f32 %v9330, %v9331
      %v9333 = vsel %vm7936, %v7599, -inf
      %v9334 = vmax.f32 %v9332, %v9333
      %v9335 = vrot.slane %v9334, 4
      %v9336 = vmax.f32 %v9334, %v9335
      %v9337 = vrot.slane %v9336, 2
      %v9338 = vmax.f32 %v9336, %v9337
      %v9339 = vrot.slane %v9338, 1
      %v9340 = vmax.f32 %v9338, %v9339
      %v9341 = vsel %vm7936, %v7600, -inf
      %v9342 = vsel %vm7936, %v7601, -inf
      %v9343 = vmax.f32 %v9341, %v9342
      %v9344 = vsel %vm7936, %v7602, -inf
      %v9345 = vmax.f32 %v9343, %v9344
      %v9346 = vsel %vm7936, %v7603, -inf
      %v9347 = vmax.f32 %v9345, %v9346
      %v9348 = vrot.slane %v9347, 4
      %v9349 = vmax.f32 %v9347, %v9348
      %v9350 = vrot.slane %v9349, 2
      %v9351 = vmax.f32 %v9349, %v9350
      %v9352 = vrot.slane %v9351, 1
      %v9353 = vmax.f32 %v9351, %v9352
      %v9354 = vsel %vm7936, %v7604, -inf
      %v9355 = vsel %vm7936, %v7605, -inf
      %v9356 = vmax.f32 %v9354, %v9355
      %v9357 = vsel %vm7936, %v7606, -inf
      %v9358 = vmax.f32 %v9356, %v9357
      %v9359 = vsel %vm7936, %v7607, -inf
      %v9360 = vmax.f32 %v9358, %v9359
      %v9361 = vrot.slane %v9360, 4
      %v9362 = vmax.f32 %v9360, %v9361
      %v9363 = vrot.slane %v9362, 2
      %v9364 = vmax.f32 %v9362, %v9363
      %v9365 = vrot.slane %v9364, 1
      %v9366 = vmax.f32 %v9364, %v9365
      %v9367 = vsel %vm7936, %v7608, -inf
      %v9368 = vsel %vm7936, %v7609, -inf
      %v9369 = vmax.f32 %v9367, %v9368
      %v9370 = vsel %vm7936, %v7610, -inf
      %v9371 = vmax.f32 %v9369, %v9370
      %v9372 = vsel %vm7936, %v7611, -inf
      %v9373 = vmax.f32 %v9371, %v9372
      %v9374 = vrot.slane %v9373, 4
      %v9375 = vmax.f32 %v9373, %v9374
      %v9376 = vrot.slane %v9375, 2
      %v9377 = vmax.f32 %v9375, %v9376
      %v9378 = vrot.slane %v9377, 1
      %v9379 = vmax.f32 %v9377, %v9378
      %v9380 = vsel %vm7936, %v7612, -inf
      %v9381 = vsel %vm7936, %v7613, -inf
      %v9382 = vmax.f32 %v9380, %v9381
      %v9383 = vsel %vm7936, %v7614, -inf
      %v9384 = vmax.f32 %v9382, %v9383
      %v9385 = vsel %vm7936, %v7615, -inf
      %v9386 = vmax.f32 %v9384, %v9385
      %v9387 = vrot.slane %v9386, 4
      %v9388 = vmax.f32 %v9386, %v9387
      %v9389 = vrot.slane %v9388, 2
      %v9390 = vmax.f32 %v9388, %v9389
      %v9391 = vrot.slane %v9390, 1
      %v9392 = vmax.f32 %v9390, %v9391
      %v9393 = vsel %vm7936, %v7616, -inf
      %v9394 = vsel %vm7936, %v7617, -inf
      %v9395 = vmax.f32 %v9393, %v9394
      %v9396 = vsel %vm7936, %v7618, -inf
      %v9397 = vmax.f32 %v9395, %v9396
      %v9398 = vsel %vm7936, %v7619, -inf
      %v9399 = vmax.f32 %v9397, %v9398
      %v9400 = vrot.slane %v9399, 4
      %v9401 = vmax.f32 %v9399, %v9400
      %v9402 = vrot.slane %v9401, 2
      %v9403 = vmax.f32 %v9401, %v9402
      %v9404 = vrot.slane %v9403, 1
      %v9405 = vmax.f32 %v9403, %v9404
      %v9406 = vsel %vm7936, %v7620, -inf
      %v9407 = vsel %vm7936, %v7621, -inf
      %v9408 = vmax.f32 %v9406, %v9407
      %v9409 = vsel %vm7936, %v7622, -inf
      %v9410 = vmax.f32 %v9408, %v9409
      %v9411 = vsel %vm7936, %v7623, -inf
      %v9412 = vmax.f32 %v9410, %v9411
      %v9413 = vrot.slane %v9412, 4
      %v9414 = vmax.f32 %v9412, %v9413
      %v9415 = vrot.slane %v9414, 2
      %v9416 = vmax.f32 %v9414, %v9415
      %v9417 = vrot.slane %v9416, 1
      %v9418 = vmax.f32 %v9416, %v9417
      %v9419 = vsel %vm7936, %v7624, -inf
      %v9420 = vsel %vm7936, %v7625, -inf
      %v9421 = vmax.f32 %v9419, %v9420
      %v9422 = vsel %vm7936, %v7626, -inf
      %v9423 = vmax.f32 %v9421, %v9422
      %v9424 = vsel %vm7936, %v7627, -inf
      %v9425 = vmax.f32 %v9423, %v9424
      %v9426 = vrot.slane %v9425, 4
      %v9427 = vmax.f32 %v9425, %v9426
      %v9428 = vrot.slane %v9427, 2
      %v9429 = vmax.f32 %v9427, %v9428
      %v9430 = vrot.slane %v9429, 1
      %v9431 = vmax.f32 %v9429, %v9430
      %v9432 = vsel %vm7936, %v7628, -inf
      %v9433 = vsel %vm7936, %v7629, -inf
      %v9434 = vmax.f32 %v9432, %v9433
      %v9435 = vsel %vm7936, %v7630, -inf
      %v9436 = vmax.f32 %v9434, %v9435
      %v9437 = vsel %vm7936, %v7631, -inf
      %v9438 = vmax.f32 %v9436, %v9437
      %v9439 = vrot.slane %v9438, 4
      %v9440 = vmax.f32 %v9438, %v9439
      %v9441 = vrot.slane %v9440, 2
      %v9442 = vmax.f32 %v9440, %v9441
      %v9443 = vrot.slane %v9442, 1
      %v9444 = vmax.f32 %v9442, %v9443
      %v9445 = vsel %vm7936, %v7632, -inf
      %v9446 = vsel %vm7936, %v7633, -inf
      %v9447 = vmax.f32 %v9445, %v9446
      %v9448 = vsel %vm7936, %v7634, -inf
      %v9449 = vmax.f32 %v9447, %v9448
      %v9450 = vsel %vm7936, %v7635, -inf
      %v9451 = vmax.f32 %v9449, %v9450
      %v9452 = vrot.slane %v9451, 4
      %v9453 = vmax.f32 %v9451, %v9452
      %v9454 = vrot.slane %v9453, 2
      %v9455 = vmax.f32 %v9453, %v9454
      %v9456 = vrot.slane %v9455, 1
      %v9457 = vmax.f32 %v9455, %v9456
      %v9458 = vsel %vm7936, %v7636, -inf
      %v9459 = vsel %vm7936, %v7637, -inf
      %v9460 = vmax.f32 %v9458, %v9459
      %v9461 = vsel %vm7936, %v7638, -inf
      %v9462 = vmax.f32 %v9460, %v9461
      %v9463 = vsel %vm7936, %v7639, -inf
      %v9464 = vmax.f32 %v9462, %v9463
      %v9465 = vrot.slane %v9464, 4
      %v9466 = vmax.f32 %v9464, %v9465
      %v9467 = vrot.slane %v9466, 2
      %v9468 = vmax.f32 %v9466, %v9467
      %v9469 = vrot.slane %v9468, 1
      %v9470 = vmax.f32 %v9468, %v9469
      %v9471 = vsel %vm7936, %v7640, -inf
      %v9472 = vsel %vm7936, %v7641, -inf
      %v9473 = vmax.f32 %v9471, %v9472
      %v9474 = vsel %vm7936, %v7642, -inf
      %v9475 = vmax.f32 %v9473, %v9474
      %v9476 = vsel %vm7936, %v7643, -inf
      %v9477 = vmax.f32 %v9475, %v9476
      %v9478 = vrot.slane %v9477, 4
      %v9479 = vmax.f32 %v9477, %v9478
      %v9480 = vrot.slane %v9479, 2
      %v9481 = vmax.f32 %v9479, %v9480
      %v9482 = vrot.slane %v9481, 1
      %v9483 = vmax.f32 %v9481, %v9482
      %v9484 = vsel %vm7936, %v7644, -inf
      %v9485 = vsel %vm7936, %v7645, -inf
      %v9486 = vmax.f32 %v9484, %v9485
      %v9487 = vsel %vm7936, %v7646, -inf
      %v9488 = vmax.f32 %v9486, %v9487
      %v9489 = vsel %vm7936, %v7647, -inf
      %v9490 = vmax.f32 %v9488, %v9489
      %v9491 = vrot.slane %v9490, 4
      %v9492 = vmax.f32 %v9490, %v9491
      %v9493 = vrot.slane %v9492, 2
      %v9494 = vmax.f32 %v9492, %v9493
      %v9495 = vrot.slane %v9494, 1
      %v9496 = vmax.f32 %v9494, %v9495
      %v9497 = vsel %vm7936, %v7648, -inf
      %v9498 = vsel %vm7936, %v7649, -inf
      %v9499 = vmax.f32 %v9497, %v9498
      %v9500 = vsel %vm7936, %v7650, -inf
      %v9501 = vmax.f32 %v9499, %v9500
      %v9502 = vsel %vm7936, %v7651, -inf
      %v9503 = vmax.f32 %v9501, %v9502
      %v9504 = vrot.slane %v9503, 4
      %v9505 = vmax.f32 %v9503, %v9504
      %v9506 = vrot.slane %v9505, 2
      %v9507 = vmax.f32 %v9505, %v9506
      %v9508 = vrot.slane %v9507, 1
      %v9509 = vmax.f32 %v9507, %v9508
      %v9510 = vsel %vm7936, %v7652, -inf
      %v9511 = vsel %vm7936, %v7653, -inf
      %v9512 = vmax.f32 %v9510, %v9511
      %v9513 = vsel %vm7936, %v7654, -inf
      %v9514 = vmax.f32 %v9512, %v9513
      %v9515 = vsel %vm7936, %v7655, -inf
      %v9516 = vmax.f32 %v9514, %v9515
      %v9517 = vrot.slane %v9516, 4
      %v9518 = vmax.f32 %v9516, %v9517
      %v9519 = vrot.slane %v9518, 2
      %v9520 = vmax.f32 %v9518, %v9519
      %v9521 = vrot.slane %v9520, 1
      %v9522 = vmax.f32 %v9520, %v9521
      %v9523 = vsel %vm7936, %v7656, -inf
      %v9524 = vsel %vm7936, %v7657, -inf
      %v9525 = vmax.f32 %v9523, %v9524
      %v9526 = vsel %vm7936, %v7658, -inf
      %v9527 = vmax.f32 %v9525, %v9526
      %v9528 = vsel %vm7936, %v7659, -inf
      %v9529 = vmax.f32 %v9527, %v9528
      %v9530 = vrot.slane %v9529, 4
      %v9531 = vmax.f32 %v9529, %v9530
      %v9532 = vrot.slane %v9531, 2
      %v9533 = vmax.f32 %v9531, %v9532
      %v9534 = vrot.slane %v9533, 1
      %v9535 = vmax.f32 %v9533, %v9534
      %v9536 = vsel %vm7936, %v7660, -inf
      %v9537 = vsel %vm7936, %v7661, -inf
      %v9538 = vmax.f32 %v9536, %v9537
      %v9539 = vsel %vm7936, %v7662, -inf
      %v9540 = vmax.f32 %v9538, %v9539
      %v9541 = vsel %vm7936, %v7663, -inf
      %v9542 = vmax.f32 %v9540, %v9541
      %v9543 = vrot.slane %v9542, 4
      %v9544 = vmax.f32 %v9542, %v9543
      %v9545 = vrot.slane %v9544, 2
      %v9546 = vmax.f32 %v9544, %v9545
      %v9547 = vrot.slane %v9546, 1
      %v9548 = vmax.f32 %v9546, %v9547
      %v9549 = vsel %vm7936, %v7664, -inf
      %v9550 = vsel %vm7936, %v7665, -inf
      %v9551 = vmax.f32 %v9549, %v9550
      %v9552 = vsel %vm7936, %v7666, -inf
      %v9553 = vmax.f32 %v9551, %v9552
      %v9554 = vsel %vm7936, %v7667, -inf
      %v9555 = vmax.f32 %v9553, %v9554
      %v9556 = vrot.slane %v9555, 4
      %v9557 = vmax.f32 %v9555, %v9556
      %v9558 = vrot.slane %v9557, 2
      %v9559 = vmax.f32 %v9557, %v9558
      %v9560 = vrot.slane %v9559, 1
      %v9561 = vmax.f32 %v9559, %v9560
      %v9562 = vsel %vm7936, %v7668, -inf
      %v9563 = vsel %vm7936, %v7669, -inf
      %v9564 = vmax.f32 %v9562, %v9563
      %v9565 = vsel %vm7936, %v7670, -inf
      %v9566 = vmax.f32 %v9564, %v9565
      %v9567 = vsel %vm7936, %v7671, -inf
      %v9568 = vmax.f32 %v9566, %v9567
      %v9569 = vrot.slane %v9568, 4
      %v9570 = vmax.f32 %v9568, %v9569
      %v9571 = vrot.slane %v9570, 2
      %v9572 = vmax.f32 %v9570, %v9571
      %v9573 = vrot.slane %v9572, 1
      %v9574 = vmax.f32 %v9572, %v9573
      %v9575 = vsel %vm7936, %v7672, -inf
      %v9576 = vsel %vm7936, %v7673, -inf
      %v9577 = vmax.f32 %v9575, %v9576
      %v9578 = vsel %vm7936, %v7674, -inf
      %v9579 = vmax.f32 %v9577, %v9578
      %v9580 = vsel %vm7936, %v7675, -inf
      %v9581 = vmax.f32 %v9579, %v9580
      %v9582 = vrot.slane %v9581, 4
      %v9583 = vmax.f32 %v9581, %v9582
      %v9584 = vrot.slane %v9583, 2
      %v9585 = vmax.f32 %v9583, %v9584
      %v9586 = vrot.slane %v9585, 1
      %v9587 = vmax.f32 %v9585, %v9586
      %v9588 = vsel %vm7936, %v7676, -inf
      %v9589 = vsel %vm7936, %v7677, -inf
      %v9590 = vmax.f32 %v9588, %v9589
      %v9591 = vsel %vm7936, %v7678, -inf
      %v9592 = vmax.f32 %v9590, %v9591
      %v9593 = vsel %vm7936, %v7679, -inf
      %v9594 = vmax.f32 %v9592, %v9593
      %v9595 = vrot.slane %v9594, 4
      %v9596 = vmax.f32 %v9594, %v9595
      %v9597 = vrot.slane %v9596, 2
      %v9598 = vmax.f32 %v9596, %v9597
      %v9599 = vrot.slane %v9598, 1
      %v9600 = vmax.f32 %v9598, %v9599
      %v9601 = vsel %vm7936, %v7680, -inf
      %v9602 = vsel %vm7936, %v7681, -inf
      %v9603 = vmax.f32 %v9601, %v9602
      %v9604 = vsel %vm7936, %v7682, -inf
      %v9605 = vmax.f32 %v9603, %v9604
      %v9606 = vsel %vm7936, %v7683, -inf
      %v9607 = vmax.f32 %v9605, %v9606
      %v9608 = vrot.slane %v9607, 4
      %v9609 = vmax.f32 %v9607, %v9608
      %v9610 = vrot.slane %v9609, 2
      %v9611 = vmax.f32 %v9609, %v9610
      %v9612 = vrot.slane %v9611, 1
      %v9613 = vmax.f32 %v9611, %v9612
      %v9614 = vsel %vm7936, %v7684, -inf
      %v9615 = vsel %vm7936, %v7685, -inf
      %v9616 = vmax.f32 %v9614, %v9615
      %v9617 = vsel %vm7936, %v7686, -inf
      %v9618 = vmax.f32 %v9616, %v9617
      %v9619 = vsel %vm7936, %v7687, -inf
      %v9620 = vmax.f32 %v9618, %v9619
      %v9621 = vrot.slane %v9620, 4
      %v9622 = vmax.f32 %v9620, %v9621
      %v9623 = vrot.slane %v9622, 2
      %v9624 = vmax.f32 %v9622, %v9623
      %v9625 = vrot.slane %v9624, 1
      %v9626 = vmax.f32 %v9624, %v9625
      %v9627 = vsel %vm7936, %v7688, -inf
      %v9628 = vsel %vm7936, %v7689, -inf
      %v9629 = vmax.f32 %v9627, %v9628
      %v9630 = vsel %vm7936, %v7690, -inf
      %v9631 = vmax.f32 %v9629, %v9630
      %v9632 = vsel %vm7936, %v7691, -inf
      %v9633 = vmax.f32 %v9631, %v9632
      %v9634 = vrot.slane %v9633, 4
      %v9635 = vmax.f32 %v9633, %v9634
      %v9636 = vrot.slane %v9635, 2
      %v9637 = vmax.f32 %v9635, %v9636
      %v9638 = vrot.slane %v9637, 1
      %v9639 = vmax.f32 %v9637, %v9638
      %v9640 = vsel %vm7936, %v7692, -inf
      %v9641 = vsel %vm7936, %v7693, -inf
      %v9642 = vmax.f32 %v9640, %v9641
      %v9643 = vsel %vm7936, %v7694, -inf
      %v9644 = vmax.f32 %v9642, %v9643
      %v9645 = vsel %vm7936, %v7695, -inf
      %v9646 = vmax.f32 %v9644, %v9645
      %v9647 = vrot.slane %v9646, 4
      %v9648 = vmax.f32 %v9646, %v9647
      %v9649 = vrot.slane %v9648, 2
      %v9650 = vmax.f32 %v9648, %v9649
      %v9651 = vrot.slane %v9650, 1
      %v9652 = vmax.f32 %v9650, %v9651
      %v9653 = vsel %vm7936, %v7696, -inf
      %v9654 = vsel %vm7936, %v7697, -inf
      %v9655 = vmax.f32 %v9653, %v9654
      %v9656 = vsel %vm7936, %v7698, -inf
      %v9657 = vmax.f32 %v9655, %v9656
      %v9658 = vsel %vm7936, %v7699, -inf
      %v9659 = vmax.f32 %v9657, %v9658
      %v9660 = vrot.slane %v9659, 4
      %v9661 = vmax.f32 %v9659, %v9660
      %v9662 = vrot.slane %v9661, 2
      %v9663 = vmax.f32 %v9661, %v9662
      %v9664 = vrot.slane %v9663, 1
      %v9665 = vmax.f32 %v9663, %v9664
      %v9666 = vsel %vm7936, %v7700, -inf
      %v9667 = vsel %vm7936, %v7701, -inf
      %v9668 = vmax.f32 %v9666, %v9667
      %v9669 = vsel %vm7936, %v7702, -inf
      %v9670 = vmax.f32 %v9668, %v9669
      %v9671 = vsel %vm7936, %v7703, -inf
      %v9672 = vmax.f32 %v9670, %v9671
      %v9673 = vrot.slane %v9672, 4
      %v9674 = vmax.f32 %v9672, %v9673
      %v9675 = vrot.slane %v9674, 2
      %v9676 = vmax.f32 %v9674, %v9675
      %v9677 = vrot.slane %v9676, 1
      %v9678 = vmax.f32 %v9676, %v9677
      %v9679 = vsel %vm7936, %v7704, -inf
      %v9680 = vsel %vm7936, %v7705, -inf
      %v9681 = vmax.f32 %v9679, %v9680
      %v9682 = vsel %vm7936, %v7706, -inf
      %v9683 = vmax.f32 %v9681, %v9682
      %v9684 = vsel %vm7936, %v7707, -inf
      %v9685 = vmax.f32 %v9683, %v9684
      %v9686 = vrot.slane %v9685, 4
      %v9687 = vmax.f32 %v9685, %v9686
      %v9688 = vrot.slane %v9687, 2
      %v9689 = vmax.f32 %v9687, %v9688
      %v9690 = vrot.slane %v9689, 1
      %v9691 = vmax.f32 %v9689, %v9690
      %v9692 = vsel %vm7936, %v7708, -inf
      %v9693 = vsel %vm7936, %v7709, -inf
      %v9694 = vmax.f32 %v9692, %v9693
      %v9695 = vsel %vm7936, %v7710, -inf
      %v9696 = vmax.f32 %v9694, %v9695
      %v9697 = vsel %vm7936, %v7711, -inf
      %v9698 = vmax.f32 %v9696, %v9697
      %v9699 = vrot.slane %v9698, 4
      %v9700 = vmax.f32 %v9698, %v9699
      %v9701 = vrot.slane %v9700, 2
      %v9702 = vmax.f32 %v9700, %v9701
      %v9703 = vrot.slane %v9702, 1
      %v9704 = vmax.f32 %v9702, %v9703
      %v9705 = vsel %vm7936, %v7712, -inf
      %v9706 = vsel %vm7936, %v7713, -inf
      %v9707 = vmax.f32 %v9705, %v9706
      %v9708 = vsel %vm7936, %v7714, -inf
      %v9709 = vmax.f32 %v9707, %v9708
      %v9710 = vsel %vm7936, %v7715, -inf
      %v9711 = vmax.f32 %v9709, %v9710
      %v9712 = vrot.slane %v9711, 4
      %v9713 = vmax.f32 %v9711, %v9712
      %v9714 = vrot.slane %v9713, 2
      %v9715 = vmax.f32 %v9713, %v9714
      %v9716 = vrot.slane %v9715, 1
      %v9717 = vmax.f32 %v9715, %v9716
      %v9718 = vsel %vm7936, %v7716, -inf
      %v9719 = vsel %vm7936, %v7717, -inf
      %v9720 = vmax.f32 %v9718, %v9719
      %v9721 = vsel %vm7936, %v7718, -inf
      %v9722 = vmax.f32 %v9720, %v9721
      %v9723 = vsel %vm7936, %v7719, -inf
      %v9724 = vmax.f32 %v9722, %v9723
      %v9725 = vrot.slane %v9724, 4
      %v9726 = vmax.f32 %v9724, %v9725
      %v9727 = vrot.slane %v9726, 2
      %v9728 = vmax.f32 %v9726, %v9727
      %v9729 = vrot.slane %v9728, 1
      %v9730 = vmax.f32 %v9728, %v9729
      %v9731 = vsel %vm7936, %v7720, -inf
      %v9732 = vsel %vm7936, %v7721, -inf
      %v9733 = vmax.f32 %v9731, %v9732
      %v9734 = vsel %vm7936, %v7722, -inf
      %v9735 = vmax.f32 %v9733, %v9734
      %v9736 = vsel %vm7936, %v7723, -inf
      %v9737 = vmax.f32 %v9735, %v9736
      %v9738 = vrot.slane %v9737, 4
      %v9739 = vmax.f32 %v9737, %v9738
      %v9740 = vrot.slane %v9739, 2
      %v9741 = vmax.f32 %v9739, %v9740
      %v9742 = vrot.slane %v9741, 1
      %v9743 = vmax.f32 %v9741, %v9742
      %v9744 = vsel %vm7936, %v7724, -inf
      %v9745 = vsel %vm7936, %v7725, -inf
      %v9746 = vmax.f32 %v9744, %v9745
      %v9747 = vsel %vm7936, %v7726, -inf
      %v9748 = vmax.f32 %v9746, %v9747
      %v9749 = vsel %vm7936, %v7727, -inf
      %v9750 = vmax.f32 %v9748, %v9749
      %v9751 = vrot.slane %v9750, 4
      %v9752 = vmax.f32 %v9750, %v9751
      %v9753 = vrot.slane %v9752, 2
      %v9754 = vmax.f32 %v9752, %v9753
      %v9755 = vrot.slane %v9754, 1
      %v9756 = vmax.f32 %v9754, %v9755
      %v9757 = vsel %vm7936, %v7728, -inf
      %v9758 = vsel %vm7936, %v7729, -inf
      %v9759 = vmax.f32 %v9757, %v9758
      %v9760 = vsel %vm7936, %v7730, -inf
      %v9761 = vmax.f32 %v9759, %v9760
      %v9762 = vsel %vm7936, %v7731, -inf
      %v9763 = vmax.f32 %v9761, %v9762
      %v9764 = vrot.slane %v9763, 4
      %v9765 = vmax.f32 %v9763, %v9764
      %v9766 = vrot.slane %v9765, 2
      %v9767 = vmax.f32 %v9765, %v9766
      %v9768 = vrot.slane %v9767, 1
      %v9769 = vmax.f32 %v9767, %v9768
      %v9770 = vsel %vm7936, %v7732, -inf
      %v9771 = vsel %vm7936, %v7733, -inf
      %v9772 = vmax.f32 %v9770, %v9771
      %v9773 = vsel %vm7936, %v7734, -inf
      %v9774 = vmax.f32 %v9772, %v9773
      %v9775 = vsel %vm7936, %v7735, -inf
      %v9776 = vmax.f32 %v9774, %v9775
      %v9777 = vrot.slane %v9776, 4
      %v9778 = vmax.f32 %v9776, %v9777
      %v9779 = vrot.slane %v9778, 2
      %v9780 = vmax.f32 %v9778, %v9779
      %v9781 = vrot.slane %v9780, 1
      %v9782 = vmax.f32 %v9780, %v9781
      %v9783 = vsel %vm7936, %v7736, -inf
      %v9784 = vsel %vm7936, %v7737, -inf
      %v9785 = vmax.f32 %v9783, %v9784
      %v9786 = vsel %vm7936, %v7738, -inf
      %v9787 = vmax.f32 %v9785, %v9786
      %v9788 = vsel %vm7936, %v7739, -inf
      %v9789 = vmax.f32 %v9787, %v9788
      %v9790 = vrot.slane %v9789, 4
      %v9791 = vmax.f32 %v9789, %v9790
      %v9792 = vrot.slane %v9791, 2
      %v9793 = vmax.f32 %v9791, %v9792
      %v9794 = vrot.slane %v9793, 1
      %v9795 = vmax.f32 %v9793, %v9794
      %v9796 = vsel %vm7936, %v7740, -inf
      %v9797 = vsel %vm7936, %v7741, -inf
      %v9798 = vmax.f32 %v9796, %v9797
      %v9799 = vsel %vm7936, %v7742, -inf
      %v9800 = vmax.f32 %v9798, %v9799
      %v9801 = vsel %vm7936, %v7743, -inf
      %v9802 = vmax.f32 %v9800, %v9801
      %v9803 = vrot.slane %v9802, 4
      %v9804 = vmax.f32 %v9802, %v9803
      %v9805 = vrot.slane %v9804, 2
      %v9806 = vmax.f32 %v9804, %v9805
      %v9807 = vrot.slane %v9806, 1
      %v9808 = vmax.f32 %v9806, %v9807
      %v9809 = vsel %vm7936, %v7744, -inf
      %v9810 = vsel %vm7936, %v7745, -inf
      %v9811 = vmax.f32 %v9809, %v9810
      %v9812 = vsel %vm7936, %v7746, -inf
      %v9813 = vmax.f32 %v9811, %v9812
      %v9814 = vsel %vm7936, %v7747, -inf
      %v9815 = vmax.f32 %v9813, %v9814
      %v9816 = vrot.slane %v9815, 4
      %v9817 = vmax.f32 %v9815, %v9816
      %v9818 = vrot.slane %v9817, 2
      %v9819 = vmax.f32 %v9817, %v9818
      %v9820 = vrot.slane %v9819, 1
      %v9821 = vmax.f32 %v9819, %v9820
      %v9822 = vsel %vm7936, %v7748, -inf
      %v9823 = vsel %vm7936, %v7749, -inf
      %v9824 = vmax.f32 %v9822, %v9823
      %v9825 = vsel %vm7936, %v7750, -inf
      %v9826 = vmax.f32 %v9824, %v9825
      %v9827 = vsel %vm7936, %v7751, -inf
      %v9828 = vmax.f32 %v9826, %v9827
      %v9829 = vrot.slane %v9828, 4
      %v9830 = vmax.f32 %v9828, %v9829
      %v9831 = vrot.slane %v9830, 2
      %v9832 = vmax.f32 %v9830, %v9831
      %v9833 = vrot.slane %v9832, 1
      %v9834 = vmax.f32 %v9832, %v9833
      %v9835 = vsel %vm7936, %v7752, -inf
      %v9836 = vsel %vm7936, %v7753, -inf
      %v9837 = vmax.f32 %v9835, %v9836
      %v9838 = vsel %vm7936, %v7754, -inf
      %v9839 = vmax.f32 %v9837, %v9838
      %v9840 = vsel %vm7936, %v7755, -inf
      %v9841 = vmax.f32 %v9839, %v9840
      %v9842 = vrot.slane %v9841, 4
      %v9843 = vmax.f32 %v9841, %v9842
      %v9844 = vrot.slane %v9843, 2
      %v9845 = vmax.f32 %v9843, %v9844
      %v9846 = vrot.slane %v9845, 1
      %v9847 = vmax.f32 %v9845, %v9846
      %v9848 = vsel %vm7936, %v7756, -inf
      %v9849 = vsel %vm7936, %v7757, -inf
      %v9850 = vmax.f32 %v9848, %v9849
      %v9851 = vsel %vm7936, %v7758, -inf
      %v9852 = vmax.f32 %v9850, %v9851
      %v9853 = vsel %vm7936, %v7759, -inf
      %v9854 = vmax.f32 %v9852, %v9853
      %v9855 = vrot.slane %v9854, 4
      %v9856 = vmax.f32 %v9854, %v9855
      %v9857 = vrot.slane %v9856, 2
      %v9858 = vmax.f32 %v9856, %v9857
      %v9859 = vrot.slane %v9858, 1
      %v9860 = vmax.f32 %v9858, %v9859
      %v9861 = vsel %vm7936, %v7760, -inf
      %v9862 = vsel %vm7936, %v7761, -inf
      %v9863 = vmax.f32 %v9861, %v9862
      %v9864 = vsel %vm7936, %v7762, -inf
      %v9865 = vmax.f32 %v9863, %v9864
      %v9866 = vsel %vm7936, %v7763, -inf
      %v9867 = vmax.f32 %v9865, %v9866
      %v9868 = vrot.slane %v9867, 4
      %v9869 = vmax.f32 %v9867, %v9868
      %v9870 = vrot.slane %v9869, 2
      %v9871 = vmax.f32 %v9869, %v9870
      %v9872 = vrot.slane %v9871, 1
      %v9873 = vmax.f32 %v9871, %v9872
      %v9874 = vsel %vm7936, %v7764, -inf
      %v9875 = vsel %vm7936, %v7765, -inf
      %v9876 = vmax.f32 %v9874, %v9875
      %v9877 = vsel %vm7936, %v7766, -inf
      %v9878 = vmax.f32 %v9876, %v9877
      %v9879 = vsel %vm7936, %v7767, -inf
      %v9880 = vmax.f32 %v9878, %v9879
      %v9881 = vrot.slane %v9880, 4
      %v9882 = vmax.f32 %v9880, %v9881
      %v9883 = vrot.slane %v9882, 2
      %v9884 = vmax.f32 %v9882, %v9883
      %v9885 = vrot.slane %v9884, 1
      %v9886 = vmax.f32 %v9884, %v9885
      %v9887 = vsel %vm7936, %v7768, -inf
      %v9888 = vsel %vm7936, %v7769, -inf
      %v9889 = vmax.f32 %v9887, %v9888
      %v9890 = vsel %vm7936, %v7770, -inf
      %v9891 = vmax.f32 %v9889, %v9890
      %v9892 = vsel %vm7936, %v7771, -inf
      %v9893 = vmax.f32 %v9891, %v9892
      %v9894 = vrot.slane %v9893, 4
      %v9895 = vmax.f32 %v9893, %v9894
      %v9896 = vrot.slane %v9895, 2
      %v9897 = vmax.f32 %v9895, %v9896
      %v9898 = vrot.slane %v9897, 1
      %v9899 = vmax.f32 %v9897, %v9898
      %v9900 = vsel %vm7936, %v7772, -inf
      %v9901 = vsel %vm7936, %v7773, -inf
      %v9902 = vmax.f32 %v9900, %v9901
      %v9903 = vsel %vm7936, %v7774, -inf
      %v9904 = vmax.f32 %v9902, %v9903
      %v9905 = vsel %vm7936, %v7775, -inf
      %v9906 = vmax.f32 %v9904, %v9905
      %v9907 = vrot.slane %v9906, 4
      %v9908 = vmax.f32 %v9906, %v9907
      %v9909 = vrot.slane %v9908, 2
      %v9910 = vmax.f32 %v9908, %v9909
      %v9911 = vrot.slane %v9910, 1
      %v9912 = vmax.f32 %v9910, %v9911
      %v9913 = vsel %vm7936, %v7776, -inf
      %v9914 = vsel %vm7936, %v7777, -inf
      %v9915 = vmax.f32 %v9913, %v9914
      %v9916 = vsel %vm7936, %v7778, -inf
      %v9917 = vmax.f32 %v9915, %v9916
      %v9918 = vsel %vm7936, %v7779, -inf
      %v9919 = vmax.f32 %v9917, %v9918
      %v9920 = vrot.slane %v9919, 4
      %v9921 = vmax.f32 %v9919, %v9920
      %v9922 = vrot.slane %v9921, 2
      %v9923 = vmax.f32 %v9921, %v9922
      %v9924 = vrot.slane %v9923, 1
      %v9925 = vmax.f32 %v9923, %v9924
      %v9926 = vsel %vm7936, %v7780, -inf
      %v9927 = vsel %vm7936, %v7781, -inf
      %v9928 = vmax.f32 %v9926, %v9927
      %v9929 = vsel %vm7936, %v7782, -inf
      %v9930 = vmax.f32 %v9928, %v9929
      %v9931 = vsel %vm7936, %v7783, -inf
      %v9932 = vmax.f32 %v9930, %v9931
      %v9933 = vrot.slane %v9932, 4
      %v9934 = vmax.f32 %v9932, %v9933
      %v9935 = vrot.slane %v9934, 2
      %v9936 = vmax.f32 %v9934, %v9935
      %v9937 = vrot.slane %v9936, 1
      %v9938 = vmax.f32 %v9936, %v9937
      %v9939 = vsel %vm7936, %v7784, -inf
      %v9940 = vsel %vm7936, %v7785, -inf
      %v9941 = vmax.f32 %v9939, %v9940
      %v9942 = vsel %vm7936, %v7786, -inf
      %v9943 = vmax.f32 %v9941, %v9942
      %v9944 = vsel %vm7936, %v7787, -inf
      %v9945 = vmax.f32 %v9943, %v9944
      %v9946 = vrot.slane %v9945, 4
      %v9947 = vmax.f32 %v9945, %v9946
      %v9948 = vrot.slane %v9947, 2
      %v9949 = vmax.f32 %v9947, %v9948
      %v9950 = vrot.slane %v9949, 1
      %v9951 = vmax.f32 %v9949, %v9950
      %v9952 = vsel %vm7936, %v7788, -inf
      %v9953 = vsel %vm7936, %v7789, -inf
      %v9954 = vmax.f32 %v9952, %v9953
      %v9955 = vsel %vm7936, %v7790, -inf
      %v9956 = vmax.f32 %v9954, %v9955
      %v9957 = vsel %vm7936, %v7791, -inf
      %v9958 = vmax.f32 %v9956, %v9957
      %v9959 = vrot.slane %v9958, 4
      %v9960 = vmax.f32 %v9958, %v9959
      %v9961 = vrot.slane %v9960, 2
      %v9962 = vmax.f32 %v9960, %v9961
      %v9963 = vrot.slane %v9962, 1
      %v9964 = vmax.f32 %v9962, %v9963
      %v9965 = vsel %vm7936, %v7792, -inf
      %v9966 = vsel %vm7936, %v7793, -inf
      %v9967 = vmax.f32 %v9965, %v9966
      %v9968 = vsel %vm7936, %v7794, -inf
      %v9969 = vmax.f32 %v9967, %v9968
      %v9970 = vsel %vm7936, %v7795, -inf
      %v9971 = vmax.f32 %v9969, %v9970
      %v9972 = vrot.slane %v9971, 4
      %v9973 = vmax.f32 %v9971, %v9972
      %v9974 = vrot.slane %v9973, 2
      %v9975 = vmax.f32 %v9973, %v9974
      %v9976 = vrot.slane %v9975, 1
      %v9977 = vmax.f32 %v9975, %v9976
      %v9978 = vsel %vm7936, %v7796, -inf
      %v9979 = vsel %vm7936, %v7797, -inf
      %v9980 = vmax.f32 %v9978, %v9979
      %v9981 = vsel %vm7936, %v7798, -inf
      %v9982 = vmax.f32 %v9980, %v9981
      %v9983 = vsel %vm7936, %v7799, -inf
      %v9984 = vmax.f32 %v9982, %v9983
      %v9985 = vrot.slane %v9984, 4
      %v9986 = vmax.f32 %v9984, %v9985
      %v9987 = vrot.slane %v9986, 2
      %v9988 = vmax.f32 %v9986, %v9987
      %v9989 = vrot.slane %v9988, 1
      %v9990 = vmax.f32 %v9988, %v9989
      %v9991 = vsel %vm7936, %v7800, -inf
      %v9992 = vsel %vm7936, %v7801, -inf
      %v9993 = vmax.f32 %v9991, %v9992
      %v9994 = vsel %vm7936, %v7802, -inf
      %v9995 = vmax.f32 %v9993, %v9994
      %v9996 = vsel %vm7936, %v7803, -inf
      %v9997 = vmax.f32 %v9995, %v9996
      %v9998 = vrot.slane %v9997, 4
      %v9999 = vmax.f32 %v9997, %v9998
      %v10000 = vrot.slane %v9999, 2
      %v10001 = vmax.f32 %v9999, %v10000
      %v10002 = vrot.slane %v10001, 1
      %v10003 = vmax.f32 %v10001, %v10002
      %v10004 = vsel %vm7936, %v7804, -inf
      %v10005 = vsel %vm7936, %v7805, -inf
      %v10006 = vmax.f32 %v10004, %v10005
      %v10007 = vsel %vm7936, %v7806, -inf
      %v10008 = vmax.f32 %v10006, %v10007
      %v10009 = vsel %vm7936, %v7807, -inf
      %v10010 = vmax.f32 %v10008, %v10009
      %v10011 = vrot.slane %v10010, 4
      %v10012 = vmax.f32 %v10010, %v10011
      %v10013 = vrot.slane %v10012, 2
      %v10014 = vmax.f32 %v10012, %v10013
      %v10015 = vrot.slane %v10014, 1
      %v10016 = vmax.f32 %v10014, %v10015
      %v10017 = vsel %vm7936, %v7808, -inf
      %v10018 = vsel %vm7936, %v7809, -inf
      %v10019 = vmax.f32 %v10017, %v10018
      %v10020 = vsel %vm7936, %v7810, -inf
      %v10021 = vmax.f32 %v10019, %v10020
      %v10022 = vsel %vm7936, %v7811, -inf
      %v10023 = vmax.f32 %v10021, %v10022
      %v10024 = vrot.slane %v10023, 4
      %v10025 = vmax.f32 %v10023, %v10024
      %v10026 = vrot.slane %v10025, 2
      %v10027 = vmax.f32 %v10025, %v10026
      %v10028 = vrot.slane %v10027, 1
      %v10029 = vmax.f32 %v10027, %v10028
      %v10030 = vsel %vm7936, %v7812, -inf
      %v10031 = vsel %vm7936, %v7813, -inf
      %v10032 = vmax.f32 %v10030, %v10031
      %v10033 = vsel %vm7936, %v7814, -inf
      %v10034 = vmax.f32 %v10032, %v10033
      %v10035 = vsel %vm7936, %v7815, -inf
      %v10036 = vmax.f32 %v10034, %v10035
      %v10037 = vrot.slane %v10036, 4
      %v10038 = vmax.f32 %v10036, %v10037
      %v10039 = vrot.slane %v10038, 2
      %v10040 = vmax.f32 %v10038, %v10039
      %v10041 = vrot.slane %v10040, 1
      %v10042 = vmax.f32 %v10040, %v10041
      %v10043 = vsel %vm7936, %v7816, -inf
      %v10044 = vsel %vm7936, %v7817, -inf
      %v10045 = vmax.f32 %v10043, %v10044
      %v10046 = vsel %vm7936, %v7818, -inf
      %v10047 = vmax.f32 %v10045, %v10046
      %v10048 = vsel %vm7936, %v7819, -inf
      %v10049 = vmax.f32 %v10047, %v10048
      %v10050 = vrot.slane %v10049, 4
      %v10051 = vmax.f32 %v10049, %v10050
      %v10052 = vrot.slane %v10051, 2
      %v10053 = vmax.f32 %v10051, %v10052
      %v10054 = vrot.slane %v10053, 1
      %v10055 = vmax.f32 %v10053, %v10054
      %v10056 = vsel %vm7936, %v7820, -inf
      %v10057 = vsel %vm7936, %v7821, -inf
      %v10058 = vmax.f32 %v10056, %v10057
      %v10059 = vsel %vm7936, %v7822, -inf
      %v10060 = vmax.f32 %v10058, %v10059
      %v10061 = vsel %vm7936, %v7823, -inf
      %v10062 = vmax.f32 %v10060, %v10061
      %v10063 = vrot.slane %v10062, 4
      %v10064 = vmax.f32 %v10062, %v10063
      %v10065 = vrot.slane %v10064, 2
      %v10066 = vmax.f32 %v10064, %v10065
      %v10067 = vrot.slane %v10066, 1
      %v10068 = vmax.f32 %v10066, %v10067
      %v10069 = vsel %vm7936, %v7824, -inf
      %v10070 = vsel %vm7936, %v7825, -inf
      %v10071 = vmax.f32 %v10069, %v10070
      %v10072 = vsel %vm7936, %v7826, -inf
      %v10073 = vmax.f32 %v10071, %v10072
      %v10074 = vsel %vm7936, %v7827, -inf
      %v10075 = vmax.f32 %v10073, %v10074
      %v10076 = vrot.slane %v10075, 4
      %v10077 = vmax.f32 %v10075, %v10076
      %v10078 = vrot.slane %v10077, 2
      %v10079 = vmax.f32 %v10077, %v10078
      %v10080 = vrot.slane %v10079, 1
      %v10081 = vmax.f32 %v10079, %v10080
      %v10082 = vsel %vm7936, %v7828, -inf
      %v10083 = vsel %vm7936, %v7829, -inf
      %v10084 = vmax.f32 %v10082, %v10083
      %v10085 = vsel %vm7936, %v7830, -inf
      %v10086 = vmax.f32 %v10084, %v10085
      %v10087 = vsel %vm7936, %v7831, -inf
      %v10088 = vmax.f32 %v10086, %v10087
      %v10089 = vrot.slane %v10088, 4
      %v10090 = vmax.f32 %v10088, %v10089
      %v10091 = vrot.slane %v10090, 2
      %v10092 = vmax.f32 %v10090, %v10091
      %v10093 = vrot.slane %v10092, 1
      %v10094 = vmax.f32 %v10092, %v10093
      %v10095 = vsel %vm7936, %v7832, -inf
      %v10096 = vsel %vm7936, %v7833, -inf
      %v10097 = vmax.f32 %v10095, %v10096
      %v10098 = vsel %vm7936, %v7834, -inf
      %v10099 = vmax.f32 %v10097, %v10098
      %v10100 = vsel %vm7936, %v7835, -inf
      %v10101 = vmax.f32 %v10099, %v10100
      %v10102 = vrot.slane %v10101, 4
      %v10103 = vmax.f32 %v10101, %v10102
      %v10104 = vrot.slane %v10103, 2
      %v10105 = vmax.f32 %v10103, %v10104
      %v10106 = vrot.slane %v10105, 1
      %v10107 = vmax.f32 %v10105, %v10106
      %v10108 = vsel %vm7936, %v7836, -inf
      %v10109 = vsel %vm7936, %v7837, -inf
      %v10110 = vmax.f32 %v10108, %v10109
      %v10111 = vsel %vm7936, %v7838, -inf
      %v10112 = vmax.f32 %v10110, %v10111
      %v10113 = vsel %vm7936, %v7839, -inf
      %v10114 = vmax.f32 %v10112, %v10113
      %v10115 = vrot.slane %v10114, 4
      %v10116 = vmax.f32 %v10114, %v10115
      %v10117 = vrot.slane %v10116, 2
      %v10118 = vmax.f32 %v10116, %v10117
      %v10119 = vrot.slane %v10118, 1
      %v10120 = vmax.f32 %v10118, %v10119
      %v10121 = vsel %vm7936, %v7840, -inf
      %v10122 = vsel %vm7936, %v7841, -inf
      %v10123 = vmax.f32 %v10121, %v10122
      %v10124 = vsel %vm7936, %v7842, -inf
      %v10125 = vmax.f32 %v10123, %v10124
      %v10126 = vsel %vm7936, %v7843, -inf
      %v10127 = vmax.f32 %v10125, %v10126
      %v10128 = vrot.slane %v10127, 4
      %v10129 = vmax.f32 %v10127, %v10128
      %v10130 = vrot.slane %v10129, 2
      %v10131 = vmax.f32 %v10129, %v10130
      %v10132 = vrot.slane %v10131, 1
      %v10133 = vmax.f32 %v10131, %v10132
      %v10134 = vsel %vm7936, %v7844, -inf
      %v10135 = vsel %vm7936, %v7845, -inf
      %v10136 = vmax.f32 %v10134, %v10135
      %v10137 = vsel %vm7936, %v7846, -inf
      %v10138 = vmax.f32 %v10136, %v10137
      %v10139 = vsel %vm7936, %v7847, -inf
      %v10140 = vmax.f32 %v10138, %v10139
      %v10141 = vrot.slane %v10140, 4
      %v10142 = vmax.f32 %v10140, %v10141
      %v10143 = vrot.slane %v10142, 2
      %v10144 = vmax.f32 %v10142, %v10143
      %v10145 = vrot.slane %v10144, 1
      %v10146 = vmax.f32 %v10144, %v10145
      %v10147 = vsel %vm7936, %v7848, -inf
      %v10148 = vsel %vm7936, %v7849, -inf
      %v10149 = vmax.f32 %v10147, %v10148
      %v10150 = vsel %vm7936, %v7850, -inf
      %v10151 = vmax.f32 %v10149, %v10150
      %v10152 = vsel %vm7936, %v7851, -inf
      %v10153 = vmax.f32 %v10151, %v10152
      %v10154 = vrot.slane %v10153, 4
      %v10155 = vmax.f32 %v10153, %v10154
      %v10156 = vrot.slane %v10155, 2
      %v10157 = vmax.f32 %v10155, %v10156
      %v10158 = vrot.slane %v10157, 1
      %v10159 = vmax.f32 %v10157, %v10158
      %v10160 = vsel %vm7936, %v7852, -inf
      %v10161 = vsel %vm7936, %v7853, -inf
      %v10162 = vmax.f32 %v10160, %v10161
      %v10163 = vsel %vm7936, %v7854, -inf
      %v10164 = vmax.f32 %v10162, %v10163
      %v10165 = vsel %vm7936, %v7855, -inf
      %v10166 = vmax.f32 %v10164, %v10165
      %v10167 = vrot.slane %v10166, 4
      %v10168 = vmax.f32 %v10166, %v10167
      %v10169 = vrot.slane %v10168, 2
      %v10170 = vmax.f32 %v10168, %v10169
      %v10171 = vrot.slane %v10170, 1
      %v10172 = vmax.f32 %v10170, %v10171
      %v10173 = vsel %vm7936, %v7856, -inf
      %v10174 = vsel %vm7936, %v7857, -inf
      %v10175 = vmax.f32 %v10173, %v10174
      %v10176 = vsel %vm7936, %v7858, -inf
      %v10177 = vmax.f32 %v10175, %v10176
      %v10178 = vsel %vm7936, %v7859, -inf
      %v10179 = vmax.f32 %v10177, %v10178
      %v10180 = vrot.slane %v10179, 4
      %v10181 = vmax.f32 %v10179, %v10180
      %v10182 = vrot.slane %v10181, 2
      %v10183 = vmax.f32 %v10181, %v10182
      %v10184 = vrot.slane %v10183, 1
      %v10185 = vmax.f32 %v10183, %v10184
      %v10186 = vsel %vm7936, %v7860, -inf
      %v10187 = vsel %vm7936, %v7861, -inf
      %v10188 = vmax.f32 %v10186, %v10187
      %v10189 = vsel %vm7936, %v7862, -inf
      %v10190 = vmax.f32 %v10188, %v10189
      %v10191 = vsel %vm7936, %v7863, -inf
      %v10192 = vmax.f32 %v10190, %v10191
      %v10193 = vrot.slane %v10192, 4
      %v10194 = vmax.f32 %v10192, %v10193
      %v10195 = vrot.slane %v10194, 2
      %v10196 = vmax.f32 %v10194, %v10195
      %v10197 = vrot.slane %v10196, 1
      %v10198 = vmax.f32 %v10196, %v10197
      %v10199 = vsel %vm7936, %v7864, -inf
      %v10200 = vsel %vm7936, %v7865, -inf
      %v10201 = vmax.f32 %v10199, %v10200
      %v10202 = vsel %vm7936, %v7866, -inf
      %v10203 = vmax.f32 %v10201, %v10202
      %v10204 = vsel %vm7936, %v7867, -inf
      %v10205 = vmax.f32 %v10203, %v10204
      %v10206 = vrot.slane %v10205, 4
      %v10207 = vmax.f32 %v10205, %v10206
      %v10208 = vrot.slane %v10207, 2
      %v10209 = vmax.f32 %v10207, %v10208
      %v10210 = vrot.slane %v10209, 1
      %v10211 = vmax.f32 %v10209, %v10210
      %v10212 = vsel %vm7936, %v7868, -inf
      %v10213 = vsel %vm7936, %v7869, -inf
      %v10214 = vmax.f32 %v10212, %v10213
      %v10215 = vsel %vm7936, %v7870, -inf
      %v10216 = vmax.f32 %v10214, %v10215
      %v10217 = vsel %vm7936, %v7871, -inf
      %v10218 = vmax.f32 %v10216, %v10217
      %v10219 = vrot.slane %v10218, 4
      %v10220 = vmax.f32 %v10218, %v10219
      %v10221 = vrot.slane %v10220, 2
      %v10222 = vmax.f32 %v10220, %v10221
      %v10223 = vrot.slane %v10222, 1
      %v10224 = vmax.f32 %v10222, %v10223
      %v10225 = vsel %vm7936, %v7872, -inf
      %v10226 = vsel %vm7936, %v7873, -inf
      %v10227 = vmax.f32 %v10225, %v10226
      %v10228 = vsel %vm7936, %v7874, -inf
      %v10229 = vmax.f32 %v10227, %v10228
      %v10230 = vsel %vm7936, %v7875, -inf
      %v10231 = vmax.f32 %v10229, %v10230
      %v10232 = vrot.slane %v10231, 4
      %v10233 = vmax.f32 %v10231, %v10232
      %v10234 = vrot.slane %v10233, 2
      %v10235 = vmax.f32 %v10233, %v10234
      %v10236 = vrot.slane %v10235, 1
      %v10237 = vmax.f32 %v10235, %v10236
      %v10238 = vsel %vm7936, %v7876, -inf
      %v10239 = vsel %vm7936, %v7877, -inf
      %v10240 = vmax.f32 %v10238, %v10239
      %v10241 = vsel %vm7936, %v7878, -inf
      %v10242 = vmax.f32 %v10240, %v10241
      %v10243 = vsel %vm7936, %v7879, -inf
      %v10244 = vmax.f32 %v10242, %v10243
      %v10245 = vrot.slane %v10244, 4
      %v10246 = vmax.f32 %v10244, %v10245
      %v10247 = vrot.slane %v10246, 2
      %v10248 = vmax.f32 %v10246, %v10247
      %v10249 = vrot.slane %v10248, 1
      %v10250 = vmax.f32 %v10248, %v10249
      %v10251 = vsel %vm7936, %v7880, -inf
      %v10252 = vsel %vm7936, %v7881, -inf
      %v10253 = vmax.f32 %v10251, %v10252
      %v10254 = vsel %vm7936, %v7882, -inf
      %v10255 = vmax.f32 %v10253, %v10254
      %v10256 = vsel %vm7936, %v7883, -inf
      %v10257 = vmax.f32 %v10255, %v10256
      %v10258 = vrot.slane %v10257, 4
      %v10259 = vmax.f32 %v10257, %v10258
      %v10260 = vrot.slane %v10259, 2
      %v10261 = vmax.f32 %v10259, %v10260
      %v10262 = vrot.slane %v10261, 1
      %v10263 = vmax.f32 %v10261, %v10262
      %v10264 = vsel %vm7936, %v7884, -inf
      %v10265 = vsel %vm7936, %v7885, -inf
      %v10266 = vmax.f32 %v10264, %v10265
      %v10267 = vsel %vm7936, %v7886, -inf
      %v10268 = vmax.f32 %v10266, %v10267
      %v10269 = vsel %vm7936, %v7887, -inf
      %v10270 = vmax.f32 %v10268, %v10269
      %v10271 = vrot.slane %v10270, 4
      %v10272 = vmax.f32 %v10270, %v10271
      %v10273 = vrot.slane %v10272, 2
      %v10274 = vmax.f32 %v10272, %v10273
      %v10275 = vrot.slane %v10274, 1
      %v10276 = vmax.f32 %v10274, %v10275
      %v10277 = vsel %vm7936, %v7888, -inf
      %v10278 = vsel %vm7936, %v7889, -inf
      %v10279 = vmax.f32 %v10277, %v10278
      %v10280 = vsel %vm7936, %v7890, -inf
      %v10281 = vmax.f32 %v10279, %v10280
      %v10282 = vsel %vm7936, %v7891, -inf
      %v10283 = vmax.f32 %v10281, %v10282
      %v10284 = vrot.slane %v10283, 4
      %v10285 = vmax.f32 %v10283, %v10284
      %v10286 = vrot.slane %v10285, 2
      %v10287 = vmax.f32 %v10285, %v10286
      %v10288 = vrot.slane %v10287, 1
      %v10289 = vmax.f32 %v10287, %v10288
      %v10290 = vsel %vm7936, %v7892, -inf
      %v10291 = vsel %vm7936, %v7893, -inf
      %v10292 = vmax.f32 %v10290, %v10291
      %v10293 = vsel %vm7936, %v7894, -inf
      %v10294 = vmax.f32 %v10292, %v10293
      %v10295 = vsel %vm7936, %v7895, -inf
      %v10296 = vmax.f32 %v10294, %v10295
      %v10297 = vrot.slane %v10296, 4
      %v10298 = vmax.f32 %v10296, %v10297
      %v10299 = vrot.slane %v10298, 2
      %v10300 = vmax.f32 %v10298, %v10299
      %v10301 = vrot.slane %v10300, 1
      %v10302 = vmax.f32 %v10300, %v10301
      %v10303 = vsel %vm7936, %v7896, -inf
      %v10304 = vsel %vm7936, %v7897, -inf
      %v10305 = vmax.f32 %v10303, %v10304
      %v10306 = vsel %vm7936, %v7898, -inf
      %v10307 = vmax.f32 %v10305, %v10306
      %v10308 = vsel %vm7936, %v7899, -inf
      %v10309 = vmax.f32 %v10307, %v10308
      %v10310 = vrot.slane %v10309, 4
      %v10311 = vmax.f32 %v10309, %v10310
      %v10312 = vrot.slane %v10311, 2
      %v10313 = vmax.f32 %v10311, %v10312
      %v10314 = vrot.slane %v10313, 1
      %v10315 = vmax.f32 %v10313, %v10314
      %v10316 = vsel %vm7936, %v7900, -inf
      %v10317 = vsel %vm7936, %v7901, -inf
      %v10318 = vmax.f32 %v10316, %v10317
      %v10319 = vsel %vm7936, %v7902, -inf
      %v10320 = vmax.f32 %v10318, %v10319
      %v10321 = vsel %vm7936, %v7903, -inf
      %v10322 = vmax.f32 %v10320, %v10321
      %v10323 = vrot.slane %v10322, 4
      %v10324 = vmax.f32 %v10322, %v10323
      %v10325 = vrot.slane %v10324, 2
      %v10326 = vmax.f32 %v10324, %v10325
      %v10327 = vrot.slane %v10326, 1
      %v10328 = vmax.f32 %v10326, %v10327
      %v10329 = vsel %vm7936, %v7904, -inf
      %v10330 = vsel %vm7936, %v7905, -inf
      %v10331 = vmax.f32 %v10329, %v10330
      %v10332 = vsel %vm7936, %v7906, -inf
      %v10333 = vmax.f32 %v10331, %v10332
      %v10334 = vsel %vm7936, %v7907, -inf
      %v10335 = vmax.f32 %v10333, %v10334
      %v10336 = vrot.slane %v10335, 4
      %v10337 = vmax.f32 %v10335, %v10336
      %v10338 = vrot.slane %v10337, 2
      %v10339 = vmax.f32 %v10337, %v10338
      %v10340 = vrot.slane %v10339, 1
      %v10341 = vmax.f32 %v10339, %v10340
      %v10342 = vsel %vm7936, %v7908, -inf
      %v10343 = vsel %vm7936, %v7909, -inf
      %v10344 = vmax.f32 %v10342, %v10343
      %v10345 = vsel %vm7936, %v7910, -inf
      %v10346 = vmax.f32 %v10344, %v10345
      %v10347 = vsel %vm7936, %v7911, -inf
      %v10348 = vmax.f32 %v10346, %v10347
      %v10349 = vrot.slane %v10348, 4
      %v10350 = vmax.f32 %v10348, %v10349
      %v10351 = vrot.slane %v10350, 2
      %v10352 = vmax.f32 %v10350, %v10351
      %v10353 = vrot.slane %v10352, 1
      %v10354 = vmax.f32 %v10352, %v10353
      %v10355 = vsel %vm7936, %v7912, -inf
      %v10356 = vsel %vm7936, %v7913, -inf
      %v10357 = vmax.f32 %v10355, %v10356
      %v10358 = vsel %vm7936, %v7914, -inf
      %v10359 = vmax.f32 %v10357, %v10358
      %v10360 = vsel %vm7936, %v7915, -inf
      %v10361 = vmax.f32 %v10359, %v10360
      %v10362 = vrot.slane %v10361, 4
      %v10363 = vmax.f32 %v10361, %v10362
      %v10364 = vrot.slane %v10363, 2
      %v10365 = vmax.f32 %v10363, %v10364
      %v10366 = vrot.slane %v10365, 1
      %v10367 = vmax.f32 %v10365, %v10366
      %v10368 = vsel %vm7936, %v7916, -inf
      %v10369 = vsel %vm7936, %v7917, -inf
      %v10370 = vmax.f32 %v10368, %v10369
      %v10371 = vsel %vm7936, %v7918, -inf
      %v10372 = vmax.f32 %v10370, %v10371
      %v10373 = vsel %vm7936, %v7919, -inf
      %v10374 = vmax.f32 %v10372, %v10373
      %v10375 = vrot.slane %v10374, 4
      %v10376 = vmax.f32 %v10374, %v10375
      %v10377 = vrot.slane %v10376, 2
      %v10378 = vmax.f32 %v10376, %v10377
      %v10379 = vrot.slane %v10378, 1
      %v10380 = vmax.f32 %v10378, %v10379
      %v10381 = vsel %vm7936, %v7920, -inf
      %v10382 = vsel %vm7936, %v7921, -inf
      %v10383 = vmax.f32 %v10381, %v10382
      %v10384 = vsel %vm7936, %v7922, -inf
      %v10385 = vmax.f32 %v10383, %v10384
      %v10386 = vsel %vm7936, %v7923, -inf
      %v10387 = vmax.f32 %v10385, %v10386
      %v10388 = vrot.slane %v10387, 4
      %v10389 = vmax.f32 %v10387, %v10388
      %v10390 = vrot.slane %v10389, 2
      %v10391 = vmax.f32 %v10389, %v10390
      %v10392 = vrot.slane %v10391, 1
      %v10393 = vmax.f32 %v10391, %v10392
      %v10394 = vsel %vm7936, %v7924, -inf
      %v10395 = vsel %vm7936, %v7925, -inf
      %v10396 = vmax.f32 %v10394, %v10395
      %v10397 = vsel %vm7936, %v7926, -inf
      %v10398 = vmax.f32 %v10396, %v10397
      %v10399 = vsel %vm7936, %v7927, -inf
      %v10400 = vmax.f32 %v10398, %v10399
      %v10401 = vrot.slane %v10400, 4
      %v10402 = vmax.f32 %v10400, %v10401
      %v10403 = vrot.slane %v10402, 2
      %v10404 = vmax.f32 %v10402, %v10403
      %v10405 = vrot.slane %v10404, 1
      %v10406 = vmax.f32 %v10404, %v10405
      %v10407 = vsel %vm7936, %v7928, -inf
      %v10408 = vsel %vm7936, %v7929, -inf
      %v10409 = vmax.f32 %v10407, %v10408
      %v10410 = vsel %vm7936, %v7930, -inf
      %v10411 = vmax.f32 %v10409, %v10410
      %v10412 = vsel %vm7936, %v7931, -inf
      %v10413 = vmax.f32 %v10411, %v10412
      %v10414 = vrot.slane %v10413, 4
      %v10415 = vmax.f32 %v10413, %v10414
      %v10416 = vrot.slane %v10415, 2
      %v10417 = vmax.f32 %v10415, %v10416
      %v10418 = vrot.slane %v10417, 1
      %v10419 = vmax.f32 %v10417, %v10418
      %v10420 = vsel %vm7936, %v7932, -inf
      %v10421 = vsel %vm7936, %v7933, -inf
      %v10422 = vmax.f32 %v10420, %v10421
      %v10423 = vsel %vm7936, %v7934, -inf
      %v10424 = vmax.f32 %v10422, %v10423
      %v10425 = vsel %vm7936, %v7935, -inf
      %v10426 = vmax.f32 %v10424, %v10425
      %v10427 = vrot.slane %v10426, 4
      %v10428 = vmax.f32 %v10426, %v10427
      %v10429 = vrot.slane %v10428, 2
      %v10430 = vmax.f32 %v10428, %v10429
      %v10431 = vrot.slane %v10430, 1
      %v10432 = vmax.f32 %v10430, %v10431
      %10625 = vrot.lane.b32.xlu0 %v7949, 32
      %v10626 = vpop.permute.xlu0 %10625
      %10627 = vrot.lane.b32.xlu0 %v7962, 32
      %v10628 = vpop.permute.xlu0 %10627
      %10629 = vrot.lane.b32.xlu0 %v7975, 32
      %v10630 = vpop.permute.xlu0 %10629
      %10631 = vrot.lane.b32.xlu0 %v7988, 32
      %v10632 = vpop.permute.xlu0 %10631
      %10633 = vrot.lane.b32.xlu0 %v8001, 32
      %v10634 = vpop.permute.xlu0 %10633
      %10635 = vrot.lane.b32.xlu0 %v8014, 32
      %v10636 = vpop.permute.xlu0 %10635
      %10637 = vrot.lane.b32.xlu0 %v8027, 32
      %v10638 = vpop.permute.xlu0 %10637
      %10639 = vrot.lane.b32.xlu0 %v8040, 32
      %v10640 = vpop.permute.xlu0 %10639
      %10641 = vrot.lane.b32.xlu0 %v8053, 32
      %v10642 = vpop.permute.xlu0 %10641
      %10643 = vrot.lane.b32.xlu0 %v8066, 32
      %v10644 = vpop.permute.xlu0 %10643
      %10645 = vrot.lane.b32.xlu0 %v8079, 32
      %v10646 = vpop.permute.xlu0 %10645
      %10647 = vrot.lane.b32.xlu0 %v8092, 32
      %v10648 = vpop.permute.xlu0 %10647
      %10649 = vrot.lane.b32.xlu0 %v8105, 32
      %v10650 = vpop.permute.xlu0 %10649
      %10651 = vrot.lane.b32.xlu0 %v8118, 32
      %v10652 = vpop.permute.xlu0 %10651
      %10653 = vrot.lane.b32.xlu0 %v8131, 32
      %v10654 = vpop.permute.xlu0 %10653
      %10655 = vrot.lane.b32.xlu0 %v8144, 32
      %v10656 = vpop.permute.xlu0 %10655
      %10657 = vrot.lane.b32.xlu0 %v8157, 32
      %v10658 = vpop.permute.xlu0 %10657
      %10659 = vrot.lane.b32.xlu0 %v8170, 32
      %v10660 = vpop.permute.xlu0 %10659
      %10661 = vrot.lane.b32.xlu0 %v8183, 32
      %v10662 = vpop.permute.xlu0 %10661
      %10663 = vrot.lane.b32.xlu0 %v8196, 32
      %v10664 = vpop.permute.xlu0 %10663
      %10665 = vrot.lane.b32.xlu0 %v8209, 32
      %v10666 = vpop.permute.xlu0 %10665
      %10667 = vrot.lane.b32.xlu0 %v8222, 32
      %v10668 = vpop.permute.xlu0 %10667
      %10669 = vrot.lane.b32.xlu0 %v8235, 32
      %v10670 = vpop.permute.xlu0 %10669
      %10671 = vrot.lane.b32.xlu0 %v8248, 32
      %v10672 = vpop.permute.xlu0 %10671
      %10673 = vrot.lane.b32.xlu0 %v8261, 32
      %v10674 = vpop.permute.xlu0 %10673
      %10675 = vrot.lane.b32.xlu0 %v8274, 32
      %v10676 = vpop.permute.xlu0 %10675
      %10677 = vrot.lane.b32.xlu0 %v8287, 32
      %v10678 = vpop.permute.xlu0 %10677
      %10679 = vrot.lane.b32.xlu0 %v8300, 32
      %v10680 = vpop.permute.xlu0 %10679
      %10681 = vrot.lane.b32.xlu0 %v8313, 32
      %v10682 = vpop.permute.xlu0 %10681
      %10683 = vrot.lane.b32.xlu0 %v8326, 32
      %v10684 = vpop.permute.xlu0 %10683
      %10685 = vrot.lane.b32.xlu0 %v8339, 32
      %v10686 = vpop.permute.xlu0 %10685
      %10687 = vrot.lane.b32.xlu0 %v8352, 32
      %v10688 = vpop.permute.xlu0 %10687
      %10689 = vrot.lane.b32.xlu0 %v8365, 32
      %v10690 = vpop.permute.xlu0 %10689
      %10691 = vrot.lane.b32.xlu0 %v8378, 32
      %v10692 = vpop.permute.xlu0 %10691
      %10693 = vrot.lane.b32.xlu0 %v8391, 32
      %v10694 = vpop.permute.xlu0 %10693
      %10695 = vrot.lane.b32.xlu0 %v8404, 32
      %v10696 = vpop.permute.xlu0 %10695
      %10697 = vrot.lane.b32.xlu0 %v8417, 32
      %v10698 = vpop.permute.xlu0 %10697
      %10699 = vrot.lane.b32.xlu0 %v8430, 32
      %v10700 = vpop.permute.xlu0 %10699
      %10701 = vrot.lane.b32.xlu0 %v8443, 32
      %v10702 = vpop.permute.xlu0 %10701
      %10703 = vrot.lane.b32.xlu0 %v8456, 32
      %v10704 = vpop.permute.xlu0 %10703
      %10705 = vrot.lane.b32.xlu0 %v8469, 32
      %v10706 = vpop.permute.xlu0 %10705
      %10707 = vrot.lane.b32.xlu0 %v8482, 32
      %v10708 = vpop.permute.xlu0 %10707
      %10709 = vrot.lane.b32.xlu0 %v8495, 32
      %v10710 = vpop.permute.xlu0 %10709
      %10711 = vrot.lane.b32.xlu0 %v8508, 32
      %v10712 = vpop.permute.xlu0 %10711
      %10713 = vrot.lane.b32.xlu0 %v8521, 32
      %v10714 = vpop.permute.xlu0 %10713
      %10715 = vrot.lane.b32.xlu0 %v8534, 32
      %v10716 = vpop.permute.xlu0 %10715
      %10717 = vrot.lane.b32.xlu0 %v8547, 32
      %v10718 = vpop.permute.xlu0 %10717
      %10719 = vrot.lane.b32.xlu0 %v8560, 32
      %v10720 = vpop.permute.xlu0 %10719
      %10721 = vrot.lane.b32.xlu0 %v8573, 32
      %v10722 = vpop.permute.xlu0 %10721
      %10723 = vrot.lane.b32.xlu0 %v8586, 32
      %v10724 = vpop.permute.xlu0 %10723
      %10725 = vrot.lane.b32.xlu0 %v8599, 32
      %v10726 = vpop.permute.xlu0 %10725
      %10727 = vrot.lane.b32.xlu0 %v8612, 32
      %v10728 = vpop.permute.xlu0 %10727
      %10729 = vrot.lane.b32.xlu0 %v8625, 32
      %v10730 = vpop.permute.xlu0 %10729
      %10731 = vrot.lane.b32.xlu0 %v8638, 32
      %v10732 = vpop.permute.xlu0 %10731
      %10733 = vrot.lane.b32.xlu0 %v8651, 32
      %v10734 = vpop.permute.xlu0 %10733
      %10735 = vrot.lane.b32.xlu0 %v8664, 32
      %v10736 = vpop.permute.xlu0 %10735
      %10737 = vrot.lane.b32.xlu0 %v8677, 32
      %v10738 = vpop.permute.xlu0 %10737
      %10739 = vrot.lane.b32.xlu0 %v8690, 32
      %v10740 = vpop.permute.xlu0 %10739
      %10741 = vrot.lane.b32.xlu0 %v8703, 32
      %v10742 = vpop.permute.xlu0 %10741
      %10743 = vrot.lane.b32.xlu0 %v8716, 32
      %v10744 = vpop.permute.xlu0 %10743
      %10745 = vrot.lane.b32.xlu0 %v8729, 32
      %v10746 = vpop.permute.xlu0 %10745
      %10747 = vrot.lane.b32.xlu0 %v8742, 32
      %v10748 = vpop.permute.xlu0 %10747
      %10749 = vrot.lane.b32.xlu0 %v8755, 32
      %v10750 = vpop.permute.xlu0 %10749
      %10751 = vrot.lane.b32.xlu0 %v8768, 32
      %v10752 = vpop.permute.xlu0 %10751
      %10753 = vrot.lane.b32.xlu0 %v8781, 32
      %v10754 = vpop.permute.xlu0 %10753
      %10755 = vrot.lane.b32.xlu0 %v8794, 32
      %v10756 = vpop.permute.xlu0 %10755
      %10757 = vrot.lane.b32.xlu0 %v8807, 32
      %v10758 = vpop.permute.xlu0 %10757
      %10759 = vrot.lane.b32.xlu0 %v8820, 32
      %v10760 = vpop.permute.xlu0 %10759
      %10761 = vrot.lane.b32.xlu0 %v8833, 32
      %v10762 = vpop.permute.xlu0 %10761
      %10763 = vrot.lane.b32.xlu0 %v8846, 32
      %v10764 = vpop.permute.xlu0 %10763
      %10765 = vrot.lane.b32.xlu0 %v8859, 32
      %v10766 = vpop.permute.xlu0 %10765
      %10767 = vrot.lane.b32.xlu0 %v8872, 32
      %v10768 = vpop.permute.xlu0 %10767
      %10769 = vrot.lane.b32.xlu0 %v8885, 32
      %v10770 = vpop.permute.xlu0 %10769
      %10771 = vrot.lane.b32.xlu0 %v8898, 32
      %v10772 = vpop.permute.xlu0 %10771
      %10773 = vrot.lane.b32.xlu0 %v8911, 32
      %v10774 = vpop.permute.xlu0 %10773
      %10775 = vrot.lane.b32.xlu0 %v8924, 32
      %v10776 = vpop.permute.xlu0 %10775
      %10777 = vrot.lane.b32.xlu0 %v8937, 32
      %v10778 = vpop.permute.xlu0 %10777
      %10779 = vrot.lane.b32.xlu0 %v8950, 32
      %v10780 = vpop.permute.xlu0 %10779
      %10781 = vrot.lane.b32.xlu0 %v8963, 32
      %v10782 = vpop.permute.xlu0 %10781
      %10783 = vrot.lane.b32.xlu0 %v8976, 32
      %v10784 = vpop.permute.xlu0 %10783
      %10785 = vrot.lane.b32.xlu0 %v8989, 32
      %v10786 = vpop.permute.xlu0 %10785
      %10787 = vrot.lane.b32.xlu0 %v9002, 32
      %v10788 = vpop.permute.xlu0 %10787
      %10789 = vrot.lane.b32.xlu0 %v9015, 32
      %v10790 = vpop.permute.xlu0 %10789
      %10791 = vrot.lane.b32.xlu0 %v9028, 32
      %v10792 = vpop.permute.xlu0 %10791
      %10793 = vrot.lane.b32.xlu0 %v9041, 32
      %v10794 = vpop.permute.xlu0 %10793
      %10795 = vrot.lane.b32.xlu0 %v9054, 32
      %v10796 = vpop.permute.xlu0 %10795
      %10797 = vrot.lane.b32.xlu0 %v9067, 32
      %v10798 = vpop.permute.xlu0 %10797
      %10799 = vrot.lane.b32.xlu0 %v9080, 32
      %v10800 = vpop.permute.xlu0 %10799
      %10801 = vrot.lane.b32.xlu0 %v9093, 32
      %v10802 = vpop.permute.xlu0 %10801
      %10803 = vrot.lane.b32.xlu0 %v9106, 32
      %v10804 = vpop.permute.xlu0 %10803
      %10805 = vrot.lane.b32.xlu0 %v9119, 32
      %v10806 = vpop.permute.xlu0 %10805
      %10807 = vrot.lane.b32.xlu0 %v9132, 32
      %v10808 = vpop.permute.xlu0 %10807
      %10809 = vrot.lane.b32.xlu0 %v9145, 32
      %v10810 = vpop.permute.xlu0 %10809
      %10811 = vrot.lane.b32.xlu0 %v9158, 32
      %v10812 = vpop.permute.xlu0 %10811
      %10813 = vrot.lane.b32.xlu0 %v9171, 32
      %v10814 = vpop.permute.xlu0 %10813
      %10815 = vrot.lane.b32.xlu0 %v9184, 32
      %v10816 = vpop.permute.xlu0 %10815
      %10817 = vrot.lane.b32.xlu0 %v9197, 32
      %v10818 = vpop.permute.xlu0 %10817
      %10819 = vrot.lane.b32.xlu0 %v9210, 32
      %v10820 = vpop.permute.xlu0 %10819
      %10821 = vrot.lane.b32.xlu0 %v9223, 32
      %v10822 = vpop.permute.xlu0 %10821
      %10823 = vrot.lane.b32.xlu0 %v9236, 32
      %v10824 = vpop.permute.xlu0 %10823
      %10825 = vrot.lane.b32.xlu0 %v9249, 32
      %v10826 = vpop.permute.xlu0 %10825
      %10827 = vrot.lane.b32.xlu0 %v9262, 32
      %v10828 = vpop.permute.xlu0 %10827
      %10829 = vrot.lane.b32.xlu0 %v9275, 32
      %v10830 = vpop.permute.xlu0 %10829
      %10831 = vrot.lane.b32.xlu0 %v9288, 32
      %v10832 = vpop.permute.xlu0 %10831
      %10833 = vrot.lane.b32.xlu0 %v9301, 32
      %v10834 = vpop.permute.xlu0 %10833
      %10835 = vrot.lane.b32.xlu0 %v9314, 32
      %v10836 = vpop.permute.xlu0 %10835
      %10837 = vrot.lane.b32.xlu0 %v9327, 32
      %v10838 = vpop.permute.xlu0 %10837
      %10839 = vrot.lane.b32.xlu0 %v9340, 32
      %v10840 = vpop.permute.xlu0 %10839
      %10841 = vrot.lane.b32.xlu0 %v9353, 32
      %v10842 = vpop.permute.xlu0 %10841
      %10843 = vrot.lane.b32.xlu0 %v9366, 32
      %v10844 = vpop.permute.xlu0 %10843
      %10845 = vrot.lane.b32.xlu0 %v9379, 32
      %v10846 = vpop.permute.xlu0 %10845
      %10847 = vrot.lane.b32.xlu0 %v9392, 32
      %v10848 = vpop.permute.xlu0 %10847
      %10849 = vrot.lane.b32.xlu0 %v9405, 32
      %v10850 = vpop.permute.xlu0 %10849
      %10851 = vrot.lane.b32.xlu0 %v9418, 32
      %v10852 = vpop.permute.xlu0 %10851
      %10853 = vrot.lane.b32.xlu0 %v9431, 32
      %v10854 = vpop.permute.xlu0 %10853
      %10855 = vrot.lane.b32.xlu0 %v9444, 32
      %v10856 = vpop.permute.xlu0 %10855
      %10857 = vrot.lane.b32.xlu0 %v9457, 32
      %v10858 = vpop.permute.xlu0 %10857
      %10859 = vrot.lane.b32.xlu0 %v9470, 32
      %v10860 = vpop.permute.xlu0 %10859
      %10861 = vrot.lane.b32.xlu0 %v9483, 32
      %v10862 = vpop.permute.xlu0 %10861
      %10863 = vrot.lane.b32.xlu0 %v9496, 32
      %v10864 = vpop.permute.xlu0 %10863
      %10865 = vrot.lane.b32.xlu0 %v9509, 32
      %v10866 = vpop.permute.xlu0 %10865
      %10867 = vrot.lane.b32.xlu0 %v9522, 32
      %v10868 = vpop.permute.xlu0 %10867
      %10869 = vrot.lane.b32.xlu0 %v9535, 32
      %v10870 = vpop.permute.xlu0 %10869
      %10871 = vrot.lane.b32.xlu0 %v9548, 32
      %v10872 = vpop.permute.xlu0 %10871
      %10873 = vrot.lane.b32.xlu0 %v9561, 32
      %v10874 = vpop.permute.xlu0 %10873
      %10875 = vrot.lane.b32.xlu0 %v9574, 32
      %v10876 = vpop.permute.xlu0 %10875
      %10877 = vrot.lane.b32.xlu0 %v9587, 32
      %v10878 = vpop.permute.xlu0 %10877
      %10879 = vrot.lane.b32.xlu0 %v9600, 32
      %v10880 = vpop.permute.xlu0 %10879
      %10881 = vrot.lane.b32.xlu0 %v9613, 32
      %v10882 = vpop.permute.xlu0 %10881
      %10883 = vrot.lane.b32.xlu0 %v9626, 32
      %v10884 = vpop.permute.xlu0 %10883
      %10885 = vrot.lane.b32.xlu0 %v9639, 32
      %v10886 = vpop.permute.xlu0 %10885
      %10887 = vrot.lane.b32.xlu0 %v9652, 32
      %v10888 = vpop.permute.xlu0 %10887
      %10889 = vrot.lane.b32.xlu0 %v9665, 32
      %v10890 = vpop.permute.xlu0 %10889
      %10891 = vrot.lane.b32.xlu0 %v9678, 32
      %v10892 = vpop.permute.xlu0 %10891
      %10893 = vrot.lane.b32.xlu0 %v9691, 32
      %v10894 = vpop.permute.xlu0 %10893
      %10895 = vrot.lane.b32.xlu0 %v9704, 32
      %v10896 = vpop.permute.xlu0 %10895
      %10897 = vrot.lane.b32.xlu0 %v9717, 32
      %v10898 = vpop.permute.xlu0 %10897
      %10899 = vrot.lane.b32.xlu0 %v9730, 32
      %v10900 = vpop.permute.xlu0 %10899
      %10901 = vrot.lane.b32.xlu0 %v9743, 32
      %v10902 = vpop.permute.xlu0 %10901
      %10903 = vrot.lane.b32.xlu0 %v9756, 32
      %v10904 = vpop.permute.xlu0 %10903
      %10905 = vrot.lane.b32.xlu0 %v9769, 32
      %v10906 = vpop.permute.xlu0 %10905
      %10907 = vrot.lane.b32.xlu0 %v9782, 32
      %v10908 = vpop.permute.xlu0 %10907
      %10909 = vrot.lane.b32.xlu0 %v9795, 32
      %v10910 = vpop.permute.xlu0 %10909
      %10911 = vrot.lane.b32.xlu0 %v9808, 32
      %v10912 = vpop.permute.xlu0 %10911
      %10913 = vrot.lane.b32.xlu0 %v9821, 32
      %v10914 = vpop.permute.xlu0 %10913
      %10915 = vrot.lane.b32.xlu0 %v9834, 32
      %v10916 = vpop.permute.xlu0 %10915
      %10917 = vrot.lane.b32.xlu0 %v9847, 32
      %v10918 = vpop.permute.xlu0 %10917
      %10919 = vrot.lane.b32.xlu0 %v9860, 32
      %v10920 = vpop.permute.xlu0 %10919
      %10921 = vrot.lane.b32.xlu0 %v9873, 32
      %v10922 = vpop.permute.xlu0 %10921
      %10923 = vrot.lane.b32.xlu0 %v9886, 32
      %v10924 = vpop.permute.xlu0 %10923
      %10925 = vrot.lane.b32.xlu0 %v9899, 32
      %v10926 = vpop.permute.xlu0 %10925
      %10927 = vrot.lane.b32.xlu0 %v9912, 32
      %v10928 = vpop.permute.xlu0 %10927
      %10929 = vrot.lane.b32.xlu0 %v9925, 32
      %v10930 = vpop.permute.xlu0 %10929
      %10931 = vrot.lane.b32.xlu0 %v9938, 32
      %v10932 = vpop.permute.xlu0 %10931
      %10933 = vrot.lane.b32.xlu0 %v9951, 32
      %v10934 = vpop.permute.xlu0 %10933
      %10935 = vrot.lane.b32.xlu0 %v9964, 32
      %v10936 = vpop.permute.xlu0 %10935
      %10937 = vrot.lane.b32.xlu0 %v9977, 32
      %v10938 = vpop.permute.xlu0 %10937
      %10939 = vrot.lane.b32.xlu0 %v9990, 32
      %v10940 = vpop.permute.xlu0 %10939
      %10941 = vrot.lane.b32.xlu0 %v10003, 32
      %v10942 = vpop.permute.xlu0 %10941
      %10943 = vrot.lane.b32.xlu0 %v10016, 32
      %v10944 = vpop.permute.xlu0 %10943
      %10945 = vrot.lane.b32.xlu0 %v10029, 32
      %v10946 = vpop.permute.xlu0 %10945
      %10947 = vrot.lane.b32.xlu0 %v10042, 32
      %v10948 = vpop.permute.xlu0 %10947
      %10949 = vrot.lane.b32.xlu0 %v10055, 32
      %v10950 = vpop.permute.xlu0 %10949
      %10951 = vrot.lane.b32.xlu0 %v10068, 32
      %v10952 = vpop.permute.xlu0 %10951
      %10953 = vrot.lane.b32.xlu0 %v10081, 32
      %v10954 = vpop.permute.xlu0 %10953
      %10955 = vrot.lane.b32.xlu0 %v10094, 32
      %v10956 = vpop.permute.xlu0 %10955
      %10957 = vrot.lane.b32.xlu0 %v10107, 32
      %v10958 = vpop.permute.xlu0 %10957
      %10959 = vrot.lane.b32.xlu0 %v10120, 32
      %v10960 = vpop.permute.xlu0 %10959
      %10961 = vrot.lane.b32.xlu0 %v10133, 32
      %v10962 = vpop.permute.xlu0 %10961
      %10963 = vrot.lane.b32.xlu0 %v10146, 32
      %v10964 = vpop.permute.xlu0 %10963
      %10965 = vrot.lane.b32.xlu0 %v10159, 32
      %v10966 = vpop.permute.xlu0 %10965
      %10967 = vrot.lane.b32.xlu0 %v10172, 32
      %v10968 = vpop.permute.xlu0 %10967
      %10969 = vrot.lane.b32.xlu0 %v10185, 32
      %v10970 = vpop.permute.xlu0 %10969
      %10971 = vrot.lane.b32.xlu0 %v10198, 32
      %v10972 = vpop.permute.xlu0 %10971
      %10973 = vrot.lane.b32.xlu0 %v10211, 32
      %v10974 = vpop.permute.xlu0 %10973
      %10975 = vrot.lane.b32.xlu0 %v10224, 32
      %v10976 = vpop.permute.xlu0 %10975
      %10977 = vrot.lane.b32.xlu0 %v10237, 32
      %v10978 = vpop.permute.xlu0 %10977
      %10979 = vrot.lane.b32.xlu0 %v10250, 32
      %v10980 = vpop.permute.xlu0 %10979
      %10981 = vrot.lane.b32.xlu0 %v10263, 32
      %v10982 = vpop.permute.xlu0 %10981
      %10983 = vrot.lane.b32.xlu0 %v10276, 32
      %v10984 = vpop.permute.xlu0 %10983
      %10985 = vrot.lane.b32.xlu0 %v10289, 32
      %v10986 = vpop.permute.xlu0 %10985
      %10987 = vrot.lane.b32.xlu0 %v10302, 32
      %v10988 = vpop.permute.xlu0 %10987
      %10989 = vrot.lane.b32.xlu0 %v10315, 32
      %v10990 = vpop.permute.xlu0 %10989
      %10991 = vrot.lane.b32.xlu0 %v10328, 32
      %v10992 = vpop.permute.xlu0 %10991
      %10993 = vrot.lane.b32.xlu0 %v10341, 32
      %v10994 = vpop.permute.xlu0 %10993
      %10995 = vrot.lane.b32.xlu0 %v10354, 32
      %v10996 = vpop.permute.xlu0 %10995
      %10997 = vrot.lane.b32.xlu0 %v10367, 32
      %v10998 = vpop.permute.xlu0 %10997
      %10999 = vrot.lane.b32.xlu0 %v10380, 32
      %v11000 = vpop.permute.xlu0 %10999
      %11001 = vrot.lane.b32.xlu0 %v10393, 32
      %v11002 = vpop.permute.xlu0 %11001
      %11003 = vrot.lane.b32.xlu0 %v10406, 32
      %v11004 = vpop.permute.xlu0 %11003
      %11005 = vrot.lane.b32.xlu0 %v10419, 32
      %v11006 = vpop.permute.xlu0 %11005
      %11007 = vrot.lane.b32.xlu0 %v10432, 32
      %v11008 = vpop.permute.xlu0 %11007
      %v11201 = vsel %vm7936, %v7168, %v10626
      %v11202 = vsel %vm7936, %v7169, %v10626
      %v11203 = vsel %vm7936, %v7170, %v10626
      %v11204 = vsel %vm7936, %v7171, %v10626
      %v11205 = vsel %vm7936, %v7172, %v10628
      %v11206 = vsel %vm7936, %v7173, %v10628
      %v11207 = vsel %vm7936, %v7174, %v10628
      %v11208 = vsel %vm7936, %v7175, %v10628
      %v11209 = vsel %vm7936, %v7176, %v10630
      %v11210 = vsel %vm7936, %v7177, %v10630
      %v11211 = vsel %vm7936, %v7178, %v10630
      %v11212 = vsel %vm7936, %v7179, %v10630
      %v11213 = vsel %vm7936, %v7180, %v10632
      %v11214 = vsel %vm7936, %v7181, %v10632
      %v11215 = vsel %vm7936, %v7182, %v10632
      %v11216 = vsel %vm7936, %v7183, %v10632
      %v11217 = vsel %vm7936, %v7184, %v10634
      %v11218 = vsel %vm7936, %v7185, %v10634
      %v11219 = vsel %vm7936, %v7186, %v10634
      %v11220 = vsel %vm7936, %v7187, %v10634
      %v11221 = vsel %vm7936, %v7188, %v10636
      %v11222 = vsel %vm7936, %v7189, %v10636
      %v11223 = vsel %vm7936, %v7190, %v10636
      %v11224 = vsel %vm7936, %v7191, %v10636
      %v11225 = vsel %vm7936, %v7192, %v10638
      %v11226 = vsel %vm7936, %v7193, %v10638
      %v11227 = vsel %vm7936, %v7194, %v10638
      %v11228 = vsel %vm7936, %v7195, %v10638
      %v11229 = vsel %vm7936, %v7196, %v10640
      %v11230 = vsel %vm7936, %v7197, %v10640
      %v11231 = vsel %vm7936, %v7198, %v10640
      %v11232 = vsel %vm7936, %v7199, %v10640
      %v11233 = vsel %vm7936, %v7200, %v10642
      %v11234 = vsel %vm7936, %v7201, %v10642
      %v11235 = vsel %vm7936, %v7202, %v10642
      %v11236 = vsel %vm7936, %v7203, %v10642
      %v11237 = vsel %vm7936, %v7204, %v10644
      %v11238 = vsel %vm7936, %v7205, %v10644
      %v11239 = vsel %vm7936, %v7206, %v10644
      %v11240 = vsel %vm7936, %v7207, %v10644
      %v11241 = vsel %vm7936, %v7208, %v10646
      %v11242 = vsel %vm7936, %v7209, %v10646
      %v11243 = vsel %vm7936, %v7210, %v10646
      %v11244 = vsel %vm7936, %v7211, %v10646
      %v11245 = vsel %vm7936, %v7212, %v10648
      %v11246 = vsel %vm7936, %v7213, %v10648
      %v11247 = vsel %vm7936, %v7214, %v10648
      %v11248 = vsel %vm7936, %v7215, %v10648
      %v11249 = vsel %vm7936, %v7216, %v10650
      %v11250 = vsel %vm7936, %v7217, %v10650
      %v11251 = vsel %vm7936, %v7218, %v10650
      %v11252 = vsel %vm7936, %v7219, %v10650
      %v11253 = vsel %vm7936, %v7220, %v10652
      %v11254 = vsel %vm7936, %v7221, %v10652
      %v11255 = vsel %vm7936, %v7222, %v10652
      %v11256 = vsel %vm7936, %v7223, %v10652
      %v11257 = vsel %vm7936, %v7224, %v10654
      %v11258 = vsel %vm7936, %v7225, %v10654
      %v11259 = vsel %vm7936, %v7226, %v10654
      %v11260 = vsel %vm7936, %v7227, %v10654
      %v11261 = vsel %vm7936, %v7228, %v10656
      %v11262 = vsel %vm7936, %v7229, %v10656
      %v11263 = vsel %vm7936, %v7230, %v10656
      %v11264 = vsel %vm7936, %v7231, %v10656
      %v11265 = vsel %vm7936, %v7232, %v10658
      %v11266 = vsel %vm7936, %v7233, %v10658
      %v11267 = vsel %vm7936, %v7234, %v10658
      %v11268 = vsel %vm7936, %v7235, %v10658
      %v11269 = vsel %vm7936, %v7236, %v10660
      %v11270 = vsel %vm7936, %v7237, %v10660
      %v11271 = vsel %vm7936, %v7238, %v10660
      %v11272 = vsel %vm7936, %v7239, %v10660
      %v11273 = vsel %vm7936, %v7240, %v10662
      %v11274 = vsel %vm7936, %v7241, %v10662
      %v11275 = vsel %vm7936, %v7242, %v10662
      %v11276 = vsel %vm7936, %v7243, %v10662
      %v11277 = vsel %vm7936, %v7244, %v10664
      %v11278 = vsel %vm7936, %v7245, %v10664
      %v11279 = vsel %vm7936, %v7246, %v10664
      %v11280 = vsel %vm7936, %v7247, %v10664
      %v11281 = vsel %vm7936, %v7248, %v10666
      %v11282 = vsel %vm7936, %v7249, %v10666
      %v11283 = vsel %vm7936, %v7250, %v10666
      %v11284 = vsel %vm7936, %v7251, %v10666
      %v11285 = vsel %vm7936, %v7252, %v10668
      %v11286 = vsel %vm7936, %v7253, %v10668
      %v11287 = vsel %vm7936, %v7254, %v10668
      %v11288 = vsel %vm7936, %v7255, %v10668
      %v11289 = vsel %vm7936, %v7256, %v10670
      %v11290 = vsel %vm7936, %v7257, %v10670
      %v11291 = vsel %vm7936, %v7258, %v10670
      %v11292 = vsel %vm7936, %v7259, %v10670
      %v11293 = vsel %vm7936, %v7260, %v10672
      %v11294 = vsel %vm7936, %v7261, %v10672
      %v11295 = vsel %vm7936, %v7262, %v10672
      %v11296 = vsel %vm7936, %v7263, %v10672
      %v11297 = vsel %vm7936, %v7264, %v10674
      %v11298 = vsel %vm7936, %v7265, %v10674
      %v11299 = vsel %vm7936, %v7266, %v10674
      %v11300 = vsel %vm7936, %v7267, %v10674
      %v11301 = vsel %vm7936, %v7268, %v10676
      %v11302 = vsel %vm7936, %v7269, %v10676
      %v11303 = vsel %vm7936, %v7270, %v10676
      %v11304 = vsel %vm7936, %v7271, %v10676
      %v11305 = vsel %vm7936, %v7272, %v10678
      %v11306 = vsel %vm7936, %v7273, %v10678
      %v11307 = vsel %vm7936, %v7274, %v10678
      %v11308 = vsel %vm7936, %v7275, %v10678
      %v11309 = vsel %vm7936, %v7276, %v10680
      %v11310 = vsel %vm7936, %v7277, %v10680
      %v11311 = vsel %vm7936, %v7278, %v10680
      %v11312 = vsel %vm7936, %v7279, %v10680
      %v11313 = vsel %vm7936, %v7280, %v10682
      %v11314 = vsel %vm7936, %v7281, %v10682
      %v11315 = vsel %vm7936, %v7282, %v10682
      %v11316 = vsel %vm7936, %v7283, %v10682
      %v11317 = vsel %vm7936, %v7284, %v10684
      %v11318 = vsel %vm7936, %v7285, %v10684
      %v11319 = vsel %vm7936, %v7286, %v10684
      %v11320 = vsel %vm7936, %v7287, %v10684
      %v11321 = vsel %vm7936, %v7288, %v10686
      %v11322 = vsel %vm7936, %v7289, %v10686
      %v11323 = vsel %vm7936, %v7290, %v10686
      %v11324 = vsel %vm7936, %v7291, %v10686
      %v11325 = vsel %vm7936, %v7292, %v10688
      %v11326 = vsel %vm7936, %v7293, %v10688
      %v11327 = vsel %vm7936, %v7294, %v10688
      %v11328 = vsel %vm7936, %v7295, %v10688
      %v11329 = vsel %vm7936, %v7296, %v10690
      %v11330 = vsel %vm7936, %v7297, %v10690
      %v11331 = vsel %vm7936, %v7298, %v10690
      %v11332 = vsel %vm7936, %v7299, %v10690
      %v11333 = vsel %vm7936, %v7300, %v10692
      %v11334 = vsel %vm7936, %v7301, %v10692
      %v11335 = vsel %vm7936, %v7302, %v10692
      %v11336 = vsel %vm7936, %v7303, %v10692
      %v11337 = vsel %vm7936, %v7304, %v10694
      %v11338 = vsel %vm7936, %v7305, %v10694
      %v11339 = vsel %vm7936, %v7306, %v10694
      %v11340 = vsel %vm7936, %v7307, %v10694
      %v11341 = vsel %vm7936, %v7308, %v10696
      %v11342 = vsel %vm7936, %v7309, %v10696
      %v11343 = vsel %vm7936, %v7310, %v10696
      %v11344 = vsel %vm7936, %v7311, %v10696
      %v11345 = vsel %vm7936, %v7312, %v10698
      %v11346 = vsel %vm7936, %v7313, %v10698
      %v11347 = vsel %vm7936, %v7314, %v10698
      %v11348 = vsel %vm7936, %v7315, %v10698
      %v11349 = vsel %vm7936, %v7316, %v10700
      %v11350 = vsel %vm7936, %v7317, %v10700
      %v11351 = vsel %vm7936, %v7318, %v10700
      %v11352 = vsel %vm7936, %v7319, %v10700
      %v11353 = vsel %vm7936, %v7320, %v10702
      %v11354 = vsel %vm7936, %v7321, %v10702
      %v11355 = vsel %vm7936, %v7322, %v10702
      %v11356 = vsel %vm7936, %v7323, %v10702
      %v11357 = vsel %vm7936, %v7324, %v10704
      %v11358 = vsel %vm7936, %v7325, %v10704
      %v11359 = vsel %vm7936, %v7326, %v10704
      %v11360 = vsel %vm7936, %v7327, %v10704
      %v11361 = vsel %vm7936, %v7328, %v10706
      %v11362 = vsel %vm7936, %v7329, %v10706
      %v11363 = vsel %vm7936, %v7330, %v10706
      %v11364 = vsel %vm7936, %v7331, %v10706
      %v11365 = vsel %vm7936, %v7332, %v10708
      %v11366 = vsel %vm7936, %v7333, %v10708
      %v11367 = vsel %vm7936, %v7334, %v10708
      %v11368 = vsel %vm7936, %v7335, %v10708
      %v11369 = vsel %vm7936, %v7336, %v10710
      %v11370 = vsel %vm7936, %v7337, %v10710
      %v11371 = vsel %vm7936, %v7338, %v10710
      %v11372 = vsel %vm7936, %v7339, %v10710
      %v11373 = vsel %vm7936, %v7340, %v10712
      %v11374 = vsel %vm7936, %v7341, %v10712
      %v11375 = vsel %vm7936, %v7342, %v10712
      %v11376 = vsel %vm7936, %v7343, %v10712
      %v11377 = vsel %vm7936, %v7344, %v10714
      %v11378 = vsel %vm7936, %v7345, %v10714
      %v11379 = vsel %vm7936, %v7346, %v10714
      %v11380 = vsel %vm7936, %v7347, %v10714
      %v11381 = vsel %vm7936, %v7348, %v10716
      %v11382 = vsel %vm7936, %v7349, %v10716
      %v11383 = vsel %vm7936, %v7350, %v10716
      %v11384 = vsel %vm7936, %v7351, %v10716
      %v11385 = vsel %vm7936, %v7352, %v10718
      %v11386 = vsel %vm7936, %v7353, %v10718
      %v11387 = vsel %vm7936, %v7354, %v10718
      %v11388 = vsel %vm7936, %v7355, %v10718
      %v11389 = vsel %vm7936, %v7356, %v10720
      %v11390 = vsel %vm7936, %v7357, %v10720
      %v11391 = vsel %vm7936, %v7358, %v10720
      %v11392 = vsel %vm7936, %v7359, %v10720
      %v11393 = vsel %vm7936, %v7360, %v10722
      %v11394 = vsel %vm7936, %v7361, %v10722
      %v11395 = vsel %vm7936, %v7362, %v10722
      %v11396 = vsel %vm7936, %v7363, %v10722
      %v11397 = vsel %vm7936, %v7364, %v10724
      %v11398 = vsel %vm7936, %v7365, %v10724
      %v11399 = vsel %vm7936, %v7366, %v10724
      %v11400 = vsel %vm7936, %v7367, %v10724
      %v11401 = vsel %vm7936, %v7368, %v10726
      %v11402 = vsel %vm7936, %v7369, %v10726
      %v11403 = vsel %vm7936, %v7370, %v10726
      %v11404 = vsel %vm7936, %v7371, %v10726
      %v11405 = vsel %vm7936, %v7372, %v10728
      %v11406 = vsel %vm7936, %v7373, %v10728
      %v11407 = vsel %vm7936, %v7374, %v10728
      %v11408 = vsel %vm7936, %v7375, %v10728
      %v11409 = vsel %vm7936, %v7376, %v10730
      %v11410 = vsel %vm7936, %v7377, %v10730
      %v11411 = vsel %vm7936, %v7378, %v10730
      %v11412 = vsel %vm7936, %v7379, %v10730
      %v11413 = vsel %vm7936, %v7380, %v10732
      %v11414 = vsel %vm7936, %v7381, %v10732
      %v11415 = vsel %vm7936, %v7382, %v10732
      %v11416 = vsel %vm7936, %v7383, %v10732
      %v11417 = vsel %vm7936, %v7384, %v10734
      %v11418 = vsel %vm7936, %v7385, %v10734
      %v11419 = vsel %vm7936, %v7386, %v10734
      %v11420 = vsel %vm7936, %v7387, %v10734
      %v11421 = vsel %vm7936, %v7388, %v10736
      %v11422 = vsel %vm7936, %v7389, %v10736
      %v11423 = vsel %vm7936, %v7390, %v10736
      %v11424 = vsel %vm7936, %v7391, %v10736
      %v11425 = vsel %vm7936, %v7392, %v10738
      %v11426 = vsel %vm7936, %v7393, %v10738
      %v11427 = vsel %vm7936, %v7394, %v10738
      %v11428 = vsel %vm7936, %v7395, %v10738
      %v11429 = vsel %vm7936, %v7396, %v10740
      %v11430 = vsel %vm7936, %v7397, %v10740
      %v11431 = vsel %vm7936, %v7398, %v10740
      %v11432 = vsel %vm7936, %v7399, %v10740
      %v11433 = vsel %vm7936, %v7400, %v10742
      %v11434 = vsel %vm7936, %v7401, %v10742
      %v11435 = vsel %vm7936, %v7402, %v10742
      %v11436 = vsel %vm7936, %v7403, %v10742
      %v11437 = vsel %vm7936, %v7404, %v10744
      %v11438 = vsel %vm7936, %v7405, %v10744
      %v11439 = vsel %vm7936, %v7406, %v10744
      %v11440 = vsel %vm7936, %v7407, %v10744
      %v11441 = vsel %vm7936, %v7408, %v10746
      %v11442 = vsel %vm7936, %v7409, %v10746
      %v11443 = vsel %vm7936, %v7410, %v10746
      %v11444 = vsel %vm7936, %v7411, %v10746
      %v11445 = vsel %vm7936, %v7412, %v10748
      %v11446 = vsel %vm7936, %v7413, %v10748
      %v11447 = vsel %vm7936, %v7414, %v10748
      %v11448 = vsel %vm7936, %v7415, %v10748
      %v11449 = vsel %vm7936, %v7416, %v10750
      %v11450 = vsel %vm7936, %v7417, %v10750
      %v11451 = vsel %vm7936, %v7418, %v10750
      %v11452 = vsel %vm7936, %v7419, %v10750
      %v11453 = vsel %vm7936, %v7420, %v10752
      %v11454 = vsel %vm7936, %v7421, %v10752
      %v11455 = vsel %vm7936, %v7422, %v10752
      %v11456 = vsel %vm7936, %v7423, %v10752
      %v11457 = vsel %vm7936, %v7424, %v10754
      %v11458 = vsel %vm7936, %v7425, %v10754
      %v11459 = vsel %vm7936, %v7426, %v10754
      %v11460 = vsel %vm7936, %v7427, %v10754
      %v11461 = vsel %vm7936, %v7428, %v10756
      %v11462 = vsel %vm7936, %v7429, %v10756
      %v11463 = vsel %vm7936, %v7430, %v10756
      %v11464 = vsel %vm7936, %v7431, %v10756
      %v11465 = vsel %vm7936, %v7432, %v10758
      %v11466 = vsel %vm7936, %v7433, %v10758
      %v11467 = vsel %vm7936, %v7434, %v10758
      %v11468 = vsel %vm7936, %v7435, %v10758
      %v11469 = vsel %vm7936, %v7436, %v10760
      %v11470 = vsel %vm7936, %v7437, %v10760
      %v11471 = vsel %vm7936, %v7438, %v10760
      %v11472 = vsel %vm7936, %v7439, %v10760
      %v11473 = vsel %vm7936, %v7440, %v10762
      %v11474 = vsel %vm7936, %v7441, %v10762
      %v11475 = vsel %vm7936, %v7442, %v10762
      %v11476 = vsel %vm7936, %v7443, %v10762
      %v11477 = vsel %vm7936, %v7444, %v10764
      %v11478 = vsel %vm7936, %v7445, %v10764
      %v11479 = vsel %vm7936, %v7446, %v10764
      %v11480 = vsel %vm7936, %v7447, %v10764
      %v11481 = vsel %vm7936, %v7448, %v10766
      %v11482 = vsel %vm7936, %v7449, %v10766
      %v11483 = vsel %vm7936, %v7450, %v10766
      %v11484 = vsel %vm7936, %v7451, %v10766
      %v11485 = vsel %vm7936, %v7452, %v10768
      %v11486 = vsel %vm7936, %v7453, %v10768
      %v11487 = vsel %vm7936, %v7454, %v10768
      %v11488 = vsel %vm7936, %v7455, %v10768
      %v11489 = vsel %vm7936, %v7456, %v10770
      %v11490 = vsel %vm7936, %v7457, %v10770
      %v11491 = vsel %vm7936, %v7458, %v10770
      %v11492 = vsel %vm7936, %v7459, %v10770
      %v11493 = vsel %vm7936, %v7460, %v10772
      %v11494 = vsel %vm7936, %v7461, %v10772
      %v11495 = vsel %vm7936, %v7462, %v10772
      %v11496 = vsel %vm7936, %v7463, %v10772
      %v11497 = vsel %vm7936, %v7464, %v10774
      %v11498 = vsel %vm7936, %v7465, %v10774
      %v11499 = vsel %vm7936, %v7466, %v10774
      %v11500 = vsel %vm7936, %v7467, %v10774
      %v11501 = vsel %vm7936, %v7468, %v10776
      %v11502 = vsel %vm7936, %v7469, %v10776
      %v11503 = vsel %vm7936, %v7470, %v10776
      %v11504 = vsel %vm7936, %v7471, %v10776
      %v11505 = vsel %vm7936, %v7472, %v10778
      %v11506 = vsel %vm7936, %v7473, %v10778
      %v11507 = vsel %vm7936, %v7474, %v10778
      %v11508 = vsel %vm7936, %v7475, %v10778
      %v11509 = vsel %vm7936, %v7476, %v10780
      %v11510 = vsel %vm7936, %v7477, %v10780
      %v11511 = vsel %vm7936, %v7478, %v10780
      %v11512 = vsel %vm7936, %v7479, %v10780
      %v11513 = vsel %vm7936, %v7480, %v10782
      %v11514 = vsel %vm7936, %v7481, %v10782
      %v11515 = vsel %vm7936, %v7482, %v10782
      %v11516 = vsel %vm7936, %v7483, %v10782
      %v11517 = vsel %vm7936, %v7484, %v10784
      %v11518 = vsel %vm7936, %v7485, %v10784
      %v11519 = vsel %vm7936, %v7486, %v10784
      %v11520 = vsel %vm7936, %v7487, %v10784
      %v11521 = vsel %vm7936, %v7488, %v10786
      %v11522 = vsel %vm7936, %v7489, %v10786
      %v11523 = vsel %vm7936, %v7490, %v10786
      %v11524 = vsel %vm7936, %v7491, %v10786
      %v11525 = vsel %vm7936, %v7492, %v10788
      %v11526 = vsel %vm7936, %v7493, %v10788
      %v11527 = vsel %vm7936, %v7494, %v10788
      %v11528 = vsel %vm7936, %v7495, %v10788
      %v11529 = vsel %vm7936, %v7496, %v10790
      %v11530 = vsel %vm7936, %v7497, %v10790
      %v11531 = vsel %vm7936, %v7498, %v10790
      %v11532 = vsel %vm7936, %v7499, %v10790
      %v11533 = vsel %vm7936, %v7500, %v10792
      %v11534 = vsel %vm7936, %v7501, %v10792
      %v11535 = vsel %vm7936, %v7502, %v10792
      %v11536 = vsel %vm7936, %v7503, %v10792
      %v11537 = vsel %vm7936, %v7504, %v10794
      %v11538 = vsel %vm7936, %v7505, %v10794
      %v11539 = vsel %vm7936, %v7506, %v10794
      %v11540 = vsel %vm7936, %v7507, %v10794
      %v11541 = vsel %vm7936, %v7508, %v10796
      %v11542 = vsel %vm7936, %v7509, %v10796
      %v11543 = vsel %vm7936, %v7510, %v10796
      %v11544 = vsel %vm7936, %v7511, %v10796
      %v11545 = vsel %vm7936, %v7512, %v10798
      %v11546 = vsel %vm7936, %v7513, %v10798
      %v11547 = vsel %vm7936, %v7514, %v10798
      %v11548 = vsel %vm7936, %v7515, %v10798
      %v11549 = vsel %vm7936, %v7516, %v10800
      %v11550 = vsel %vm7936, %v7517, %v10800
      %v11551 = vsel %vm7936, %v7518, %v10800
      %v11552 = vsel %vm7936, %v7519, %v10800
      %v11553 = vsel %vm7936, %v7520, %v10802
      %v11554 = vsel %vm7936, %v7521, %v10802
      %v11555 = vsel %vm7936, %v7522, %v10802
      %v11556 = vsel %vm7936, %v7523, %v10802
      %v11557 = vsel %vm7936, %v7524, %v10804
      %v11558 = vsel %vm7936, %v7525, %v10804
      %v11559 = vsel %vm7936, %v7526, %v10804
      %v11560 = vsel %vm7936, %v7527, %v10804
      %v11561 = vsel %vm7936, %v7528, %v10806
      %v11562 = vsel %vm7936, %v7529, %v10806
      %v11563 = vsel %vm7936, %v7530, %v10806
      %v11564 = vsel %vm7936, %v7531, %v10806
      %v11565 = vsel %vm7936, %v7532, %v10808
      %v11566 = vsel %vm7936, %v7533, %v10808
      %v11567 = vsel %vm7936, %v7534, %v10808
      %v11568 = vsel %vm7936, %v7535, %v10808
      %v11569 = vsel %vm7936, %v7536, %v10810
      %v11570 = vsel %vm7936, %v7537, %v10810
      %v11571 = vsel %vm7936, %v7538, %v10810
      %v11572 = vsel %vm7936, %v7539, %v10810
      %v11573 = vsel %vm7936, %v7540, %v10812
      %v11574 = vsel %vm7936, %v7541, %v10812
      %v11575 = vsel %vm7936, %v7542, %v10812
      %v11576 = vsel %vm7936, %v7543, %v10812
      %v11577 = vsel %vm7936, %v7544, %v10814
      %v11578 = vsel %vm7936, %v7545, %v10814
      %v11579 = vsel %vm7936, %v7546, %v10814
      %v11580 = vsel %vm7936, %v7547, %v10814
      %v11581 = vsel %vm7936, %v7548, %v10816
      %v11582 = vsel %vm7936, %v7549, %v10816
      %v11583 = vsel %vm7936, %v7550, %v10816
      %v11584 = vsel %vm7936, %v7551, %v10816
      %v11585 = vsel %vm7936, %v7552, %v10818
      %v11586 = vsel %vm7936, %v7553, %v10818
      %v11587 = vsel %vm7936, %v7554, %v10818
      %v11588 = vsel %vm7936, %v7555, %v10818
      %v11589 = vsel %vm7936, %v7556, %v10820
      %v11590 = vsel %vm7936, %v7557, %v10820
      %v11591 = vsel %vm7936, %v7558, %v10820
      %v11592 = vsel %vm7936, %v7559, %v10820
      %v11593 = vsel %vm7936, %v7560, %v10822
      %v11594 = vsel %vm7936, %v7561, %v10822
      %v11595 = vsel %vm7936, %v7562, %v10822
      %v11596 = vsel %vm7936, %v7563, %v10822
      %v11597 = vsel %vm7936, %v7564, %v10824
      %v11598 = vsel %vm7936, %v7565, %v10824
      %v11599 = vsel %vm7936, %v7566, %v10824
      %v11600 = vsel %vm7936, %v7567, %v10824
      %v11601 = vsel %vm7936, %v7568, %v10826
      %v11602 = vsel %vm7936, %v7569, %v10826
      %v11603 = vsel %vm7936, %v7570, %v10826
      %v11604 = vsel %vm7936, %v7571, %v10826
      %v11605 = vsel %vm7936, %v7572, %v10828
      %v11606 = vsel %vm7936, %v7573, %v10828
      %v11607 = vsel %vm7936, %v7574, %v10828
      %v11608 = vsel %vm7936, %v7575, %v10828
      %v11609 = vsel %vm7936, %v7576, %v10830
      %v11610 = vsel %vm7936, %v7577, %v10830
      %v11611 = vsel %vm7936, %v7578, %v10830
      %v11612 = vsel %vm7936, %v7579, %v10830
      %v11613 = vsel %vm7936, %v7580, %v10832
      %v11614 = vsel %vm7936, %v7581, %v10832
      %v11615 = vsel %vm7936, %v7582, %v10832
      %v11616 = vsel %vm7936, %v7583, %v10832
      %v11617 = vsel %vm7936, %v7584, %v10834
      %v11618 = vsel %vm7936, %v7585, %v10834
      %v11619 = vsel %vm7936, %v7586, %v10834
      %v11620 = vsel %vm7936, %v7587, %v10834
      %v11621 = vsel %vm7936, %v7588, %v10836
      %v11622 = vsel %vm7936, %v7589, %v10836
      %v11623 = vsel %vm7936, %v7590, %v10836
      %v11624 = vsel %vm7936, %v7591, %v10836
      %v11625 = vsel %vm7936, %v7592, %v10838
      %v11626 = vsel %vm7936, %v7593, %v10838
      %v11627 = vsel %vm7936, %v7594, %v10838
      %v11628 = vsel %vm7936, %v7595, %v10838
      %v11629 = vsel %vm7936, %v7596, %v10840
      %v11630 = vsel %vm7936, %v7597, %v10840
      %v11631 = vsel %vm7936, %v7598, %v10840
      %v11632 = vsel %vm7936, %v7599, %v10840
      %v11633 = vsel %vm7936, %v7600, %v10842
      %v11634 = vsel %vm7936, %v7601, %v10842
      %v11635 = vsel %vm7936, %v7602, %v10842
      %v11636 = vsel %vm7936, %v7603, %v10842
      %v11637 = vsel %vm7936, %v7604, %v10844
      %v11638 = vsel %vm7936, %v7605, %v10844
      %v11639 = vsel %vm7936, %v7606, %v10844
      %v11640 = vsel %vm7936, %v7607, %v10844
      %v11641 = vsel %vm7936, %v7608, %v10846
      %v11642 = vsel %vm7936, %v7609, %v10846
      %v11643 = vsel %vm7936, %v7610, %v10846
      %v11644 = vsel %vm7936, %v7611, %v10846
      %v11645 = vsel %vm7936, %v7612, %v10848
      %v11646 = vsel %vm7936, %v7613, %v10848
      %v11647 = vsel %vm7936, %v7614, %v10848
      %v11648 = vsel %vm7936, %v7615, %v10848
      %v11649 = vsel %vm7936, %v7616, %v10850
      %v11650 = vsel %vm7936, %v7617, %v10850
      %v11651 = vsel %vm7936, %v7618, %v10850
      %v11652 = vsel %vm7936, %v7619, %v10850
      %v11653 = vsel %vm7936, %v7620, %v10852
      %v11654 = vsel %vm7936, %v7621, %v10852
      %v11655 = vsel %vm7936, %v7622, %v10852
      %v11656 = vsel %vm7936, %v7623, %v10852
      %v11657 = vsel %vm7936, %v7624, %v10854
      %v11658 = vsel %vm7936, %v7625, %v10854
      %v11659 = vsel %vm7936, %v7626, %v10854
      %v11660 = vsel %vm7936, %v7627, %v10854
      %v11661 = vsel %vm7936, %v7628, %v10856
      %v11662 = vsel %vm7936, %v7629, %v10856
      %v11663 = vsel %vm7936, %v7630, %v10856
      %v11664 = vsel %vm7936, %v7631, %v10856
      %v11665 = vsel %vm7936, %v7632, %v10858
      %v11666 = vsel %vm7936, %v7633, %v10858
      %v11667 = vsel %vm7936, %v7634, %v10858
      %v11668 = vsel %vm7936, %v7635, %v10858
      %v11669 = vsel %vm7936, %v7636, %v10860
      %v11670 = vsel %vm7936, %v7637, %v10860
      %v11671 = vsel %vm7936, %v7638, %v10860
      %v11672 = vsel %vm7936, %v7639, %v10860
      %v11673 = vsel %vm7936, %v7640, %v10862
      %v11674 = vsel %vm7936, %v7641, %v10862
      %v11675 = vsel %vm7936, %v7642, %v10862
      %v11676 = vsel %vm7936, %v7643, %v10862
      %v11677 = vsel %vm7936, %v7644, %v10864
      %v11678 = vsel %vm7936, %v7645, %v10864
      %v11679 = vsel %vm7936, %v7646, %v10864
      %v11680 = vsel %vm7936, %v7647, %v10864
      %v11681 = vsel %vm7936, %v7648, %v10866
      %v11682 = vsel %vm7936, %v7649, %v10866
      %v11683 = vsel %vm7936, %v7650, %v10866
      %v11684 = vsel %vm7936, %v7651, %v10866
      %v11685 = vsel %vm7936, %v7652, %v10868
      %v11686 = vsel %vm7936, %v7653, %v10868
      %v11687 = vsel %vm7936, %v7654, %v10868
      %v11688 = vsel %vm7936, %v7655, %v10868
      %v11689 = vsel %vm7936, %v7656, %v10870
      %v11690 = vsel %vm7936, %v7657, %v10870
      %v11691 = vsel %vm7936, %v7658, %v10870
      %v11692 = vsel %vm7936, %v7659, %v10870
      %v11693 = vsel %vm7936, %v7660, %v10872
      %v11694 = vsel %vm7936, %v7661, %v10872
      %v11695 = vsel %vm7936, %v7662, %v10872
      %v11696 = vsel %vm7936, %v7663, %v10872
      %v11697 = vsel %vm7936, %v7664, %v10874
      %v11698 = vsel %vm7936, %v7665, %v10874
      %v11699 = vsel %vm7936, %v7666, %v10874
      %v11700 = vsel %vm7936, %v7667, %v10874
      %v11701 = vsel %vm7936, %v7668, %v10876
      %v11702 = vsel %vm7936, %v7669, %v10876
      %v11703 = vsel %vm7936, %v7670, %v10876
      %v11704 = vsel %vm7936, %v7671, %v10876
      %v11705 = vsel %vm7936, %v7672, %v10878
      %v11706 = vsel %vm7936, %v7673, %v10878
      %v11707 = vsel %vm7936, %v7674, %v10878
      %v11708 = vsel %vm7936, %v7675, %v10878
      %v11709 = vsel %vm7936, %v7676, %v10880
      %v11710 = vsel %vm7936, %v7677, %v10880
      %v11711 = vsel %vm7936, %v7678, %v10880
      %v11712 = vsel %vm7936, %v7679, %v10880
      %v11713 = vsel %vm7936, %v7680, %v10882
      %v11714 = vsel %vm7936, %v7681, %v10882
      %v11715 = vsel %vm7936, %v7682, %v10882
      %v11716 = vsel %vm7936, %v7683, %v10882
      %v11717 = vsel %vm7936, %v7684, %v10884
      %v11718 = vsel %vm7936, %v7685, %v10884
      %v11719 = vsel %vm7936, %v7686, %v10884
      %v11720 = vsel %vm7936, %v7687, %v10884
      %v11721 = vsel %vm7936, %v7688, %v10886
      %v11722 = vsel %vm7936, %v7689, %v10886
      %v11723 = vsel %vm7936, %v7690, %v10886
      %v11724 = vsel %vm7936, %v7691, %v10886
      %v11725 = vsel %vm7936, %v7692, %v10888
      %v11726 = vsel %vm7936, %v7693, %v10888
      %v11727 = vsel %vm7936, %v7694, %v10888
      %v11728 = vsel %vm7936, %v7695, %v10888
      %v11729 = vsel %vm7936, %v7696, %v10890
      %v11730 = vsel %vm7936, %v7697, %v10890
      %v11731 = vsel %vm7936, %v7698, %v10890
      %v11732 = vsel %vm7936, %v7699, %v10890
      %v11733 = vsel %vm7936, %v7700, %v10892
      %v11734 = vsel %vm7936, %v7701, %v10892
      %v11735 = vsel %vm7936, %v7702, %v10892
      %v11736 = vsel %vm7936, %v7703, %v10892
      %v11737 = vsel %vm7936, %v7704, %v10894
      %v11738 = vsel %vm7936, %v7705, %v10894
      %v11739 = vsel %vm7936, %v7706, %v10894
      %v11740 = vsel %vm7936, %v7707, %v10894
      %v11741 = vsel %vm7936, %v7708, %v10896
      %v11742 = vsel %vm7936, %v7709, %v10896
      %v11743 = vsel %vm7936, %v7710, %v10896
      %v11744 = vsel %vm7936, %v7711, %v10896
      %v11745 = vsel %vm7936, %v7712, %v10898
      %v11746 = vsel %vm7936, %v7713, %v10898
      %v11747 = vsel %vm7936, %v7714, %v10898
      %v11748 = vsel %vm7936, %v7715, %v10898
      %v11749 = vsel %vm7936, %v7716, %v10900
      %v11750 = vsel %vm7936, %v7717, %v10900
      %v11751 = vsel %vm7936, %v7718, %v10900
      %v11752 = vsel %vm7936, %v7719, %v10900
      %v11753 = vsel %vm7936, %v7720, %v10902
      %v11754 = vsel %vm7936, %v7721, %v10902
      %v11755 = vsel %vm7936, %v7722, %v10902
      %v11756 = vsel %vm7936, %v7723, %v10902
      %v11757 = vsel %vm7936, %v7724, %v10904
      %v11758 = vsel %vm7936, %v7725, %v10904
      %v11759 = vsel %vm7936, %v7726, %v10904
      %v11760 = vsel %vm7936, %v7727, %v10904
      %v11761 = vsel %vm7936, %v7728, %v10906
      %v11762 = vsel %vm7936, %v7729, %v10906
      %v11763 = vsel %vm7936, %v7730, %v10906
      %v11764 = vsel %vm7936, %v7731, %v10906
      %v11765 = vsel %vm7936, %v7732, %v10908
      %v11766 = vsel %vm7936, %v7733, %v10908
      %v11767 = vsel %vm7936, %v7734, %v10908
      %v11768 = vsel %vm7936, %v7735, %v10908
      %v11769 = vsel %vm7936, %v7736, %v10910
      %v11770 = vsel %vm7936, %v7737, %v10910
      %v11771 = vsel %vm7936, %v7738, %v10910
      %v11772 = vsel %vm7936, %v7739, %v10910
      %v11773 = vsel %vm7936, %v7740, %v10912
      %v11774 = vsel %vm7936, %v7741, %v10912
      %v11775 = vsel %vm7936, %v7742, %v10912
      %v11776 = vsel %vm7936, %v7743, %v10912
      %v11777 = vsel %vm7936, %v7744, %v10914
      %v11778 = vsel %vm7936, %v7745, %v10914
      %v11779 = vsel %vm7936, %v7746, %v10914
      %v11780 = vsel %vm7936, %v7747, %v10914
      %v11781 = vsel %vm7936, %v7748, %v10916
      %v11782 = vsel %vm7936, %v7749, %v10916
      %v11783 = vsel %vm7936, %v7750, %v10916
      %v11784 = vsel %vm7936, %v7751, %v10916
      %v11785 = vsel %vm7936, %v7752, %v10918
      %v11786 = vsel %vm7936, %v7753, %v10918
      %v11787 = vsel %vm7936, %v7754, %v10918
      %v11788 = vsel %vm7936, %v7755, %v10918
      %v11789 = vsel %vm7936, %v7756, %v10920
      %v11790 = vsel %vm7936, %v7757, %v10920
      %v11791 = vsel %vm7936, %v7758, %v10920
      %v11792 = vsel %vm7936, %v7759, %v10920
      %v11793 = vsel %vm7936, %v7760, %v10922
      %v11794 = vsel %vm7936, %v7761, %v10922
      %v11795 = vsel %vm7936, %v7762, %v10922
      %v11796 = vsel %vm7936, %v7763, %v10922
      %v11797 = vsel %vm7936, %v7764, %v10924
      %v11798 = vsel %vm7936, %v7765, %v10924
      %v11799 = vsel %vm7936, %v7766, %v10924
      %v11800 = vsel %vm7936, %v7767, %v10924
      %v11801 = vsel %vm7936, %v7768, %v10926
      %v11802 = vsel %vm7936, %v7769, %v10926
      %v11803 = vsel %vm7936, %v7770, %v10926
      %v11804 = vsel %vm7936, %v7771, %v10926
      %v11805 = vsel %vm7936, %v7772, %v10928
      %v11806 = vsel %vm7936, %v7773, %v10928
      %v11807 = vsel %vm7936, %v7774, %v10928
      %v11808 = vsel %vm7936, %v7775, %v10928
      %v11809 = vsel %vm7936, %v7776, %v10930
      %v11810 = vsel %vm7936, %v7777, %v10930
      %v11811 = vsel %vm7936, %v7778, %v10930
      %v11812 = vsel %vm7936, %v7779, %v10930
      %v11813 = vsel %vm7936, %v7780, %v10932
      %v11814 = vsel %vm7936, %v7781, %v10932
      %v11815 = vsel %vm7936, %v7782, %v10932
      %v11816 = vsel %vm7936, %v7783, %v10932
      %v11817 = vsel %vm7936, %v7784, %v10934
      %v11818 = vsel %vm7936, %v7785, %v10934
      %v11819 = vsel %vm7936, %v7786, %v10934
      %v11820 = vsel %vm7936, %v7787, %v10934
      %v11821 = vsel %vm7936, %v7788, %v10936
      %v11822 = vsel %vm7936, %v7789, %v10936
      %v11823 = vsel %vm7936, %v7790, %v10936
      %v11824 = vsel %vm7936, %v7791, %v10936
      %v11825 = vsel %vm7936, %v7792, %v10938
      %v11826 = vsel %vm7936, %v7793, %v10938
      %v11827 = vsel %vm7936, %v7794, %v10938
      %v11828 = vsel %vm7936, %v7795, %v10938
      %v11829 = vsel %vm7936, %v7796, %v10940
      %v11830 = vsel %vm7936, %v7797, %v10940
      %v11831 = vsel %vm7936, %v7798, %v10940
      %v11832 = vsel %vm7936, %v7799, %v10940
      %v11833 = vsel %vm7936, %v7800, %v10942
      %v11834 = vsel %vm7936, %v7801, %v10942
      %v11835 = vsel %vm7936, %v7802, %v10942
      %v11836 = vsel %vm7936, %v7803, %v10942
      %v11837 = vsel %vm7936, %v7804, %v10944
      %v11838 = vsel %vm7936, %v7805, %v10944
      %v11839 = vsel %vm7936, %v7806, %v10944
      %v11840 = vsel %vm7936, %v7807, %v10944
      %v11841 = vsel %vm7936, %v7808, %v10946
      %v11842 = vsel %vm7936, %v7809, %v10946
      %v11843 = vsel %vm7936, %v7810, %v10946
      %v11844 = vsel %vm7936, %v7811, %v10946
      %v11845 = vsel %vm7936, %v7812, %v10948
      %v11846 = vsel %vm7936, %v7813, %v10948
      %v11847 = vsel %vm7936, %v7814, %v10948
      %v11848 = vsel %vm7936, %v7815, %v10948
      %v11849 = vsel %vm7936, %v7816, %v10950
      %v11850 = vsel %vm7936, %v7817, %v10950
      %v11851 = vsel %vm7936, %v7818, %v10950
      %v11852 = vsel %vm7936, %v7819, %v10950
      %v11853 = vsel %vm7936, %v7820, %v10952
      %v11854 = vsel %vm7936, %v7821, %v10952
      %v11855 = vsel %vm7936, %v7822, %v10952
      %v11856 = vsel %vm7936, %v7823, %v10952
      %v11857 = vsel %vm7936, %v7824, %v10954
      %v11858 = vsel %vm7936, %v7825, %v10954
      %v11859 = vsel %vm7936, %v7826, %v10954
      %v11860 = vsel %vm7936, %v7827, %v10954
      %v11861 = vsel %vm7936, %v7828, %v10956
      %v11862 = vsel %vm7936, %v7829, %v10956
      %v11863 = vsel %vm7936, %v7830, %v10956
      %v11864 = vsel %vm7936, %v7831, %v10956
      %v11865 = vsel %vm7936, %v7832, %v10958
      %v11866 = vsel %vm7936, %v7833, %v10958
      %v11867 = vsel %vm7936, %v7834, %v10958
      %v11868 = vsel %vm7936, %v7835, %v10958
      %v11869 = vsel %vm7936, %v7836, %v10960
      %v11870 = vsel %vm7936, %v7837, %v10960
      %v11871 = vsel %vm7936, %v7838, %v10960
      %v11872 = vsel %vm7936, %v7839, %v10960
      %v11873 = vsel %vm7936, %v7840, %v10962
      %v11874 = vsel %vm7936, %v7841, %v10962
      %v11875 = vsel %vm7936, %v7842, %v10962
      %v11876 = vsel %vm7936, %v7843, %v10962
      %v11877 = vsel %vm7936, %v7844, %v10964
      %v11878 = vsel %vm7936, %v7845, %v10964
      %v11879 = vsel %vm7936, %v7846, %v10964
      %v11880 = vsel %vm7936, %v7847, %v10964
      %v11881 = vsel %vm7936, %v7848, %v10966
      %v11882 = vsel %vm7936, %v7849, %v10966
      %v11883 = vsel %vm7936, %v7850, %v10966
      %v11884 = vsel %vm7936, %v7851, %v10966
      %v11885 = vsel %vm7936, %v7852, %v10968
      %v11886 = vsel %vm7936, %v7853, %v10968
      %v11887 = vsel %vm7936, %v7854, %v10968
      %v11888 = vsel %vm7936, %v7855, %v10968
      %v11889 = vsel %vm7936, %v7856, %v10970
      %v11890 = vsel %vm7936, %v7857, %v10970
      %v11891 = vsel %vm7936, %v7858, %v10970
      %v11892 = vsel %vm7936, %v7859, %v10970
      %v11893 = vsel %vm7936, %v7860, %v10972
      %v11894 = vsel %vm7936, %v7861, %v10972
      %v11895 = vsel %vm7936, %v7862, %v10972
      %v11896 = vsel %vm7936, %v7863, %v10972
      %v11897 = vsel %vm7936, %v7864, %v10974
      %v11898 = vsel %vm7936, %v7865, %v10974
      %v11899 = vsel %vm7936, %v7866, %v10974
      %v11900 = vsel %vm7936, %v7867, %v10974
      %v11901 = vsel %vm7936, %v7868, %v10976
      %v11902 = vsel %vm7936, %v7869, %v10976
      %v11903 = vsel %vm7936, %v7870, %v10976
      %v11904 = vsel %vm7936, %v7871, %v10976
      %v11905 = vsel %vm7936, %v7872, %v10978
      %v11906 = vsel %vm7936, %v7873, %v10978
      %v11907 = vsel %vm7936, %v7874, %v10978
      %v11908 = vsel %vm7936, %v7875, %v10978
      %v11909 = vsel %vm7936, %v7876, %v10980
      %v11910 = vsel %vm7936, %v7877, %v10980
      %v11911 = vsel %vm7936, %v7878, %v10980
      %v11912 = vsel %vm7936, %v7879, %v10980
      %v11913 = vsel %vm7936, %v7880, %v10982
      %v11914 = vsel %vm7936, %v7881, %v10982
      %v11915 = vsel %vm7936, %v7882, %v10982
      %v11916 = vsel %vm7936, %v7883, %v10982
      %v11917 = vsel %vm7936, %v7884, %v10984
      %v11918 = vsel %vm7936, %v7885, %v10984
      %v11919 = vsel %vm7936, %v7886, %v10984
      %v11920 = vsel %vm7936, %v7887, %v10984
      %v11921 = vsel %vm7936, %v7888, %v10986
      %v11922 = vsel %vm7936, %v7889, %v10986
      %v11923 = vsel %vm7936, %v7890, %v10986
      %v11924 = vsel %vm7936, %v7891, %v10986
      %v11925 = vsel %vm7936, %v7892, %v10988
      %v11926 = vsel %vm7936, %v7893, %v10988
      %v11927 = vsel %vm7936, %v7894, %v10988
      %v11928 = vsel %vm7936, %v7895, %v10988
      %v11929 = vsel %vm7936, %v7896, %v10990
      %v11930 = vsel %vm7936, %v7897, %v10990
      %v11931 = vsel %vm7936, %v7898, %v10990
      %v11932 = vsel %vm7936, %v7899, %v10990
      %v11933 = vsel %vm7936, %v7900, %v10992
      %v11934 = vsel %vm7936, %v7901, %v10992
      %v11935 = vsel %vm7936, %v7902, %v10992
      %v11936 = vsel %vm7936, %v7903, %v10992
      %v11937 = vsel %vm7936, %v7904, %v10994
      %v11938 = vsel %vm7936, %v7905, %v10994
      %v11939 = vsel %vm7936, %v7906, %v10994
      %v11940 = vsel %vm7936, %v7907, %v10994
      %v11941 = vsel %vm7936, %v7908, %v10996
      %v11942 = vsel %vm7936, %v7909, %v10996
      %v11943 = vsel %vm7936, %v7910, %v10996
      %v11944 = vsel %vm7936, %v7911, %v10996
      %v11945 = vsel %vm7936, %v7912, %v10998
      %v11946 = vsel %vm7936, %v7913, %v10998
      %v11947 = vsel %vm7936, %v7914, %v10998
      %v11948 = vsel %vm7936, %v7915, %v10998
      %v11949 = vsel %vm7936, %v7916, %v11000
      %v11950 = vsel %vm7936, %v7917, %v11000
      %v11951 = vsel %vm7936, %v7918, %v11000
      %v11952 = vsel %vm7936, %v7919, %v11000
      %v11953 = vsel %vm7936, %v7920, %v11002
      %v11954 = vsel %vm7936, %v7921, %v11002
      %v11955 = vsel %vm7936, %v7922, %v11002
      %v11956 = vsel %vm7936, %v7923, %v11002
      %v11957 = vsel %vm7936, %v7924, %v11004
      %v11958 = vsel %vm7936, %v7925, %v11004
      %v11959 = vsel %vm7936, %v7926, %v11004
      %v11960 = vsel %vm7936, %v7927, %v11004
      %v11961 = vsel %vm7936, %v7928, %v11006
      %v11962 = vsel %vm7936, %v7929, %v11006
      %v11963 = vsel %vm7936, %v7930, %v11006
      %v11964 = vsel %vm7936, %v7931, %v11006
      %v11965 = vsel %vm7936, %v7932, %v11008
      %v11966 = vsel %vm7936, %v7933, %v11008
      %v11967 = vsel %vm7936, %v7934, %v11008
      %v11968 = vsel %vm7936, %v7935, %v11008
      %vm11969 = vcmask 523264
      %11970 = vst.msk [vmem:[%s175] sm:$0xff] %vm11969, %v11201
      %11971 = vst.msk [vmem:[%s175 + $0x8] sm:$0xff] %vm11969, %v11202
      %11972 = vst.msk [vmem:[%s175 + $0x10] sm:$0xff] %vm11969, %v11203
      %11973 = vst.msk [vmem:[%s175 + $0x18] sm:$0xff] %vm11969, %v11204
      %11974 = vst.msk [vmem:[%s175 + $0x20] sm:$0xff] %vm11969, %v11205
      %11975 = vst.msk [vmem:[%s175 + $0x28] sm:$0xff] %vm11969, %v11206
      %11976 = vst.msk [vmem:[%s175 + $0x30] sm:$0xff] %vm11969, %v11207
      %11977 = vst.msk [vmem:[%s175 + $0x38] sm:$0xff] %vm11969, %v11208
      %11978 = vst.msk [vmem:[%s175 + $0x40] sm:$0xff] %vm11969, %v11209
      %11979 = vst.msk [vmem:[%s175 + $0x48] sm:$0xff] %vm11969, %v11210
      %11980 = vst.msk [vmem:[%s175 + $0x50] sm:$0xff] %vm11969, %v11211
      %11981 = vst.msk [vmem:[%s175 + $0x58] sm:$0xff] %vm11969, %v11212
      %11982 = vst.msk [vmem:[%s175 + $0x60] sm:$0xff] %vm11969, %v11213
      %11983 = vst.msk [vmem:[%s175 + $0x68] sm:$0xff] %vm11969, %v11214
      %11984 = vst.msk [vmem:[%s175 + $0x70] sm:$0xff] %vm11969, %v11215
      %11985 = vst.msk [vmem:[%s175 + $0x78] sm:$0xff] %vm11969, %v11216
      %11986 = vst.msk [vmem:[%s175 + $0x80] sm:$0xff] %vm11969, %v11217
      %11987 = vst.msk [vmem:[%s175 + $0x88] sm:$0xff] %vm11969, %v11218
      %11988 = vst.msk [vmem:[%s175 + $0x90] sm:$0xff] %vm11969, %v11219
      %11989 = vst.msk [vmem:[%s175 + $0x98] sm:$0xff] %vm11969, %v11220
      %11990 = vst.msk [vmem:[%s175 + $0xa0] sm:$0xff] %vm11969, %v11221
      %11991 = vst.msk [vmem:[%s175 + $0xa8] sm:$0xff] %vm11969, %v11222
      %11992 = vst.msk [vmem:[%s175 + $0xb0] sm:$0xff] %vm11969, %v11223
      %11993 = vst.msk [vmem:[%s175 + $0xb8] sm:$0xff] %vm11969, %v11224
      %11994 = vst.msk [vmem:[%s175 + $0xc0] sm:$0xff] %vm11969, %v11225
      %11995 = vst.msk [vmem:[%s175 + $0xc8] sm:$0xff] %vm11969, %v11226
      %11996 = vst.msk [vmem:[%s175 + $0xd0] sm:$0xff] %vm11969, %v11227
      %11997 = vst.msk [vmem:[%s175 + $0xd8] sm:$0xff] %vm11969, %v11228
      %11998 = vst.msk [vmem:[%s175 + $0xe0] sm:$0xff] %vm11969, %v11229
      %11999 = vst.msk [vmem:[%s175 + $0xe8] sm:$0xff] %vm11969, %v11230
      %12000 = vst.msk [vmem:[%s175 + $0xf0] sm:$0xff] %vm11969, %v11231
      %12001 = vst.msk [vmem:[%s175 + $0xf8] sm:$0xff] %vm11969, %v11232
      %12002 = vst.msk [vmem:[%s175 + $0x100] sm:$0xff] %vm11969, %v11233
      %12003 = vst.msk [vmem:[%s175 + $0x108] sm:$0xff] %vm11969, %v11234
      %12004 = vst.msk [vmem:[%s175 + $0x110] sm:$0xff] %vm11969, %v11235
      %12005 = vst.msk [vmem:[%s175 + $0x118] sm:$0xff] %vm11969, %v11236
      %12006 = vst.msk [vmem:[%s175 + $0x120] sm:$0xff] %vm11969, %v11237
      %12007 = vst.msk [vmem:[%s175 + $0x128] sm:$0xff] %vm11969, %v11238
      %12008 = vst.msk [vmem:[%s175 + $0x130] sm:$0xff] %vm11969, %v11239
      %12009 = vst.msk [vmem:[%s175 + $0x138] sm:$0xff] %vm11969, %v11240
      %12010 = vst.msk [vmem:[%s175 + $0x140] sm:$0xff] %vm11969, %v11241
      %12011 = vst.msk [vmem:[%s175 + $0x148] sm:$0xff] %vm11969, %v11242
      %12012 = vst.msk [vmem:[%s175 + $0x150] sm:$0xff] %vm11969, %v11243
      %12013 = vst.msk [vmem:[%s175 + $0x158] sm:$0xff] %vm11969, %v11244
      %12014 = vst.msk [vmem:[%s175 + $0x160] sm:$0xff] %vm11969, %v11245
      %12015 = vst.msk [vmem:[%s175 + $0x168] sm:$0xff] %vm11969, %v11246
      %12016 = vst.msk [vmem:[%s175 + $0x170] sm:$0xff] %vm11969, %v11247
      %12017 = vst.msk [vmem:[%s175 + $0x178] sm:$0xff] %vm11969, %v11248
      %12018 = vst.msk [vmem:[%s175 + $0x180] sm:$0xff] %vm11969, %v11249
      %12019 = vst.msk [vmem:[%s175 + $0x188] sm:$0xff] %vm11969, %v11250
      %12020 = vst.msk [vmem:[%s175 + $0x190] sm:$0xff] %vm11969, %v11251
      %12021 = vst.msk [vmem:[%s175 + $0x198] sm:$0xff] %vm11969, %v11252
      %12022 = vst.msk [vmem:[%s175 + $0x1a0] sm:$0xff] %vm11969, %v11253
      %12023 = vst.msk [vmem:[%s175 + $0x1a8] sm:$0xff] %vm11969, %v11254
      %12024 = vst.msk [vmem:[%s175 + $0x1b0] sm:$0xff] %vm11969, %v11255
      %12025 = vst.msk [vmem:[%s175 + $0x1b8] sm:$0xff] %vm11969, %v11256
      %12026 = vst.msk [vmem:[%s175 + $0x1c0] sm:$0xff] %vm11969, %v11257
      %12027 = vst.msk [vmem:[%s175 + $0x1c8] sm:$0xff] %vm11969, %v11258
      %12028 = vst.msk [vmem:[%s175 + $0x1d0] sm:$0xff] %vm11969, %v11259
      %12029 = vst.msk [vmem:[%s175 + $0x1d8] sm:$0xff] %vm11969, %v11260
      %12030 = vst.msk [vmem:[%s175 + $0x1e0] sm:$0xff] %vm11969, %v11261
      %12031 = vst.msk [vmem:[%s175 + $0x1e8] sm:$0xff] %vm11969, %v11262
      %12032 = vst.msk [vmem:[%s175 + $0x1f0] sm:$0xff] %vm11969, %v11263
      %12033 = vst.msk [vmem:[%s175 + $0x1f8] sm:$0xff] %vm11969, %v11264
      %12034 = vst.msk [vmem:[%s175 + $0x200] sm:$0xff] %vm11969, %v11265
      %12035 = vst.msk [vmem:[%s175 + $0x208] sm:$0xff] %vm11969, %v11266
      %12036 = vst.msk [vmem:[%s175 + $0x210] sm:$0xff] %vm11969, %v11267
      %12037 = vst.msk [vmem:[%s175 + $0x218] sm:$0xff] %vm11969, %v11268
      %12038 = vst.msk [vmem:[%s175 + $0x220] sm:$0xff] %vm11969, %v11269
      %12039 = vst.msk [vmem:[%s175 + $0x228] sm:$0xff] %vm11969, %v11270
      %12040 = vst.msk [vmem:[%s175 + $0x230] sm:$0xff] %vm11969, %v11271
      %12041 = vst.msk [vmem:[%s175 + $0x238] sm:$0xff] %vm11969, %v11272
      %12042 = vst.msk [vmem:[%s175 + $0x240] sm:$0xff] %vm11969, %v11273
      %12043 = vst.msk [vmem:[%s175 + $0x248] sm:$0xff] %vm11969, %v11274
      %12044 = vst.msk [vmem:[%s175 + $0x250] sm:$0xff] %vm11969, %v11275
      %12045 = vst.msk [vmem:[%s175 + $0x258] sm:$0xff] %vm11969, %v11276
      %12046 = vst.msk [vmem:[%s175 + $0x260] sm:$0xff] %vm11969, %v11277
      %12047 = vst.msk [vmem:[%s175 + $0x268] sm:$0xff] %vm11969, %v11278
      %12048 = vst.msk [vmem:[%s175 + $0x270] sm:$0xff] %vm11969, %v11279
      %12049 = vst.msk [vmem:[%s175 + $0x278] sm:$0xff] %vm11969, %v11280
      %12050 = vst.msk [vmem:[%s175 + $0x280] sm:$0xff] %vm11969, %v11281
      %12051 = vst.msk [vmem:[%s175 + $0x288] sm:$0xff] %vm11969, %v11282
      %12052 = vst.msk [vmem:[%s175 + $0x290] sm:$0xff] %vm11969, %v11283
      %12053 = vst.msk [vmem:[%s175 + $0x298] sm:$0xff] %vm11969, %v11284
      %12054 = vst.msk [vmem:[%s175 + $0x2a0] sm:$0xff] %vm11969, %v11285
      %12055 = vst.msk [vmem:[%s175 + $0x2a8] sm:$0xff] %vm11969, %v11286
      %12056 = vst.msk [vmem:[%s175 + $0x2b0] sm:$0xff] %vm11969, %v11287
      %12057 = vst.msk [vmem:[%s175 + $0x2b8] sm:$0xff] %vm11969, %v11288
      %12058 = vst.msk [vmem:[%s175 + $0x2c0] sm:$0xff] %vm11969, %v11289
      %12059 = vst.msk [vmem:[%s175 + $0x2c8] sm:$0xff] %vm11969, %v11290
      %12060 = vst.msk [vmem:[%s175 + $0x2d0] sm:$0xff] %vm11969, %v11291
      %12061 = vst.msk [vmem:[%s175 + $0x2d8] sm:$0xff] %vm11969, %v11292
      %12062 = vst.msk [vmem:[%s175 + $0x2e0] sm:$0xff] %vm11969, %v11293
      %12063 = vst.msk [vmem:[%s175 + $0x2e8] sm:$0xff] %vm11969, %v11294
      %12064 = vst.msk [vmem:[%s175 + $0x2f0] sm:$0xff] %vm11969, %v11295
      %12065 = vst.msk [vmem:[%s175 + $0x2f8] sm:$0xff] %vm11969, %v11296
      %12066 = vst.msk [vmem:[%s175 + $0x300] sm:$0xff] %vm11969, %v11297
      %12067 = vst.msk [vmem:[%s175 + $0x308] sm:$0xff] %vm11969, %v11298
      %12068 = vst.msk [vmem:[%s175 + $0x310] sm:$0xff] %vm11969, %v11299
      %12069 = vst.msk [vmem:[%s175 + $0x318] sm:$0xff] %vm11969, %v11300
      %12070 = vst.msk [vmem:[%s175 + $0x320] sm:$0xff] %vm11969, %v11301
      %12071 = vst.msk [vmem:[%s175 + $0x328] sm:$0xff] %vm11969, %v11302
      %12072 = vst.msk [vmem:[%s175 + $0x330] sm:$0xff] %vm11969, %v11303
      %12073 = vst.msk [vmem:[%s175 + $0x338] sm:$0xff] %vm11969, %v11304
      %12074 = vst.msk [vmem:[%s175 + $0x340] sm:$0xff] %vm11969, %v11305
      %12075 = vst.msk [vmem:[%s175 + $0x348] sm:$0xff] %vm11969, %v11306
      %12076 = vst.msk [vmem:[%s175 + $0x350] sm:$0xff] %vm11969, %v11307
      %12077 = vst.msk [vmem:[%s175 + $0x358] sm:$0xff] %vm11969, %v11308
      %12078 = vst.msk [vmem:[%s175 + $0x360] sm:$0xff] %vm11969, %v11309
      %12079 = vst.msk [vmem:[%s175 + $0x368] sm:$0xff] %vm11969, %v11310
      %12080 = vst.msk [vmem:[%s175 + $0x370] sm:$0xff] %vm11969, %v11311
      %12081 = vst.msk [vmem:[%s175 + $0x378] sm:$0xff] %vm11969, %v11312
      %12082 = vst.msk [vmem:[%s175 + $0x380] sm:$0xff] %vm11969, %v11313
      %12083 = vst.msk [vmem:[%s175 + $0x388] sm:$0xff] %vm11969, %v11314
      %12084 = vst.msk [vmem:[%s175 + $0x390] sm:$0xff] %vm11969, %v11315
      %12085 = vst.msk [vmem:[%s175 + $0x398] sm:$0xff] %vm11969, %v11316
      %12086 = vst.msk [vmem:[%s175 + $0x3a0] sm:$0xff] %vm11969, %v11317
      %12087 = vst.msk [vmem:[%s175 + $0x3a8] sm:$0xff] %vm11969, %v11318
      %12088 = vst.msk [vmem:[%s175 + $0x3b0] sm:$0xff] %vm11969, %v11319
      %12089 = vst.msk [vmem:[%s175 + $0x3b8] sm:$0xff] %vm11969, %v11320
      %12090 = vst.msk [vmem:[%s175 + $0x3c0] sm:$0xff] %vm11969, %v11321
      %12091 = vst.msk [vmem:[%s175 + $0x3c8] sm:$0xff] %vm11969, %v11322
      %12092 = vst.msk [vmem:[%s175 + $0x3d0] sm:$0xff] %vm11969, %v11323
      %12093 = vst.msk [vmem:[%s175 + $0x3d8] sm:$0xff] %vm11969, %v11324
      %12094 = vst.msk [vmem:[%s175 + $0x3e0] sm:$0xff] %vm11969, %v11325
      %12095 = vst.msk [vmem:[%s175 + $0x3e8] sm:$0xff] %vm11969, %v11326
      %12096 = vst.msk [vmem:[%s175 + $0x3f0] sm:$0xff] %vm11969, %v11327
      %12097 = vst.msk [vmem:[%s175 + $0x3f8] sm:$0xff] %vm11969, %v11328
      %12098 = vst.msk [vmem:[%s175 + $0x400] sm:$0xff] %vm11969, %v11329
      %12099 = vst.msk [vmem:[%s175 + $0x408] sm:$0xff] %vm11969, %v11330
      %12100 = vst.msk [vmem:[%s175 + $0x410] sm:$0xff] %vm11969, %v11331
      %12101 = vst.msk [vmem:[%s175 + $0x418] sm:$0xff] %vm11969, %v11332
      %12102 = vst.msk [vmem:[%s175 + $0x420] sm:$0xff] %vm11969, %v11333
      %12103 = vst.msk [vmem:[%s175 + $0x428] sm:$0xff] %vm11969, %v11334
      %12104 = vst.msk [vmem:[%s175 + $0x430] sm:$0xff] %vm11969, %v11335
      %12105 = vst.msk [vmem:[%s175 + $0x438] sm:$0xff] %vm11969, %v11336
      %12106 = vst.msk [vmem:[%s175 + $0x440] sm:$0xff] %vm11969, %v11337
      %12107 = vst.msk [vmem:[%s175 + $0x448] sm:$0xff] %vm11969, %v11338
      %12108 = vst.msk [vmem:[%s175 + $0x450] sm:$0xff] %vm11969, %v11339
      %12109 = vst.msk [vmem:[%s175 + $0x458] sm:$0xff] %vm11969, %v11340
      %12110 = vst.msk [vmem:[%s175 + $0x460] sm:$0xff] %vm11969, %v11341
      %12111 = vst.msk [vmem:[%s175 + $0x468] sm:$0xff] %vm11969, %v11342
      %12112 = vst.msk [vmem:[%s175 + $0x470] sm:$0xff] %vm11969, %v11343
      %12113 = vst.msk [vmem:[%s175 + $0x478] sm:$0xff] %vm11969, %v11344
      %12114 = vst.msk [vmem:[%s175 + $0x480] sm:$0xff] %vm11969, %v11345
      %12115 = vst.msk [vmem:[%s175 + $0x488] sm:$0xff] %vm11969, %v11346
      %12116 = vst.msk [vmem:[%s175 + $0x490] sm:$0xff] %vm11969, %v11347
      %12117 = vst.msk [vmem:[%s175 + $0x498] sm:$0xff] %vm11969, %v11348
      %12118 = vst.msk [vmem:[%s175 + $0x4a0] sm:$0xff] %vm11969, %v11349
      %12119 = vst.msk [vmem:[%s175 + $0x4a8] sm:$0xff] %vm11969, %v11350
      %12120 = vst.msk [vmem:[%s175 + $0x4b0] sm:$0xff] %vm11969, %v11351
      %12121 = vst.msk [vmem:[%s175 + $0x4b8] sm:$0xff] %vm11969, %v11352
      %12122 = vst.msk [vmem:[%s175 + $0x4c0] sm:$0xff] %vm11969, %v11353
      %12123 = vst.msk [vmem:[%s175 + $0x4c8] sm:$0xff] %vm11969, %v11354
      %12124 = vst.msk [vmem:[%s175 + $0x4d0] sm:$0xff] %vm11969, %v11355
      %12125 = vst.msk [vmem:[%s175 + $0x4d8] sm:$0xff] %vm11969, %v11356
      %12126 = vst.msk [vmem:[%s175 + $0x4e0] sm:$0xff] %vm11969, %v11357
      %12127 = vst.msk [vmem:[%s175 + $0x4e8] sm:$0xff] %vm11969, %v11358
      %12128 = vst.msk [vmem:[%s175 + $0x4f0] sm:$0xff] %vm11969, %v11359
      %12129 = vst.msk [vmem:[%s175 + $0x4f8] sm:$0xff] %vm11969, %v11360
      %12130 = vst.msk [vmem:[%s175 + $0x500] sm:$0xff] %vm11969, %v11361
      %12131 = vst.msk [vmem:[%s175 + $0x508] sm:$0xff] %vm11969, %v11362
      %12132 = vst.msk [vmem:[%s175 + $0x510] sm:$0xff] %vm11969, %v11363
      %12133 = vst.msk [vmem:[%s175 + $0x518] sm:$0xff] %vm11969, %v11364
      %12134 = vst.msk [vmem:[%s175 + $0x520] sm:$0xff] %vm11969, %v11365
      %12135 = vst.msk [vmem:[%s175 + $0x528] sm:$0xff] %vm11969, %v11366
      %12136 = vst.msk [vmem:[%s175 + $0x530] sm:$0xff] %vm11969, %v11367
      %12137 = vst.msk [vmem:[%s175 + $0x538] sm:$0xff] %vm11969, %v11368
      %12138 = vst.msk [vmem:[%s175 + $0x540] sm:$0xff] %vm11969, %v11369
      %12139 = vst.msk [vmem:[%s175 + $0x548] sm:$0xff] %vm11969, %v11370
      %12140 = vst.msk [vmem:[%s175 + $0x550] sm:$0xff] %vm11969, %v11371
      %12141 = vst.msk [vmem:[%s175 + $0x558] sm:$0xff] %vm11969, %v11372
      %12142 = vst.msk [vmem:[%s175 + $0x560] sm:$0xff] %vm11969, %v11373
      %12143 = vst.msk [vmem:[%s175 + $0x568] sm:$0xff] %vm11969, %v11374
      %12144 = vst.msk [vmem:[%s175 + $0x570] sm:$0xff] %vm11969, %v11375
      %12145 = vst.msk [vmem:[%s175 + $0x578] sm:$0xff] %vm11969, %v11376
      %12146 = vst.msk [vmem:[%s175 + $0x580] sm:$0xff] %vm11969, %v11377
      %12147 = vst.msk [vmem:[%s175 + $0x588] sm:$0xff] %vm11969, %v11378
      %12148 = vst.msk [vmem:[%s175 + $0x590] sm:$0xff] %vm11969, %v11379
      %12149 = vst.msk [vmem:[%s175 + $0x598] sm:$0xff] %vm11969, %v11380
      %12150 = vst.msk [vmem:[%s175 + $0x5a0] sm:$0xff] %vm11969, %v11381
      %12151 = vst.msk [vmem:[%s175 + $0x5a8] sm:$0xff] %vm11969, %v11382
      %12152 = vst.msk [vmem:[%s175 + $0x5b0] sm:$0xff] %vm11969, %v11383
      %12153 = vst.msk [vmem:[%s175 + $0x5b8] sm:$0xff] %vm11969, %v11384
      %12154 = vst.msk [vmem:[%s175 + $0x5c0] sm:$0xff] %vm11969, %v11385
      %12155 = vst.msk [vmem:[%s175 + $0x5c8] sm:$0xff] %vm11969, %v11386
      %12156 = vst.msk [vmem:[%s175 + $0x5d0] sm:$0xff] %vm11969, %v11387
      %12157 = vst.msk [vmem:[%s175 + $0x5d8] sm:$0xff] %vm11969, %v11388
      %12158 = vst.msk [vmem:[%s175 + $0x5e0] sm:$0xff] %vm11969, %v11389
      %12159 = vst.msk [vmem:[%s175 + $0x5e8] sm:$0xff] %vm11969, %v11390
      %12160 = vst.msk [vmem:[%s175 + $0x5f0] sm:$0xff] %vm11969, %v11391
      %12161 = vst.msk [vmem:[%s175 + $0x5f8] sm:$0xff] %vm11969, %v11392
      %12162 = vst.msk [vmem:[%s175 + $0x600] sm:$0xff] %vm11969, %v11393
      %12163 = vst.msk [vmem:[%s175 + $0x608] sm:$0xff] %vm11969, %v11394
      %12164 = vst.msk [vmem:[%s175 + $0x610] sm:$0xff] %vm11969, %v11395
      %12165 = vst.msk [vmem:[%s175 + $0x618] sm:$0xff] %vm11969, %v11396
      %12166 = vst.msk [vmem:[%s175 + $0x620] sm:$0xff] %vm11969, %v11397
      %12167 = vst.msk [vmem:[%s175 + $0x628] sm:$0xff] %vm11969, %v11398
      %12168 = vst.msk [vmem:[%s175 + $0x630] sm:$0xff] %vm11969, %v11399
      %12169 = vst.msk [vmem:[%s175 + $0x638] sm:$0xff] %vm11969, %v11400
      %12170 = vst.msk [vmem:[%s175 + $0x640] sm:$0xff] %vm11969, %v11401
      %12171 = vst.msk [vmem:[%s175 + $0x648] sm:$0xff] %vm11969, %v11402
      %12172 = vst.msk [vmem:[%s175 + $0x650] sm:$0xff] %vm11969, %v11403
      %12173 = vst.msk [vmem:[%s175 + $0x658] sm:$0xff] %vm11969, %v11404
      %12174 = vst.msk [vmem:[%s175 + $0x660] sm:$0xff] %vm11969, %v11405
      %12175 = vst.msk [vmem:[%s175 + $0x668] sm:$0xff] %vm11969, %v11406
      %12176 = vst.msk [vmem:[%s175 + $0x670] sm:$0xff] %vm11969, %v11407
      %12177 = vst.msk [vmem:[%s175 + $0x678] sm:$0xff] %vm11969, %v11408
      %12178 = vst.msk [vmem:[%s175 + $0x680] sm:$0xff] %vm11969, %v11409
      %12179 = vst.msk [vmem:[%s175 + $0x688] sm:$0xff] %vm11969, %v11410
      %12180 = vst.msk [vmem:[%s175 + $0x690] sm:$0xff] %vm11969, %v11411
      %12181 = vst.msk [vmem:[%s175 + $0x698] sm:$0xff] %vm11969, %v11412
      %12182 = vst.msk [vmem:[%s175 + $0x6a0] sm:$0xff] %vm11969, %v11413
      %12183 = vst.msk [vmem:[%s175 + $0x6a8] sm:$0xff] %vm11969, %v11414
      %12184 = vst.msk [vmem:[%s175 + $0x6b0] sm:$0xff] %vm11969, %v11415
      %12185 = vst.msk [vmem:[%s175 + $0x6b8] sm:$0xff] %vm11969, %v11416
      %12186 = vst.msk [vmem:[%s175 + $0x6c0] sm:$0xff] %vm11969, %v11417
      %12187 = vst.msk [vmem:[%s175 + $0x6c8] sm:$0xff] %vm11969, %v11418
      %12188 = vst.msk [vmem:[%s175 + $0x6d0] sm:$0xff] %vm11969, %v11419
      %12189 = vst.msk [vmem:[%s175 + $0x6d8] sm:$0xff] %vm11969, %v11420
      %12190 = vst.msk [vmem:[%s175 + $0x6e0] sm:$0xff] %vm11969, %v11421
      %12191 = vst.msk [vmem:[%s175 + $0x6e8] sm:$0xff] %vm11969, %v11422
      %12192 = vst.msk [vmem:[%s175 + $0x6f0] sm:$0xff] %vm11969, %v11423
      %12193 = vst.msk [vmem:[%s175 + $0x6f8] sm:$0xff] %vm11969, %v11424
      %12194 = vst.msk [vmem:[%s175 + $0x700] sm:$0xff] %vm11969, %v11425
      %12195 = vst.msk [vmem:[%s175 + $0x708] sm:$0xff] %vm11969, %v11426
      %12196 = vst.msk [vmem:[%s175 + $0x710] sm:$0xff] %vm11969, %v11427
      %12197 = vst.msk [vmem:[%s175 + $0x718] sm:$0xff] %vm11969, %v11428
      %12198 = vst.msk [vmem:[%s175 + $0x720] sm:$0xff] %vm11969, %v11429
      %12199 = vst.msk [vmem:[%s175 + $0x728] sm:$0xff] %vm11969, %v11430
      %12200 = vst.msk [vmem:[%s175 + $0x730] sm:$0xff] %vm11969, %v11431
      %12201 = vst.msk [vmem:[%s175 + $0x738] sm:$0xff] %vm11969, %v11432
      %12202 = vst.msk [vmem:[%s175 + $0x740] sm:$0xff] %vm11969, %v11433
      %12203 = vst.msk [vmem:[%s175 + $0x748] sm:$0xff] %vm11969, %v11434
      %12204 = vst.msk [vmem:[%s175 + $0x750] sm:$0xff] %vm11969, %v11435
      %12205 = vst.msk [vmem:[%s175 + $0x758] sm:$0xff] %vm11969, %v11436
      %12206 = vst.msk [vmem:[%s175 + $0x760] sm:$0xff] %vm11969, %v11437
      %12207 = vst.msk [vmem:[%s175 + $0x768] sm:$0xff] %vm11969, %v11438
      %12208 = vst.msk [vmem:[%s175 + $0x770] sm:$0xff] %vm11969, %v11439
      %12209 = vst.msk [vmem:[%s175 + $0x778] sm:$0xff] %vm11969, %v11440
      %12210 = vst.msk [vmem:[%s175 + $0x780] sm:$0xff] %vm11969, %v11441
      %12211 = vst.msk [vmem:[%s175 + $0x788] sm:$0xff] %vm11969, %v11442
      %12212 = vst.msk [vmem:[%s175 + $0x790] sm:$0xff] %vm11969, %v11443
      %12213 = vst.msk [vmem:[%s175 + $0x798] sm:$0xff] %vm11969, %v11444
      %12214 = vst.msk [vmem:[%s175 + $0x7a0] sm:$0xff] %vm11969, %v11445
      %12215 = vst.msk [vmem:[%s175 + $0x7a8] sm:$0xff] %vm11969, %v11446
      %12216 = vst.msk [vmem:[%s175 + $0x7b0] sm:$0xff] %vm11969, %v11447
      %12217 = vst.msk [vmem:[%s175 + $0x7b8] sm:$0xff] %vm11969, %v11448
      %12218 = vst.msk [vmem:[%s175 + $0x7c0] sm:$0xff] %vm11969, %v11449
      %12219 = vst.msk [vmem:[%s175 + $0x7c8] sm:$0xff] %vm11969, %v11450
      %12220 = vst.msk [vmem:[%s175 + $0x7d0] sm:$0xff] %vm11969, %v11451
      %12221 = vst.msk [vmem:[%s175 + $0x7d8] sm:$0xff] %vm11969, %v11452
      %12222 = vst.msk [vmem:[%s175 + $0x7e0] sm:$0xff] %vm11969, %v11453
      %12223 = vst.msk [vmem:[%s175 + $0x7e8] sm:$0xff] %vm11969, %v11454
      %12224 = vst.msk [vmem:[%s175 + $0x7f0] sm:$0xff] %vm11969, %v11455
      %12225 = vst.msk [vmem:[%s175 + $0x7f8] sm:$0xff] %vm11969, %v11456
      %12226 = vst.msk [vmem:[%s175 + $0x800] sm:$0xff] %vm11969, %v11457
      %12227 = vst.msk [vmem:[%s175 + $0x808] sm:$0xff] %vm11969, %v11458
      %12228 = vst.msk [vmem:[%s175 + $0x810] sm:$0xff] %vm11969, %v11459
      %12229 = vst.msk [vmem:[%s175 + $0x818] sm:$0xff] %vm11969, %v11460
      %12230 = vst.msk [vmem:[%s175 + $0x820] sm:$0xff] %vm11969, %v11461
      %12231 = vst.msk [vmem:[%s175 + $0x828] sm:$0xff] %vm11969, %v11462
      %12232 = vst.msk [vmem:[%s175 + $0x830] sm:$0xff] %vm11969, %v11463
      %12233 = vst.msk [vmem:[%s175 + $0x838] sm:$0xff] %vm11969, %v11464
      %12234 = vst.msk [vmem:[%s175 + $0x840] sm:$0xff] %vm11969, %v11465
      %12235 = vst.msk [vmem:[%s175 + $0x848] sm:$0xff] %vm11969, %v11466
      %12236 = vst.msk [vmem:[%s175 + $0x850] sm:$0xff] %vm11969, %v11467
      %12237 = vst.msk [vmem:[%s175 + $0x858] sm:$0xff] %vm11969, %v11468
      %12238 = vst.msk [vmem:[%s175 + $0x860] sm:$0xff] %vm11969, %v11469
      %12239 = vst.msk [vmem:[%s175 + $0x868] sm:$0xff] %vm11969, %v11470
      %12240 = vst.msk [vmem:[%s175 + $0x870] sm:$0xff] %vm11969, %v11471
      %12241 = vst.msk [vmem:[%s175 + $0x878] sm:$0xff] %vm11969, %v11472
      %12242 = vst.msk [vmem:[%s175 + $0x880] sm:$0xff] %vm11969, %v11473
      %12243 = vst.msk [vmem:[%s175 + $0x888] sm:$0xff] %vm11969, %v11474
      %12244 = vst.msk [vmem:[%s175 + $0x890] sm:$0xff] %vm11969, %v11475
      %12245 = vst.msk [vmem:[%s175 + $0x898] sm:$0xff] %vm11969, %v11476
      %12246 = vst.msk [vmem:[%s175 + $0x8a0] sm:$0xff] %vm11969, %v11477
      %12247 = vst.msk [vmem:[%s175 + $0x8a8] sm:$0xff] %vm11969, %v11478
      %12248 = vst.msk [vmem:[%s175 + $0x8b0] sm:$0xff] %vm11969, %v11479
      %12249 = vst.msk [vmem:[%s175 + $0x8b8] sm:$0xff] %vm11969, %v11480
      %12250 = vst.msk [vmem:[%s175 + $0x8c0] sm:$0xff] %vm11969, %v11481
      %12251 = vst.msk [vmem:[%s175 + $0x8c8] sm:$0xff] %vm11969, %v11482
      %12252 = vst.msk [vmem:[%s175 + $0x8d0] sm:$0xff] %vm11969, %v11483
      %12253 = vst.msk [vmem:[%s175 + $0x8d8] sm:$0xff] %vm11969, %v11484
      %12254 = vst.msk [vmem:[%s175 + $0x8e0] sm:$0xff] %vm11969, %v11485
      %12255 = vst.msk [vmem:[%s175 + $0x8e8] sm:$0xff] %vm11969, %v11486
      %12256 = vst.msk [vmem:[%s175 + $0x8f0] sm:$0xff] %vm11969, %v11487
      %12257 = vst.msk [vmem:[%s175 + $0x8f8] sm:$0xff] %vm11969, %v11488
      %12258 = vst.msk [vmem:[%s175 + $0x900] sm:$0xff] %vm11969, %v11489
      %12259 = vst.msk [vmem:[%s175 + $0x908] sm:$0xff] %vm11969, %v11490
      %12260 = vst.msk [vmem:[%s175 + $0x910] sm:$0xff] %vm11969, %v11491
      %12261 = vst.msk [vmem:[%s175 + $0x918] sm:$0xff] %vm11969, %v11492
      %12262 = vst.msk [vmem:[%s175 + $0x920] sm:$0xff] %vm11969, %v11493
      %12263 = vst.msk [vmem:[%s175 + $0x928] sm:$0xff] %vm11969, %v11494
      %12264 = vst.msk [vmem:[%s175 + $0x930] sm:$0xff] %vm11969, %v11495
      %12265 = vst.msk [vmem:[%s175 + $0x938] sm:$0xff] %vm11969, %v11496
      %12266 = vst.msk [vmem:[%s175 + $0x940] sm:$0xff] %vm11969, %v11497
      %12267 = vst.msk [vmem:[%s175 + $0x948] sm:$0xff] %vm11969, %v11498
      %12268 = vst.msk [vmem:[%s175 + $0x950] sm:$0xff] %vm11969, %v11499
      %12269 = vst.msk [vmem:[%s175 + $0x958] sm:$0xff] %vm11969, %v11500
      %12270 = vst.msk [vmem:[%s175 + $0x960] sm:$0xff] %vm11969, %v11501
      %12271 = vst.msk [vmem:[%s175 + $0x968] sm:$0xff] %vm11969, %v11502
      %12272 = vst.msk [vmem:[%s175 + $0x970] sm:$0xff] %vm11969, %v11503
      %12273 = vst.msk [vmem:[%s175 + $0x978] sm:$0xff] %vm11969, %v11504
      %12274 = vst.msk [vmem:[%s175 + $0x980] sm:$0xff] %vm11969, %v11505
      %12275 = vst.msk [vmem:[%s175 + $0x988] sm:$0xff] %vm11969, %v11506
      %12276 = vst.msk [vmem:[%s175 + $0x990] sm:$0xff] %vm11969, %v11507
      %12277 = vst.msk [vmem:[%s175 + $0x998] sm:$0xff] %vm11969, %v11508
      %12278 = vst.msk [vmem:[%s175 + $0x9a0] sm:$0xff] %vm11969, %v11509
      %12279 = vst.msk [vmem:[%s175 + $0x9a8] sm:$0xff] %vm11969, %v11510
      %12280 = vst.msk [vmem:[%s175 + $0x9b0] sm:$0xff] %vm11969, %v11511
      %12281 = vst.msk [vmem:[%s175 + $0x9b8] sm:$0xff] %vm11969, %v11512
      %12282 = vst.msk [vmem:[%s175 + $0x9c0] sm:$0xff] %vm11969, %v11513
      %12283 = vst.msk [vmem:[%s175 + $0x9c8] sm:$0xff] %vm11969, %v11514
      %12284 = vst.msk [vmem:[%s175 + $0x9d0] sm:$0xff] %vm11969, %v11515
      %12285 = vst.msk [vmem:[%s175 + $0x9d8] sm:$0xff] %vm11969, %v11516
      %12286 = vst.msk [vmem:[%s175 + $0x9e0] sm:$0xff] %vm11969, %v11517
      %12287 = vst.msk [vmem:[%s175 + $0x9e8] sm:$0xff] %vm11969, %v11518
      %12288 = vst.msk [vmem:[%s175 + $0x9f0] sm:$0xff] %vm11969, %v11519
      %12289 = vst.msk [vmem:[%s175 + $0x9f8] sm:$0xff] %vm11969, %v11520
      %12290 = vst.msk [vmem:[%s175 + $0xa00] sm:$0xff] %vm11969, %v11521
      %12291 = vst.msk [vmem:[%s175 + $0xa08] sm:$0xff] %vm11969, %v11522
      %12292 = vst.msk [vmem:[%s175 + $0xa10] sm:$0xff] %vm11969, %v11523
      %12293 = vst.msk [vmem:[%s175 + $0xa18] sm:$0xff] %vm11969, %v11524
      %12294 = vst.msk [vmem:[%s175 + $0xa20] sm:$0xff] %vm11969, %v11525
      %12295 = vst.msk [vmem:[%s175 + $0xa28] sm:$0xff] %vm11969, %v11526
      %12296 = vst.msk [vmem:[%s175 + $0xa30] sm:$0xff] %vm11969, %v11527
      %12297 = vst.msk [vmem:[%s175 + $0xa38] sm:$0xff] %vm11969, %v11528
      %12298 = vst.msk [vmem:[%s175 + $0xa40] sm:$0xff] %vm11969, %v11529
      %12299 = vst.msk [vmem:[%s175 + $0xa48] sm:$0xff] %vm11969, %v11530
      %12300 = vst.msk [vmem:[%s175 + $0xa50] sm:$0xff] %vm11969, %v11531
      %12301 = vst.msk [vmem:[%s175 + $0xa58] sm:$0xff] %vm11969, %v11532
      %12302 = vst.msk [vmem:[%s175 + $0xa60] sm:$0xff] %vm11969, %v11533
      %12303 = vst.msk [vmem:[%s175 + $0xa68] sm:$0xff] %vm11969, %v11534
      %12304 = vst.msk [vmem:[%s175 + $0xa70] sm:$0xff] %vm11969, %v11535
      %12305 = vst.msk [vmem:[%s175 + $0xa78] sm:$0xff] %vm11969, %v11536
      %12306 = vst.msk [vmem:[%s175 + $0xa80] sm:$0xff] %vm11969, %v11537
      %12307 = vst.msk [vmem:[%s175 + $0xa88] sm:$0xff] %vm11969, %v11538
      %12308 = vst.msk [vmem:[%s175 + $0xa90] sm:$0xff] %vm11969, %v11539
      %12309 = vst.msk [vmem:[%s175 + $0xa98] sm:$0xff] %vm11969, %v11540
      %12310 = vst.msk [vmem:[%s175 + $0xaa0] sm:$0xff] %vm11969, %v11541
      %12311 = vst.msk [vmem:[%s175 + $0xaa8] sm:$0xff] %vm11969, %v11542
      %12312 = vst.msk [vmem:[%s175 + $0xab0] sm:$0xff] %vm11969, %v11543
      %12313 = vst.msk [vmem:[%s175 + $0xab8] sm:$0xff] %vm11969, %v11544
      %12314 = vst.msk [vmem:[%s175 + $0xac0] sm:$0xff] %vm11969, %v11545
      %12315 = vst.msk [vmem:[%s175 + $0xac8] sm:$0xff] %vm11969, %v11546
      %12316 = vst.msk [vmem:[%s175 + $0xad0] sm:$0xff] %vm11969, %v11547
      %12317 = vst.msk [vmem:[%s175 + $0xad8] sm:$0xff] %vm11969, %v11548
      %12318 = vst.msk [vmem:[%s175 + $0xae0] sm:$0xff] %vm11969, %v11549
      %12319 = vst.msk [vmem:[%s175 + $0xae8] sm:$0xff] %vm11969, %v11550
      %12320 = vst.msk [vmem:[%s175 + $0xaf0] sm:$0xff] %vm11969, %v11551
      %12321 = vst.msk [vmem:[%s175 + $0xaf8] sm:$0xff] %vm11969, %v11552
      %12322 = vst.msk [vmem:[%s175 + $0xb00] sm:$0xff] %vm11969, %v11553
      %12323 = vst.msk [vmem:[%s175 + $0xb08] sm:$0xff] %vm11969, %v11554
      %12324 = vst.msk [vmem:[%s175 + $0xb10] sm:$0xff] %vm11969, %v11555
      %12325 = vst.msk [vmem:[%s175 + $0xb18] sm:$0xff] %vm11969, %v11556
      %12326 = vst.msk [vmem:[%s175 + $0xb20] sm:$0xff] %vm11969, %v11557
      %12327 = vst.msk [vmem:[%s175 + $0xb28] sm:$0xff] %vm11969, %v11558
      %12328 = vst.msk [vmem:[%s175 + $0xb30] sm:$0xff] %vm11969, %v11559
      %12329 = vst.msk [vmem:[%s175 + $0xb38] sm:$0xff] %vm11969, %v11560
      %12330 = vst.msk [vmem:[%s175 + $0xb40] sm:$0xff] %vm11969, %v11561
      %12331 = vst.msk [vmem:[%s175 + $0xb48] sm:$0xff] %vm11969, %v11562
      %12332 = vst.msk [vmem:[%s175 + $0xb50] sm:$0xff] %vm11969, %v11563
      %12333 = vst.msk [vmem:[%s175 + $0xb58] sm:$0xff] %vm11969, %v11564
      %12334 = vst.msk [vmem:[%s175 + $0xb60] sm:$0xff] %vm11969, %v11565
      %12335 = vst.msk [vmem:[%s175 + $0xb68] sm:$0xff] %vm11969, %v11566
      %12336 = vst.msk [vmem:[%s175 + $0xb70] sm:$0xff] %vm11969, %v11567
      %12337 = vst.msk [vmem:[%s175 + $0xb78] sm:$0xff] %vm11969, %v11568
      %12338 = vst.msk [vmem:[%s175 + $0xb80] sm:$0xff] %vm11969, %v11569
      %12339 = vst.msk [vmem:[%s175 + $0xb88] sm:$0xff] %vm11969, %v11570
      %12340 = vst.msk [vmem:[%s175 + $0xb90] sm:$0xff] %vm11969, %v11571
      %12341 = vst.msk [vmem:[%s175 + $0xb98] sm:$0xff] %vm11969, %v11572
      %12342 = vst.msk [vmem:[%s175 + $0xba0] sm:$0xff] %vm11969, %v11573
      %12343 = vst.msk [vmem:[%s175 + $0xba8] sm:$0xff] %vm11969, %v11574
      %12344 = vst.msk [vmem:[%s175 + $0xbb0] sm:$0xff] %vm11969, %v11575
      %12345 = vst.msk [vmem:[%s175 + $0xbb8] sm:$0xff] %vm11969, %v11576
      %12346 = vst.msk [vmem:[%s175 + $0xbc0] sm:$0xff] %vm11969, %v11577
      %12347 = vst.msk [vmem:[%s175 + $0xbc8] sm:$0xff] %vm11969, %v11578
      %12348 = vst.msk [vmem:[%s175 + $0xbd0] sm:$0xff] %vm11969, %v11579
      %12349 = vst.msk [vmem:[%s175 + $0xbd8] sm:$0xff] %vm11969, %v11580
      %12350 = vst.msk [vmem:[%s175 + $0xbe0] sm:$0xff] %vm11969, %v11581
      %12351 = vst.msk [vmem:[%s175 + $0xbe8] sm:$0xff] %vm11969, %v11582
      %12352 = vst.msk [vmem:[%s175 + $0xbf0] sm:$0xff] %vm11969, %v11583
      %12353 = vst.msk [vmem:[%s175 + $0xbf8] sm:$0xff] %vm11969, %v11584
      %12354 = vst.msk [vmem:[%s175 + $0xc00] sm:$0xff] %vm11969, %v11585
      %12355 = vst.msk [vmem:[%s175 + $0xc08] sm:$0xff] %vm11969, %v11586
      %12356 = vst.msk [vmem:[%s175 + $0xc10] sm:$0xff] %vm11969, %v11587
      %12357 = vst.msk [vmem:[%s175 + $0xc18] sm:$0xff] %vm11969, %v11588
      %12358 = vst.msk [vmem:[%s175 + $0xc20] sm:$0xff] %vm11969, %v11589
      %12359 = vst.msk [vmem:[%s175 + $0xc28] sm:$0xff] %vm11969, %v11590
      %12360 = vst.msk [vmem:[%s175 + $0xc30] sm:$0xff] %vm11969, %v11591
      %12361 = vst.msk [vmem:[%s175 + $0xc38] sm:$0xff] %vm11969, %v11592
      %12362 = vst.msk [vmem:[%s175 + $0xc40] sm:$0xff] %vm11969, %v11593
      %12363 = vst.msk [vmem:[%s175 + $0xc48] sm:$0xff] %vm11969, %v11594
      %12364 = vst.msk [vmem:[%s175 + $0xc50] sm:$0xff] %vm11969, %v11595
      %12365 = vst.msk [vmem:[%s175 + $0xc58] sm:$0xff] %vm11969, %v11596
      %12366 = vst.msk [vmem:[%s175 + $0xc60] sm:$0xff] %vm11969, %v11597
      %12367 = vst.msk [vmem:[%s175 + $0xc68] sm:$0xff] %vm11969, %v11598
      %12368 = vst.msk [vmem:[%s175 + $0xc70] sm:$0xff] %vm11969, %v11599
      %12369 = vst.msk [vmem:[%s175 + $0xc78] sm:$0xff] %vm11969, %v11600
      %12370 = vst.msk [vmem:[%s175 + $0xc80] sm:$0xff] %vm11969, %v11601
      %12371 = vst.msk [vmem:[%s175 + $0xc88] sm:$0xff] %vm11969, %v11602
      %12372 = vst.msk [vmem:[%s175 + $0xc90] sm:$0xff] %vm11969, %v11603
      %12373 = vst.msk [vmem:[%s175 + $0xc98] sm:$0xff] %vm11969, %v11604
      %12374 = vst.msk [vmem:[%s175 + $0xca0] sm:$0xff] %vm11969, %v11605
      %12375 = vst.msk [vmem:[%s175 + $0xca8] sm:$0xff] %vm11969, %v11606
      %12376 = vst.msk [vmem:[%s175 + $0xcb0] sm:$0xff] %vm11969, %v11607
      %12377 = vst.msk [vmem:[%s175 + $0xcb8] sm:$0xff] %vm11969, %v11608
      %12378 = vst.msk [vmem:[%s175 + $0xcc0] sm:$0xff] %vm11969, %v11609
      %12379 = vst.msk [vmem:[%s175 + $0xcc8] sm:$0xff] %vm11969, %v11610
      %12380 = vst.msk [vmem:[%s175 + $0xcd0] sm:$0xff] %vm11969, %v11611
      %12381 = vst.msk [vmem:[%s175 + $0xcd8] sm:$0xff] %vm11969, %v11612
      %12382 = vst.msk [vmem:[%s175 + $0xce0] sm:$0xff] %vm11969, %v11613
      %12383 = vst.msk [vmem:[%s175 + $0xce8] sm:$0xff] %vm11969, %v11614
      %12384 = vst.msk [vmem:[%s175 + $0xcf0] sm:$0xff] %vm11969, %v11615
      %12385 = vst.msk [vmem:[%s175 + $0xcf8] sm:$0xff] %vm11969, %v11616
      %12386 = vst.msk [vmem:[%s175 + $0xd00] sm:$0xff] %vm11969, %v11617
      %12387 = vst.msk [vmem:[%s175 + $0xd08] sm:$0xff] %vm11969, %v11618
      %12388 = vst.msk [vmem:[%s175 + $0xd10] sm:$0xff] %vm11969, %v11619
      %12389 = vst.msk [vmem:[%s175 + $0xd18] sm:$0xff] %vm11969, %v11620
      %12390 = vst.msk [vmem:[%s175 + $0xd20] sm:$0xff] %vm11969, %v11621
      %12391 = vst.msk [vmem:[%s175 + $0xd28] sm:$0xff] %vm11969, %v11622
      %12392 = vst.msk [vmem:[%s175 + $0xd30] sm:$0xff] %vm11969, %v11623
      %12393 = vst.msk [vmem:[%s175 + $0xd38] sm:$0xff] %vm11969, %v11624
      %12394 = vst.msk [vmem:[%s175 + $0xd40] sm:$0xff] %vm11969, %v11625
      %12395 = vst.msk [vmem:[%s175 + $0xd48] sm:$0xff] %vm11969, %v11626
      %12396 = vst.msk [vmem:[%s175 + $0xd50] sm:$0xff] %vm11969, %v11627
      %12397 = vst.msk [vmem:[%s175 + $0xd58] sm:$0xff] %vm11969, %v11628
      %12398 = vst.msk [vmem:[%s175 + $0xd60] sm:$0xff] %vm11969, %v11629
      %12399 = vst.msk [vmem:[%s175 + $0xd68] sm:$0xff] %vm11969, %v11630
      %12400 = vst.msk [vmem:[%s175 + $0xd70] sm:$0xff] %vm11969, %v11631
      %12401 = vst.msk [vmem:[%s175 + $0xd78] sm:$0xff] %vm11969, %v11632
      %12402 = vst.msk [vmem:[%s175 + $0xd80] sm:$0xff] %vm11969, %v11633
      %12403 = vst.msk [vmem:[%s175 + $0xd88] sm:$0xff] %vm11969, %v11634
      %12404 = vst.msk [vmem:[%s175 + $0xd90] sm:$0xff] %vm11969, %v11635
      %12405 = vst.msk [vmem:[%s175 + $0xd98] sm:$0xff] %vm11969, %v11636
      %12406 = vst.msk [vmem:[%s175 + $0xda0] sm:$0xff] %vm11969, %v11637
      %12407 = vst.msk [vmem:[%s175 + $0xda8] sm:$0xff] %vm11969, %v11638
      %12408 = vst.msk [vmem:[%s175 + $0xdb0] sm:$0xff] %vm11969, %v11639
      %12409 = vst.msk [vmem:[%s175 + $0xdb8] sm:$0xff] %vm11969, %v11640
      %12410 = vst.msk [vmem:[%s175 + $0xdc0] sm:$0xff] %vm11969, %v11641
      %12411 = vst.msk [vmem:[%s175 + $0xdc8] sm:$0xff] %vm11969, %v11642
      %12412 = vst.msk [vmem:[%s175 + $0xdd0] sm:$0xff] %vm11969, %v11643
      %12413 = vst.msk [vmem:[%s175 + $0xdd8] sm:$0xff] %vm11969, %v11644
      %12414 = vst.msk [vmem:[%s175 + $0xde0] sm:$0xff] %vm11969, %v11645
      %12415 = vst.msk [vmem:[%s175 + $0xde8] sm:$0xff] %vm11969, %v11646
      %12416 = vst.msk [vmem:[%s175 + $0xdf0] sm:$0xff] %vm11969, %v11647
      %12417 = vst.msk [vmem:[%s175 + $0xdf8] sm:$0xff] %vm11969, %v11648
      %12418 = vst.msk [vmem:[%s175 + $0xe00] sm:$0xff] %vm11969, %v11649
      %12419 = vst.msk [vmem:[%s175 + $0xe08] sm:$0xff] %vm11969, %v11650
      %12420 = vst.msk [vmem:[%s175 + $0xe10] sm:$0xff] %vm11969, %v11651
      %12421 = vst.msk [vmem:[%s175 + $0xe18] sm:$0xff] %vm11969, %v11652
      %12422 = vst.msk [vmem:[%s175 + $0xe20] sm:$0xff] %vm11969, %v11653
      %12423 = vst.msk [vmem:[%s175 + $0xe28] sm:$0xff] %vm11969, %v11654
      %12424 = vst.msk [vmem:[%s175 + $0xe30] sm:$0xff] %vm11969, %v11655
      %12425 = vst.msk [vmem:[%s175 + $0xe38] sm:$0xff] %vm11969, %v11656
      %12426 = vst.msk [vmem:[%s175 + $0xe40] sm:$0xff] %vm11969, %v11657
      %12427 = vst.msk [vmem:[%s175 + $0xe48] sm:$0xff] %vm11969, %v11658
      %12428 = vst.msk [vmem:[%s175 + $0xe50] sm:$0xff] %vm11969, %v11659
      %12429 = vst.msk [vmem:[%s175 + $0xe58] sm:$0xff] %vm11969, %v11660
      %12430 = vst.msk [vmem:[%s175 + $0xe60] sm:$0xff] %vm11969, %v11661
      %12431 = vst.msk [vmem:[%s175 + $0xe68] sm:$0xff] %vm11969, %v11662
      %12432 = vst.msk [vmem:[%s175 + $0xe70] sm:$0xff] %vm11969, %v11663
      %12433 = vst.msk [vmem:[%s175 + $0xe78] sm:$0xff] %vm11969, %v11664
      %12434 = vst.msk [vmem:[%s175 + $0xe80] sm:$0xff] %vm11969, %v11665
      %12435 = vst.msk [vmem:[%s175 + $0xe88] sm:$0xff] %vm11969, %v11666
      %12436 = vst.msk [vmem:[%s175 + $0xe90] sm:$0xff] %vm11969, %v11667
      %12437 = vst.msk [vmem:[%s175 + $0xe98] sm:$0xff] %vm11969, %v11668
      %12438 = vst.msk [vmem:[%s175 + $0xea0] sm:$0xff] %vm11969, %v11669
      %12439 = vst.msk [vmem:[%s175 + $0xea8] sm:$0xff] %vm11969, %v11670
      %12440 = vst.msk [vmem:[%s175 + $0xeb0] sm:$0xff] %vm11969, %v11671
      %12441 = vst.msk [vmem:[%s175 + $0xeb8] sm:$0xff] %vm11969, %v11672
      %12442 = vst.msk [vmem:[%s175 + $0xec0] sm:$0xff] %vm11969, %v11673
      %12443 = vst.msk [vmem:[%s175 + $0xec8] sm:$0xff] %vm11969, %v11674
      %12444 = vst.msk [vmem:[%s175 + $0xed0] sm:$0xff] %vm11969, %v11675
      %12445 = vst.msk [vmem:[%s175 + $0xed8] sm:$0xff] %vm11969, %v11676
      %12446 = vst.msk [vmem:[%s175 + $0xee0] sm:$0xff] %vm11969, %v11677
      %12447 = vst.msk [vmem:[%s175 + $0xee8] sm:$0xff] %vm11969, %v11678
      %12448 = vst.msk [vmem:[%s175 + $0xef0] sm:$0xff] %vm11969, %v11679
      %12449 = vst.msk [vmem:[%s175 + $0xef8] sm:$0xff] %vm11969, %v11680
      %12450 = vst.msk [vmem:[%s175 + $0xf00] sm:$0xff] %vm11969, %v11681
      %12451 = vst.msk [vmem:[%s175 + $0xf08] sm:$0xff] %vm11969, %v11682
      %12452 = vst.msk [vmem:[%s175 + $0xf10] sm:$0xff] %vm11969, %v11683
      %12453 = vst.msk [vmem:[%s175 + $0xf18] sm:$0xff] %vm11969, %v11684
      %12454 = vst.msk [vmem:[%s175 + $0xf20] sm:$0xff] %vm11969, %v11685
      %12455 = vst.msk [vmem:[%s175 + $0xf28] sm:$0xff] %vm11969, %v11686
      %12456 = vst.msk [vmem:[%s175 + $0xf30] sm:$0xff] %vm11969, %v11687
      %12457 = vst.msk [vmem:[%s175 + $0xf38] sm:$0xff] %vm11969, %v11688
      %12458 = vst.msk [vmem:[%s175 + $0xf40] sm:$0xff] %vm11969, %v11689
      %12459 = vst.msk [vmem:[%s175 + $0xf48] sm:$0xff] %vm11969, %v11690
      %12460 = vst.msk [vmem:[%s175 + $0xf50] sm:$0xff] %vm11969, %v11691
      %12461 = vst.msk [vmem:[%s175 + $0xf58] sm:$0xff] %vm11969, %v11692
      %12462 = vst.msk [vmem:[%s175 + $0xf60] sm:$0xff] %vm11969, %v11693
      %12463 = vst.msk [vmem:[%s175 + $0xf68] sm:$0xff] %vm11969, %v11694
      %12464 = vst.msk [vmem:[%s175 + $0xf70] sm:$0xff] %vm11969, %v11695
      %12465 = vst.msk [vmem:[%s175 + $0xf78] sm:$0xff] %vm11969, %v11696
      %12466 = vst.msk [vmem:[%s175 + $0xf80] sm:$0xff] %vm11969, %v11697
      %12467 = vst.msk [vmem:[%s175 + $0xf88] sm:$0xff] %vm11969, %v11698
      %12468 = vst.msk [vmem:[%s175 + $0xf90] sm:$0xff] %vm11969, %v11699
      %12469 = vst.msk [vmem:[%s175 + $0xf98] sm:$0xff] %vm11969, %v11700
      %12470 = vst.msk [vmem:[%s175 + $0xfa0] sm:$0xff] %vm11969, %v11701
      %12471 = vst.msk [vmem:[%s175 + $0xfa8] sm:$0xff] %vm11969, %v11702
      %12472 = vst.msk [vmem:[%s175 + $0xfb0] sm:$0xff] %vm11969, %v11703
      %12473 = vst.msk [vmem:[%s175 + $0xfb8] sm:$0xff] %vm11969, %v11704
      %12474 = vst.msk [vmem:[%s175 + $0xfc0] sm:$0xff] %vm11969, %v11705
      %12475 = vst.msk [vmem:[%s175 + $0xfc8] sm:$0xff] %vm11969, %v11706
      %12476 = vst.msk [vmem:[%s175 + $0xfd0] sm:$0xff] %vm11969, %v11707
      %12477 = vst.msk [vmem:[%s175 + $0xfd8] sm:$0xff] %vm11969, %v11708
      %12478 = vst.msk [vmem:[%s175 + $0xfe0] sm:$0xff] %vm11969, %v11709
      %12479 = vst.msk [vmem:[%s175 + $0xfe8] sm:$0xff] %vm11969, %v11710
      %12480 = vst.msk [vmem:[%s175 + $0xff0] sm:$0xff] %vm11969, %v11711
      %12481 = vst.msk [vmem:[%s175 + $0xff8] sm:$0xff] %vm11969, %v11712
      %12482 = vst.msk [vmem:[%s175 + $0x1000] sm:$0xff] %vm11969, %v11713
      %12483 = vst.msk [vmem:[%s175 + $0x1008] sm:$0xff] %vm11969, %v11714
      %12484 = vst.msk [vmem:[%s175 + $0x1010] sm:$0xff] %vm11969, %v11715
      %12485 = vst.msk [vmem:[%s175 + $0x1018] sm:$0xff] %vm11969, %v11716
      %12486 = vst.msk [vmem:[%s175 + $0x1020] sm:$0xff] %vm11969, %v11717
      %12487 = vst.msk [vmem:[%s175 + $0x1028] sm:$0xff] %vm11969, %v11718
      %12488 = vst.msk [vmem:[%s175 + $0x1030] sm:$0xff] %vm11969, %v11719
      %12489 = vst.msk [vmem:[%s175 + $0x1038] sm:$0xff] %vm11969, %v11720
      %12490 = vst.msk [vmem:[%s175 + $0x1040] sm:$0xff] %vm11969, %v11721
      %12491 = vst.msk [vmem:[%s175 + $0x1048] sm:$0xff] %vm11969, %v11722
      %12492 = vst.msk [vmem:[%s175 + $0x1050] sm:$0xff] %vm11969, %v11723
      %12493 = vst.msk [vmem:[%s175 + $0x1058] sm:$0xff] %vm11969, %v11724
      %12494 = vst.msk [vmem:[%s175 + $0x1060] sm:$0xff] %vm11969, %v11725
      %12495 = vst.msk [vmem:[%s175 + $0x1068] sm:$0xff] %vm11969, %v11726
      %12496 = vst.msk [vmem:[%s175 + $0x1070] sm:$0xff] %vm11969, %v11727
      %12497 = vst.msk [vmem:[%s175 + $0x1078] sm:$0xff] %vm11969, %v11728
      %12498 = vst.msk [vmem:[%s175 + $0x1080] sm:$0xff] %vm11969, %v11729
      %12499 = vst.msk [vmem:[%s175 + $0x1088] sm:$0xff] %vm11969, %v11730
      %12500 = vst.msk [vmem:[%s175 + $0x1090] sm:$0xff] %vm11969, %v11731
      %12501 = vst.msk [vmem:[%s175 + $0x1098] sm:$0xff] %vm11969, %v11732
      %12502 = vst.msk [vmem:[%s175 + $0x10a0] sm:$0xff] %vm11969, %v11733
      %12503 = vst.msk [vmem:[%s175 + $0x10a8] sm:$0xff] %vm11969, %v11734
      %12504 = vst.msk [vmem:[%s175 + $0x10b0] sm:$0xff] %vm11969, %v11735
      %12505 = vst.msk [vmem:[%s175 + $0x10b8] sm:$0xff] %vm11969, %v11736
      %12506 = vst.msk [vmem:[%s175 + $0x10c0] sm:$0xff] %vm11969, %v11737
      %12507 = vst.msk [vmem:[%s175 + $0x10c8] sm:$0xff] %vm11969, %v11738
      %12508 = vst.msk [vmem:[%s175 + $0x10d0] sm:$0xff] %vm11969, %v11739
      %12509 = vst.msk [vmem:[%s175 + $0x10d8] sm:$0xff] %vm11969, %v11740
      %12510 = vst.msk [vmem:[%s175 + $0x10e0] sm:$0xff] %vm11969, %v11741
      %12511 = vst.msk [vmem:[%s175 + $0x10e8] sm:$0xff] %vm11969, %v11742
      %12512 = vst.msk [vmem:[%s175 + $0x10f0] sm:$0xff] %vm11969, %v11743
      %12513 = vst.msk [vmem:[%s175 + $0x10f8] sm:$0xff] %vm11969, %v11744
      %12514 = vst.msk [vmem:[%s175 + $0x1100] sm:$0xff] %vm11969, %v11745
      %12515 = vst.msk [vmem:[%s175 + $0x1108] sm:$0xff] %vm11969, %v11746
      %12516 = vst.msk [vmem:[%s175 + $0x1110] sm:$0xff] %vm11969, %v11747
      %12517 = vst.msk [vmem:[%s175 + $0x1118] sm:$0xff] %vm11969, %v11748
      %12518 = vst.msk [vmem:[%s175 + $0x1120] sm:$0xff] %vm11969, %v11749
      %12519 = vst.msk [vmem:[%s175 + $0x1128] sm:$0xff] %vm11969, %v11750
      %12520 = vst.msk [vmem:[%s175 + $0x1130] sm:$0xff] %vm11969, %v11751
      %12521 = vst.msk [vmem:[%s175 + $0x1138] sm:$0xff] %vm11969, %v11752
      %12522 = vst.msk [vmem:[%s175 + $0x1140] sm:$0xff] %vm11969, %v11753
      %12523 = vst.msk [vmem:[%s175 + $0x1148] sm:$0xff] %vm11969, %v11754
      %12524 = vst.msk [vmem:[%s175 + $0x1150] sm:$0xff] %vm11969, %v11755
      %12525 = vst.msk [vmem:[%s175 + $0x1158] sm:$0xff] %vm11969, %v11756
      %12526 = vst.msk [vmem:[%s175 + $0x1160] sm:$0xff] %vm11969, %v11757
      %12527 = vst.msk [vmem:[%s175 + $0x1168] sm:$0xff] %vm11969, %v11758
      %12528 = vst.msk [vmem:[%s175 + $0x1170] sm:$0xff] %vm11969, %v11759
      %12529 = vst.msk [vmem:[%s175 + $0x1178] sm:$0xff] %vm11969, %v11760
      %12530 = vst.msk [vmem:[%s175 + $0x1180] sm:$0xff] %vm11969, %v11761
      %12531 = vst.msk [vmem:[%s175 + $0x1188] sm:$0xff] %vm11969, %v11762
      %12532 = vst.msk [vmem:[%s175 + $0x1190] sm:$0xff] %vm11969, %v11763
      %12533 = vst.msk [vmem:[%s175 + $0x1198] sm:$0xff] %vm11969, %v11764
      %12534 = vst.msk [vmem:[%s175 + $0x11a0] sm:$0xff] %vm11969, %v11765
      %12535 = vst.msk [vmem:[%s175 + $0x11a8] sm:$0xff] %vm11969, %v11766
      %12536 = vst.msk [vmem:[%s175 + $0x11b0] sm:$0xff] %vm11969, %v11767
      %12537 = vst.msk [vmem:[%s175 + $0x11b8] sm:$0xff] %vm11969, %v11768
      %12538 = vst.msk [vmem:[%s175 + $0x11c0] sm:$0xff] %vm11969, %v11769
      %12539 = vst.msk [vmem:[%s175 + $0x11c8] sm:$0xff] %vm11969, %v11770
      %12540 = vst.msk [vmem:[%s175 + $0x11d0] sm:$0xff] %vm11969, %v11771
      %12541 = vst.msk [vmem:[%s175 + $0x11d8] sm:$0xff] %vm11969, %v11772
      %12542 = vst.msk [vmem:[%s175 + $0x11e0] sm:$0xff] %vm11969, %v11773
      %12543 = vst.msk [vmem:[%s175 + $0x11e8] sm:$0xff] %vm11969, %v11774
      %12544 = vst.msk [vmem:[%s175 + $0x11f0] sm:$0xff] %vm11969, %v11775
      %12545 = vst.msk [vmem:[%s175 + $0x11f8] sm:$0xff] %vm11969, %v11776
      %12546 = vst.msk [vmem:[%s175 + $0x1200] sm:$0xff] %vm11969, %v11777
      %12547 = vst.msk [vmem:[%s175 + $0x1208] sm:$0xff] %vm11969, %v11778
      %12548 = vst.msk [vmem:[%s175 + $0x1210] sm:$0xff] %vm11969, %v11779
      %12549 = vst.msk [vmem:[%s175 + $0x1218] sm:$0xff] %vm11969, %v11780
      %12550 = vst.msk [vmem:[%s175 + $0x1220] sm:$0xff] %vm11969, %v11781
      %12551 = vst.msk [vmem:[%s175 + $0x1228] sm:$0xff] %vm11969, %v11782
      %12552 = vst.msk [vmem:[%s175 + $0x1230] sm:$0xff] %vm11969, %v11783
      %12553 = vst.msk [vmem:[%s175 + $0x1238] sm:$0xff] %vm11969, %v11784
      %12554 = vst.msk [vmem:[%s175 + $0x1240] sm:$0xff] %vm11969, %v11785
      %12555 = vst.msk [vmem:[%s175 + $0x1248] sm:$0xff] %vm11969, %v11786
      %12556 = vst.msk [vmem:[%s175 + $0x1250] sm:$0xff] %vm11969, %v11787
      %12557 = vst.msk [vmem:[%s175 + $0x1258] sm:$0xff] %vm11969, %v11788
      %12558 = vst.msk [vmem:[%s175 + $0x1260] sm:$0xff] %vm11969, %v11789
      %12559 = vst.msk [vmem:[%s175 + $0x1268] sm:$0xff] %vm11969, %v11790
      %12560 = vst.msk [vmem:[%s175 + $0x1270] sm:$0xff] %vm11969, %v11791
      %12561 = vst.msk [vmem:[%s175 + $0x1278] sm:$0xff] %vm11969, %v11792
      %12562 = vst.msk [vmem:[%s175 + $0x1280] sm:$0xff] %vm11969, %v11793
      %12563 = vst.msk [vmem:[%s175 + $0x1288] sm:$0xff] %vm11969, %v11794
      %12564 = vst.msk [vmem:[%s175 + $0x1290] sm:$0xff] %vm11969, %v11795
      %12565 = vst.msk [vmem:[%s175 + $0x1298] sm:$0xff] %vm11969, %v11796
      %12566 = vst.msk [vmem:[%s175 + $0x12a0] sm:$0xff] %vm11969, %v11797
      %12567 = vst.msk [vmem:[%s175 + $0x12a8] sm:$0xff] %vm11969, %v11798
      %12568 = vst.msk [vmem:[%s175 + $0x12b0] sm:$0xff] %vm11969, %v11799
      %12569 = vst.msk [vmem:[%s175 + $0x12b8] sm:$0xff] %vm11969, %v11800
      %12570 = vst.msk [vmem:[%s175 + $0x12c0] sm:$0xff] %vm11969, %v11801
      %12571 = vst.msk [vmem:[%s175 + $0x12c8] sm:$0xff] %vm11969, %v11802
      %12572 = vst.msk [vmem:[%s175 + $0x12d0] sm:$0xff] %vm11969, %v11803
      %12573 = vst.msk [vmem:[%s175 + $0x12d8] sm:$0xff] %vm11969, %v11804
      %12574 = vst.msk [vmem:[%s175 + $0x12e0] sm:$0xff] %vm11969, %v11805
      %12575 = vst.msk [vmem:[%s175 + $0x12e8] sm:$0xff] %vm11969, %v11806
      %12576 = vst.msk [vmem:[%s175 + $0x12f0] sm:$0xff] %vm11969, %v11807
      %12577 = vst.msk [vmem:[%s175 + $0x12f8] sm:$0xff] %vm11969, %v11808
      %12578 = vst.msk [vmem:[%s175 + $0x1300] sm:$0xff] %vm11969, %v11809
      %12579 = vst.msk [vmem:[%s175 + $0x1308] sm:$0xff] %vm11969, %v11810
      %12580 = vst.msk [vmem:[%s175 + $0x1310] sm:$0xff] %vm11969, %v11811
      %12581 = vst.msk [vmem:[%s175 + $0x1318] sm:$0xff] %vm11969, %v11812
      %12582 = vst.msk [vmem:[%s175 + $0x1320] sm:$0xff] %vm11969, %v11813
      %12583 = vst.msk [vmem:[%s175 + $0x1328] sm:$0xff] %vm11969, %v11814
      %12584 = vst.msk [vmem:[%s175 + $0x1330] sm:$0xff] %vm11969, %v11815
      %12585 = vst.msk [vmem:[%s175 + $0x1338] sm:$0xff] %vm11969, %v11816
      %12586 = vst.msk [vmem:[%s175 + $0x1340] sm:$0xff] %vm11969, %v11817
      %12587 = vst.msk [vmem:[%s175 + $0x1348] sm:$0xff] %vm11969, %v11818
      %12588 = vst.msk [vmem:[%s175 + $0x1350] sm:$0xff] %vm11969, %v11819
      %12589 = vst.msk [vmem:[%s175 + $0x1358] sm:$0xff] %vm11969, %v11820
      %12590 = vst.msk [vmem:[%s175 + $0x1360] sm:$0xff] %vm11969, %v11821
      %12591 = vst.msk [vmem:[%s175 + $0x1368] sm:$0xff] %vm11969, %v11822
      %12592 = vst.msk [vmem:[%s175 + $0x1370] sm:$0xff] %vm11969, %v11823
      %12593 = vst.msk [vmem:[%s175 + $0x1378] sm:$0xff] %vm11969, %v11824
      %12594 = vst.msk [vmem:[%s175 + $0x1380] sm:$0xff] %vm11969, %v11825
      %12595 = vst.msk [vmem:[%s175 + $0x1388] sm:$0xff] %vm11969, %v11826
      %12596 = vst.msk [vmem:[%s175 + $0x1390] sm:$0xff] %vm11969, %v11827
      %12597 = vst.msk [vmem:[%s175 + $0x1398] sm:$0xff] %vm11969, %v11828
      %12598 = vst.msk [vmem:[%s175 + $0x13a0] sm:$0xff] %vm11969, %v11829
      %12599 = vst.msk [vmem:[%s175 + $0x13a8] sm:$0xff] %vm11969, %v11830
      %12600 = vst.msk [vmem:[%s175 + $0x13b0] sm:$0xff] %vm11969, %v11831
      %12601 = vst.msk [vmem:[%s175 + $0x13b8] sm:$0xff] %vm11969, %v11832
      %12602 = vst.msk [vmem:[%s175 + $0x13c0] sm:$0xff] %vm11969, %v11833
      %12603 = vst.msk [vmem:[%s175 + $0x13c8] sm:$0xff] %vm11969, %v11834
      %12604 = vst.msk [vmem:[%s175 + $0x13d0] sm:$0xff] %vm11969, %v11835
      %12605 = vst.msk [vmem:[%s175 + $0x13d8] sm:$0xff] %vm11969, %v11836
      %12606 = vst.msk [vmem:[%s175 + $0x13e0] sm:$0xff] %vm11969, %v11837
      %12607 = vst.msk [vmem:[%s175 + $0x13e8] sm:$0xff] %vm11969, %v11838
      %12608 = vst.msk [vmem:[%s175 + $0x13f0] sm:$0xff] %vm11969, %v11839
      %12609 = vst.msk [vmem:[%s175 + $0x13f8] sm:$0xff] %vm11969, %v11840
      %12610 = vst.msk [vmem:[%s175 + $0x1400] sm:$0xff] %vm11969, %v11841
      %12611 = vst.msk [vmem:[%s175 + $0x1408] sm:$0xff] %vm11969, %v11842
      %12612 = vst.msk [vmem:[%s175 + $0x1410] sm:$0xff] %vm11969, %v11843
      %12613 = vst.msk [vmem:[%s175 + $0x1418] sm:$0xff] %vm11969, %v11844
      %12614 = vst.msk [vmem:[%s175 + $0x1420] sm:$0xff] %vm11969, %v11845
      %12615 = vst.msk [vmem:[%s175 + $0x1428] sm:$0xff] %vm11969, %v11846
      %12616 = vst.msk [vmem:[%s175 + $0x1430] sm:$0xff] %vm11969, %v11847
      %12617 = vst.msk [vmem:[%s175 + $0x1438] sm:$0xff] %vm11969, %v11848
      %12618 = vst.msk [vmem:[%s175 + $0x1440] sm:$0xff] %vm11969, %v11849
      %12619 = vst.msk [vmem:[%s175 + $0x1448] sm:$0xff] %vm11969, %v11850
      %12620 = vst.msk [vmem:[%s175 + $0x1450] sm:$0xff] %vm11969, %v11851
      %12621 = vst.msk [vmem:[%s175 + $0x1458] sm:$0xff] %vm11969, %v11852
      %12622 = vst.msk [vmem:[%s175 + $0x1460] sm:$0xff] %vm11969, %v11853
      %12623 = vst.msk [vmem:[%s175 + $0x1468] sm:$0xff] %vm11969, %v11854
      %12624 = vst.msk [vmem:[%s175 + $0x1470] sm:$0xff] %vm11969, %v11855
      %12625 = vst.msk [vmem:[%s175 + $0x1478] sm:$0xff] %vm11969, %v11856
      %12626 = vst.msk [vmem:[%s175 + $0x1480] sm:$0xff] %vm11969, %v11857
      %12627 = vst.msk [vmem:[%s175 + $0x1488] sm:$0xff] %vm11969, %v11858
      %12628 = vst.msk [vmem:[%s175 + $0x1490] sm:$0xff] %vm11969, %v11859
      %12629 = vst.msk [vmem:[%s175 + $0x1498] sm:$0xff] %vm11969, %v11860
      %12630 = vst.msk [vmem:[%s175 + $0x14a0] sm:$0xff] %vm11969, %v11861
      %12631 = vst.msk [vmem:[%s175 + $0x14a8] sm:$0xff] %vm11969, %v11862
      %12632 = vst.msk [vmem:[%s175 + $0x14b0] sm:$0xff] %vm11969, %v11863
      %12633 = vst.msk [vmem:[%s175 + $0x14b8] sm:$0xff] %vm11969, %v11864
      %12634 = vst.msk [vmem:[%s175 + $0x14c0] sm:$0xff] %vm11969, %v11865
      %12635 = vst.msk [vmem:[%s175 + $0x14c8] sm:$0xff] %vm11969, %v11866
      %12636 = vst.msk [vmem:[%s175 + $0x14d0] sm:$0xff] %vm11969, %v11867
      %12637 = vst.msk [vmem:[%s175 + $0x14d8] sm:$0xff] %vm11969, %v11868
      %12638 = vst.msk [vmem:[%s175 + $0x14e0] sm:$0xff] %vm11969, %v11869
      %12639 = vst.msk [vmem:[%s175 + $0x14e8] sm:$0xff] %vm11969, %v11870
      %12640 = vst.msk [vmem:[%s175 + $0x14f0] sm:$0xff] %vm11969, %v11871
      %12641 = vst.msk [vmem:[%s175 + $0x14f8] sm:$0xff] %vm11969, %v11872
      %12642 = vst.msk [vmem:[%s175 + $0x1500] sm:$0xff] %vm11969, %v11873
      %12643 = vst.msk [vmem:[%s175 + $0x1508] sm:$0xff] %vm11969, %v11874
      %12644 = vst.msk [vmem:[%s175 + $0x1510] sm:$0xff] %vm11969, %v11875
      %12645 = vst.msk [vmem:[%s175 + $0x1518] sm:$0xff] %vm11969, %v11876
      %12646 = vst.msk [vmem:[%s175 + $0x1520] sm:$0xff] %vm11969, %v11877
      %12647 = vst.msk [vmem:[%s175 + $0x1528] sm:$0xff] %vm11969, %v11878
      %12648 = vst.msk [vmem:[%s175 + $0x1530] sm:$0xff] %vm11969, %v11879
      %12649 = vst.msk [vmem:[%s175 + $0x1538] sm:$0xff] %vm11969, %v11880
      %12650 = vst.msk [vmem:[%s175 + $0x1540] sm:$0xff] %vm11969, %v11881
      %12651 = vst.msk [vmem:[%s175 + $0x1548] sm:$0xff] %vm11969, %v11882
      %12652 = vst.msk [vmem:[%s175 + $0x1550] sm:$0xff] %vm11969, %v11883
      %12653 = vst.msk [vmem:[%s175 + $0x1558] sm:$0xff] %vm11969, %v11884
      %12654 = vst.msk [vmem:[%s175 + $0x1560] sm:$0xff] %vm11969, %v11885
      %12655 = vst.msk [vmem:[%s175 + $0x1568] sm:$0xff] %vm11969, %v11886
      %12656 = vst.msk [vmem:[%s175 + $0x1570] sm:$0xff] %vm11969, %v11887
      %12657 = vst.msk [vmem:[%s175 + $0x1578] sm:$0xff] %vm11969, %v11888
      %12658 = vst.msk [vmem:[%s175 + $0x1580] sm:$0xff] %vm11969, %v11889
      %12659 = vst.msk [vmem:[%s175 + $0x1588] sm:$0xff] %vm11969, %v11890
      %12660 = vst.msk [vmem:[%s175 + $0x1590] sm:$0xff] %vm11969, %v11891
      %12661 = vst.msk [vmem:[%s175 + $0x1598] sm:$0xff] %vm11969, %v11892
      %12662 = vst.msk [vmem:[%s175 + $0x15a0] sm:$0xff] %vm11969, %v11893
      %12663 = vst.msk [vmem:[%s175 + $0x15a8] sm:$0xff] %vm11969, %v11894
      %12664 = vst.msk [vmem:[%s175 + $0x15b0] sm:$0xff] %vm11969, %v11895
      %12665 = vst.msk [vmem:[%s175 + $0x15b8] sm:$0xff] %vm11969, %v11896
      %12666 = vst.msk [vmem:[%s175 + $0x15c0] sm:$0xff] %vm11969, %v11897
      %12667 = vst.msk [vmem:[%s175 + $0x15c8] sm:$0xff] %vm11969, %v11898
      %12668 = vst.msk [vmem:[%s175 + $0x15d0] sm:$0xff] %vm11969, %v11899
      %12669 = vst.msk [vmem:[%s175 + $0x15d8] sm:$0xff] %vm11969, %v11900
      %12670 = vst.msk [vmem:[%s175 + $0x15e0] sm:$0xff] %vm11969, %v11901
      %12671 = vst.msk [vmem:[%s175 + $0x15e8] sm:$0xff] %vm11969, %v11902
      %12672 = vst.msk [vmem:[%s175 + $0x15f0] sm:$0xff] %vm11969, %v11903
      %12673 = vst.msk [vmem:[%s175 + $0x15f8] sm:$0xff] %vm11969, %v11904
      %12674 = vst.msk [vmem:[%s175 + $0x1600] sm:$0xff] %vm11969, %v11905
      %12675 = vst.msk [vmem:[%s175 + $0x1608] sm:$0xff] %vm11969, %v11906
      %12676 = vst.msk [vmem:[%s175 + $0x1610] sm:$0xff] %vm11969, %v11907
      %12677 = vst.msk [vmem:[%s175 + $0x1618] sm:$0xff] %vm11969, %v11908
      %12678 = vst.msk [vmem:[%s175 + $0x1620] sm:$0xff] %vm11969, %v11909
      %12679 = vst.msk [vmem:[%s175 + $0x1628] sm:$0xff] %vm11969, %v11910
      %12680 = vst.msk [vmem:[%s175 + $0x1630] sm:$0xff] %vm11969, %v11911
      %12681 = vst.msk [vmem:[%s175 + $0x1638] sm:$0xff] %vm11969, %v11912
      %12682 = vst.msk [vmem:[%s175 + $0x1640] sm:$0xff] %vm11969, %v11913
      %12683 = vst.msk [vmem:[%s175 + $0x1648] sm:$0xff] %vm11969, %v11914
      %12684 = vst.msk [vmem:[%s175 + $0x1650] sm:$0xff] %vm11969, %v11915
      %12685 = vst.msk [vmem:[%s175 + $0x1658] sm:$0xff] %vm11969, %v11916
      %12686 = vst.msk [vmem:[%s175 + $0x1660] sm:$0xff] %vm11969, %v11917
      %12687 = vst.msk [vmem:[%s175 + $0x1668] sm:$0xff] %vm11969, %v11918
      %12688 = vst.msk [vmem:[%s175 + $0x1670] sm:$0xff] %vm11969, %v11919
      %12689 = vst.msk [vmem:[%s175 + $0x1678] sm:$0xff] %vm11969, %v11920
      %12690 = vst.msk [vmem:[%s175 + $0x1680] sm:$0xff] %vm11969, %v11921
      %12691 = vst.msk [vmem:[%s175 + $0x1688] sm:$0xff] %vm11969, %v11922
      %12692 = vst.msk [vmem:[%s175 + $0x1690] sm:$0xff] %vm11969, %v11923
      %12693 = vst.msk [vmem:[%s175 + $0x1698] sm:$0xff] %vm11969, %v11924
      %12694 = vst.msk [vmem:[%s175 + $0x16a0] sm:$0xff] %vm11969, %v11925
      %12695 = vst.msk [vmem:[%s175 + $0x16a8] sm:$0xff] %vm11969, %v11926
      %12696 = vst.msk [vmem:[%s175 + $0x16b0] sm:$0xff] %vm11969, %v11927
      %12697 = vst.msk [vmem:[%s175 + $0x16b8] sm:$0xff] %vm11969, %v11928
      %12698 = vst.msk [vmem:[%s175 + $0x16c0] sm:$0xff] %vm11969, %v11929
      %12699 = vst.msk [vmem:[%s175 + $0x16c8] sm:$0xff] %vm11969, %v11930
      %12700 = vst.msk [vmem:[%s175 + $0x16d0] sm:$0xff] %vm11969, %v11931
      %12701 = vst.msk [vmem:[%s175 + $0x16d8] sm:$0xff] %vm11969, %v11932
      %12702 = vst.msk [vmem:[%s175 + $0x16e0] sm:$0xff] %vm11969, %v11933
      %12703 = vst.msk [vmem:[%s175 + $0x16e8] sm:$0xff] %vm11969, %v11934
      %12704 = vst.msk [vmem:[%s175 + $0x16f0] sm:$0xff] %vm11969, %v11935
      %12705 = vst.msk [vmem:[%s175 + $0x16f8] sm:$0xff] %vm11969, %v11936
      %12706 = vst.msk [vmem:[%s175 + $0x1700] sm:$0xff] %vm11969, %v11937
      %12707 = vst.msk [vmem:[%s175 + $0x1708] sm:$0xff] %vm11969, %v11938
      %12708 = vst.msk [vmem:[%s175 + $0x1710] sm:$0xff] %vm11969, %v11939
      %12709 = vst.msk [vmem:[%s175 + $0x1718] sm:$0xff] %vm11969, %v11940
      %12710 = vst.msk [vmem:[%s175 + $0x1720] sm:$0xff] %vm11969, %v11941
      %12711 = vst.msk [vmem:[%s175 + $0x1728] sm:$0xff] %vm11969, %v11942
      %12712 = vst.msk [vmem:[%s175 + $0x1730] sm:$0xff] %vm11969, %v11943
      %12713 = vst.msk [vmem:[%s175 + $0x1738] sm:$0xff] %vm11969, %v11944
      %12714 = vst.msk [vmem:[%s175 + $0x1740] sm:$0xff] %vm11969, %v11945
      %12715 = vst.msk [vmem:[%s175 + $0x1748] sm:$0xff] %vm11969, %v11946
      %12716 = vst.msk [vmem:[%s175 + $0x1750] sm:$0xff] %vm11969, %v11947
      %12717 = vst.msk [vmem:[%s175 + $0x1758] sm:$0xff] %vm11969, %v11948
      %12718 = vst.msk [vmem:[%s175 + $0x1760] sm:$0xff] %vm11969, %v11949
      %12719 = vst.msk [vmem:[%s175 + $0x1768] sm:$0xff] %vm11969, %v11950
      %12720 = vst.msk [vmem:[%s175 + $0x1770] sm:$0xff] %vm11969, %v11951
      %12721 = vst.msk [vmem:[%s175 + $0x1778] sm:$0xff] %vm11969, %v11952
      %12722 = vst.msk [vmem:[%s175 + $0x1780] sm:$0xff] %vm11969, %v11953
      %12723 = vst.msk [vmem:[%s175 + $0x1788] sm:$0xff] %vm11969, %v11954
      %12724 = vst.msk [vmem:[%s175 + $0x1790] sm:$0xff] %vm11969, %v11955
      %12725 = vst.msk [vmem:[%s175 + $0x1798] sm:$0xff] %vm11969, %v11956
      %12726 = vst.msk [vmem:[%s175 + $0x17a0] sm:$0xff] %vm11969, %v11957
      %12727 = vst.msk [vmem:[%s175 + $0x17a8] sm:$0xff] %vm11969, %v11958
      %12728 = vst.msk [vmem:[%s175 + $0x17b0] sm:$0xff] %vm11969, %v11959
      %12729 = vst.msk [vmem:[%s175 + $0x17b8] sm:$0xff] %vm11969, %v11960
      %12730 = vst.msk [vmem:[%s175 + $0x17c0] sm:$0xff] %vm11969, %v11961
      %12731 = vst.msk [vmem:[%s175 + $0x17c8] sm:$0xff] %vm11969, %v11962
      %12732 = vst.msk [vmem:[%s175 + $0x17d0] sm:$0xff] %vm11969, %v11963
      %12733 = vst.msk [vmem:[%s175 + $0x17d8] sm:$0xff] %vm11969, %v11964
      %12734 = vst.msk [vmem:[%s175 + $0x17e0] sm:$0xff] %vm11969, %v11965
      %12735 = vst.msk [vmem:[%s175 + $0x17e8] sm:$0xff] %vm11969, %v11966
      %12736 = vst.msk [vmem:[%s175 + $0x17f0] sm:$0xff] %vm11969, %v11967
      %12737 = vst.msk [vmem:[%s175 + $0x17f8] sm:$0xff] %vm11969, %v11968
      %s12738 = smul.u32 768, %s14
      %p12739 = scmp.lt.s32.totalorder %s12738, 1535
      %s12740 = scalar_select %p12739, %s12738, 1535
      %s12741 = smul.addr %s12740, 8
      %s12742 = scalar_lea.vmem %s3, %s12741
      // Predicated region
      $region33: #{pfn_layer_forward.1} parent=31 // pred_check
        %p12743 = pneg %p100
      $region34: #{pfn_layer_forward.1} parent=31 // pred_check_branch
        %12745 = sbr.rel (%p12743) target = $region36
      $region35: #{pfn_layer_forward.1} parent=31 // pred_region
        %s12746 = smul.u32 768, %s14
      $region36: #{pfn_layer_forward.1} parent=31 // pred_fallthru
        _
    $region32: #{pfn_layer_forward.1} parent=5 // pred_fallthru
      _
    %p12747 = scmp.le.s32.totalorder 2, %s9
    // Predicated region
    $region37: #{pfn_layer_forward.1} parent=5 // pred_check
      %p12748 = pneg %p12747
    $region38: #{pfn_layer_forward.1} parent=5 // pred_check_branch
      %12750 = sbr.rel (%p12748) target = $region40
    $region39: #{pfn_layer_forward.1} parent=5 // pred_region
      %s12751 = ssub.s32 %s9, 2
      // Predicated region
      $region41: #{pfn_layer_forward.1} parent=39 // pred_check
        %p12752 = pneg %p106
      $region42: #{pfn_layer_forward.1} parent=39 // pred_check_branch
        %12754 = sbr.rel (%p12752) target = $region44
      $region43: #{pfn_layer_forward.1} parent=39 // pred_region
        %s12755 = smul.u32 768, %s15
        %p12756 = scmp.lt.s32.totalorder %s12755, 1535
        %s12757 = scalar_select %p12756, %s12755, 1535
        %s12758 = smul.addr %s12757, 8
        %s12759 = scalar_lea.vmem %s3, %s12758
      $region44: #{pfn_layer_forward.1} parent=39 // pred_fallthru
        _
    $region40: #{pfn_layer_forward.1} parent=5 // pred_fallthru
      _
  $region6: #{pfn_layer_forward.1} parent=0 // loop_footer
    %s13 = sadd.s32 1, %s9
  $region7: #{pfn_layer_forward.1} parent=0 // loop_footer_branch
    %8 = sbr.rel target = $region3
  $region8: #{pfn_layer_forward.1} parent=0 // loop_exit
    _

</llo_original>
